<compile_context>
chip_gen: v7x
topology: tpu7x:2x2x1
jax: 0.10.0
libtpu: 0.0.40
codegen_flags: <defaults>
</compile_context>

<pallas_src>
import functools

import jax
import jax.numpy as jnp
from jax import lax
from jax.experimental import pallas as pl
from jax.experimental.pallas import tpu as pltpu

D_IN, D_HID, D_OUT = 512, 128, 64
BN_EPS = 1e-5


def _projection_head_kernel(x_ref, w1_ref, b1_ref, g1_ref, be1_ref,
                            w2_ref, b2_ref, g2_ref, be2_ref,
                            o_ref,
                            h_scr, z_scr,
                            hsum, hsq, zsum, zsq,
                            hc, zc, s1, t1, s2, t2,
                            *, inv_b):
    phase = pl.program_id(0)
    tile = pl.program_id(1)

    # ---- phase 0: fc1 GEMM, keep h resident (bf16), shifted BN1 sums ----------
    @pl.when(phase == 0)
    def _fc1():
        x = x_ref[...].astype(jnp.bfloat16)           # bf16 MXU operand
        h = jnp.dot(x, w1_ref[...], preferred_element_type=jnp.float32)
        h = h + b1_ref[...]

        @pl.when(tile == 0)
        def _init():
            # Per-feature shift (first tile's mean): keeps the shifted sums small
            # so var = E[d^2] - E[d]^2 below does not cancel catastrophically.
            hc[...] = jnp.mean(h, axis=0, keepdims=True)
            hsum[...] = jnp.zeros_like(hsum)
            hsq[...] = jnp.zeros_like(hsq)
            zsum[...] = jnp.zeros_like(zsum)
            zsq[...] = jnp.zeros_like(zsq)

        d = h - hc[...]
        hsum[...] += jnp.sum(d, axis=0, keepdims=True)
        hsq[...] += jnp.sum(d * d, axis=0, keepdims=True)
        h_scr[tile] = h.astype(jnp.bfloat16)          # resident bf16 slab

    # ---- phase 1: BN1 (FMA) + ReLU, fc2 GEMM, keep z resident, BN2 sums -------
    @pl.when(phase == 1)
    def _bn1_fc2():
        @pl.when(tile == 0)
        def _finalize_bn1():
            m = hsum[...] * inv_b                     # mean of (h - c1)
            var = hsq[...] * inv_b - m * m            # biased batch variance
            scale = g1_ref[...] * lax.rsqrt(var + BN_EPS)
            s1[...] = scale
            t1[...] = be1_ref[...] - (hc[...] + m) * scale

        h = h_scr[tile].astype(jnp.float32)
        h = jnp.maximum(h * s1[...] + t1[...], 0.0)   # BN1 + ReLU (single FMA)
        z = jnp.dot(h.astype(jnp.bfloat16), w2_ref[...],
                    preferred_element_type=jnp.float32)
        z = z + b2_ref[...]

        @pl.when(tile == 0)
        def _zshift():
            zc[...] = jnp.mean(z, axis=0, keepdims=True)

        d = z - zc[...]
        zsum[...] += jnp.sum(d, axis=0, keepdims=True)
        zsq[...] += jnp.sum(d * d, axis=0, keepdims=True)
        z_scr[tile] = z                               # f32 slab (feeds output)

    # ---- phase 2: BN2 (FMA) and store the (TB, 64) output tile ----------------
    @pl.when(phase == 2)
    def _bn2_store():
        @pl.when(tile == 0)
        def _finalize_bn2():
            m = zsum[...] * inv_b
            var = zsq[...] * inv_b - m * m
            scale = g2_ref[...] * lax.rsqrt(var + BN_EPS)
            s2[...] = scale
            t2[...] = be2_ref[...] - (zc[...] + m) * scale

        o_ref[...] = (z_scr[tile] * s2[...] + t2[...]).astype(o_ref.dtype)


def _vmem_capacity_bytes():
    """Generation-aware per-core VMEM (v5e/v6e: 128 MiB, v7x: 64 MiB)."""
    try:
        return int(pltpu.get_tpu_info().vmem_capacity_bytes)
    except Exception:
        return 64 * 1024 * 1024   # conservative fallback = v7x per-TensorCore


def _vmem_needed_bytes(B, tb, x_itemsize):
    slabs = B * (D_HID * 2 + D_OUT * 4)                 # resident bf16 h + f32 z
    tiles = 2 * tb * D_IN * x_itemsize + 2 * tb * D_OUT * 4   # dbl-buffered I/O tiles
    params = 2 * ((D_IN * D_HID + D_HID * D_OUT) * 2 + 6 * D_HID * 4)
    misc = 128 * 1024                                   # stats + slack
    return slabs + tiles + params + misc


def _pick_block_b(B, budget, x_itemsize):
    """Largest tile (divisor of B, multiple of 8) whose working set fits."""
    k = 1
    while B // k >= 8:
        if B % k == 0:
            tb = B // k
            if tb % 8 == 0 and _vmem_needed_bytes(B, tb, x_itemsize) <= budget:
                return tb
        k += 1
    return 8


def projection_head(x, w1, b1, g1, be1, w2, b2, g2, be2, *, block_b=None):
    """Fused fc1 -> BN -> ReLU -> fc2 -> BN on encoder features x [B, 512].

    x is ideally supplied in bf16 (producer contract); f32 is also accepted.
    """
    B, d_in = x.shape
    assert d_in == D_IN
    xsz = x.dtype.itemsize

    vmem_cap = _vmem_capacity_bytes()
    budget = int(0.70 * vmem_cap)
    # Resident h/z slabs must fit regardless of the batch tiling (v7x: 64 MiB/TC).
    assert B * (D_HID * 2 + D_OUT * 4) + (2 << 20) <= budget, (
        "batch too large for VMEM-resident h/z slabs on this TPU generation; "
        "reduce the batch (or add the HBM-spill path, see TODO)")

    tb = _pick_block_b(B, budget, xsz) if block_b is None else min(block_b, B)
    assert tb % 8 == 0 and B % tb == 0, "batch must be a multiple of the tile (x8)"
    num_tiles = B // tb

    needed = _vmem_needed_bytes(B, tb, xsz)
    vmem_limit = min(int(0.9 * vmem_cap), max(needed + (8 << 20), 32 << 20))

    # bf16 weights, f32 BN/bias vectors; fetched once (constant index_maps).
    w1b = w1.astype(jnp.bfloat16)
    w2b = w2.astype(jnp.bfloat16)
    b1f = b1.astype(jnp.float32).reshape(1, D_HID)
    g1f = g1.astype(jnp.float32).reshape(1, D_HID)
    be1f = be1.astype(jnp.float32).reshape(1, D_HID)
    b2f = b2.astype(jnp.float32).reshape(1, D_OUT)
    g2f = g2.astype(jnp.float32).reshape(1, D_OUT)
    be2f = be2.astype(jnp.float32).reshape(1, D_OUT)

    def x_map(p, i):
        # Only phase 0 consumes x; afterwards pin to the LAST tile so the block
        # index never changes at the phase 0 -> 1 boundary (no HBM re-fetch).
        return (jnp.where(p == 0, i, num_tiles - 1), 0)

    def out_map(p, i):
        # Written only in phase 2; constant block 0 before that (never written
        # -> never flushed), then one store per tile.
        return (jnp.where(p == 2, i, 0), 0)

    const = lambda p, i: (0, 0)   # parameters: fetched once, VMEM-resident

    kernel = functools.partial(_projection_head_kernel, inv_b=1.0 / B)

    cost = pl.CostEstimate(
        flops=2 * B * (D_IN * D_HID + D_HID * D_OUT),
        transcendentals=2 * (D_HID + D_OUT),
        bytes_accessed=int(B * D_IN * xsz + B * D_OUT * 4
                           + (D_IN * D_HID + D_HID * D_OUT) * 2
                           + 6 * (D_HID + D_OUT) * 4),
    )

    out = pl.pallas_call(
        kernel,
        out_shape=jax.ShapeDtypeStruct((B, D_OUT), jnp.float32),
        grid_spec=pltpu.PrefetchScalarGridSpec(
            num_scalar_prefetch=0,
            grid=(3, num_tiles),
            in_specs=[
                pl.BlockSpec((tb, D_IN), x_map),
                pl.BlockSpec((D_IN, D_HID), const),
                pl.BlockSpec((1, D_HID), const),
                pl.BlockSpec((1, D_HID), const),
                pl.BlockSpec((1, D_HID), const),
                pl.BlockSpec((D_HID, D_OUT), const),
                pl.BlockSpec((1, D_OUT), const),
                pl.BlockSpec((1, D_OUT), const),
                pl.BlockSpec((1, D_OUT), const),
            ],
            out_specs=pl.BlockSpec((tb, D_OUT), out_map),
            scratch_shapes=[
                pltpu.VMEM((num_tiles, tb, D_HID), jnp.bfloat16),  # h slab (bf16)
                pltpu.VMEM((num_tiles, tb, D_OUT), jnp.float32),   # z slab (f32)
                pltpu.VMEM((1, D_HID), jnp.float32),               # sum(h - c1)
                pltpu.VMEM((1, D_HID), jnp.float32),               # sum((h-c1)^2)
                pltpu.VMEM((1, D_OUT), jnp.float32),               # sum(z - c2)
                pltpu.VMEM((1, D_OUT), jnp.float32),               # sum((z-c2)^2)
                pltpu.VMEM((1, D_HID), jnp.float32),               # c1 shift
                pltpu.VMEM((1, D_OUT), jnp.float32),               # c2 shift
                pltpu.VMEM((1, D_HID), jnp.float32),               # BN1 scale
                pltpu.VMEM((1, D_HID), jnp.float32),               # BN1 shift
                pltpu.VMEM((1, D_OUT), jnp.float32),               # BN2 scale
                pltpu.VMEM((1, D_OUT), jnp.float32),               # BN2 shift
            ]),
        compiler_params=pltpu.CompilerParams(
            # Both axes carry scratch state (BN stats, h/z slabs) -> arbitrary.
            dimension_semantics=("arbitrary", "arbitrary"),
            vmem_limit_bytes=vmem_limit),
        cost_estimate=cost,
    )(x, w1b, b1f, g1f, be1f, w2b, b2f, g2f, be2f)

    return out


def init_params(key):
    """Deterministic init matching PyTorch shapes/init scheme (no checkpoint)."""
    k1, k2, k3, k4 = jax.random.split(key, 4)
    lim1 = 1.0 / jnp.sqrt(jnp.float32(D_IN))
    lim2 = 1.0 / jnp.sqrt(jnp.float32(D_HID))
    # Linear weights stored [in, out] (== PyTorch weight [out, in] transposed)
    w1 = jax.random.uniform(k1, (D_IN, D_HID), jnp.float32, -lim1, lim1)
    b1 = jax.random.uniform(k2, (1, D_HID), jnp.float32, -lim1, lim1)
    w2 = jax.random.uniform(k3, (D_HID, D_OUT), jnp.float32, -lim2, lim2)
    b2 = jax.random.uniform(k4, (1, D_OUT), jnp.float32, -lim2, lim2)
    g1 = jnp.ones((1, D_HID), jnp.float32)
    be1 = jnp.zeros((1, D_HID), jnp.float32)
    g2 = jnp.ones((1, D_OUT), jnp.float32)
    be2 = jnp.zeros((1, D_OUT), jnp.float32)
    return w1, b1, g1, be1, w2, b2, g2, be2


def reference(x, w1, b1, g1, be1, w2, b2, g2, be2):
    """Mixed-precision (bf16 GEMM operands, f32 accum/BN) reference."""
    h = jnp.dot(x.astype(jnp.bfloat16), w1.astype(jnp.bfloat16),
                preferred_element_type=jnp.float32) + b1
    mu1 = h.mean(0, keepdims=True)
    var1 = ((h - mu1) ** 2).mean(0, keepdims=True)
    h = (h - mu1) * lax.rsqrt(var1 + BN_EPS) * g1 + be1
    h = jnp.maximum(h, 0.0)
    z = jnp.dot(h.astype(jnp.bfloat16), w2.astype(jnp.bfloat16),
                preferred_element_type=jnp.float32) + b2
    mu2 = z.mean(0, keepdims=True)
    var2 = ((z - mu2) ** 2).mean(0, keepdims=True)
    return (z - mu2) * lax.rsqrt(var2 + BN_EPS) * g2 + be2


if __name__ == "__main__":
    key = jax.random.PRNGKey(0)
    k_x, k_p = jax.random.split(key)
    params = init_params(k_p)

    # x stands in for the encoder (resnet18) output features: [B, 512].
    # Producer contract: features arrive in bf16 (halves the dominant HBM read).
    B = 1024
    x = jax.random.normal(k_x, (B, D_IN), jnp.float32).astype(jnp.bfloat16)

    # Default path: VMEM-aware tile selection -> single batch tile, grid (3, 1).
    out = jax.block_until_ready(projection_head(x, *params))
    ref = reference(x, *params)
    assert out.shape == (B, D_OUT)
    max_err = float(jnp.max(jnp.abs(out - ref)))
    # bf16 GEMM operands + bf16-resident h slab => relaxed tolerance.
    assert jnp.allclose(out, ref, atol=2e-2, rtol=2e-2), (
        f"mismatch vs reference (single tile), max abs err {max_err}")

    # Also exercise the multi-tile path (cross-tile shifted BN statistics).
    B2 = 256
    x2 = jax.random.normal(jax.random.PRNGKey(1), (B2, D_IN),
                           jnp.float32).astype(jnp.bfloat16)
    out2 = jax.block_until_ready(projection_head(x2, *params, block_b=64))
    ref2 = reference(x2, *params)
    max_err2 = float(jnp.max(jnp.abs(out2 - ref2)))
    assert jnp.allclose(out2, ref2, atol=2e-2, rtol=2e-2), (
        f"mismatch vs reference (4 tiles), max abs err {max_err2}")

    print("KERNEL_OK")
</pallas_src>

<mosaic_0001>
module attributes {stable_mosaic.version = 11 : i64} {
  func.func @_projection_head_kernel(%arg0: i32, %arg1: i32, %arg2: memref<1024x512xbf16, #tpu.memory_space<vmem>>, %arg3: memref<512x128xbf16, #tpu.memory_space<vmem>>, %arg4: memref<1x128xf32, #tpu.memory_space<vmem>>, %arg5: memref<1x128xf32, #tpu.memory_space<vmem>>, %arg6: memref<1x128xf32, #tpu.memory_space<vmem>>, %arg7: memref<128x64xbf16, #tpu.memory_space<vmem>>, %arg8: memref<1x64xf32, #tpu.memory_space<vmem>>, %arg9: memref<1x64xf32, #tpu.memory_space<vmem>>, %arg10: memref<1x64xf32, #tpu.memory_space<vmem>>, %arg11: memref<1024x64xf32, #tpu.memory_space<vmem>>, %arg12: memref<1x1024x128xbf16, #tpu.memory_space<vmem>>, %arg13: memref<1x1024x64xf32, #tpu.memory_space<vmem>>, %arg14: memref<1x128xf32, #tpu.memory_space<vmem>>, %arg15: memref<1x128xf32, #tpu.memory_space<vmem>>, %arg16: memref<1x64xf32, #tpu.memory_space<vmem>>, %arg17: memref<1x64xf32, #tpu.memory_space<vmem>>, %arg18: memref<1x128xf32, #tpu.memory_space<vmem>>, %arg19: memref<1x64xf32, #tpu.memory_space<vmem>>, %arg20: memref<1x128xf32, #tpu.memory_space<vmem>>, %arg21: memref<1x128xf32, #tpu.memory_space<vmem>>, %arg22: memref<1x64xf32, #tpu.memory_space<vmem>>, %arg23: memref<1x64xf32, #tpu.memory_space<vmem>>) attributes {dimension_semantics = [#tpu.dimension_semantics<arbitrary>, #tpu.dimension_semantics<arbitrary>], iteration_bounds = array<i64: 3, 1>, scalar_prefetch = 0 : i64, scratch_operands = 12 : i64, tpu.core_type = #tpu.core_type<tc>, window_params = [{transform_indices = @transform_0, window_bounds = array<i64: 1024, 512>}, {pipeline_mode = #tpu.pipeline_mode<synchronous>, transform_indices = @transform_1, window_bounds = array<i64: 512, 128>}, {pipeline_mode = #tpu.pipeline_mode<synchronous>, transform_indices = @transform_2, window_bounds = array<i64: 1, 128>}, {pipeline_mode = #tpu.pipeline_mode<synchronous>, transform_indices = @transform_3, window_bounds = array<i64: 1, 128>}, {pipeline_mode = #tpu.pipeline_mode<synchronous>, transform_indices = @transform_4, window_bounds = array<i64: 1, 128>}, {pipeline_mode = #tpu.pipeline_mode<synchronous>, transform_indices = @transform_5, window_bounds = array<i64: 128, 64>}, {pipeline_mode = #tpu.pipeline_mode<synchronous>, transform_indices = @transform_6, window_bounds = array<i64: 1, 64>}, {pipeline_mode = #tpu.pipeline_mode<synchronous>, transform_indices = @transform_7, window_bounds = array<i64: 1, 64>}, {pipeline_mode = #tpu.pipeline_mode<synchronous>, transform_indices = @transform_8, window_bounds = array<i64: 1, 64>}, {transform_indices = @transform_9, window_bounds = array<i64: 1024, 64>}]} {
    %c0_i32 = arith.constant 0 : i32
    %0 = arith.cmpi eq, %arg0, %c0_i32 : i32
    %1 = arith.extui %0 : i1 to i32
    %c0_i32_0 = arith.constant 0 : i32
    %2 = arith.cmpi ne, %1, %c0_i32_0 : i32
    scf.if %2 {
      %c0 = arith.constant 0 : index
      %c0_3 = arith.constant 0 : index
      %9 = vector.load %arg2[%c0, %c0_3] : memref<1024x512xbf16, #tpu.memory_space<vmem>>, vector<1024x512xbf16>
      %c0_4 = arith.constant 0 : index
      %c0_5 = arith.constant 0 : index
      %10 = vector.load %arg3[%c0_4, %c0_5] : memref<512x128xbf16, #tpu.memory_space<vmem>>, vector<512x128xbf16>
      %cst = arith.constant dense<0.000000e+00> : vector<1024x128xf32>
      %11 = tpu.matmul %9, %10, %cst {dimension_numbers = #tpu.dot_dimension_numbers<[1], [0], [0], [1], [0, 0, 1, 1], [], []>} : vector<1024x512xbf16>, vector<512x128xbf16>, vector<1024x128xf32> -> vector<1024x128xf32>
      %c0_6 = arith.constant 0 : index
      %c0_7 = arith.constant 0 : index
      %12 = vector.load %arg4[%c0_6, %c0_7] : memref<1x128xf32, #tpu.memory_space<vmem>>, vector<1x128xf32>
      %13 = vector.broadcast %12 : vector<1x128xf32> to vector<1024x128xf32>
      %14 = arith.addf %11, %13 : vector<1024x128xf32>
      %c0_i32_8 = arith.constant 0 : i32
      %15 = arith.cmpi eq, %arg1, %c0_i32_8 : i32
      %16 = arith.extui %15 : i1 to i32
      %c0_i32_9 = arith.constant 0 : i32
      %17 = arith.cmpi ne, %16, %c0_i32_9 : i32
      scf.if %17 {
        %cst_24 = arith.constant dense<0.000000e+00> : vector<128xf32>
        %37 = vector.multi_reduction <add>, %14, %cst_24 [0] : vector<1024x128xf32> to vector<128xf32>
        %38 = vector.shape_cast %37 : vector<128xf32> to vector<1x128xf32>
        %cst_25 = arith.constant 1.024000e+03 : f32
        %39 = vector.broadcast %cst_25 : f32 to vector<1x128xf32>
        %40 = arith.divf %38, %39 : vector<1x128xf32>
        %c0_26 = arith.constant 0 : index
        %c0_27 = arith.constant 0 : index
        %41 = vector.load %arg18[%c0_26, %c0_27] : memref<1x128xf32, #tpu.memory_space<vmem>>, vector<1x128xf32>
        tpu.vector_store %arg18[%c0_26, %c0_27], %40 {strides = array<i32>} : memref<1x128xf32, #tpu.memory_space<vmem>>, vector<1x128xf32>,
        %cst_28 = arith.constant 0.000000e+00 : f32
        %42 = vector.broadcast %cst_28 : f32 to vector<1x128xf32>
        %c0_29 = arith.constant 0 : index
        %c0_30 = arith.constant 0 : index
        %43 = vector.load %arg14[%c0_29, %c0_30] : memref<1x128xf32, #tpu.memory_space<vmem>>, vector<1x128xf32>
        tpu.vector_store %arg14[%c0_29, %c0_30], %42 {strides = array<i32>} : memref<1x128xf32, #tpu.memory_space<vmem>>, vector<1x128xf32>,
        %cst_31 = arith.constant 0.000000e+00 : f32
        %44 = vector.broadcast %cst_31 : f32 to vector<1x128xf32>
        %c0_32 = arith.constant 0 : index
        %c0_33 = arith.constant 0 : index
        %45 = vector.load %arg15[%c0_32, %c0_33] : memref<1x128xf32, #tpu.memory_space<vmem>>, vector<1x128xf32>
        tpu.vector_store %arg15[%c0_32, %c0_33], %44 {strides = array<i32>} : memref<1x128xf32, #tpu.memory_space<vmem>>, vector<1x128xf32>,
        %cst_34 = arith.constant 0.000000e+00 : f32
        %46 = vector.broadcast %cst_34 : f32 to vector<1x64xf32>
        %c0_35 = arith.constant 0 : index
        %c0_36 = arith.constant 0 : index
        %47 = vector.load %arg16[%c0_35, %c0_36] : memref<1x64xf32, #tpu.memory_space<vmem>>, vector<1x64xf32>
        tpu.vector_store %arg16[%c0_35, %c0_36], %46 {strides = array<i32>} : memref<1x64xf32, #tpu.memory_space<vmem>>, vector<1x64xf32>,
        %cst_37 = arith.constant 0.000000e+00 : f32
        %48 = vector.broadcast %cst_37 : f32 to vector<1x64xf32>
        %c0_38 = arith.constant 0 : index
        %c0_39 = arith.constant 0 : index
        %49 = vector.load %arg17[%c0_38, %c0_39] : memref<1x64xf32, #tpu.memory_space<vmem>>, vector<1x64xf32>
        tpu.vector_store %arg17[%c0_38, %c0_39], %48 {strides = array<i32>} : memref<1x64xf32, #tpu.memory_space<vmem>>, vector<1x64xf32>,
      } else {
      }
      %c0_10 = arith.constant 0 : index
      %c0_11 = arith.constant 0 : index
      %18 = vector.load %arg18[%c0_10, %c0_11] : memref<1x128xf32, #tpu.memory_space<vmem>>, vector<1x128xf32>
      %19 = vector.broadcast %18 : vector<1x128xf32> to vector<1024x128xf32>
      %20 = arith.subf %14, %19 : vector<1024x128xf32>
      %c0_12 = arith.constant 0 : index
      %c0_13 = arith.constant 0 : index
      %21 = vector.load %arg14[%c0_12, %c0_13] : memref<1x128xf32, #tpu.memory_space<vmem>>, vector<1x128xf32>
      %cst_14 = arith.constant dense<0.000000e+00> : vector<128xf32>
      %22 = vector.multi_reduction <add>, %20, %cst_14 [0] : vector<1024x128xf32> to vector<128xf32>
      %23 = vector.shape_cast %22 : vector<128xf32> to vector<1x128xf32>
      %24 = arith.addf %21, %23 : vector<1x128xf32>
      %c0_15 = arith.constant 0 : index
      %c0_16 = arith.constant 0 : index
      %25 = vector.load %arg14[%c0_15, %c0_16] : memref<1x128xf32, #tpu.memory_space<vmem>>, vector<1x128xf32>
      tpu.vector_store %arg14[%c0_15, %c0_16], %24 {strides = array<i32>} : memref<1x128xf32, #tpu.memory_space<vmem>>, vector<1x128xf32>,
      %c0_17 = arith.constant 0 : index
      %c0_18 = arith.constant 0 : index
      %26 = vector.load %arg15[%c0_17, %c0_18] : memref<1x128xf32, #tpu.memory_space<vmem>>, vector<1x128xf32>
      %27 = arith.mulf %20, %20 : vector<1024x128xf32>
      %cst_19 = arith.constant dense<0.000000e+00> : vector<128xf32>
      %28 = vector.multi_reduction <add>, %27, %cst_19 [0] : vector<1024x128xf32> to vector<128xf32>
      %29 = vector.shape_cast %28 : vector<128xf32> to vector<1x128xf32>
      %30 = arith.addf %26, %29 : vector<1x128xf32>
      %c0_20 = arith.constant 0 : index
      %c0_21 = arith.constant 0 : index
      %31 = vector.load %arg15[%c0_20, %c0_21] : memref<1x128xf32, #tpu.memory_space<vmem>>, vector<1x128xf32>
      tpu.vector_store %arg15[%c0_20, %c0_21], %30 {strides = array<i32>} : memref<1x128xf32, #tpu.memory_space<vmem>>, vector<1x128xf32>,
      %32 = arith.truncf %14 : vector<1024x128xf32> to vector<1024x128xbf16>
      %33 = arith.index_cast %arg1 : i32 to index
      %c0_22 = arith.constant 0 : index
      %c0_23 = arith.constant 0 : index
      %34 = vector.load %arg12[%33, %c0_22, %c0_23] : memref<1x1024x128xbf16, #tpu.memory_space<vmem>>, vector<1x1024x128xbf16>
      %35 = vector.shape_cast %34 : vector<1x1024x128xbf16> to vector<1024x128xbf16>
      %36 = vector.shape_cast %32 : vector<1024x128xbf16> to vector<1x1024x128xbf16>
      tpu.vector_store %arg12[%33, %c0_22, %c0_23], %36 {strides = array<i32>} : memref<1x1024x128xbf16, #tpu.memory_space<vmem>>, vector<1x1024x128xbf16>,
    } else {
    }
    %c1_i32 = arith.constant 1 : i32
    %3 = arith.cmpi eq, %arg0, %c1_i32 : i32
    %4 = arith.extui %3 : i1 to i32
    %c0_i32_1 = arith.constant 0 : i32
    %5 = arith.cmpi ne, %4, %c0_i32_1 : i32
    scf.if %5 {
      %c0_i32_3 = arith.constant 0 : i32
      %9 = arith.cmpi eq, %arg1, %c0_i32_3 : i32
      %10 = arith.extui %9 : i1 to i32
      %c0_i32_4 = arith.constant 0 : i32
      %11 = arith.cmpi ne, %10, %c0_i32_4 : i32
      scf.if %11 {
        %c0_31 = arith.constant 0 : index
        %c0_32 = arith.constant 0 : index
        %51 = vector.load %arg14[%c0_31, %c0_32] : memref<1x128xf32, #tpu.memory_space<vmem>>, vector<1x128xf32>
        %cst_33 = arith.constant 9.765625E-4 : f32
        %52 = vector.broadcast %cst_33 : f32 to vector<1x128xf32>
        %53 = arith.mulf %51, %52 : vector<1x128xf32>
        %c0_34 = arith.constant 0 : index
        %c0_35 = arith.constant 0 : index
        %54 = vector.load %arg15[%c0_34, %c0_35] : memref<1x128xf32, #tpu.memory_space<vmem>>, vector<1x128xf32>
        %cst_36 = arith.constant 9.765625E-4 : f32
        %55 = vector.broadcast %cst_36 : f32 to vector<1x128xf32>
        %56 = arith.mulf %54, %55 : vector<1x128xf32>
        %57 = arith.mulf %53, %53 : vector<1x128xf32>
        %58 = arith.subf %56, %57 : vector<1x128xf32>
        %c0_37 = arith.constant 0 : index
        %c0_38 = arith.constant 0 : index
        %59 = vector.load %arg5[%c0_37, %c0_38] : memref<1x128xf32, #tpu.memory_space<vmem>>, vector<1x128xf32>
        %cst_39 = arith.constant 9.99999974E-6 : f32
        %60 = vector.broadcast %cst_39 : f32 to vector<1x128xf32>
        %61 = arith.addf %58, %60 : vector<1x128xf32>
        %62 = math.rsqrt %61 : vector<1x128xf32>
        %63 = arith.mulf %59, %62 : vector<1x128xf32>
        %c0_40 = arith.constant 0 : index
        %c0_41 = arith.constant 0 : index
        %64 = vector.load %arg20[%c0_40, %c0_41] : memref<1x128xf32, #tpu.memory_space<vmem>>, vector<1x128xf32>
        tpu.vector_store %arg20[%c0_40, %c0_41], %63 {strides = array<i32>} : memref<1x128xf32, #tpu.memory_space<vmem>>, vector<1x128xf32>,
        %c0_42 = arith.constant 0 : index
        %c0_43 = arith.constant 0 : index
        %65 = vector.load %arg6[%c0_42, %c0_43] : memref<1x128xf32, #tpu.memory_space<vmem>>, vector<1x128xf32>
        %c0_44 = arith.constant 0 : index
        %c0_45 = arith.constant 0 : index
        %66 = vector.load %arg18[%c0_44, %c0_45] : memref<1x128xf32, #tpu.memory_space<vmem>>, vector<1x128xf32>
        %67 = arith.addf %66, %53 : vector<1x128xf32>
        %68 = arith.mulf %67, %63 : vector<1x128xf32>
        %69 = arith.subf %65, %68 : vector<1x128xf32>
        %c0_46 = arith.constant 0 : index
        %c0_47 = arith.constant 0 : index
        %70 = vector.load %arg21[%c0_46, %c0_47] : memref<1x128xf32, #tpu.memory_space<vmem>>, vector<1x128xf32>
        tpu.vector_store %arg21[%c0_46, %c0_47], %69 {strides = array<i32>} : memref<1x128xf32, #tpu.memory_space<vmem>>, vector<1x128xf32>,
      } else {
      }
      %12 = arith.index_cast %arg1 : i32 to index
      %c0 = arith.constant 0 : index
      %c0_5 = arith.constant 0 : index
      %13 = vector.load %arg12[%12, %c0, %c0_5] : memref<1x1024x128xbf16, #tpu.memory_space<vmem>>, vector<1x1024x128xbf16>
      %14 = vector.shape_cast %13 : vector<1x1024x128xbf16> to vector<1024x128xbf16>
      %15 = arith.extf %14 : vector<1024x128xbf16> to vector<1024x128xf32>
      %c0_6 = arith.constant 0 : index
      %c0_7 = arith.constant 0 : index
      %16 = vector.load %arg20[%c0_6, %c0_7] : memref<1x128xf32, #tpu.memory_space<vmem>>, vector<1x128xf32>
      %17 = vector.broadcast %16 : vector<1x128xf32> to vector<1024x128xf32>
      %18 = arith.mulf %15, %17 : vector<1024x128xf32>
      %c0_8 = arith.constant 0 : index
      %c0_9 = arith.constant 0 : index
      %19 = vector.load %arg21[%c0_8, %c0_9] : memref<1x128xf32, #tpu.memory_space<vmem>>, vector<1x128xf32>
      %20 = vector.broadcast %19 : vector<1x128xf32> to vector<1024x128xf32>
      %21 = arith.addf %18, %20 : vector<1024x128xf32>
      %cst = arith.constant 0.000000e+00 : f32
      %22 = vector.broadcast %cst : f32 to vector<1024x128xf32>
      %23 = arith.maximumf %21, %22 : vector<1024x128xf32>
      %24 = arith.truncf %23 : vector<1024x128xf32> to vector<1024x128xbf16>
      %c0_10 = arith.constant 0 : index
      %c0_11 = arith.constant 0 : index
      %25 = vector.load %arg7[%c0_10, %c0_11] : memref<128x64xbf16, #tpu.memory_space<vmem>>, vector<128x64xbf16>
      %cst_12 = arith.constant dense<0.000000e+00> : vector<1024x64xf32>
      %26 = tpu.matmul %24, %25, %cst_12 {dimension_numbers = #tpu.dot_dimension_numbers<[1], [0], [0], [1], [0, 0, 1, 1], [], []>} : vector<1024x128xbf16>, vector<128x64xbf16>, vector<1024x64xf32> -> vector<1024x64xf32>
      %c0_13 = arith.constant 0 : index
      %c0_14 = arith.constant 0 : index
      %27 = vector.load %arg8[%c0_13, %c0_14] : memref<1x64xf32, #tpu.memory_space<vmem>>, vector<1x64xf32>
      %28 = vector.broadcast %27 : vector<1x64xf32> to vector<1024x64xf32>
      %29 = arith.addf %26, %28 : vector<1024x64xf32>
      %c0_i32_15 = arith.constant 0 : i32
      %30 = arith.cmpi eq, %arg1, %c0_i32_15 : i32
      %31 = arith.extui %30 : i1 to i32
      %c0_i32_16 = arith.constant 0 : i32
      %32 = arith.cmpi ne, %31, %c0_i32_16 : i32
      scf.if %32 {
        %cst_31 = arith.constant dense<0.000000e+00> : vector<64xf32>
        %51 = vector.multi_reduction <add>, %29, %cst_31 [0] : vector<1024x64xf32> to vector<64xf32>
        %52 = vector.shape_cast %51 : vector<64xf32> to vector<1x64xf32>
        %cst_32 = arith.constant 1.024000e+03 : f32
        %53 = vector.broadcast %cst_32 : f32 to vector<1x64xf32>
        %54 = arith.divf %52, %53 : vector<1x64xf32>
        %c0_33 = arith.constant 0 : index
        %c0_34 = arith.constant 0 : index
        %55 = vector.load %arg19[%c0_33, %c0_34] : memref<1x64xf32, #tpu.memory_space<vmem>>, vector<1x64xf32>
        tpu.vector_store %arg19[%c0_33, %c0_34], %54 {strides = array<i32>} : memref<1x64xf32, #tpu.memory_space<vmem>>, vector<1x64xf32>,
      } else {
      }
      %c0_17 = arith.constant 0 : index
      %c0_18 = arith.constant 0 : index
      %33 = vector.load %arg19[%c0_17, %c0_18] : memref<1x64xf32, #tpu.memory_space<vmem>>, vector<1x64xf32>
      %34 = vector.broadcast %33 : vector<1x64xf32> to vector<1024x64xf32>
      %35 = arith.subf %29, %34 : vector<1024x64xf32>
      %c0_19 = arith.constant 0 : index
      %c0_20 = arith.constant 0 : index
      %36 = vector.load %arg16[%c0_19, %c0_20] : memref<1x64xf32, #tpu.memory_space<vmem>>, vector<1x64xf32>
      %cst_21 = arith.constant dense<0.000000e+00> : vector<64xf32>
      %37 = vector.multi_reduction <add>, %35, %cst_21 [0] : vector<1024x64xf32> to vector<64xf32>
      %38 = vector.shape_cast %37 : vector<64xf32> to vector<1x64xf32>
      %39 = arith.addf %36, %38 : vector<1x64xf32>
      %c0_22 = arith.constant 0 : index
      %c0_23 = arith.constant 0 : index
      %40 = vector.load %arg16[%c0_22, %c0_23] : memref<1x64xf32, #tpu.memory_space<vmem>>, vector<1x64xf32>
      tpu.vector_store %arg16[%c0_22, %c0_23], %39 {strides = array<i32>} : memref<1x64xf32, #tpu.memory_space<vmem>>, vector<1x64xf32>,
      %c0_24 = arith.constant 0 : index
      %c0_25 = arith.constant 0 : index
      %41 = vector.load %arg17[%c0_24, %c0_25] : memref<1x64xf32, #tpu.memory_space<vmem>>, vector<1x64xf32>
      %42 = arith.mulf %35, %35 : vector<1024x64xf32>
      %cst_26 = arith.constant dense<0.000000e+00> : vector<64xf32>
      %43 = vector.multi_reduction <add>, %42, %cst_26 [0] : vector<1024x64xf32> to vector<64xf32>
      %44 = vector.shape_cast %43 : vector<64xf32> to vector<1x64xf32>
      %45 = arith.addf %41, %44 : vector<1x64xf32>
      %c0_27 = arith.constant 0 : index
      %c0_28 = arith.constant 0 : index
      %46 = vector.load %arg17[%c0_27, %c0_28] : memref<1x64xf32, #tpu.memory_space<vmem>>, vector<1x64xf32>
      tpu.vector_store %arg17[%c0_27, %c0_28], %45 {strides = array<i32>} : memref<1x64xf32, #tpu.memory_space<vmem>>, vector<1x64xf32>,
      %47 = arith.index_cast %arg1 : i32 to index
      %c0_29 = arith.constant 0 : index
      %c0_30 = arith.constant 0 : index
      %48 = vector.load %arg13[%47, %c0_29, %c0_30] : memref<1x1024x64xf32, #tpu.memory_space<vmem>>, vector<1x1024x64xf32>
      %49 = vector.shape_cast %48 : vector<1x1024x64xf32> to vector<1024x64xf32>
      %50 = vector.shape_cast %29 : vector<1024x64xf32> to vector<1x1024x64xf32>
      tpu.vector_store %arg13[%47, %c0_29, %c0_30], %50 {strides = array<i32>} : memref<1x1024x64xf32, #tpu.memory_space<vmem>>, vector<1x1024x64xf32>,
    } else {
    }
    %c2_i32 = arith.constant 2 : i32
    %6 = arith.cmpi eq, %arg0, %c2_i32 : i32
    %7 = arith.extui %6 : i1 to i32
    %c0_i32_2 = arith.constant 0 : i32
    %8 = arith.cmpi ne, %7, %c0_i32_2 : i32
    scf.if %8 {
      %c0_i32_3 = arith.constant 0 : i32
      %9 = arith.cmpi eq, %arg1, %c0_i32_3 : i32
      %10 = arith.extui %9 : i1 to i32
      %c0_i32_4 = arith.constant 0 : i32
      %11 = arith.cmpi ne, %10, %c0_i32_4 : i32
      scf.if %11 {
        %c0_12 = arith.constant 0 : index
        %c0_13 = arith.constant 0 : index
        %22 = vector.load %arg16[%c0_12, %c0_13] : memref<1x64xf32, #tpu.memory_space<vmem>>, vector<1x64xf32>
        %cst = arith.constant 9.765625E-4 : f32
        %23 = vector.broadcast %cst : f32 to vector<1x64xf32>
        %24 = arith.mulf %22, %23 : vector<1x64xf32>
        %c0_14 = arith.constant 0 : index
        %c0_15 = arith.constant 0 : index
        %25 = vector.load %arg17[%c0_14, %c0_15] : memref<1x64xf32, #tpu.memory_space<vmem>>, vector<1x64xf32>
        %cst_16 = arith.constant 9.765625E-4 : f32
        %26 = vector.broadcast %cst_16 : f32 to vector<1x64xf32>
        %27 = arith.mulf %25, %26 : vector<1x64xf32>
        %28 = arith.mulf %24, %24 : vector<1x64xf32>
        %29 = arith.subf %27, %28 : vector<1x64xf32>
        %c0_17 = arith.constant 0 : index
        %c0_18 = arith.constant 0 : index
        %30 = vector.load %arg9[%c0_17, %c0_18] : memref<1x64xf32, #tpu.memory_space<vmem>>, vector<1x64xf32>
        %cst_19 = arith.constant 9.99999974E-6 : f32
        %31 = vector.broadcast %cst_19 : f32 to vector<1x64xf32>
        %32 = arith.addf %29, %31 : vector<1x64xf32>
        %33 = math.rsqrt %32 : vector<1x64xf32>
        %34 = arith.mulf %30, %33 : vector<1x64xf32>
        %c0_20 = arith.constant 0 : index
        %c0_21 = arith.constant 0 : index
        %35 = vector.load %arg22[%c0_20, %c0_21] : memref<1x64xf32, #tpu.memory_space<vmem>>, vector<1x64xf32>
        tpu.vector_store %arg22[%c0_20, %c0_21], %34 {strides = array<i32>} : memref<1x64xf32, #tpu.memory_space<vmem>>, vector<1x64xf32>,
        %c0_22 = arith.constant 0 : index
        %c0_23 = arith.constant 0 : index
        %36 = vector.load %arg10[%c0_22, %c0_23] : memref<1x64xf32, #tpu.memory_space<vmem>>, vector<1x64xf32>
        %c0_24 = arith.constant 0 : index
        %c0_25 = arith.constant 0 : index
        %37 = vector.load %arg19[%c0_24, %c0_25] : memref<1x64xf32, #tpu.memory_space<vmem>>, vector<1x64xf32>
        %38 = arith.addf %37, %24 : vector<1x64xf32>
        %39 = arith.mulf %38, %34 : vector<1x64xf32>
        %40 = arith.subf %36, %39 : vector<1x64xf32>
        %c0_26 = arith.constant 0 : index
        %c0_27 = arith.constant 0 : index
        %41 = vector.load %arg23[%c0_26, %c0_27] : memref<1x64xf32, #tpu.memory_space<vmem>>, vector<1x64xf32>
        tpu.vector_store %arg23[%c0_26, %c0_27], %40 {strides = array<i32>} : memref<1x64xf32, #tpu.memory_space<vmem>>, vector<1x64xf32>,
      } else {
      }
      %12 = arith.index_cast %arg1 : i32 to index
      %c0 = arith.constant 0 : index
      %c0_5 = arith.constant 0 : index
      %13 = vector.load %arg13[%12, %c0, %c0_5] : memref<1x1024x64xf32, #tpu.memory_space<vmem>>, vector<1x1024x64xf32>
      %14 = vector.shape_cast %13 : vector<1x1024x64xf32> to vector<1024x64xf32>
      %c0_6 = arith.constant 0 : index
      %c0_7 = arith.constant 0 : index
      %15 = vector.load %arg22[%c0_6, %c0_7] : memref<1x64xf32, #tpu.memory_space<vmem>>, vector<1x64xf32>
      %16 = vector.broadcast %15 : vector<1x64xf32> to vector<1024x64xf32>
      %17 = arith.mulf %14, %16 : vector<1024x64xf32>
      %c0_8 = arith.constant 0 : index
      %c0_9 = arith.constant 0 : index
      %18 = vector.load %arg23[%c0_8, %c0_9] : memref<1x64xf32, #tpu.memory_space<vmem>>, vector<1x64xf32>
      %19 = vector.broadcast %18 : vector<1x64xf32> to vector<1024x64xf32>
      %20 = arith.addf %17, %19 : vector<1024x64xf32>
      %c0_10 = arith.constant 0 : index
      %c0_11 = arith.constant 0 : index
      %21 = vector.load %arg11[%c0_10, %c0_11] : memref<1024x64xf32, #tpu.memory_space<vmem>>, vector<1024x64xf32>
      tpu.vector_store %arg11[%c0_10, %c0_11], %20 {strides = array<i32>} : memref<1024x64xf32, #tpu.memory_space<vmem>>, vector<1024x64xf32>,
    } else {
    }
    return
  }
  func.func @transform_0(%arg0: i32, %arg1: i32) -> (i32, i32) {
    %c0_i32 = arith.constant 0 : i32
    %0 = arith.cmpi eq, %arg0, %c0_i32 : i32
    %c0_i32_0 = arith.constant 0 : i32
    %1 = arith.select %0, %arg1, %c0_i32_0 : i32
    %c0_i32_1 = arith.constant 0 : i32
    %c0_i32_2 = arith.constant 0 : i32
    return %1, %c0_i32_1 : i32, i32
  }
  func.func @transform_1(%arg0: i32, %arg1: i32) -> (i32, i32) {
    %c0_i32 = arith.constant 0 : i32
    %c0_i32_0 = arith.constant 0 : i32
    %c0_i32_1 = arith.constant 0 : i32
    return %c0_i32, %c0_i32_0 : i32, i32
  }
  func.func @transform_2(%arg0: i32, %arg1: i32) -> (i32, i32) {
    %c0_i32 = arith.constant 0 : i32
    %c0_i32_0 = arith.constant 0 : i32
    %c0_i32_1 = arith.constant 0 : i32
    return %c0_i32, %c0_i32_0 : i32, i32
  }
  func.func @transform_3(%arg0: i32, %arg1: i32) -> (i32, i32) {
    %c0_i32 = arith.constant 0 : i32
    %c0_i32_0 = arith.constant 0 : i32
    %c0_i32_1 = arith.constant 0 : i32
    return %c0_i32, %c0_i32_0 : i32, i32
  }
  func.func @transform_4(%arg0: i32, %arg1: i32) -> (i32, i32) {
    %c0_i32 = arith.constant 0 : i32
    %c0_i32_0 = arith.constant 0 : i32
    %c0_i32_1 = arith.constant 0 : i32
    return %c0_i32, %c0_i32_0 : i32, i32
  }
  func.func @transform_5(%arg0: i32, %arg1: i32) -> (i32, i32) {
    %c0_i32 = arith.constant 0 : i32
    %c0_i32_0 = arith.constant 0 : i32
    %c0_i32_1 = arith.constant 0 : i32
    return %c0_i32, %c0_i32_0 : i32, i32
  }
  func.func @transform_6(%arg0: i32, %arg1: i32) -> (i32, i32) {
    %c0_i32 = arith.constant 0 : i32
    %c0_i32_0 = arith.constant 0 : i32
    %c0_i32_1 = arith.constant 0 : i32
    return %c0_i32, %c0_i32_0 : i32, i32
  }
  func.func @transform_7(%arg0: i32, %arg1: i32) -> (i32, i32) {
    %c0_i32 = arith.constant 0 : i32
    %c0_i32_0 = arith.constant 0 : i32
    %c0_i32_1 = arith.constant 0 : i32
    return %c0_i32, %c0_i32_0 : i32, i32
  }
  func.func @transform_8(%arg0: i32, %arg1: i32) -> (i32, i32) {
    %c0_i32 = arith.constant 0 : i32
    %c0_i32_0 = arith.constant 0 : i32
    %c0_i32_1 = arith.constant 0 : i32
    return %c0_i32, %c0_i32_0 : i32, i32
  }
  func.func @transform_9(%arg0: i32, %arg1: i32) -> (i32, i32) {
    %c2_i32 = arith.constant 2 : i32
    %0 = arith.cmpi eq, %arg0, %c2_i32 : i32
    %c0_i32 = arith.constant 0 : i32
    %1 = arith.select %0, %arg1, %c0_i32 : i32
    %c0_i32_0 = arith.constant 0 : i32
    %c0_i32_1 = arith.constant 0 : i32
    return %1, %c0_i32_0 : i32, i32
  }
}

</mosaic_0001>

<llo_original>
// kernel: tpu_custom_call.1
$region0: #{tpu_custom_call.1}
  #allocation0 [shape = 'u32[]', space=smem, size = 0x4, offset = 0x4, fixed_abs, tag = 'smem constant byte address 0x4 - core index']
  #allocation1 [shape = 'u32[144,128]{1,0:T(1,128)}', space=vmem, size = 0x12000, scoped, tag = 'internal scratch']
  #allocation2 [shape = 'bf16[1,1024,128]{2,1,0:T(16,128)(2,1)}', space=vmem, size = 0x40000, scoped, tag = 'scratch operand']
  #allocation3 [shape = 'f32[1,1024,64]{2,1,0:T(8,128)}', space=vmem, size = 0x80000, scoped, tag = 'scratch operand']
  #allocation4 [shape = 'f32[1,128]{1,0:T(1,128)}', space=vmem, size = 0x200, scoped, tag = 'scratch operand']
  #allocation5 [shape = 'f32[1,128]{1,0:T(1,128)}', space=vmem, size = 0x200, scoped, tag = 'scratch operand']
  #allocation6 [shape = 'f32[1,64]{1,0:T(1,128)}', space=vmem, size = 0x200, scoped, tag = 'scratch operand']
  #allocation7 [shape = 'f32[1,64]{1,0:T(1,128)}', space=vmem, size = 0x200, scoped, tag = 'scratch operand']
  #allocation8 [shape = 'f32[1,128]{1,0:T(1,128)}', space=vmem, size = 0x200, scoped, tag = 'scratch operand']
  #allocation9 [shape = 'f32[1,64]{1,0:T(1,128)}', space=vmem, size = 0x200, scoped, tag = 'scratch operand']
  #allocation10 [shape = 'f32[1,128]{1,0:T(1,128)}', space=vmem, size = 0x200, scoped, tag = 'scratch operand']
  #allocation11 [shape = 'f32[1,128]{1,0:T(1,128)}', space=vmem, size = 0x200, scoped, tag = 'scratch operand']
  #allocation12 [shape = 'f32[1,64]{1,0:T(1,128)}', space=vmem, size = 0x200, scoped, tag = 'scratch operand']
  #allocation13 [shape = 'f32[1,64]{1,0:T(1,128)}', space=vmem, size = 0x200, scoped, tag = 'scratch operand']
  %s0 = inlined_call_operand.hbm [shape: bf16[1024,512], index: 0, kind: input, shape index: {}]
  %s1 = inlined_call_operand.hbm [shape: bf16[512,128], index: 1, kind: input, shape index: {}]
  %s2 = inlined_call_operand.vmem [shape: f32[1,128], index: 2, kind: input, shape index: {}]
  %s3 = inlined_call_operand.vmem [shape: f32[1,128], index: 3, kind: input, shape index: {}]
  %s4 = inlined_call_operand.vmem [shape: f32[1,128], index: 4, kind: input, shape index: {}]
  %s5 = inlined_call_operand.vmem [shape: bf16[128,64], index: 5, kind: input, shape index: {}]
  %s6 = inlined_call_operand.vmem [shape: f32[1,64], index: 6, kind: input, shape index: {}]
  %s7 = inlined_call_operand.vmem [shape: f32[1,64], index: 7, kind: input, shape index: {}]
  %s8 = inlined_call_operand.vmem [shape: f32[1,64], index: 8, kind: input, shape index: {}]
  %s9 = inlined_call_operand.vmem [shape: f32[1024,64], index: 9, kind: output, shape index: {}]
  %s10 = sld [smem:[#allocation0]]
  $region105: #{tpu_custom_call.1} parent=0
    _
  %s12 = ssub.s32 1, %s10
  %s13 = scalar_select 0, %s12, %s10
  $region1: #{tpu_custom_call.1} parent=0
    #allocation14 [shape = 'u8[2097152]{0}', space=vmem, size = 0x200000, scoped, tag = 'input window, operand 0']
    #allocation15 [shape = 's32[2]{0}', space=sflag, size = 0x8, scoped, tag = 'scoped memory for tpu_custom_call.1']
    #allocation16 [shape = 'u8[131072]{0}', space=vmem, size = 0x20000, scoped, tag = 'input window, operand 1, single buffered']
    #allocation17 [shape = 's32[1]{0}', space=sflag, size = 0x4, scoped, tag = 'scoped memory for tpu_custom_call.1']
    %14 = vsyncpa [#allocation15], 0
    %s15 = scalar_lea.sflag [#allocation15], 1
    %16 = vsyncpa %s15, 0
    %17 = vsyncpa [#allocation17], 0
    loop: start=0, step=1, limit=5
    $region2: #{tpu_custom_call.1} parent=1 // loop_pre_header
      _
    $region3: #{tpu_custom_call.1} parent=1 // loop_header
      %s19 = sphi 0, %s23
      %p20 = scmp.ge.s32.totalorder %s19, 5
      %s26 = sphi 0, %s38
      %s27 = sphi 0, %s34
      %s28 = sphi 0, %s26
      %s29 = sphi 0, %s27
      %s30 = sphi 0, %s28
      %s31 = sphi 0, %s29
      %s45 = sphi 0, %s47
      %s48 = sphi 0, %s45
      %s49 = sphi 0, %s48
      %s65 = sphi 0, %s49
      %s69 = sphi 0, %s69
      %s71 = sphi 0, %s69
      %s72 = sphi 0, %s71
      %s86 = sphi 0, %s72
      %s90 = sphi 0, %s90
      %s92 = sphi 0, %s90
      %s93 = sphi 0, %s92
      %s107 = sphi 0, %s93
      %s111 = sphi 0, %s111
      %s113 = sphi 0, %s111
      %s114 = sphi 0, %s113
      %s128 = sphi 0, %s114
      %s132 = sphi 0, %s132
      %s134 = sphi 0, %s132
      %s135 = sphi 0, %s134
      %s149 = sphi 0, %s135
      %s153 = sphi 0, %s153
      %s155 = sphi 0, %s153
      %s156 = sphi 0, %s155
      %s170 = sphi 0, %s156
      %s174 = sphi 0, %s174
      %s176 = sphi 0, %s174
      %s177 = sphi 0, %s176
      %s191 = sphi 0, %s177
      %s195 = sphi 0, %s195
      %s197 = sphi 0, %s195
      %s198 = sphi 0, %s197
      %s212 = sphi 0, %s198
      %s216 = sphi 0, %s216
      %s218 = sphi 0, %s216
      %s219 = sphi 0, %s218
      %s233 = sphi 0, %s219
      %s243 = sphi 0, %s245
      %s246 = sphi 0, %s243
      %s247 = sphi 0, %s246
      %s263 = sphi 0, %s247
    $region4: #{tpu_custom_call.1} parent=1 // loop_header_branch
      %22 = sbr.rel (%p20) target = $region8
    $region5: #{tpu_custom_call.1} parent=1 // loop_body
      %s24 = ssub.s32 %s19, 1
      %s25 = ssub.s32 %s19, 2
      %s32 = sadd.s32 1, %s27
      %p33 = scmp.ge.s32.totalorder %s32, 1
      %s34 = scalar_select %p33, 0, %s32
      %s35 = sadd.s32 1, %s26
      %s36 = scalar_select %p33, %s35, %s26
      %p37 = scmp.ge.s32.totalorder %s36, 3
      %s38 = scalar_select %p37, 0, %s36
      %p39 = scmp.eq.s32.totalorder %s26, 0
      %s40 = scalar_select %p39, %s27, 0
      %p41 = scmp.eq.s32.totalorder %s38, 0
      %s42 = scalar_select %p41, %s34, 0
      %s43 = ssub.s32 %s40, %s42
      %p44 = scmp.eq.s32.totalorder %s43, 0
      %s46 = sadd.s32 %s45, 1
      %s47 = scalar_select %p44, %s45, %s46
      %p50 = pneg %p44
      %p51 = scmp.eq.s32.totalorder %s19, 2
      %p52 = por %p50, %p51
      %p53 = scmp.ne.s32.totalorder %s45, %s48
      %p54 = scmp.eq.s32.totalorder %s19, 0
      %p55 = por %p53, %p54
      %p56 = scmp.ne.s32.totalorder %s45, %s48
      %p57 = scmp.eq.s32.totalorder %s24, 2
      %p58 = por %p56, %p57
      %p59 = scmp.ne.s32.totalorder %s48, %s49
      %p60 = scmp.eq.s32.totalorder %s24, 0
      %p61 = por %p59, %p60
      %p62 = scmp.ne.s32.totalorder %s48, %s49
      %p63 = scmp.eq.s32.totalorder %s25, 2
      %p64 = por %p62, %p63
      %p66 = scmp.ne.s32.totalorder %s49, %s65
      %p67 = scmp.eq.s32.totalorder %s25, 0
      %p68 = por %p66, %p67
      %s70 = sadd.s32 %s69, 1
      %p73 = scmp.eq.s32.totalorder %s19, 2
      %p74 = scmp.ne.s32.totalorder %s69, %s71
      %p75 = scmp.eq.s32.totalorder %s19, 0
      %p76 = por %p74, %p75
      %p77 = scmp.ne.s32.totalorder %s69, %s71
      %p78 = scmp.eq.s32.totalorder %s24, 2
      %p79 = por %p77, %p78
      %p80 = scmp.ne.s32.totalorder %s71, %s72
      %p81 = scmp.eq.s32.totalorder %s24, 0
      %p82 = por %p80, %p81
      %p83 = scmp.ne.s32.totalorder %s71, %s72
      %p84 = scmp.eq.s32.totalorder %s25, 2
      %p85 = por %p83, %p84
      %p87 = scmp.ne.s32.totalorder %s72, %s86
      %p88 = scmp.eq.s32.totalorder %s25, 0
      %p89 = por %p87, %p88
      %s91 = sadd.s32 %s90, 1
      %p94 = scmp.eq.s32.totalorder %s19, 2
      %p95 = scmp.ne.s32.totalorder %s90, %s92
      %p96 = scmp.eq.s32.totalorder %s19, 0
      %p97 = por %p95, %p96
      %p98 = scmp.ne.s32.totalorder %s90, %s92
      %p99 = scmp.eq.s32.totalorder %s24, 2
      %p100 = por %p98, %p99
      %p101 = scmp.ne.s32.totalorder %s92, %s93
      %p102 = scmp.eq.s32.totalorder %s24, 0
      %p103 = por %p101, %p102
      %p104 = scmp.ne.s32.totalorder %s92, %s93
      %p105 = scmp.eq.s32.totalorder %s25, 2
      %p106 = por %p104, %p105
      %p108 = scmp.ne.s32.totalorder %s93, %s107
      %p109 = scmp.eq.s32.totalorder %s25, 0
      %p110 = por %p108, %p109
      %s112 = sadd.s32 %s111, 1
      %p115 = scmp.eq.s32.totalorder %s19, 2
      %p116 = scmp.ne.s32.totalorder %s111, %s113
      %p117 = scmp.eq.s32.totalorder %s19, 0
      %p118 = por %p116, %p117
      %p119 = scmp.ne.s32.totalorder %s111, %s113
      %p120 = scmp.eq.s32.totalorder %s24, 2
      %p121 = por %p119, %p120
      %p122 = scmp.ne.s32.totalorder %s113, %s114
      %p123 = scmp.eq.s32.totalorder %s24, 0
      %p124 = por %p122, %p123
      %p125 = scmp.ne.s32.totalorder %s113, %s114
      %p126 = scmp.eq.s32.totalorder %s25, 2
      %p127 = por %p125, %p126
      %p129 = scmp.ne.s32.totalorder %s114, %s128
      %p130 = scmp.eq.s32.totalorder %s25, 0
      %p131 = por %p129, %p130
      %s133 = sadd.s32 %s132, 1
      %p136 = scmp.eq.s32.totalorder %s19, 2
      %p137 = scmp.ne.s32.totalorder %s132, %s134
      %p138 = scmp.eq.s32.totalorder %s19, 0
      %p139 = por %p137, %p138
      %p140 = scmp.ne.s32.totalorder %s132, %s134
      %p141 = scmp.eq.s32.totalorder %s24, 2
      %p142 = por %p140, %p141
      %p143 = scmp.ne.s32.totalorder %s134, %s135
      %p144 = scmp.eq.s32.totalorder %s24, 0
      %p145 = por %p143, %p144
      %p146 = scmp.ne.s32.totalorder %s134, %s135
      %p147 = scmp.eq.s32.totalorder %s25, 2
      %p148 = por %p146, %p147
      %p150 = scmp.ne.s32.totalorder %s135, %s149
      %p151 = scmp.eq.s32.totalorder %s25, 0
      %p152 = por %p150, %p151
      %s154 = sadd.s32 %s153, 1
      %p157 = scmp.eq.s32.totalorder %s19, 2
      %p158 = scmp.ne.s32.totalorder %s153, %s155
      %p159 = scmp.eq.s32.totalorder %s19, 0
      %p160 = por %p158, %p159
      %p161 = scmp.ne.s32.totalorder %s153, %s155
      %p162 = scmp.eq.s32.totalorder %s24, 2
      %p163 = por %p161, %p162
      %p164 = scmp.ne.s32.totalorder %s155, %s156
      %p165 = scmp.eq.s32.totalorder %s24, 0
      %p166 = por %p164, %p165
      %p167 = scmp.ne.s32.totalorder %s155, %s156
      %p168 = scmp.eq.s32.totalorder %s25, 2
      %p169 = por %p167, %p168
      %p171 = scmp.ne.s32.totalorder %s156, %s170
      %p172 = scmp.eq.s32.totalorder %s25, 0
      %p173 = por %p171, %p172
      %s175 = sadd.s32 %s174, 1
      %p178 = scmp.eq.s32.totalorder %s19, 2
      %p179 = scmp.ne.s32.totalorder %s174, %s176
      %p180 = scmp.eq.s32.totalorder %s19, 0
      %p181 = por %p179, %p180
      %p182 = scmp.ne.s32.totalorder %s174, %s176
      %p183 = scmp.eq.s32.totalorder %s24, 2
      %p184 = por %p182, %p183
      %p185 = scmp.ne.s32.totalorder %s176, %s177
      %p186 = scmp.eq.s32.totalorder %s24, 0
      %p187 = por %p185, %p186
      %p188 = scmp.ne.s32.totalorder %s176, %s177
      %p189 = scmp.eq.s32.totalorder %s25, 2
      %p190 = por %p188, %p189
      %p192 = scmp.ne.s32.totalorder %s177, %s191
      %p193 = scmp.eq.s32.totalorder %s25, 0
      %p194 = por %p192, %p193
      %s196 = sadd.s32 %s195, 1
      %p199 = scmp.eq.s32.totalorder %s19, 2
      %p200 = scmp.ne.s32.totalorder %s195, %s197
      %p201 = scmp.eq.s32.totalorder %s19, 0
      %p202 = por %p200, %p201
      %p203 = scmp.ne.s32.totalorder %s195, %s197
      %p204 = scmp.eq.s32.totalorder %s24, 2
      %p205 = por %p203, %p204
      %p206 = scmp.ne.s32.totalorder %s197, %s198
      %p207 = scmp.eq.s32.totalorder %s24, 0
      %p208 = por %p206, %p207
      %p209 = scmp.ne.s32.totalorder %s197, %s198
      %p210 = scmp.eq.s32.totalorder %s25, 2
      %p211 = por %p209, %p210
      %p213 = scmp.ne.s32.totalorder %s198, %s212
      %p214 = scmp.eq.s32.totalorder %s25, 0
      %p215 = por %p213, %p214
      %s217 = sadd.s32 %s216, 1
      %p220 = scmp.eq.s32.totalorder %s19, 2
      %p221 = scmp.ne.s32.totalorder %s216, %s218
      %p222 = scmp.eq.s32.totalorder %s19, 0
      %p223 = por %p221, %p222
      %p224 = scmp.ne.s32.totalorder %s216, %s218
      %p225 = scmp.eq.s32.totalorder %s24, 2
      %p226 = por %p224, %p225
      %p227 = scmp.ne.s32.totalorder %s218, %s219
      %p228 = scmp.eq.s32.totalorder %s24, 0
      %p229 = por %p227, %p228
      %p230 = scmp.ne.s32.totalorder %s218, %s219
      %p231 = scmp.eq.s32.totalorder %s25, 2
      %p232 = por %p230, %p231
      %p234 = scmp.ne.s32.totalorder %s219, %s233
      %p235 = scmp.eq.s32.totalorder %s25, 0
      %p236 = por %p234, %p235
      %p237 = scmp.eq.s32.totalorder %s26, 2
      %s238 = scalar_select %p237, %s27, 0
      %p239 = scmp.eq.s32.totalorder %s38, 2
      %s240 = scalar_select %p239, %s34, 0
      %s241 = ssub.s32 %s238, %s240
      %p242 = scmp.eq.s32.totalorder %s241, 0
      %s244 = sadd.s32 %s243, 1
      %s245 = scalar_select %p242, %s243, %s244
      %p248 = pneg %p242
      %p249 = scmp.eq.s32.totalorder %s19, 2
      %p250 = por %p248, %p249
      %p251 = scmp.ne.s32.totalorder %s243, %s246
      %p252 = scmp.eq.s32.totalorder %s19, 0
      %p253 = por %p251, %p252
      %p254 = scmp.ne.s32.totalorder %s243, %s246
      %p255 = scmp.eq.s32.totalorder %s24, 2
      %p256 = por %p254, %p255
      %p257 = scmp.ne.s32.totalorder %s246, %s247
      %p258 = scmp.eq.s32.totalorder %s24, 0
      %p259 = por %p257, %p258
      %p260 = scmp.ne.s32.totalorder %s246, %s247
      %p261 = scmp.eq.s32.totalorder %s25, 2
      %p262 = por %p260, %p261
      %p264 = scmp.ne.s32.totalorder %s247, %s263
      %p265 = scmp.eq.s32.totalorder %s25, 0
      %p266 = por %p264, %p265
      %p267 = scmp.le.s32.totalorder 1, %s19
      %p268 = scmp.lt.s32.totalorder %s19, 4
      %p269 = pnand %p267, %p268
      %p270 = pneg %p269
      // Predicated region
      $region9: #{tpu_custom_call.1} parent=5 // pred_check
        _
      $region10: #{tpu_custom_call.1} parent=5 // pred_check_branch
        %272 = sbr.rel (%p269) target = $region12
      $region11: #{tpu_custom_call.1} parent=5 // pred_region
        %s273 = ssub.s32 %s19, 1
        // Predicated region
        $region13: #{tpu_custom_call.1} parent=11 // pred_check
          %p274 = pneg %p82
        $region14: #{tpu_custom_call.1} parent=11 // pred_check_branch
          %276 = sbr.rel (%p274) target = $region16
        $region15: #{tpu_custom_call.1} parent=11 // pred_region
          %s278 = ssub.s32 4096, 4096
          %279 = vsyncadd [#allocation17], %s278
          %s280 = sshll.u32 [#allocation16], 4
          %s281 = int_to_ptr.vmem [resolvable:$true] %s280
          %286 = dma.hbm_to_vmem [thread:$0]  %s1, 4096, %s281, [#allocation17], 64, 64, 4
        $region16: #{tpu_custom_call.1} parent=11 // pred_fallthru
          _
        // Predicated region
        $region17: #{tpu_custom_call.1} parent=11 // pred_check
          %p287 = pneg %p103
        $region18: #{tpu_custom_call.1} parent=11 // pred_check_branch
          %289 = sbr.rel (%p287) target = $region20
        $region19: #{tpu_custom_call.1} parent=11 // pred_region
          _
        $region20: #{tpu_custom_call.1} parent=11 // pred_fallthru
          _
        // Predicated region
        $region21: #{tpu_custom_call.1} parent=11 // pred_check
          %p290 = pneg %p124
        $region22: #{tpu_custom_call.1} parent=11 // pred_check_branch
          %292 = sbr.rel (%p290) target = $region24
        $region23: #{tpu_custom_call.1} parent=11 // pred_region
          _
        $region24: #{tpu_custom_call.1} parent=11 // pred_fallthru
          _
        // Predicated region
        $region25: #{tpu_custom_call.1} parent=11 // pred_check
          %p293 = pneg %p145
        $region26: #{tpu_custom_call.1} parent=11 // pred_check_branch
          %295 = sbr.rel (%p293) target = $region28
        $region27: #{tpu_custom_call.1} parent=11 // pred_region
          _
        $region28: #{tpu_custom_call.1} parent=11 // pred_fallthru
          _
        // Predicated region
        $region29: #{tpu_custom_call.1} parent=11 // pred_check
          %p296 = pneg %p166
        $region30: #{tpu_custom_call.1} parent=11 // pred_check_branch
          %298 = sbr.rel (%p296) target = $region32
        $region31: #{tpu_custom_call.1} parent=11 // pred_region
          _
        $region32: #{tpu_custom_call.1} parent=11 // pred_fallthru
          _
        // Predicated region
        $region33: #{tpu_custom_call.1} parent=11 // pred_check
          %p299 = pneg %p187
        $region34: #{tpu_custom_call.1} parent=11 // pred_check_branch
          %301 = sbr.rel (%p299) target = $region36
        $region35: #{tpu_custom_call.1} parent=11 // pred_region
          _
        $region36: #{tpu_custom_call.1} parent=11 // pred_fallthru
          _
        // Predicated region
        $region37: #{tpu_custom_call.1} parent=11 // pred_check
          %p302 = pneg %p208
        $region38: #{tpu_custom_call.1} parent=11 // pred_check_branch
          %304 = sbr.rel (%p302) target = $region40
        $region39: #{tpu_custom_call.1} parent=11 // pred_region
          _
        $region40: #{tpu_custom_call.1} parent=11 // pred_fallthru
          _
        // Predicated region
        $region41: #{tpu_custom_call.1} parent=11 // pred_check
          %p305 = pneg %p229
        $region42: #{tpu_custom_call.1} parent=11 // pred_check_branch
          %307 = sbr.rel (%p305) target = $region44
        $region43: #{tpu_custom_call.1} parent=11 // pred_region
          _
        $region44: #{tpu_custom_call.1} parent=11 // pred_fallthru
          _
      $region12: #{tpu_custom_call.1} parent=5 // pred_fallthru
        _
      %p308 = scmp.lt.s32.totalorder %s19, 3
      // Predicated region
      $region45: #{tpu_custom_call.1} parent=5 // pred_check
        %p309 = pneg %p308
      $region46: #{tpu_custom_call.1} parent=5 // pred_check_branch
        %311 = sbr.rel (%p309) target = $region48
      $region47: #{tpu_custom_call.1} parent=5 // pred_region
        // Predicated region
        $region49: #{tpu_custom_call.1} parent=47 // pred_check
          %p312 = pneg %p55
        $region50: #{tpu_custom_call.1} parent=47 // pred_check_branch
          %314 = sbr.rel (%p312) target = $region52
        $region51: #{tpu_custom_call.1} parent=47 // pred_region
          %s315 = sand.u32 %s45, 1
          %s316 = scalar_lea.sflag [#allocation15], %s315
          %s317 = sand.u32 %s45, 1
          %s318 = smul.addr %s317, 2048
          %s319 = scalar_lea.vmem [#allocation14], %s318
          %p320 = scmp.eq.s32.totalorder %s26, 0
          %s321 = scalar_select %p320, %s27, 0
          %s322 = smul.u32 128, %s321
          %s324 = ssub.s32 32768, 32768
          %325 = vsyncadd %s316, %s324
          %s326 = smul.addr %s322, 4
          %s327 = smul.addr %s326, 64
          %s328 = scalar_lea.hbm %s0, %s327
          %s329 = sshll.u32 %s319, 4
          %s330 = int_to_ptr.vmem [resolvable:$true] %s329
          %335 = dma.hbm_to_vmem [thread:$0]  %s328, 32768, %s330, %s316, 256, 256, 16
        $region52: #{tpu_custom_call.1} parent=47 // pred_fallthru
          _
      $region48: #{tpu_custom_call.1} parent=5 // pred_fallthru
        _
      %p336 = scmp.le.s32.totalorder 1, %s19
      %p337 = scmp.lt.s32.totalorder %s19, 4
      %p338 = pnand %p336, %p337
      %p339 = pneg %p338
      // Predicated region
      $region53: #{tpu_custom_call.1} parent=5 // pred_check
        _
      $region54: #{tpu_custom_call.1} parent=5 // pred_check_branch
        %341 = sbr.rel (%p338) target = $region56
      $region55: #{tpu_custom_call.1} parent=5 // pred_region
        %s342 = ssub.s32 %s19, 1
        %s343 = sand.u32 %s48, 1
        %s344 = scalar_lea.sflag [#allocation15], %s343
        %s345 = sand.u32 %s48, 1
        %s346 = smul.addr %s345, 2048
        %s347 = scalar_lea.vmem [#allocation14], %s346
        // Predicated region
        $region57: #{tpu_custom_call.1} parent=55 // pred_check
          %p348 = pneg %p61
        $region58: #{tpu_custom_call.1} parent=55 // pred_check_branch
          %350 = sbr.rel (%p348) target = $region60
        $region59: #{tpu_custom_call.1} parent=55 // pred_region
          %351 = dma.done %s344, 32768
        $region60: #{tpu_custom_call.1} parent=55 // pred_fallthru
          _
        // Predicated region
        $region61: #{tpu_custom_call.1} parent=55 // pred_check
          %p352 = pneg %p82
        $region62: #{tpu_custom_call.1} parent=55 // pred_check_branch
          %354 = sbr.rel (%p352) target = $region64
        $region63: #{tpu_custom_call.1} parent=55 // pred_region
          %355 = dma.done [#allocation17], 4096
        $region64: #{tpu_custom_call.1} parent=55 // pred_fallthru
          _
        %s356 = sand.u32 %s48, 1
        %s357 = scalar_lea.sflag [#allocation15], %s356
        %s358 = sand.u32 %s48, 1
        %s359 = smul.addr %s358, 2048
        %s360 = scalar_lea.vmem [#allocation14], %s359
        %p361 = pneg %p61
        %p362 = pneg %p58
        %p363 = pneg %p82
        %p364 = pneg %p79
        %p365 = pneg %p103
        %p366 = pneg %p100
        %p367 = pneg %p124
        %p368 = pneg %p121
        %p369 = pneg %p145
        %p370 = pneg %p142
        %p371 = pneg %p166
        %p372 = pneg %p163
        %p373 = pneg %p187
        %p374 = pneg %p184
        %p375 = pneg %p208
        %p376 = pneg %p205
        %p377 = pneg %p229
        %p378 = pneg %p226
        %p379 = pneg %p259
        %p380 = pneg %p256
        %p381 = scmp.eq.s32.totalorder %s28, 2
        %s382 = scalar_select %p381, %s29, 0
        %s383 = smul.u32 128, %s382
        %p384 = scmp.lt.s32.totalorder %s383, 127
        %s385 = scalar_select %p384, %s383, 127
        %s386 = smul.addr %s385, 8
        %s387 = scalar_lea.vmem %s9, %s386
        %p388 = scmp.eq.s32.totalorder %s28, 0
        %s389 = scalar_select %p388, %s29, 0
        %s390 = smul.u32 128, %s389
        %p391 = scmp.eq.s32.totalorder %s28, 2
        %s392 = scalar_select %p391, %s29, 0
        %s393 = smul.u32 128, %s392
        %p394 = scmp.lt.s32.totalorder %s393, 127
        %s395 = scalar_select %p394, %s393, 127
        %s396 = smul.addr %s395, 8
        %s397 = scalar_lea.vmem %s9, %s396
        %p398 = scmp.eq.s32.totalorder %s28, 2
        %s399 = scalar_select %p398, %s29, 0
        %s400 = smul.u32 128, %s399
        %p402 = scmp.eq.s32.totalorder %s28, 0
        // Predicated region
        $region65: #{tpu_custom_call.1} parent=55 // pred_check
          %p403 = pneg %p402
        $region66: #{tpu_custom_call.1} parent=55 // pred_check_branch
          %405 = sbr.rel (%p403) target = $region68
        $region67: #{tpu_custom_call.1} parent=55 // pred_region
          %v406 = vld [vmem:[%s347] sm:$0xff]
          %v407 = vld [vmem:[%s347 + $0x8] sm:$0xff]
          %v408 = vld [vmem:[%s347 + $0x10] sm:$0xff]
          %v409 = vld [vmem:[%s347 + $0x18] sm:$0xff]
          %v410 = vld [vmem:[%s347 + $0x20] sm:$0xff]
          %v411 = vld [vmem:[%s347 + $0x28] sm:$0xff]
          %v412 = vld [vmem:[%s347 + $0x30] sm:$0xff]
          %v413 = vld [vmem:[%s347 + $0x38] sm:$0xff]
          %v414 = vld [vmem:[%s347 + $0x40] sm:$0xff]
          %v415 = vld [vmem:[%s347 + $0x48] sm:$0xff]
          %v416 = vld [vmem:[%s347 + $0x50] sm:$0xff]
          %v417 = vld [vmem:[%s347 + $0x58] sm:$0xff]
          %v418 = vld [vmem:[%s347 + $0x60] sm:$0xff]
          %v419 = vld [vmem:[%s347 + $0x68] sm:$0xff]
          %v420 = vld [vmem:[%s347 + $0x70] sm:$0xff]
          %v421 = vld [vmem:[%s347 + $0x78] sm:$0xff]
          %v422 = vld [vmem:[%s347 + $0x80] sm:$0xff]
          %v423 = vld [vmem:[%s347 + $0x88] sm:$0xff]
          %v424 = vld [vmem:[%s347 + $0x90] sm:$0xff]
          %v425 = vld [vmem:[%s347 + $0x98] sm:$0xff]
          %v426 = vld [vmem:[%s347 + $0xa0] sm:$0xff]
          %v427 = vld [vmem:[%s347 + $0xa8] sm:$0xff]
          %v428 = vld [vmem:[%s347 + $0xb0] sm:$0xff]
          %v429 = vld [vmem:[%s347 + $0xb8] sm:$0xff]
          %v430 = vld [vmem:[%s347 + $0xc0] sm:$0xff]
          %v431 = vld [vmem:[%s347 + $0xc8] sm:$0xff]
          %v432 = vld [vmem:[%s347 + $0xd0] sm:$0xff]
          %v433 = vld [vmem:[%s347 + $0xd8] sm:$0xff]
          %v434 = vld [vmem:[%s347 + $0xe0] sm:$0xff]
          %v435 = vld [vmem:[%s347 + $0xe8] sm:$0xff]
          %v436 = vld [vmem:[%s347 + $0xf0] sm:$0xff]
          %v437 = vld [vmem:[%s347 + $0xf8] sm:$0xff]
          %v438 = vld [vmem:[%s347 + $0x100] sm:$0xff]
          %v439 = vld [vmem:[%s347 + $0x108] sm:$0xff]
          %v440 = vld [vmem:[%s347 + $0x110] sm:$0xff]
          %v441 = vld [vmem:[%s347 + $0x118] sm:$0xff]
          %v442 = vld [vmem:[%s347 + $0x120] sm:$0xff]
          %v443 = vld [vmem:[%s347 + $0x128] sm:$0xff]
          %v444 = vld [vmem:[%s347 + $0x130] sm:$0xff]
          %v445 = vld [vmem:[%s347 + $0x138] sm:$0xff]
          %v446 = vld [vmem:[%s347 + $0x140] sm:$0xff]
          %v447 = vld [vmem:[%s347 + $0x148] sm:$0xff]
          %v448 = vld [vmem:[%s347 + $0x150] sm:$0xff]
          %v449 = vld [vmem:[%s347 + $0x158] sm:$0xff]
          %v450 = vld [vmem:[%s347 + $0x160] sm:$0xff]
          %v451 = vld [vmem:[%s347 + $0x168] sm:$0xff]
          %v452 = vld [vmem:[%s347 + $0x170] sm:$0xff]
          %v453 = vld [vmem:[%s347 + $0x178] sm:$0xff]
          %v454 = vld [vmem:[%s347 + $0x180] sm:$0xff]
          %v455 = vld [vmem:[%s347 + $0x188] sm:$0xff]
          %v456 = vld [vmem:[%s347 + $0x190] sm:$0xff]
          %v457 = vld [vmem:[%s347 + $0x198] sm:$0xff]
          %v458 = vld [vmem:[%s347 + $0x1a0] sm:$0xff]
          %v459 = vld [vmem:[%s347 + $0x1a8] sm:$0xff]
          %v460 = vld [vmem:[%s347 + $0x1b0] sm:$0xff]
          %v461 = vld [vmem:[%s347 + $0x1b8] sm:$0xff]
          %v462 = vld [vmem:[%s347 + $0x1c0] sm:$0xff]
          %v463 = vld [vmem:[%s347 + $0x1c8] sm:$0xff]
          %v464 = vld [vmem:[%s347 + $0x1d0] sm:$0xff]
          %v465 = vld [vmem:[%s347 + $0x1d8] sm:$0xff]
          %v466 = vld [vmem:[%s347 + $0x1e0] sm:$0xff]
          %v467 = vld [vmem:[%s347 + $0x1e8] sm:$0xff]
          %v468 = vld [vmem:[%s347 + $0x1f0] sm:$0xff]
          %v469 = vld [vmem:[%s347 + $0x1f8] sm:$0xff]
          %v470 = vld [vmem:[%s347 + $0x200] sm:$0xff]
          %v471 = vld [vmem:[%s347 + $0x208] sm:$0xff]
          %v472 = vld [vmem:[%s347 + $0x210] sm:$0xff]
          %v473 = vld [vmem:[%s347 + $0x218] sm:$0xff]
          %v474 = vld [vmem:[%s347 + $0x220] sm:$0xff]
          %v475 = vld [vmem:[%s347 + $0x228] sm:$0xff]
          %v476 = vld [vmem:[%s347 + $0x230] sm:$0xff]
          %v477 = vld [vmem:[%s347 + $0x238] sm:$0xff]
          %v478 = vld [vmem:[%s347 + $0x240] sm:$0xff]
          %v479 = vld [vmem:[%s347 + $0x248] sm:$0xff]
          %v480 = vld [vmem:[%s347 + $0x250] sm:$0xff]
          %v481 = vld [vmem:[%s347 + $0x258] sm:$0xff]
          %v482 = vld [vmem:[%s347 + $0x260] sm:$0xff]
          %v483 = vld [vmem:[%s347 + $0x268] sm:$0xff]
          %v484 = vld [vmem:[%s347 + $0x270] sm:$0xff]
          %v485 = vld [vmem:[%s347 + $0x278] sm:$0xff]
          %v486 = vld [vmem:[%s347 + $0x280] sm:$0xff]
          %v487 = vld [vmem:[%s347 + $0x288] sm:$0xff]
          %v488 = vld [vmem:[%s347 + $0x290] sm:$0xff]
          %v489 = vld [vmem:[%s347 + $0x298] sm:$0xff]
          %v490 = vld [vmem:[%s347 + $0x2a0] sm:$0xff]
          %v491 = vld [vmem:[%s347 + $0x2a8] sm:$0xff]
          %v492 = vld [vmem:[%s347 + $0x2b0] sm:$0xff]
          %v493 = vld [vmem:[%s347 + $0x2b8] sm:$0xff]
          %v494 = vld [vmem:[%s347 + $0x2c0] sm:$0xff]
          %v495 = vld [vmem:[%s347 + $0x2c8] sm:$0xff]
          %v496 = vld [vmem:[%s347 + $0x2d0] sm:$0xff]
          %v497 = vld [vmem:[%s347 + $0x2d8] sm:$0xff]
          %v498 = vld [vmem:[%s347 + $0x2e0] sm:$0xff]
          %v499 = vld [vmem:[%s347 + $0x2e8] sm:$0xff]
          %v500 = vld [vmem:[%s347 + $0x2f0] sm:$0xff]
          %v501 = vld [vmem:[%s347 + $0x2f8] sm:$0xff]
          %v502 = vld [vmem:[%s347 + $0x300] sm:$0xff]
          %v503 = vld [vmem:[%s347 + $0x308] sm:$0xff]
          %v504 = vld [vmem:[%s347 + $0x310] sm:$0xff]
          %v505 = vld [vmem:[%s347 + $0x318] sm:$0xff]
          %v506 = vld [vmem:[%s347 + $0x320] sm:$0xff]
          %v507 = vld [vmem:[%s347 + $0x328] sm:$0xff]
          %v508 = vld [vmem:[%s347 + $0x330] sm:$0xff]
          %v509 = vld [vmem:[%s347 + $0x338] sm:$0xff]
          %v510 = vld [vmem:[%s347 + $0x340] sm:$0xff]
          %v511 = vld [vmem:[%s347 + $0x348] sm:$0xff]
          %v512 = vld [vmem:[%s347 + $0x350] sm:$0xff]
          %v513 = vld [vmem:[%s347 + $0x358] sm:$0xff]
          %v514 = vld [vmem:[%s347 + $0x360] sm:$0xff]
          %v515 = vld [vmem:[%s347 + $0x368] sm:$0xff]
          %v516 = vld [vmem:[%s347 + $0x370] sm:$0xff]
          %v517 = vld [vmem:[%s347 + $0x378] sm:$0xff]
          %v518 = vld [vmem:[%s347 + $0x380] sm:$0xff]
          %v519 = vld [vmem:[%s347 + $0x388] sm:$0xff]
          %v520 = vld [vmem:[%s347 + $0x390] sm:$0xff]
          %v521 = vld [vmem:[%s347 + $0x398] sm:$0xff]
          %v522 = vld [vmem:[%s347 + $0x3a0] sm:$0xff]
          %v523 = vld [vmem:[%s347 + $0x3a8] sm:$0xff]
          %v524 = vld [vmem:[%s347 + $0x3b0] sm:$0xff]
          %v525 = vld [vmem:[%s347 + $0x3b8] sm:$0xff]
          %v526 = vld [vmem:[%s347 + $0x3c0] sm:$0xff]
          %v527 = vld [vmem:[%s347 + $0x3c8] sm:$0xff]
          %v528 = vld [vmem:[%s347 + $0x3d0] sm:$0xff]
          %v529 = vld [vmem:[%s347 + $0x3d8] sm:$0xff]
          %v530 = vld [vmem:[%s347 + $0x3e0] sm:$0xff]
          %v531 = vld [vmem:[%s347 + $0x3e8] sm:$0xff]
          %v532 = vld [vmem:[%s347 + $0x3f0] sm:$0xff]
          %v533 = vld [vmem:[%s347 + $0x3f8] sm:$0xff]
          %v534 = vld [vmem:[%s347 + $0x400] sm:$0xff]
          %v535 = vld [vmem:[%s347 + $0x408] sm:$0xff]
          %v536 = vld [vmem:[%s347 + $0x410] sm:$0xff]
          %v537 = vld [vmem:[%s347 + $0x418] sm:$0xff]
          %v538 = vld [vmem:[%s347 + $0x420] sm:$0xff]
          %v539 = vld [vmem:[%s347 + $0x428] sm:$0xff]
          %v540 = vld [vmem:[%s347 + $0x430] sm:$0xff]
          %v541 = vld [vmem:[%s347 + $0x438] sm:$0xff]
          %v542 = vld [vmem:[%s347 + $0x440] sm:$0xff]
          %v543 = vld [vmem:[%s347 + $0x448] sm:$0xff]
          %v544 = vld [vmem:[%s347 + $0x450] sm:$0xff]
          %v545 = vld [vmem:[%s347 + $0x458] sm:$0xff]
          %v546 = vld [vmem:[%s347 + $0x460] sm:$0xff]
          %v547 = vld [vmem:[%s347 + $0x468] sm:$0xff]
          %v548 = vld [vmem:[%s347 + $0x470] sm:$0xff]
          %v549 = vld [vmem:[%s347 + $0x478] sm:$0xff]
          %v550 = vld [vmem:[%s347 + $0x480] sm:$0xff]
          %v551 = vld [vmem:[%s347 + $0x488] sm:$0xff]
          %v552 = vld [vmem:[%s347 + $0x490] sm:$0xff]
          %v553 = vld [vmem:[%s347 + $0x498] sm:$0xff]
          %v554 = vld [vmem:[%s347 + $0x4a0] sm:$0xff]
          %v555 = vld [vmem:[%s347 + $0x4a8] sm:$0xff]
          %v556 = vld [vmem:[%s347 + $0x4b0] sm:$0xff]
          %v557 = vld [vmem:[%s347 + $0x4b8] sm:$0xff]
          %v558 = vld [vmem:[%s347 + $0x4c0] sm:$0xff]
          %v559 = vld [vmem:[%s347 + $0x4c8] sm:$0xff]
          %v560 = vld [vmem:[%s347 + $0x4d0] sm:$0xff]
          %v561 = vld [vmem:[%s347 + $0x4d8] sm:$0xff]
          %v562 = vld [vmem:[%s347 + $0x4e0] sm:$0xff]
          %v563 = vld [vmem:[%s347 + $0x4e8] sm:$0xff]
          %v564 = vld [vmem:[%s347 + $0x4f0] sm:$0xff]
          %v565 = vld [vmem:[%s347 + $0x4f8] sm:$0xff]
          %v566 = vld [vmem:[%s347 + $0x500] sm:$0xff]
          %v567 = vld [vmem:[%s347 + $0x508] sm:$0xff]
          %v568 = vld [vmem:[%s347 + $0x510] sm:$0xff]
          %v569 = vld [vmem:[%s347 + $0x518] sm:$0xff]
          %v570 = vld [vmem:[%s347 + $0x520] sm:$0xff]
          %v571 = vld [vmem:[%s347 + $0x528] sm:$0xff]
          %v572 = vld [vmem:[%s347 + $0x530] sm:$0xff]
          %v573 = vld [vmem:[%s347 + $0x538] sm:$0xff]
          %v574 = vld [vmem:[%s347 + $0x540] sm:$0xff]
          %v575 = vld [vmem:[%s347 + $0x548] sm:$0xff]
          %v576 = vld [vmem:[%s347 + $0x550] sm:$0xff]
          %v577 = vld [vmem:[%s347 + $0x558] sm:$0xff]
          %v578 = vld [vmem:[%s347 + $0x560] sm:$0xff]
          %v579 = vld [vmem:[%s347 + $0x568] sm:$0xff]
          %v580 = vld [vmem:[%s347 + $0x570] sm:$0xff]
          %v581 = vld [vmem:[%s347 + $0x578] sm:$0xff]
          %v582 = vld [vmem:[%s347 + $0x580] sm:$0xff]
          %v583 = vld [vmem:[%s347 + $0x588] sm:$0xff]
          %v584 = vld [vmem:[%s347 + $0x590] sm:$0xff]
          %v585 = vld [vmem:[%s347 + $0x598] sm:$0xff]
          %v586 = vld [vmem:[%s347 + $0x5a0] sm:$0xff]
          %v587 = vld [vmem:[%s347 + $0x5a8] sm:$0xff]
          %v588 = vld [vmem:[%s347 + $0x5b0] sm:$0xff]
          %v589 = vld [vmem:[%s347 + $0x5b8] sm:$0xff]
          %v590 = vld [vmem:[%s347 + $0x5c0] sm:$0xff]
          %v591 = vld [vmem:[%s347 + $0x5c8] sm:$0xff]
          %v592 = vld [vmem:[%s347 + $0x5d0] sm:$0xff]
          %v593 = vld [vmem:[%s347 + $0x5d8] sm:$0xff]
          %v594 = vld [vmem:[%s347 + $0x5e0] sm:$0xff]
          %v595 = vld [vmem:[%s347 + $0x5e8] sm:$0xff]
          %v596 = vld [vmem:[%s347 + $0x5f0] sm:$0xff]
          %v597 = vld [vmem:[%s347 + $0x5f8] sm:$0xff]
          %v598 = vld [vmem:[%s347 + $0x600] sm:$0xff]
          %v599 = vld [vmem:[%s347 + $0x608] sm:$0xff]
          %v600 = vld [vmem:[%s347 + $0x610] sm:$0xff]
          %v601 = vld [vmem:[%s347 + $0x618] sm:$0xff]
          %v602 = vld [vmem:[%s347 + $0x620] sm:$0xff]
          %v603 = vld [vmem:[%s347 + $0x628] sm:$0xff]
          %v604 = vld [vmem:[%s347 + $0x630] sm:$0xff]
          %v605 = vld [vmem:[%s347 + $0x638] sm:$0xff]
          %v606 = vld [vmem:[%s347 + $0x640] sm:$0xff]
          %v607 = vld [vmem:[%s347 + $0x648] sm:$0xff]
          %v608 = vld [vmem:[%s347 + $0x650] sm:$0xff]
          %v609 = vld [vmem:[%s347 + $0x658] sm:$0xff]
          %v610 = vld [vmem:[%s347 + $0x660] sm:$0xff]
          %v611 = vld [vmem:[%s347 + $0x668] sm:$0xff]
          %v612 = vld [vmem:[%s347 + $0x670] sm:$0xff]
          %v613 = vld [vmem:[%s347 + $0x678] sm:$0xff]
          %v614 = vld [vmem:[%s347 + $0x680] sm:$0xff]
          %v615 = vld [vmem:[%s347 + $0x688] sm:$0xff]
          %v616 = vld [vmem:[%s347 + $0x690] sm:$0xff]
          %v617 = vld [vmem:[%s347 + $0x698] sm:$0xff]
          %v618 = vld [vmem:[%s347 + $0x6a0] sm:$0xff]
          %v619 = vld [vmem:[%s347 + $0x6a8] sm:$0xff]
          %v620 = vld [vmem:[%s347 + $0x6b0] sm:$0xff]
          %v621 = vld [vmem:[%s347 + $0x6b8] sm:$0xff]
          %v622 = vld [vmem:[%s347 + $0x6c0] sm:$0xff]
          %v623 = vld [vmem:[%s347 + $0x6c8] sm:$0xff]
          %v624 = vld [vmem:[%s347 + $0x6d0] sm:$0xff]
          %v625 = vld [vmem:[%s347 + $0x6d8] sm:$0xff]
          %v626 = vld [vmem:[%s347 + $0x6e0] sm:$0xff]
          %v627 = vld [vmem:[%s347 + $0x6e8] sm:$0xff]
          %v628 = vld [vmem:[%s347 + $0x6f0] sm:$0xff]
          %v629 = vld [vmem:[%s347 + $0x6f8] sm:$0xff]
          %v630 = vld [vmem:[%s347 + $0x700] sm:$0xff]
          %v631 = vld [vmem:[%s347 + $0x708] sm:$0xff]
          %v632 = vld [vmem:[%s347 + $0x710] sm:$0xff]
          %v633 = vld [vmem:[%s347 + $0x718] sm:$0xff]
          %v634 = vld [vmem:[%s347 + $0x720] sm:$0xff]
          %v635 = vld [vmem:[%s347 + $0x728] sm:$0xff]
          %v636 = vld [vmem:[%s347 + $0x730] sm:$0xff]
          %v637 = vld [vmem:[%s347 + $0x738] sm:$0xff]
          %v638 = vld [vmem:[%s347 + $0x740] sm:$0xff]
          %v639 = vld [vmem:[%s347 + $0x748] sm:$0xff]
          %v640 = vld [vmem:[%s347 + $0x750] sm:$0xff]
          %v641 = vld [vmem:[%s347 + $0x758] sm:$0xff]
          %v642 = vld [vmem:[%s347 + $0x760] sm:$0xff]
          %v643 = vld [vmem:[%s347 + $0x768] sm:$0xff]
          %v644 = vld [vmem:[%s347 + $0x770] sm:$0xff]
          %v645 = vld [vmem:[%s347 + $0x778] sm:$0xff]
          %v646 = vld [vmem:[%s347 + $0x780] sm:$0xff]
          %v647 = vld [vmem:[%s347 + $0x788] sm:$0xff]
          %v648 = vld [vmem:[%s347 + $0x790] sm:$0xff]
          %v649 = vld [vmem:[%s347 + $0x798] sm:$0xff]
          %v650 = vld [vmem:[%s347 + $0x7a0] sm:$0xff]
          %v651 = vld [vmem:[%s347 + $0x7a8] sm:$0xff]
          %v652 = vld [vmem:[%s347 + $0x7b0] sm:$0xff]
          %v653 = vld [vmem:[%s347 + $0x7b8] sm:$0xff]
          %v654 = vld [vmem:[%s347 + $0x7c0] sm:$0xff]
          %v655 = vld [vmem:[%s347 + $0x7c8] sm:$0xff]
          %v656 = vld [vmem:[%s347 + $0x7d0] sm:$0xff]
          %v657 = vld [vmem:[%s347 + $0x7d8] sm:$0xff]
          %v658 = vld [vmem:[%s347 + $0x7e0] sm:$0xff]
          %v659 = vld [vmem:[%s347 + $0x7e8] sm:$0xff]
          %v660 = vld [vmem:[%s347 + $0x7f0] sm:$0xff]
          %v661 = vld [vmem:[%s347 + $0x7f8] sm:$0xff]
          %v662 = vld [vmem:[#allocation16] sm:$0xf]
          %v663 = vld [vmem:[#allocation16 + $0x4] sm:$0xf]
          %v664 = vld [vmem:[#allocation16 + $0x8] sm:$0xf]
          %v665 = vld [vmem:[#allocation16 + $0xc] sm:$0xf]
          %v666 = vld [vmem:[#allocation16 + $0x10] sm:$0xf]
          %v667 = vld [vmem:[#allocation16 + $0x14] sm:$0xf]
          %v668 = vld [vmem:[#allocation16 + $0x18] sm:$0xf]
          %v669 = vld [vmem:[#allocation16 + $0x1c] sm:$0xf]
          %v670 = vld [vmem:[#allocation16 + $0x20] sm:$0xf]
          %v671 = vld [vmem:[#allocation16 + $0x24] sm:$0xf]
          %v672 = vld [vmem:[#allocation16 + $0x28] sm:$0xf]
          %v673 = vld [vmem:[#allocation16 + $0x2c] sm:$0xf]
          %v674 = vld [vmem:[#allocation16 + $0x30] sm:$0xf]
          %v675 = vld [vmem:[#allocation16 + $0x34] sm:$0xf]
          %v676 = vld [vmem:[#allocation16 + $0x38] sm:$0xf]
          %v677 = vld [vmem:[#allocation16 + $0x3c] sm:$0xf]
          %v678 = vld [vmem:[#allocation16 + $0x40] sm:$0xf]
          %v679 = vld [vmem:[#allocation16 + $0x44] sm:$0xf]
          %v680 = vld [vmem:[#allocation16 + $0x48] sm:$0xf]
          %v681 = vld [vmem:[#allocation16 + $0x4c] sm:$0xf]
          %v682 = vld [vmem:[#allocation16 + $0x50] sm:$0xf]
          %v683 = vld [vmem:[#allocation16 + $0x54] sm:$0xf]
          %v684 = vld [vmem:[#allocation16 + $0x58] sm:$0xf]
          %v685 = vld [vmem:[#allocation16 + $0x5c] sm:$0xf]
          %v686 = vld [vmem:[#allocation16 + $0x60] sm:$0xf]
          %v687 = vld [vmem:[#allocation16 + $0x64] sm:$0xf]
          %v688 = vld [vmem:[#allocation16 + $0x68] sm:$0xf]
          %v689 = vld [vmem:[#allocation16 + $0x6c] sm:$0xf]
          %v690 = vld [vmem:[#allocation16 + $0x70] sm:$0xf]
          %v691 = vld [vmem:[#allocation16 + $0x74] sm:$0xf]
          %v692 = vld [vmem:[#allocation16 + $0x78] sm:$0xf]
          %v693 = vld [vmem:[#allocation16 + $0x7c] sm:$0xf]
          %v694 = vld [vmem:[#allocation16 + $0x80] sm:$0xf]
          %v695 = vld [vmem:[#allocation16 + $0x84] sm:$0xf]
          %v696 = vld [vmem:[#allocation16 + $0x88] sm:$0xf]
          %v697 = vld [vmem:[#allocation16 + $0x8c] sm:$0xf]
          %v698 = vld [vmem:[#allocation16 + $0x90] sm:$0xf]
          %v699 = vld [vmem:[#allocation16 + $0x94] sm:$0xf]
          %v700 = vld [vmem:[#allocation16 + $0x98] sm:$0xf]
          %v701 = vld [vmem:[#allocation16 + $0x9c] sm:$0xf]
          %v702 = vld [vmem:[#allocation16 + $0xa0] sm:$0xf]
          %v703 = vld [vmem:[#allocation16 + $0xa4] sm:$0xf]
          %v704 = vld [vmem:[#allocation16 + $0xa8] sm:$0xf]
          %v705 = vld [vmem:[#allocation16 + $0xac] sm:$0xf]
          %v706 = vld [vmem:[#allocation16 + $0xb0] sm:$0xf]
          %v707 = vld [vmem:[#allocation16 + $0xb4] sm:$0xf]
          %v708 = vld [vmem:[#allocation16 + $0xb8] sm:$0xf]
          %v709 = vld [vmem:[#allocation16 + $0xbc] sm:$0xf]
          %v710 = vld [vmem:[#allocation16 + $0xc0] sm:$0xf]
          %v711 = vld [vmem:[#allocation16 + $0xc4] sm:$0xf]
          %v712 = vld [vmem:[#allocation16 + $0xc8] sm:$0xf]
          %v713 = vld [vmem:[#allocation16 + $0xcc] sm:$0xf]
          %v714 = vld [vmem:[#allocation16 + $0xd0] sm:$0xf]
          %v715 = vld [vmem:[#allocation16 + $0xd4] sm:$0xf]
          %v716 = vld [vmem:[#allocation16 + $0xd8] sm:$0xf]
          %v717 = vld [vmem:[#allocation16 + $0xdc] sm:$0xf]
          %v718 = vld [vmem:[#allocation16 + $0xe0] sm:$0xf]
          %v719 = vld [vmem:[#allocation16 + $0xe4] sm:$0xf]
          %v720 = vld [vmem:[#allocation16 + $0xe8] sm:$0xf]
          %v721 = vld [vmem:[#allocation16 + $0xec] sm:$0xf]
          %v722 = vld [vmem:[#allocation16 + $0xf0] sm:$0xf]
          %v723 = vld [vmem:[#allocation16 + $0xf4] sm:$0xf]
          %v724 = vld [vmem:[#allocation16 + $0xf8] sm:$0xf]
          %v725 = vld [vmem:[#allocation16 + $0xfc] sm:$0xf]
          %v726 = vld [vmem:[%s2] sm:$0x1]
          %v728 = vlaneseq
          %v729 = vshrl.u32 %v728, 7
          %v730 = vsub.s32 0, %v729
          %v731 = vrot.slane %v726, %v730
          %v989 = vunpack.c.l.b16 %v406
          %v990 = vunpack.c.h.b16 %v406
          %v991 = vunpack.c.l.b16 %v407
          %v992 = vunpack.c.h.b16 %v407
          %v993 = vunpack.c.l.b16 %v408
          %v994 = vunpack.c.h.b16 %v408
          %v995 = vunpack.c.l.b16 %v409
          %v996 = vunpack.c.h.b16 %v409
          %v997 = vunpack.c.l.b16 %v410
          %v998 = vunpack.c.h.b16 %v410
          %v999 = vunpack.c.l.b16 %v411
          %v1000 = vunpack.c.h.b16 %v411
          %v1001 = vunpack.c.l.b16 %v412
          %v1002 = vunpack.c.h.b16 %v412
          %v1003 = vunpack.c.l.b16 %v413
          %v1004 = vunpack.c.h.b16 %v413
          %v1005 = vunpack.c.l.b16 %v414
          %v1006 = vunpack.c.h.b16 %v414
          %v1007 = vunpack.c.l.b16 %v415
          %v1008 = vunpack.c.h.b16 %v415
          %v1009 = vunpack.c.l.b16 %v416
          %v1010 = vunpack.c.h.b16 %v416
          %v1011 = vunpack.c.l.b16 %v417
          %v1012 = vunpack.c.h.b16 %v417
          %v1013 = vunpack.c.l.b16 %v418
          %v1014 = vunpack.c.h.b16 %v418
          %v1015 = vunpack.c.l.b16 %v419
          %v1016 = vunpack.c.h.b16 %v419
          %v1017 = vunpack.c.l.b16 %v420
          %v1018 = vunpack.c.h.b16 %v420
          %v1019 = vunpack.c.l.b16 %v421
          %v1020 = vunpack.c.h.b16 %v421
          %v1021 = vunpack.c.l.b16 %v422
          %v1022 = vunpack.c.h.b16 %v422
          %v1023 = vunpack.c.l.b16 %v423
          %v1024 = vunpack.c.h.b16 %v423
          %v1025 = vunpack.c.l.b16 %v424
          %v1026 = vunpack.c.h.b16 %v424
          %v1027 = vunpack.c.l.b16 %v425
          %v1028 = vunpack.c.h.b16 %v425
          %v1029 = vunpack.c.l.b16 %v426
          %v1030 = vunpack.c.h.b16 %v426
          %v1031 = vunpack.c.l.b16 %v427
          %v1032 = vunpack.c.h.b16 %v427
          %v1033 = vunpack.c.l.b16 %v428
          %v1034 = vunpack.c.h.b16 %v428
          %v1035 = vunpack.c.l.b16 %v429
          %v1036 = vunpack.c.h.b16 %v429
          %v1037 = vunpack.c.l.b16 %v430
          %v1038 = vunpack.c.h.b16 %v430
          %v1039 = vunpack.c.l.b16 %v431
          %v1040 = vunpack.c.h.b16 %v431
          %v1041 = vunpack.c.l.b16 %v432
          %v1042 = vunpack.c.h.b16 %v432
          %v1043 = vunpack.c.l.b16 %v433
          %v1044 = vunpack.c.h.b16 %v433
          %v1045 = vunpack.c.l.b16 %v434
          %v1046 = vunpack.c.h.b16 %v434
          %v1047 = vunpack.c.l.b16 %v435
          %v1048 = vunpack.c.h.b16 %v435
          %v1049 = vunpack.c.l.b16 %v436
          %v1050 = vunpack.c.h.b16 %v436
          %v1051 = vunpack.c.l.b16 %v437
          %v1052 = vunpack.c.h.b16 %v437
          %v1053 = vunpack.c.l.b16 %v438
          %v1054 = vunpack.c.h.b16 %v438
          %v1055 = vunpack.c.l.b16 %v439
          %v1056 = vunpack.c.h.b16 %v439
          %v1057 = vunpack.c.l.b16 %v440
          %v1058 = vunpack.c.h.b16 %v440
          %v1059 = vunpack.c.l.b16 %v441
          %v1060 = vunpack.c.h.b16 %v441
          %v1061 = vunpack.c.l.b16 %v442
          %v1062 = vunpack.c.h.b16 %v442
          %v1063 = vunpack.c.l.b16 %v443
          %v1064 = vunpack.c.h.b16 %v443
          %v1065 = vunpack.c.l.b16 %v444
          %v1066 = vunpack.c.h.b16 %v444
          %v1067 = vunpack.c.l.b16 %v445
          %v1068 = vunpack.c.h.b16 %v445
          %v1069 = vunpack.c.l.b16 %v446
          %v1070 = vunpack.c.h.b16 %v446
          %v1071 = vunpack.c.l.b16 %v447
          %v1072 = vunpack.c.h.b16 %v447
          %v1073 = vunpack.c.l.b16 %v448
          %v1074 = vunpack.c.h.b16 %v448
          %v1075 = vunpack.c.l.b16 %v449
          %v1076 = vunpack.c.h.b16 %v449
          %v1077 = vunpack.c.l.b16 %v450
          %v1078 = vunpack.c.h.b16 %v450
          %v1079 = vunpack.c.l.b16 %v451
          %v1080 = vunpack.c.h.b16 %v451
          %v1081 = vunpack.c.l.b16 %v452
          %v1082 = vunpack.c.h.b16 %v452
          %v1083 = vunpack.c.l.b16 %v453
          %v1084 = vunpack.c.h.b16 %v453
          %v1085 = vunpack.c.l.b16 %v454
          %v1086 = vunpack.c.h.b16 %v454
          %v1087 = vunpack.c.l.b16 %v455
          %v1088 = vunpack.c.h.b16 %v455
          %v1089 = vunpack.c.l.b16 %v456
          %v1090 = vunpack.c.h.b16 %v456
          %v1091 = vunpack.c.l.b16 %v457
          %v1092 = vunpack.c.h.b16 %v457
          %v1093 = vunpack.c.l.b16 %v458
          %v1094 = vunpack.c.h.b16 %v458
          %v1095 = vunpack.c.l.b16 %v459
          %v1096 = vunpack.c.h.b16 %v459
          %v1097 = vunpack.c.l.b16 %v460
          %v1098 = vunpack.c.h.b16 %v460
          %v1099 = vunpack.c.l.b16 %v461
          %v1100 = vunpack.c.h.b16 %v461
          %v1101 = vunpack.c.l.b16 %v462
          %v1102 = vunpack.c.h.b16 %v462
          %v1103 = vunpack.c.l.b16 %v463
          %v1104 = vunpack.c.h.b16 %v463
          %v1105 = vunpack.c.l.b16 %v464
          %v1106 = vunpack.c.h.b16 %v464
          %v1107 = vunpack.c.l.b16 %v465
          %v1108 = vunpack.c.h.b16 %v465
          %v1109 = vunpack.c.l.b16 %v466
          %v1110 = vunpack.c.h.b16 %v466
          %v1111 = vunpack.c.l.b16 %v467
          %v1112 = vunpack.c.h.b16 %v467
          %v1113 = vunpack.c.l.b16 %v468
          %v1114 = vunpack.c.h.b16 %v468
          %v1115 = vunpack.c.l.b16 %v469
          %v1116 = vunpack.c.h.b16 %v469
          %v1117 = vunpack.c.l.b16 %v470
          %v1118 = vunpack.c.h.b16 %v470
          %v1119 = vunpack.c.l.b16 %v471
          %v1120 = vunpack.c.h.b16 %v471
          %v1121 = vunpack.c.l.b16 %v472
          %v1122 = vunpack.c.h.b16 %v472
          %v1123 = vunpack.c.l.b16 %v473
          %v1124 = vunpack.c.h.b16 %v473
          %v1125 = vunpack.c.l.b16 %v474
          %v1126 = vunpack.c.h.b16 %v474
          %v1127 = vunpack.c.l.b16 %v475
          %v1128 = vunpack.c.h.b16 %v475
          %v1129 = vunpack.c.l.b16 %v476
          %v1130 = vunpack.c.h.b16 %v476
          %v1131 = vunpack.c.l.b16 %v477
          %v1132 = vunpack.c.h.b16 %v477
          %v1133 = vunpack.c.l.b16 %v478
          %v1134 = vunpack.c.h.b16 %v478
          %v1135 = vunpack.c.l.b16 %v479
          %v1136 = vunpack.c.h.b16 %v479
          %v1137 = vunpack.c.l.b16 %v480
          %v1138 = vunpack.c.h.b16 %v480
          %v1139 = vunpack.c.l.b16 %v481
          %v1140 = vunpack.c.h.b16 %v481
          %v1141 = vunpack.c.l.b16 %v482
          %v1142 = vunpack.c.h.b16 %v482
          %v1143 = vunpack.c.l.b16 %v483
          %v1144 = vunpack.c.h.b16 %v483
          %v1145 = vunpack.c.l.b16 %v484
          %v1146 = vunpack.c.h.b16 %v484
          %v1147 = vunpack.c.l.b16 %v485
          %v1148 = vunpack.c.h.b16 %v485
          %v1149 = vunpack.c.l.b16 %v486
          %v1150 = vunpack.c.h.b16 %v486
          %v1151 = vunpack.c.l.b16 %v487
          %v1152 = vunpack.c.h.b16 %v487
          %v1153 = vunpack.c.l.b16 %v488
          %v1154 = vunpack.c.h.b16 %v488
          %v1155 = vunpack.c.l.b16 %v489
          %v1156 = vunpack.c.h.b16 %v489
          %v1157 = vunpack.c.l.b16 %v490
          %v1158 = vunpack.c.h.b16 %v490
          %v1159 = vunpack.c.l.b16 %v491
          %v1160 = vunpack.c.h.b16 %v491
          %v1161 = vunpack.c.l.b16 %v492
          %v1162 = vunpack.c.h.b16 %v492
          %v1163 = vunpack.c.l.b16 %v493
          %v1164 = vunpack.c.h.b16 %v493
          %v1165 = vunpack.c.l.b16 %v494
          %v1166 = vunpack.c.h.b16 %v494
          %v1167 = vunpack.c.l.b16 %v495
          %v1168 = vunpack.c.h.b16 %v495
          %v1169 = vunpack.c.l.b16 %v496
          %v1170 = vunpack.c.h.b16 %v496
          %v1171 = vunpack.c.l.b16 %v497
          %v1172 = vunpack.c.h.b16 %v497
          %v1173 = vunpack.c.l.b16 %v498
          %v1174 = vunpack.c.h.b16 %v498
          %v1175 = vunpack.c.l.b16 %v499
          %v1176 = vunpack.c.h.b16 %v499
          %v1177 = vunpack.c.l.b16 %v500
          %v1178 = vunpack.c.h.b16 %v500
          %v1179 = vunpack.c.l.b16 %v501
          %v1180 = vunpack.c.h.b16 %v501
          %v1181 = vunpack.c.l.b16 %v502
          %v1182 = vunpack.c.h.b16 %v502
          %v1183 = vunpack.c.l.b16 %v503
          %v1184 = vunpack.c.h.b16 %v503
          %v1185 = vunpack.c.l.b16 %v504
          %v1186 = vunpack.c.h.b16 %v504
          %v1187 = vunpack.c.l.b16 %v505
          %v1188 = vunpack.c.h.b16 %v505
          %v1189 = vunpack.c.l.b16 %v506
          %v1190 = vunpack.c.h.b16 %v506
          %v1191 = vunpack.c.l.b16 %v507
          %v1192 = vunpack.c.h.b16 %v507
          %v1193 = vunpack.c.l.b16 %v508
          %v1194 = vunpack.c.h.b16 %v508
          %v1195 = vunpack.c.l.b16 %v509
          %v1196 = vunpack.c.h.b16 %v509
          %v1197 = vunpack.c.l.b16 %v510
          %v1198 = vunpack.c.h.b16 %v510
          %v1199 = vunpack.c.l.b16 %v511
          %v1200 = vunpack.c.h.b16 %v511
          %v1201 = vunpack.c.l.b16 %v512
          %v1202 = vunpack.c.h.b16 %v512
          %v1203 = vunpack.c.l.b16 %v513
          %v1204 = vunpack.c.h.b16 %v513
          %v1205 = vunpack.c.l.b16 %v514
          %v1206 = vunpack.c.h.b16 %v514
          %v1207 = vunpack.c.l.b16 %v515
          %v1208 = vunpack.c.h.b16 %v515
          %v1209 = vunpack.c.l.b16 %v516
          %v1210 = vunpack.c.h.b16 %v516
          %v1211 = vunpack.c.l.b16 %v517
          %v1212 = vunpack.c.h.b16 %v517
          %v1213 = vunpack.c.l.b16 %v518
          %v1214 = vunpack.c.h.b16 %v518
          %v1215 = vunpack.c.l.b16 %v519
          %v1216 = vunpack.c.h.b16 %v519
          %v1217 = vunpack.c.l.b16 %v520
          %v1218 = vunpack.c.h.b16 %v520
          %v1219 = vunpack.c.l.b16 %v521
          %v1220 = vunpack.c.h.b16 %v521
          %v1221 = vunpack.c.l.b16 %v522
          %v1222 = vunpack.c.h.b16 %v522
          %v1223 = vunpack.c.l.b16 %v523
          %v1224 = vunpack.c.h.b16 %v523
          %v1225 = vunpack.c.l.b16 %v524
          %v1226 = vunpack.c.h.b16 %v524
          %v1227 = vunpack.c.l.b16 %v525
          %v1228 = vunpack.c.h.b16 %v525
          %v1229 = vunpack.c.l.b16 %v526
          %v1230 = vunpack.c.h.b16 %v526
          %v1231 = vunpack.c.l.b16 %v527
          %v1232 = vunpack.c.h.b16 %v527
          %v1233 = vunpack.c.l.b16 %v528
          %v1234 = vunpack.c.h.b16 %v528
          %v1235 = vunpack.c.l.b16 %v529
          %v1236 = vunpack.c.h.b16 %v529
          %v1237 = vunpack.c.l.b16 %v530
          %v1238 = vunpack.c.h.b16 %v530
          %v1239 = vunpack.c.l.b16 %v531
          %v1240 = vunpack.c.h.b16 %v531
          %v1241 = vunpack.c.l.b16 %v532
          %v1242 = vunpack.c.h.b16 %v532
          %v1243 = vunpack.c.l.b16 %v533
          %v1244 = vunpack.c.h.b16 %v533
          %v1245 = vunpack.c.l.b16 %v534
          %v1246 = vunpack.c.h.b16 %v534
          %v1247 = vunpack.c.l.b16 %v535
          %v1248 = vunpack.c.h.b16 %v535
          %v1249 = vunpack.c.l.b16 %v536
          %v1250 = vunpack.c.h.b16 %v536
          %v1251 = vunpack.c.l.b16 %v537
          %v1252 = vunpack.c.h.b16 %v537
          %v1253 = vunpack.c.l.b16 %v538
          %v1254 = vunpack.c.h.b16 %v538
          %v1255 = vunpack.c.l.b16 %v539
          %v1256 = vunpack.c.h.b16 %v539
          %v1257 = vunpack.c.l.b16 %v540
          %v1258 = vunpack.c.h.b16 %v540
          %v1259 = vunpack.c.l.b16 %v541
          %v1260 = vunpack.c.h.b16 %v541
          %v1261 = vunpack.c.l.b16 %v542
          %v1262 = vunpack.c.h.b16 %v542
          %v1263 = vunpack.c.l.b16 %v543
          %v1264 = vunpack.c.h.b16 %v543
          %v1265 = vunpack.c.l.b16 %v544
          %v1266 = vunpack.c.h.b16 %v544
          %v1267 = vunpack.c.l.b16 %v545
          %v1268 = vunpack.c.h.b16 %v545
          %v1269 = vunpack.c.l.b16 %v546
          %v1270 = vunpack.c.h.b16 %v546
          %v1271 = vunpack.c.l.b16 %v547
          %v1272 = vunpack.c.h.b16 %v547
          %v1273 = vunpack.c.l.b16 %v548
          %v1274 = vunpack.c.h.b16 %v548
          %v1275 = vunpack.c.l.b16 %v549
          %v1276 = vunpack.c.h.b16 %v549
          %v1277 = vunpack.c.l.b16 %v550
          %v1278 = vunpack.c.h.b16 %v550
          %v1279 = vunpack.c.l.b16 %v551
          %v1280 = vunpack.c.h.b16 %v551
          %v1281 = vunpack.c.l.b16 %v552
          %v1282 = vunpack.c.h.b16 %v552
          %v1283 = vunpack.c.l.b16 %v553
          %v1284 = vunpack.c.h.b16 %v553
          %v1285 = vunpack.c.l.b16 %v554
          %v1286 = vunpack.c.h.b16 %v554
          %v1287 = vunpack.c.l.b16 %v555
          %v1288 = vunpack.c.h.b16 %v555
          %v1289 = vunpack.c.l.b16 %v556
          %v1290 = vunpack.c.h.b16 %v556
          %v1291 = vunpack.c.l.b16 %v557
          %v1292 = vunpack.c.h.b16 %v557
          %v1293 = vunpack.c.l.b16 %v558
          %v1294 = vunpack.c.h.b16 %v558
          %v1295 = vunpack.c.l.b16 %v559
          %v1296 = vunpack.c.h.b16 %v559
          %v1297 = vunpack.c.l.b16 %v560
          %v1298 = vunpack.c.h.b16 %v560
          %v1299 = vunpack.c.l.b16 %v561
          %v1300 = vunpack.c.h.b16 %v561
          %v1301 = vunpack.c.l.b16 %v562
          %v1302 = vunpack.c.h.b16 %v562
          %v1303 = vunpack.c.l.b16 %v563
          %v1304 = vunpack.c.h.b16 %v563
          %v1305 = vunpack.c.l.b16 %v564
          %v1306 = vunpack.c.h.b16 %v564
          %v1307 = vunpack.c.l.b16 %v565
          %v1308 = vunpack.c.h.b16 %v565
          %v1309 = vunpack.c.l.b16 %v566
          %v1310 = vunpack.c.h.b16 %v566
          %v1311 = vunpack.c.l.b16 %v567
          %v1312 = vunpack.c.h.b16 %v567
          %v1313 = vunpack.c.l.b16 %v568
          %v1314 = vunpack.c.h.b16 %v568
          %v1315 = vunpack.c.l.b16 %v569
          %v1316 = vunpack.c.h.b16 %v569
          %v1317 = vunpack.c.l.b16 %v570
          %v1318 = vunpack.c.h.b16 %v570
          %v1319 = vunpack.c.l.b16 %v571
          %v1320 = vunpack.c.h.b16 %v571
          %v1321 = vunpack.c.l.b16 %v572
          %v1322 = vunpack.c.h.b16 %v572
          %v1323 = vunpack.c.l.b16 %v573
          %v1324 = vunpack.c.h.b16 %v573
          %v1325 = vunpack.c.l.b16 %v574
          %v1326 = vunpack.c.h.b16 %v574
          %v1327 = vunpack.c.l.b16 %v575
          %v1328 = vunpack.c.h.b16 %v575
          %v1329 = vunpack.c.l.b16 %v576
          %v1330 = vunpack.c.h.b16 %v576
          %v1331 = vunpack.c.l.b16 %v577
          %v1332 = vunpack.c.h.b16 %v577
          %v1333 = vunpack.c.l.b16 %v578
          %v1334 = vunpack.c.h.b16 %v578
          %v1335 = vunpack.c.l.b16 %v579
          %v1336 = vunpack.c.h.b16 %v579
          %v1337 = vunpack.c.l.b16 %v580
          %v1338 = vunpack.c.h.b16 %v580
          %v1339 = vunpack.c.l.b16 %v581
          %v1340 = vunpack.c.h.b16 %v581
          %v1341 = vunpack.c.l.b16 %v582
          %v1342 = vunpack.c.h.b16 %v582
          %v1343 = vunpack.c.l.b16 %v583
          %v1344 = vunpack.c.h.b16 %v583
          %v1345 = vunpack.c.l.b16 %v584
          %v1346 = vunpack.c.h.b16 %v584
          %v1347 = vunpack.c.l.b16 %v585
          %v1348 = vunpack.c.h.b16 %v585
          %v1349 = vunpack.c.l.b16 %v586
          %v1350 = vunpack.c.h.b16 %v586
          %v1351 = vunpack.c.l.b16 %v587
          %v1352 = vunpack.c.h.b16 %v587
          %v1353 = vunpack.c.l.b16 %v588
          %v1354 = vunpack.c.h.b16 %v588
          %v1355 = vunpack.c.l.b16 %v589
          %v1356 = vunpack.c.h.b16 %v589
          %v1357 = vunpack.c.l.b16 %v590
          %v1358 = vunpack.c.h.b16 %v590
          %v1359 = vunpack.c.l.b16 %v591
          %v1360 = vunpack.c.h.b16 %v591
          %v1361 = vunpack.c.l.b16 %v592
          %v1362 = vunpack.c.h.b16 %v592
          %v1363 = vunpack.c.l.b16 %v593
          %v1364 = vunpack.c.h.b16 %v593
          %v1365 = vunpack.c.l.b16 %v594
          %v1366 = vunpack.c.h.b16 %v594
          %v1367 = vunpack.c.l.b16 %v595
          %v1368 = vunpack.c.h.b16 %v595
          %v1369 = vunpack.c.l.b16 %v596
          %v1370 = vunpack.c.h.b16 %v596
          %v1371 = vunpack.c.l.b16 %v597
          %v1372 = vunpack.c.h.b16 %v597
          %v1373 = vunpack.c.l.b16 %v598
          %v1374 = vunpack.c.h.b16 %v598
          %v1375 = vunpack.c.l.b16 %v599
          %v1376 = vunpack.c.h.b16 %v599
          %v1377 = vunpack.c.l.b16 %v600
          %v1378 = vunpack.c.h.b16 %v600
          %v1379 = vunpack.c.l.b16 %v601
          %v1380 = vunpack.c.h.b16 %v601
          %v1381 = vunpack.c.l.b16 %v602
          %v1382 = vunpack.c.h.b16 %v602
          %v1383 = vunpack.c.l.b16 %v603
          %v1384 = vunpack.c.h.b16 %v603
          %v1385 = vunpack.c.l.b16 %v604
          %v1386 = vunpack.c.h.b16 %v604
          %v1387 = vunpack.c.l.b16 %v605
          %v1388 = vunpack.c.h.b16 %v605
          %v1389 = vunpack.c.l.b16 %v606
          %v1390 = vunpack.c.h.b16 %v606
          %v1391 = vunpack.c.l.b16 %v607
          %v1392 = vunpack.c.h.b16 %v607
          %v1393 = vunpack.c.l.b16 %v608
          %v1394 = vunpack.c.h.b16 %v608
          %v1395 = vunpack.c.l.b16 %v609
          %v1396 = vunpack.c.h.b16 %v609
          %v1397 = vunpack.c.l.b16 %v610
          %v1398 = vunpack.c.h.b16 %v610
          %v1399 = vunpack.c.l.b16 %v611
          %v1400 = vunpack.c.h.b16 %v611
          %v1401 = vunpack.c.l.b16 %v612
          %v1402 = vunpack.c.h.b16 %v612
          %v1403 = vunpack.c.l.b16 %v613
          %v1404 = vunpack.c.h.b16 %v613
          %v1405 = vunpack.c.l.b16 %v614
          %v1406 = vunpack.c.h.b16 %v614
          %v1407 = vunpack.c.l.b16 %v615
          %v1408 = vunpack.c.h.b16 %v615
          %v1409 = vunpack.c.l.b16 %v616
          %v1410 = vunpack.c.h.b16 %v616
          %v1411 = vunpack.c.l.b16 %v617
          %v1412 = vunpack.c.h.b16 %v617
          %v1413 = vunpack.c.l.b16 %v618
          %v1414 = vunpack.c.h.b16 %v618
          %v1415 = vunpack.c.l.b16 %v619
          %v1416 = vunpack.c.h.b16 %v619
          %v1417 = vunpack.c.l.b16 %v620
          %v1418 = vunpack.c.h.b16 %v620
          %v1419 = vunpack.c.l.b16 %v621
          %v1420 = vunpack.c.h.b16 %v621
          %v1421 = vunpack.c.l.b16 %v622
          %v1422 = vunpack.c.h.b16 %v622
          %v1423 = vunpack.c.l.b16 %v623
          %v1424 = vunpack.c.h.b16 %v623
          %v1425 = vunpack.c.l.b16 %v624
          %v1426 = vunpack.c.h.b16 %v624
          %v1427 = vunpack.c.l.b16 %v625
          %v1428 = vunpack.c.h.b16 %v625
          %v1429 = vunpack.c.l.b16 %v626
          %v1430 = vunpack.c.h.b16 %v626
          %v1431 = vunpack.c.l.b16 %v627
          %v1432 = vunpack.c.h.b16 %v627
          %v1433 = vunpack.c.l.b16 %v628
          %v1434 = vunpack.c.h.b16 %v628
          %v1435 = vunpack.c.l.b16 %v629
          %v1436 = vunpack.c.h.b16 %v629
          %v1437 = vunpack.c.l.b16 %v630
          %v1438 = vunpack.c.h.b16 %v630
          %v1439 = vunpack.c.l.b16 %v631
          %v1440 = vunpack.c.h.b16 %v631
          %v1441 = vunpack.c.l.b16 %v632
          %v1442 = vunpack.c.h.b16 %v632
          %v1443 = vunpack.c.l.b16 %v633
          %v1444 = vunpack.c.h.b16 %v633
          %v1445 = vunpack.c.l.b16 %v634
          %v1446 = vunpack.c.h.b16 %v634
          %v1447 = vunpack.c.l.b16 %v635
          %v1448 = vunpack.c.h.b16 %v635
          %v1449 = vunpack.c.l.b16 %v636
          %v1450 = vunpack.c.h.b16 %v636
          %v1451 = vunpack.c.l.b16 %v637
          %v1452 = vunpack.c.h.b16 %v637
          %v1453 = vunpack.c.l.b16 %v638
          %v1454 = vunpack.c.h.b16 %v638
          %v1455 = vunpack.c.l.b16 %v639
          %v1456 = vunpack.c.h.b16 %v639
          %v1457 = vunpack.c.l.b16 %v640
          %v1458 = vunpack.c.h.b16 %v640
          %v1459 = vunpack.c.l.b16 %v641
          %v1460 = vunpack.c.h.b16 %v641
          %v1461 = vunpack.c.l.b16 %v642
          %v1462 = vunpack.c.h.b16 %v642
          %v1463 = vunpack.c.l.b16 %v643
          %v1464 = vunpack.c.h.b16 %v643
          %v1465 = vunpack.c.l.b16 %v644
          %v1466 = vunpack.c.h.b16 %v644
          %v1467 = vunpack.c.l.b16 %v645
          %v1468 = vunpack.c.h.b16 %v645
          %v1469 = vunpack.c.l.b16 %v646
          %v1470 = vunpack.c.h.b16 %v646
          %v1471 = vunpack.c.l.b16 %v647
          %v1472 = vunpack.c.h.b16 %v647
          %v1473 = vunpack.c.l.b16 %v648
          %v1474 = vunpack.c.h.b16 %v648
          %v1475 = vunpack.c.l.b16 %v649
          %v1476 = vunpack.c.h.b16 %v649
          %v1477 = vunpack.c.l.b16 %v650
          %v1478 = vunpack.c.h.b16 %v650
          %v1479 = vunpack.c.l.b16 %v651
          %v1480 = vunpack.c.h.b16 %v651
          %v1481 = vunpack.c.l.b16 %v652
          %v1482 = vunpack.c.h.b16 %v652
          %v1483 = vunpack.c.l.b16 %v653
          %v1484 = vunpack.c.h.b16 %v653
          %v1485 = vunpack.c.l.b16 %v654
          %v1486 = vunpack.c.h.b16 %v654
          %v1487 = vunpack.c.l.b16 %v655
          %v1488 = vunpack.c.h.b16 %v655
          %v1489 = vunpack.c.l.b16 %v656
          %v1490 = vunpack.c.h.b16 %v656
          %v1491 = vunpack.c.l.b16 %v657
          %v1492 = vunpack.c.h.b16 %v657
          %v1493 = vunpack.c.l.b16 %v658
          %v1494 = vunpack.c.h.b16 %v658
          %v1495 = vunpack.c.l.b16 %v659
          %v1496 = vunpack.c.h.b16 %v659
          %v1497 = vunpack.c.l.b16 %v660
          %v1498 = vunpack.c.h.b16 %v660
          %v1499 = vunpack.c.l.b16 %v661
          %v1500 = vunpack.c.h.b16 %v661
          %v1501 = vpack.c.b16 %v993, %v989
          %v1502 = vpack.c.b16 %v994, %v990
          %v1503 = vpack.c.b16 %v995, %v991
          %v1504 = vpack.c.b16 %v996, %v992
          %v1505 = vpack.c.b16 %v1001, %v997
          %v1506 = vpack.c.b16 %v1002, %v998
          %v1507 = vpack.c.b16 %v1003, %v999
          %v1508 = vpack.c.b16 %v1004, %v1000
          %v1509 = vpack.c.b16 %v1009, %v1005
          %v1510 = vpack.c.b16 %v1010, %v1006
          %v1511 = vpack.c.b16 %v1011, %v1007
          %v1512 = vpack.c.b16 %v1012, %v1008
          %v1513 = vpack.c.b16 %v1017, %v1013
          %v1514 = vpack.c.b16 %v1018, %v1014
          %v1515 = vpack.c.b16 %v1019, %v1015
          %v1516 = vpack.c.b16 %v1020, %v1016
          %v1517 = vpack.c.b16 %v1025, %v1021
          %v1518 = vpack.c.b16 %v1026, %v1022
          %v1519 = vpack.c.b16 %v1027, %v1023
          %v1520 = vpack.c.b16 %v1028, %v1024
          %v1521 = vpack.c.b16 %v1033, %v1029
          %v1522 = vpack.c.b16 %v1034, %v1030
          %v1523 = vpack.c.b16 %v1035, %v1031
          %v1524 = vpack.c.b16 %v1036, %v1032
          %v1525 = vpack.c.b16 %v1041, %v1037
          %v1526 = vpack.c.b16 %v1042, %v1038
          %v1527 = vpack.c.b16 %v1043, %v1039
          %v1528 = vpack.c.b16 %v1044, %v1040
          %v1529 = vpack.c.b16 %v1049, %v1045
          %v1530 = vpack.c.b16 %v1050, %v1046
          %v1531 = vpack.c.b16 %v1051, %v1047
          %v1532 = vpack.c.b16 %v1052, %v1048
          %v1533 = vpack.c.b16 %v1057, %v1053
          %v1534 = vpack.c.b16 %v1058, %v1054
          %v1535 = vpack.c.b16 %v1059, %v1055
          %v1536 = vpack.c.b16 %v1060, %v1056
          %v1537 = vpack.c.b16 %v1065, %v1061
          %v1538 = vpack.c.b16 %v1066, %v1062
          %v1539 = vpack.c.b16 %v1067, %v1063
          %v1540 = vpack.c.b16 %v1068, %v1064
          %v1541 = vpack.c.b16 %v1073, %v1069
          %v1542 = vpack.c.b16 %v1074, %v1070
          %v1543 = vpack.c.b16 %v1075, %v1071
          %v1544 = vpack.c.b16 %v1076, %v1072
          %v1545 = vpack.c.b16 %v1081, %v1077
          %v1546 = vpack.c.b16 %v1082, %v1078
          %v1547 = vpack.c.b16 %v1083, %v1079
          %v1548 = vpack.c.b16 %v1084, %v1080
          %v1549 = vpack.c.b16 %v1089, %v1085
          %v1550 = vpack.c.b16 %v1090, %v1086
          %v1551 = vpack.c.b16 %v1091, %v1087
          %v1552 = vpack.c.b16 %v1092, %v1088
          %v1553 = vpack.c.b16 %v1097, %v1093
          %v1554 = vpack.c.b16 %v1098, %v1094
          %v1555 = vpack.c.b16 %v1099, %v1095
          %v1556 = vpack.c.b16 %v1100, %v1096
          %v1557 = vpack.c.b16 %v1105, %v1101
          %v1558 = vpack.c.b16 %v1106, %v1102
          %v1559 = vpack.c.b16 %v1107, %v1103
          %v1560 = vpack.c.b16 %v1108, %v1104
          %v1561 = vpack.c.b16 %v1113, %v1109
          %v1562 = vpack.c.b16 %v1114, %v1110
          %v1563 = vpack.c.b16 %v1115, %v1111
          %v1564 = vpack.c.b16 %v1116, %v1112
          %v1565 = vpack.c.b16 %v1121, %v1117
          %v1566 = vpack.c.b16 %v1122, %v1118
          %v1567 = vpack.c.b16 %v1123, %v1119
          %v1568 = vpack.c.b16 %v1124, %v1120
          %v1569 = vpack.c.b16 %v1129, %v1125
          %v1570 = vpack.c.b16 %v1130, %v1126
          %v1571 = vpack.c.b16 %v1131, %v1127
          %v1572 = vpack.c.b16 %v1132, %v1128
          %v1573 = vpack.c.b16 %v1137, %v1133
          %v1574 = vpack.c.b16 %v1138, %v1134
          %v1575 = vpack.c.b16 %v1139, %v1135
          %v1576 = vpack.c.b16 %v1140, %v1136
          %v1577 = vpack.c.b16 %v1145, %v1141
          %v1578 = vpack.c.b16 %v1146, %v1142
          %v1579 = vpack.c.b16 %v1147, %v1143
          %v1580 = vpack.c.b16 %v1148, %v1144
          %v1581 = vpack.c.b16 %v1153, %v1149
          %v1582 = vpack.c.b16 %v1154, %v1150
          %v1583 = vpack.c.b16 %v1155, %v1151
          %v1584 = vpack.c.b16 %v1156, %v1152
          %v1585 = vpack.c.b16 %v1161, %v1157
          %v1586 = vpack.c.b16 %v1162, %v1158
          %v1587 = vpack.c.b16 %v1163, %v1159
          %v1588 = vpack.c.b16 %v1164, %v1160
          %v1589 = vpack.c.b16 %v1169, %v1165
          %v1590 = vpack.c.b16 %v1170, %v1166
          %v1591 = vpack.c.b16 %v1171, %v1167
          %v1592 = vpack.c.b16 %v1172, %v1168
          %v1593 = vpack.c.b16 %v1177, %v1173
          %v1594 = vpack.c.b16 %v1178, %v1174
          %v1595 = vpack.c.b16 %v1179, %v1175
          %v1596 = vpack.c.b16 %v1180, %v1176
          %v1597 = vpack.c.b16 %v1185, %v1181
          %v1598 = vpack.c.b16 %v1186, %v1182
          %v1599 = vpack.c.b16 %v1187, %v1183
          %v1600 = vpack.c.b16 %v1188, %v1184
          %v1601 = vpack.c.b16 %v1193, %v1189
          %v1602 = vpack.c.b16 %v1194, %v1190
          %v1603 = vpack.c.b16 %v1195, %v1191
          %v1604 = vpack.c.b16 %v1196, %v1192
          %v1605 = vpack.c.b16 %v1201, %v1197
          %v1606 = vpack.c.b16 %v1202, %v1198
          %v1607 = vpack.c.b16 %v1203, %v1199
          %v1608 = vpack.c.b16 %v1204, %v1200
          %v1609 = vpack.c.b16 %v1209, %v1205
          %v1610 = vpack.c.b16 %v1210, %v1206
          %v1611 = vpack.c.b16 %v1211, %v1207
          %v1612 = vpack.c.b16 %v1212, %v1208
          %v1613 = vpack.c.b16 %v1217, %v1213
          %v1614 = vpack.c.b16 %v1218, %v1214
          %v1615 = vpack.c.b16 %v1219, %v1215
          %v1616 = vpack.c.b16 %v1220, %v1216
          %v1617 = vpack.c.b16 %v1225, %v1221
          %v1618 = vpack.c.b16 %v1226, %v1222
          %v1619 = vpack.c.b16 %v1227, %v1223
          %v1620 = vpack.c.b16 %v1228, %v1224
          %v1621 = vpack.c.b16 %v1233, %v1229
          %v1622 = vpack.c.b16 %v1234, %v1230
          %v1623 = vpack.c.b16 %v1235, %v1231
          %v1624 = vpack.c.b16 %v1236, %v1232
          %v1625 = vpack.c.b16 %v1241, %v1237
          %v1626 = vpack.c.b16 %v1242, %v1238
          %v1627 = vpack.c.b16 %v1243, %v1239
          %v1628 = vpack.c.b16 %v1244, %v1240
          %v1629 = vpack.c.b16 %v1249, %v1245
          %v1630 = vpack.c.b16 %v1250, %v1246
          %v1631 = vpack.c.b16 %v1251, %v1247
          %v1632 = vpack.c.b16 %v1252, %v1248
          %v1633 = vpack.c.b16 %v1257, %v1253
          %v1634 = vpack.c.b16 %v1258, %v1254
          %v1635 = vpack.c.b16 %v1259, %v1255
          %v1636 = vpack.c.b16 %v1260, %v1256
          %v1637 = vpack.c.b16 %v1265, %v1261
          %v1638 = vpack.c.b16 %v1266, %v1262
          %v1639 = vpack.c.b16 %v1267, %v1263
          %v1640 = vpack.c.b16 %v1268, %v1264
          %v1641 = vpack.c.b16 %v1273, %v1269
          %v1642 = vpack.c.b16 %v1274, %v1270
          %v1643 = vpack.c.b16 %v1275, %v1271
          %v1644 = vpack.c.b16 %v1276, %v1272
          %v1645 = vpack.c.b16 %v1281, %v1277
          %v1646 = vpack.c.b16 %v1282, %v1278
          %v1647 = vpack.c.b16 %v1283, %v1279
          %v1648 = vpack.c.b16 %v1284, %v1280
          %v1649 = vpack.c.b16 %v1289, %v1285
          %v1650 = vpack.c.b16 %v1290, %v1286
          %v1651 = vpack.c.b16 %v1291, %v1287
          %v1652 = vpack.c.b16 %v1292, %v1288
          %v1653 = vpack.c.b16 %v1297, %v1293
          %v1654 = vpack.c.b16 %v1298, %v1294
          %v1655 = vpack.c.b16 %v1299, %v1295
          %v1656 = vpack.c.b16 %v1300, %v1296
          %v1657 = vpack.c.b16 %v1305, %v1301
          %v1658 = vpack.c.b16 %v1306, %v1302
          %v1659 = vpack.c.b16 %v1307, %v1303
          %v1660 = vpack.c.b16 %v1308, %v1304
          %v1661 = vpack.c.b16 %v1313, %v1309
          %v1662 = vpack.c.b16 %v1314, %v1310
          %v1663 = vpack.c.b16 %v1315, %v1311
          %v1664 = vpack.c.b16 %v1316, %v1312
          %v1665 = vpack.c.b16 %v1321, %v1317
          %v1666 = vpack.c.b16 %v1322, %v1318
          %v1667 = vpack.c.b16 %v1323, %v1319
          %v1668 = vpack.c.b16 %v1324, %v1320
          %v1669 = vpack.c.b16 %v1329, %v1325
          %v1670 = vpack.c.b16 %v1330, %v1326
          %v1671 = vpack.c.b16 %v1331, %v1327
          %v1672 = vpack.c.b16 %v1332, %v1328
          %v1673 = vpack.c.b16 %v1337, %v1333
          %v1674 = vpack.c.b16 %v1338, %v1334
          %v1675 = vpack.c.b16 %v1339, %v1335
          %v1676 = vpack.c.b16 %v1340, %v1336
          %v1677 = vpack.c.b16 %v1345, %v1341
          %v1678 = vpack.c.b16 %v1346, %v1342
          %v1679 = vpack.c.b16 %v1347, %v1343
          %v1680 = vpack.c.b16 %v1348, %v1344
          %v1681 = vpack.c.b16 %v1353, %v1349
          %v1682 = vpack.c.b16 %v1354, %v1350
          %v1683 = vpack.c.b16 %v1355, %v1351
          %v1684 = vpack.c.b16 %v1356, %v1352
          %v1685 = vpack.c.b16 %v1361, %v1357
          %v1686 = vpack.c.b16 %v1362, %v1358
          %v1687 = vpack.c.b16 %v1363, %v1359
          %v1688 = vpack.c.b16 %v1364, %v1360
          %v1689 = vpack.c.b16 %v1369, %v1365
          %v1690 = vpack.c.b16 %v1370, %v1366
          %v1691 = vpack.c.b16 %v1371, %v1367
          %v1692 = vpack.c.b16 %v1372, %v1368
          %v1693 = vpack.c.b16 %v1377, %v1373
          %v1694 = vpack.c.b16 %v1378, %v1374
          %v1695 = vpack.c.b16 %v1379, %v1375
          %v1696 = vpack.c.b16 %v1380, %v1376
          %v1697 = vpack.c.b16 %v1385, %v1381
          %v1698 = vpack.c.b16 %v1386, %v1382
          %v1699 = vpack.c.b16 %v1387, %v1383
          %v1700 = vpack.c.b16 %v1388, %v1384
          %v1701 = vpack.c.b16 %v1393, %v1389
          %v1702 = vpack.c.b16 %v1394, %v1390
          %v1703 = vpack.c.b16 %v1395, %v1391
          %v1704 = vpack.c.b16 %v1396, %v1392
          %v1705 = vpack.c.b16 %v1401, %v1397
          %v1706 = vpack.c.b16 %v1402, %v1398
          %v1707 = vpack.c.b16 %v1403, %v1399
          %v1708 = vpack.c.b16 %v1404, %v1400
          %v1709 = vpack.c.b16 %v1409, %v1405
          %v1710 = vpack.c.b16 %v1410, %v1406
          %v1711 = vpack.c.b16 %v1411, %v1407
          %v1712 = vpack.c.b16 %v1412, %v1408
          %v1713 = vpack.c.b16 %v1417, %v1413
          %v1714 = vpack.c.b16 %v1418, %v1414
          %v1715 = vpack.c.b16 %v1419, %v1415
          %v1716 = vpack.c.b16 %v1420, %v1416
          %v1717 = vpack.c.b16 %v1425, %v1421
          %v1718 = vpack.c.b16 %v1426, %v1422
          %v1719 = vpack.c.b16 %v1427, %v1423
          %v1720 = vpack.c.b16 %v1428, %v1424
          %v1721 = vpack.c.b16 %v1433, %v1429
          %v1722 = vpack.c.b16 %v1434, %v1430
          %v1723 = vpack.c.b16 %v1435, %v1431
          %v1724 = vpack.c.b16 %v1436, %v1432
          %v1725 = vpack.c.b16 %v1441, %v1437
          %v1726 = vpack.c.b16 %v1442, %v1438
          %v1727 = vpack.c.b16 %v1443, %v1439
          %v1728 = vpack.c.b16 %v1444, %v1440
          %v1729 = vpack.c.b16 %v1449, %v1445
          %v1730 = vpack.c.b16 %v1450, %v1446
          %v1731 = vpack.c.b16 %v1451, %v1447
          %v1732 = vpack.c.b16 %v1452, %v1448
          %v1733 = vpack.c.b16 %v1457, %v1453
          %v1734 = vpack.c.b16 %v1458, %v1454
          %v1735 = vpack.c.b16 %v1459, %v1455
          %v1736 = vpack.c.b16 %v1460, %v1456
          %v1737 = vpack.c.b16 %v1465, %v1461
          %v1738 = vpack.c.b16 %v1466, %v1462
          %v1739 = vpack.c.b16 %v1467, %v1463
          %v1740 = vpack.c.b16 %v1468, %v1464
          %v1741 = vpack.c.b16 %v1473, %v1469
          %v1742 = vpack.c.b16 %v1474, %v1470
          %v1743 = vpack.c.b16 %v1475, %v1471
          %v1744 = vpack.c.b16 %v1476, %v1472
          %v1745 = vpack.c.b16 %v1481, %v1477
          %v1746 = vpack.c.b16 %v1482, %v1478
          %v1747 = vpack.c.b16 %v1483, %v1479
          %v1748 = vpack.c.b16 %v1484, %v1480
          %v1749 = vpack.c.b16 %v1489, %v1485
          %v1750 = vpack.c.b16 %v1490, %v1486
          %v1751 = vpack.c.b16 %v1491, %v1487
          %v1752 = vpack.c.b16 %v1492, %v1488
          %v1753 = vpack.c.b16 %v1497, %v1493
          %v1754 = vpack.c.b16 %v1498, %v1494
          %v1755 = vpack.c.b16 %v1499, %v1495
          %v1756 = vpack.c.b16 %v1500, %v1496
          %v2077 = vunpack.c.l.b16 %v662
          %v2078 = vunpack.c.l.b16 %v663
          %v2079 = vunpack.c.l.b16 %v664
          %v2080 = vunpack.c.l.b16 %v665
          %v2081 = vunpack.c.l.b16 %v666
          %v2082 = vunpack.c.l.b16 %v667
          %v2083 = vunpack.c.l.b16 %v668
          %v2084 = vunpack.c.l.b16 %v669
          %v2085 = vunpack.c.l.b16 %v670
          %v2086 = vunpack.c.l.b16 %v671
          %v2087 = vunpack.c.l.b16 %v672
          %v2088 = vunpack.c.l.b16 %v673
          %v2089 = vunpack.c.l.b16 %v674
          %v2090 = vunpack.c.l.b16 %v675
          %v2091 = vunpack.c.l.b16 %v676
          %v2092 = vunpack.c.l.b16 %v677
          %v2093 = vunpack.c.l.b16 %v678
          %v2094 = vunpack.c.l.b16 %v679
          %v2095 = vunpack.c.l.b16 %v680
          %v2096 = vunpack.c.l.b16 %v681
          %v2097 = vunpack.c.l.b16 %v682
          %v2098 = vunpack.c.l.b16 %v683
          %v2099 = vunpack.c.l.b16 %v684
          %v2100 = vunpack.c.l.b16 %v685
          %v2101 = vunpack.c.l.b16 %v686
          %v2102 = vunpack.c.l.b16 %v687
          %v2103 = vunpack.c.l.b16 %v688
          %v2104 = vunpack.c.l.b16 %v689
          %v2105 = vunpack.c.l.b16 %v690
          %v2106 = vunpack.c.l.b16 %v691
          %v2107 = vunpack.c.l.b16 %v692
          %v2108 = vunpack.c.l.b16 %v693
          %v2109 = vunpack.c.l.b16 %v694
          %v2110 = vunpack.c.l.b16 %v695
          %v2111 = vunpack.c.l.b16 %v696
          %v2112 = vunpack.c.l.b16 %v697
          %v2113 = vunpack.c.l.b16 %v698
          %v2114 = vunpack.c.l.b16 %v699
          %v2115 = vunpack.c.l.b16 %v700
          %v2116 = vunpack.c.l.b16 %v701
          %v2117 = vunpack.c.l.b16 %v702
          %v2118 = vunpack.c.l.b16 %v703
          %v2119 = vunpack.c.l.b16 %v704
          %v2120 = vunpack.c.l.b16 %v705
          %v2121 = vunpack.c.l.b16 %v706
          %v2122 = vunpack.c.l.b16 %v707
          %v2123 = vunpack.c.l.b16 %v708
          %v2124 = vunpack.c.l.b16 %v709
          %v2125 = vunpack.c.l.b16 %v710
          %v2126 = vunpack.c.l.b16 %v711
          %v2127 = vunpack.c.l.b16 %v712
          %v2128 = vunpack.c.l.b16 %v713
          %v2129 = vunpack.c.l.b16 %v714
          %v2130 = vunpack.c.l.b16 %v715
          %v2131 = vunpack.c.l.b16 %v716
          %v2132 = vunpack.c.l.b16 %v717
          %v2133 = vunpack.c.l.b16 %v718
          %v2134 = vunpack.c.l.b16 %v719
          %v2135 = vunpack.c.l.b16 %v720
          %v2136 = vunpack.c.l.b16 %v721
          %v2137 = vunpack.c.l.b16 %v722
          %v2138 = vunpack.c.l.b16 %v723
          %v2139 = vunpack.c.l.b16 %v724
          %v2140 = vunpack.c.l.b16 %v725
          %v2141 = vpack.c.b16 %v2078, %v2077
          %v2142 = vpack.c.b16 %v2080, %v2079
          %v2143 = vpack.c.b16 %v2082, %v2081
          %v2144 = vpack.c.b16 %v2084, %v2083
          %v2145 = vpack.c.b16 %v2086, %v2085
          %v2146 = vpack.c.b16 %v2088, %v2087
          %v2147 = vpack.c.b16 %v2090, %v2089
          %v2148 = vpack.c.b16 %v2092, %v2091
          %v2149 = vpack.c.b16 %v2094, %v2093
          %v2150 = vpack.c.b16 %v2096, %v2095
          %v2151 = vpack.c.b16 %v2098, %v2097
          %v2152 = vpack.c.b16 %v2100, %v2099
          %v2153 = vpack.c.b16 %v2102, %v2101
          %v2154 = vpack.c.b16 %v2104, %v2103
          %v2155 = vpack.c.b16 %v2106, %v2105
          %v2156 = vpack.c.b16 %v2108, %v2107
          %v2157 = vpack.c.b16 %v2110, %v2109
          %v2158 = vpack.c.b16 %v2112, %v2111
          %v2159 = vpack.c.b16 %v2114, %v2113
          %v2160 = vpack.c.b16 %v2116, %v2115
          %v2161 = vpack.c.b16 %v2118, %v2117
          %v2162 = vpack.c.b16 %v2120, %v2119
          %v2163 = vpack.c.b16 %v2122, %v2121
          %v2164 = vpack.c.b16 %v2124, %v2123
          %v2165 = vpack.c.b16 %v2126, %v2125
          %v2166 = vpack.c.b16 %v2128, %v2127
          %v2167 = vpack.c.b16 %v2130, %v2129
          %v2168 = vpack.c.b16 %v2132, %v2131
          %v2169 = vpack.c.b16 %v2134, %v2133
          %v2170 = vpack.c.b16 %v2136, %v2135
          %v2171 = vpack.c.b16 %v2138, %v2137
          %v2172 = vpack.c.b16 %v2140, %v2139
          %2205 = vmatprep.subr.bf16.mxu0 0
          %2206 = vmatpush1.bf16.msra.mxu0 %v2141
          %2207 = vmatprep.subr.bf16.mxu0 0
          %2208 = vmatpush1.bf16.msra.mxu0 %v2142
          %2209 = vmatprep.subr.bf16.mxu0 0
          %2210 = vmatpush1.bf16.msra.mxu0 %v2143
          %2211 = vmatprep.subr.bf16.mxu0 0
          %2212 = vmatpush1.bf16.msra.mxu0 %v2144
          %2213 = vmatprep.subr.bf16.mxu0 0
          %2214 = vmatpush1.bf16.msra.mxu0 %v2145
          %2215 = vmatprep.subr.bf16.mxu0 0
          %2216 = vmatpush1.bf16.msra.mxu0 %v2146
          %2217 = vmatprep.subr.bf16.mxu0 0
          %2218 = vmatpush1.bf16.msra.mxu0 %v2147
          %2219 = vmatprep.subr.bf16.mxu0 0
          %2220 = vmatpush1.bf16.msra.mxu0 %v2148
          %2221 = vmatprep.subr.bf16.mxu0 0
          %2222 = vmatpush1.bf16.msra.mxu0 %v2149
          %2223 = vmatprep.subr.bf16.mxu0 0
          %2224 = vmatpush1.bf16.msra.mxu0 %v2150
          %2225 = vmatprep.subr.bf16.mxu0 0
          %2226 = vmatpush1.bf16.msra.mxu0 %v2151
          %2227 = vmatprep.subr.bf16.mxu0 0
          %2228 = vmatpush1.bf16.msra.mxu0 %v2152
          %2229 = vmatprep.subr.bf16.mxu0 0
          %2230 = vmatpush1.bf16.msra.mxu0 %v2153
          %2231 = vmatprep.subr.bf16.mxu0 0
          %2232 = vmatpush1.bf16.msra.mxu0 %v2154
          %2233 = vmatprep.subr.bf16.mxu0 0
          %2234 = vmatpush1.bf16.msra.mxu0 %v2155
          %2235 = vmatprep.subr.bf16.mxu0 0
          %2236 = vmatpush1.bf16.msra.mxu0 %v2156
          %2237 = vmatprep.mubr.bf16.mxu0 %v1502
          %2238 = vmatmul.mubr.bf16.gmra.mrb[0].mxu0 %v1501
          %v2239 = vpop.f32.mrb[0].mxu0
          %v2240 = vadd.f32 %v731, %v2239
          %v2241 = vpop.f32.mrb[0].mxu0
          %v2242 = vpop.f32.mrb[0].mxu0
          %v2243 = vadd.f32 %v731, %v2242
          %v2244 = vpop.f32.mrb[0].mxu0
          %2245 = vmatprep.mubr.bf16.mxu0 %v1506
          %2246 = vmatmul.mubr.bf16.gmra.mrb[0].mxu0 %v1505
          %v2247 = vpop.f32.mrb[0].mxu0
          %v2248 = vadd.f32 %v731, %v2247
          %v2249 = vpop.f32.mrb[0].mxu0
          %v2250 = vpop.f32.mrb[0].mxu0
          %v2251 = vadd.f32 %v731, %v2250
          %v2252 = vpop.f32.mrb[0].mxu0
          %2253 = vmatprep.mubr.bf16.mxu0 %v1510
          %2254 = vmatmul.mubr.bf16.gmra.mrb[0].mxu0 %v1509
          %v2255 = vpop.f32.mrb[0].mxu0
          %v2256 = vadd.f32 %v731, %v2255
          %v2257 = vpop.f32.mrb[0].mxu0
          %v2258 = vpop.f32.mrb[0].mxu0
          %v2259 = vadd.f32 %v731, %v2258
          %v2260 = vpop.f32.mrb[0].mxu0
          %2261 = vmatprep.mubr.bf16.mxu0 %v1514
          %2262 = vmatmul.mubr.bf16.gmra.mrb[0].mxu0 %v1513
          %v2263 = vpop.f32.mrb[0].mxu0
          %v2264 = vadd.f32 %v731, %v2263
          %v2265 = vpop.f32.mrb[0].mxu0
          %v2266 = vpop.f32.mrb[0].mxu0
          %v2267 = vadd.f32 %v731, %v2266
          %v2268 = vpop.f32.mrb[0].mxu0
          %2269 = vmatprep.mubr.bf16.mxu0 %v1518
          %2270 = vmatmul.mubr.bf16.gmra.mrb[0].mxu0 %v1517
          %v2271 = vpop.f32.mrb[0].mxu0
          %v2272 = vadd.f32 %v731, %v2271
          %v2273 = vpop.f32.mrb[0].mxu0
          %v2274 = vpop.f32.mrb[0].mxu0
          %v2275 = vadd.f32 %v731, %v2274
          %v2276 = vpop.f32.mrb[0].mxu0
          %2277 = vmatprep.mubr.bf16.mxu0 %v1522
          %2278 = vmatmul.mubr.bf16.gmra.mrb[0].mxu0 %v1521
          %v2279 = vpop.f32.mrb[0].mxu0
          %v2280 = vadd.f32 %v731, %v2279
          %v2281 = vpop.f32.mrb[0].mxu0
          %v2282 = vpop.f32.mrb[0].mxu0
          %v2283 = vadd.f32 %v731, %v2282
          %v2284 = vpop.f32.mrb[0].mxu0
          %2285 = vmatprep.mubr.bf16.mxu0 %v1526
          %2286 = vmatmul.mubr.bf16.gmra.mrb[0].mxu0 %v1525
          %v2287 = vpop.f32.mrb[0].mxu0
          %v2288 = vadd.f32 %v731, %v2287
          %v2289 = vpop.f32.mrb[0].mxu0
          %v2290 = vpop.f32.mrb[0].mxu0
          %v2291 = vadd.f32 %v731, %v2290
          %v2292 = vpop.f32.mrb[0].mxu0
          %2293 = vmatprep.mubr.bf16.mxu0 %v1530
          %2294 = vmatmul.mubr.bf16.gmra.mrb[0].mxu0 %v1529
          %v2295 = vpop.f32.mrb[0].mxu0
          %v2296 = vadd.f32 %v731, %v2295
          %v2297 = vpop.f32.mrb[0].mxu0
          %v2298 = vpop.f32.mrb[0].mxu0
          %v2299 = vadd.f32 %v731, %v2298
          %v2300 = vpop.f32.mrb[0].mxu0
          %2301 = vmatprep.mubr.bf16.mxu0 %v1534
          %2302 = vmatmul.mubr.bf16.gmra.mrb[0].mxu0 %v1533
          %v2303 = vpop.f32.mrb[0].mxu0
          %v2304 = vadd.f32 %v731, %v2303
          %v2305 = vpop.f32.mrb[0].mxu0
          %v2306 = vpop.f32.mrb[0].mxu0
          %v2307 = vadd.f32 %v731, %v2306
          %v2308 = vpop.f32.mrb[0].mxu0
          %2309 = vmatprep.mubr.bf16.mxu0 %v1538
          %2310 = vmatmul.mubr.bf16.gmra.mrb[0].mxu0 %v1537
          %v2311 = vpop.f32.mrb[0].mxu0
          %v2312 = vadd.f32 %v731, %v2311
          %v2313 = vpop.f32.mrb[0].mxu0
          %v2314 = vpop.f32.mrb[0].mxu0
          %v2315 = vadd.f32 %v731, %v2314
          %v2316 = vpop.f32.mrb[0].mxu0
          %2317 = vmatprep.mubr.bf16.mxu0 %v1542
          %2318 = vmatmul.mubr.bf16.gmra.mrb[0].mxu0 %v1541
          %v2319 = vpop.f32.mrb[0].mxu0
          %v2320 = vadd.f32 %v731, %v2319
          %v2321 = vpop.f32.mrb[0].mxu0
          %v2322 = vpop.f32.mrb[0].mxu0
          %v2323 = vadd.f32 %v731, %v2322
          %v2324 = vpop.f32.mrb[0].mxu0
          %2325 = vmatprep.mubr.bf16.mxu0 %v1546
          %2326 = vmatmul.mubr.bf16.gmra.mrb[0].mxu0 %v1545
          %v2327 = vpop.f32.mrb[0].mxu0
          %v2328 = vadd.f32 %v731, %v2327
          %v2329 = vpop.f32.mrb[0].mxu0
          %v2330 = vpop.f32.mrb[0].mxu0
          %v2331 = vadd.f32 %v731, %v2330
          %v2332 = vpop.f32.mrb[0].mxu0
          %2333 = vmatprep.mubr.bf16.mxu0 %v1550
          %2334 = vmatmul.mubr.bf16.gmra.mrb[0].mxu0 %v1549
          %v2335 = vpop.f32.mrb[0].mxu0
          %v2336 = vadd.f32 %v731, %v2335
          %v2337 = vpop.f32.mrb[0].mxu0
          %v2338 = vpop.f32.mrb[0].mxu0
          %v2339 = vadd.f32 %v731, %v2338
          %v2340 = vpop.f32.mrb[0].mxu0
          %2341 = vmatprep.mubr.bf16.mxu0 %v1554
          %2342 = vmatmul.mubr.bf16.gmra.mrb[0].mxu0 %v1553
          %v2343 = vpop.f32.mrb[0].mxu0
          %v2344 = vadd.f32 %v731, %v2343
          %v2345 = vpop.f32.mrb[0].mxu0
          %v2346 = vpop.f32.mrb[0].mxu0
          %v2347 = vadd.f32 %v731, %v2346
          %v2348 = vpop.f32.mrb[0].mxu0
          %2349 = vmatprep.mubr.bf16.mxu0 %v1558
          %2350 = vmatmul.mubr.bf16.gmra.mrb[0].mxu0 %v1557
          %v2351 = vpop.f32.mrb[0].mxu0
          %v2352 = vadd.f32 %v731, %v2351
          %v2353 = vpop.f32.mrb[0].mxu0
          %v2354 = vpop.f32.mrb[0].mxu0
          %v2355 = vadd.f32 %v731, %v2354
          %v2356 = vpop.f32.mrb[0].mxu0
          %2357 = vmatprep.mubr.bf16.mxu0 %v1562
          %2358 = vmatmul.mubr.bf16.gmra.mrb[0].mxu0 %v1561
          %v2359 = vpop.f32.mrb[0].mxu0
          %v2360 = vadd.f32 %v731, %v2359
          %v2361 = vpop.f32.mrb[0].mxu0
          %v2362 = vpop.f32.mrb[0].mxu0
          %v2363 = vadd.f32 %v731, %v2362
          %v2364 = vpop.f32.mrb[0].mxu0
          %2365 = vmatprep.mubr.bf16.mxu0 %v1566
          %2366 = vmatmul.mubr.bf16.gmra.mrb[0].mxu0 %v1565
          %v2367 = vpop.f32.mrb[0].mxu0
          %v2368 = vadd.f32 %v731, %v2367
          %v2369 = vpop.f32.mrb[0].mxu0
          %v2370 = vpop.f32.mrb[0].mxu0
          %v2371 = vadd.f32 %v731, %v2370
          %v2372 = vpop.f32.mrb[0].mxu0
          %2373 = vmatprep.mubr.bf16.mxu0 %v1570
          %2374 = vmatmul.mubr.bf16.gmra.mrb[0].mxu0 %v1569
          %v2375 = vpop.f32.mrb[0].mxu0
          %v2376 = vadd.f32 %v731, %v2375
          %v2377 = vpop.f32.mrb[0].mxu0
          %v2378 = vpop.f32.mrb[0].mxu0
          %v2379 = vadd.f32 %v731, %v2378
          %v2380 = vpop.f32.mrb[0].mxu0
          %2381 = vmatprep.mubr.bf16.mxu0 %v1574
          %2382 = vmatmul.mubr.bf16.gmra.mrb[0].mxu0 %v1573
          %v2383 = vpop.f32.mrb[0].mxu0
          %v2384 = vadd.f32 %v731, %v2383
          %v2385 = vpop.f32.mrb[0].mxu0
          %v2386 = vpop.f32.mrb[0].mxu0
          %v2387 = vadd.f32 %v731, %v2386
          %v2388 = vpop.f32.mrb[0].mxu0
          %2389 = vmatprep.mubr.bf16.mxu0 %v1578
          %2390 = vmatmul.mubr.bf16.gmra.mrb[0].mxu0 %v1577
          %v2391 = vpop.f32.mrb[0].mxu0
          %v2392 = vadd.f32 %v731, %v2391
          %v2393 = vpop.f32.mrb[0].mxu0
          %v2394 = vpop.f32.mrb[0].mxu0
          %v2395 = vadd.f32 %v731, %v2394
          %v2396 = vpop.f32.mrb[0].mxu0
          %2397 = vmatprep.mubr.bf16.mxu0 %v1582
          %2398 = vmatmul.mubr.bf16.gmra.mrb[0].mxu0 %v1581
          %v2399 = vpop.f32.mrb[0].mxu0
          %v2400 = vadd.f32 %v731, %v2399
          %v2401 = vpop.f32.mrb[0].mxu0
          %v2402 = vpop.f32.mrb[0].mxu0
          %v2403 = vadd.f32 %v731, %v2402
          %v2404 = vpop.f32.mrb[0].mxu0
          %2405 = vmatprep.mubr.bf16.mxu0 %v1586
          %2406 = vmatmul.mubr.bf16.gmra.mrb[0].mxu0 %v1585
          %v2407 = vpop.f32.mrb[0].mxu0
          %v2408 = vadd.f32 %v731, %v2407
          %v2409 = vpop.f32.mrb[0].mxu0
          %v2410 = vpop.f32.mrb[0].mxu0
          %v2411 = vadd.f32 %v731, %v2410
          %v2412 = vpop.f32.mrb[0].mxu0
          %2413 = vmatprep.mubr.bf16.mxu0 %v1590
          %2414 = vmatmul.mubr.bf16.gmra.mrb[0].mxu0 %v1589
          %v2415 = vpop.f32.mrb[0].mxu0
          %v2416 = vadd.f32 %v731, %v2415
          %v2417 = vpop.f32.mrb[0].mxu0
          %v2418 = vpop.f32.mrb[0].mxu0
          %v2419 = vadd.f32 %v731, %v2418
          %v2420 = vpop.f32.mrb[0].mxu0
          %2421 = vmatprep.mubr.bf16.mxu0 %v1594
          %2422 = vmatmul.mubr.bf16.gmra.mrb[0].mxu0 %v1593
          %v2423 = vpop.f32.mrb[0].mxu0
          %v2424 = vadd.f32 %v731, %v2423
          %v2425 = vpop.f32.mrb[0].mxu0
          %v2426 = vpop.f32.mrb[0].mxu0
          %v2427 = vadd.f32 %v731, %v2426
          %v2428 = vpop.f32.mrb[0].mxu0
          %2429 = vmatprep.mubr.bf16.mxu0 %v1598
          %2430 = vmatmul.mubr.bf16.gmra.mrb[0].mxu0 %v1597
          %v2431 = vpop.f32.mrb[0].mxu0
          %v2432 = vadd.f32 %v731, %v2431
          %v2433 = vpop.f32.mrb[0].mxu0
          %v2434 = vpop.f32.mrb[0].mxu0
          %v2435 = vadd.f32 %v731, %v2434
          %v2436 = vpop.f32.mrb[0].mxu0
          %2437 = vmatprep.mubr.bf16.mxu0 %v1602
          %2438 = vmatmul.mubr.bf16.gmra.mrb[0].mxu0 %v1601
          %v2439 = vpop.f32.mrb[0].mxu0
          %v2440 = vadd.f32 %v731, %v2439
          %v2441 = vpop.f32.mrb[0].mxu0
          %v2442 = vpop.f32.mrb[0].mxu0
          %v2443 = vadd.f32 %v731, %v2442
          %v2444 = vpop.f32.mrb[0].mxu0
          %2445 = vmatprep.mubr.bf16.mxu0 %v1606
          %2446 = vmatmul.mubr.bf16.gmra.mrb[0].mxu0 %v1605
          %v2447 = vpop.f32.mrb[0].mxu0
          %v2448 = vadd.f32 %v731, %v2447
          %v2449 = vpop.f32.mrb[0].mxu0
          %v2450 = vpop.f32.mrb[0].mxu0
          %v2451 = vadd.f32 %v731, %v2450
          %v2452 = vpop.f32.mrb[0].mxu0
          %2453 = vmatprep.mubr.bf16.mxu0 %v1610
          %2454 = vmatmul.mubr.bf16.gmra.mrb[0].mxu0 %v1609
          %v2455 = vpop.f32.mrb[0].mxu0
          %v2456 = vadd.f32 %v731, %v2455
          %v2457 = vpop.f32.mrb[0].mxu0
          %v2458 = vpop.f32.mrb[0].mxu0
          %v2459 = vadd.f32 %v731, %v2458
          %v2460 = vpop.f32.mrb[0].mxu0
          %2461 = vmatprep.mubr.bf16.mxu0 %v1614
          %2462 = vmatmul.mubr.bf16.gmra.mrb[0].mxu0 %v1613
          %v2463 = vpop.f32.mrb[0].mxu0
          %v2464 = vadd.f32 %v731, %v2463
          %v2465 = vpop.f32.mrb[0].mxu0
          %v2466 = vpop.f32.mrb[0].mxu0
          %v2467 = vadd.f32 %v731, %v2466
          %v2468 = vpop.f32.mrb[0].mxu0
          %2469 = vmatprep.mubr.bf16.mxu0 %v1618
          %2470 = vmatmul.mubr.bf16.gmra.mrb[0].mxu0 %v1617
          %v2471 = vpop.f32.mrb[0].mxu0
          %v2472 = vadd.f32 %v731, %v2471
          %v2473 = vpop.f32.mrb[0].mxu0
          %v2474 = vpop.f32.mrb[0].mxu0
          %v2475 = vadd.f32 %v731, %v2474
          %v2476 = vpop.f32.mrb[0].mxu0
          %2477 = vmatprep.mubr.bf16.mxu0 %v1622
          %2478 = vmatmul.mubr.bf16.gmra.mrb[0].mxu0 %v1621
          %v2479 = vpop.f32.mrb[0].mxu0
          %v2480 = vadd.f32 %v731, %v2479
          %v2481 = vpop.f32.mrb[0].mxu0
          %v2482 = vpop.f32.mrb[0].mxu0
          %v2483 = vadd.f32 %v731, %v2482
          %v2484 = vpop.f32.mrb[0].mxu0
          %2485 = vmatprep.mubr.bf16.mxu0 %v1626
          %2486 = vmatmul.mubr.bf16.gmra.mrb[0].mxu0 %v1625
          %v2487 = vpop.f32.mrb[0].mxu0
          %v2488 = vadd.f32 %v731, %v2487
          %v2489 = vpop.f32.mrb[0].mxu0
          %v2490 = vpop.f32.mrb[0].mxu0
          %v2491 = vadd.f32 %v731, %v2490
          %v2492 = vpop.f32.mrb[0].mxu0
          %2493 = vmatprep.mubr.bf16.mxu0 %v1630
          %2494 = vmatmul.mubr.bf16.gmra.mrb[0].mxu0 %v1629
          %v2495 = vpop.f32.mrb[0].mxu0
          %v2496 = vadd.f32 %v731, %v2495
          %v2497 = vpop.f32.mrb[0].mxu0
          %v2498 = vpop.f32.mrb[0].mxu0
          %v2499 = vadd.f32 %v731, %v2498
          %v2500 = vpop.f32.mrb[0].mxu0
          %2501 = vmatprep.mubr.bf16.mxu0 %v1634
          %2502 = vmatmul.mubr.bf16.gmra.mrb[0].mxu0 %v1633
          %v2503 = vpop.f32.mrb[0].mxu0
          %v2504 = vadd.f32 %v731, %v2503
          %v2505 = vpop.f32.mrb[0].mxu0
          %v2506 = vpop.f32.mrb[0].mxu0
          %v2507 = vadd.f32 %v731, %v2506
          %v2508 = vpop.f32.mrb[0].mxu0
          %2509 = vmatprep.mubr.bf16.mxu0 %v1638
          %2510 = vmatmul.mubr.bf16.gmra.mrb[0].mxu0 %v1637
          %v2511 = vpop.f32.mrb[0].mxu0
          %v2512 = vadd.f32 %v731, %v2511
          %v2513 = vpop.f32.mrb[0].mxu0
          %v2514 = vpop.f32.mrb[0].mxu0
          %v2515 = vadd.f32 %v731, %v2514
          %v2516 = vpop.f32.mrb[0].mxu0
          %2517 = vmatprep.mubr.bf16.mxu0 %v1642
          %2518 = vmatmul.mubr.bf16.gmra.mrb[0].mxu0 %v1641
          %v2519 = vpop.f32.mrb[0].mxu0
          %v2520 = vadd.f32 %v731, %v2519
          %v2521 = vpop.f32.mrb[0].mxu0
          %v2522 = vpop.f32.mrb[0].mxu0
          %v2523 = vadd.f32 %v731, %v2522
          %v2524 = vpop.f32.mrb[0].mxu0
          %2525 = vmatprep.mubr.bf16.mxu0 %v1646
          %2526 = vmatmul.mubr.bf16.gmra.mrb[0].mxu0 %v1645
          %v2527 = vpop.f32.mrb[0].mxu0
          %v2528 = vadd.f32 %v731, %v2527
          %v2529 = vpop.f32.mrb[0].mxu0
          %v2530 = vpop.f32.mrb[0].mxu0
          %v2531 = vadd.f32 %v731, %v2530
          %v2532 = vpop.f32.mrb[0].mxu0
          %2533 = vmatprep.mubr.bf16.mxu0 %v1650
          %2534 = vmatmul.mubr.bf16.gmra.mrb[0].mxu0 %v1649
          %v2535 = vpop.f32.mrb[0].mxu0
          %v2536 = vadd.f32 %v731, %v2535
          %v2537 = vpop.f32.mrb[0].mxu0
          %v2538 = vpop.f32.mrb[0].mxu0
          %v2539 = vadd.f32 %v731, %v2538
          %v2540 = vpop.f32.mrb[0].mxu0
          %2541 = vmatprep.mubr.bf16.mxu0 %v1654
          %2542 = vmatmul.mubr.bf16.gmra.mrb[0].mxu0 %v1653
          %v2543 = vpop.f32.mrb[0].mxu0
          %v2544 = vadd.f32 %v731, %v2543
          %v2545 = vpop.f32.mrb[0].mxu0
          %v2546 = vpop.f32.mrb[0].mxu0
          %v2547 = vadd.f32 %v731, %v2546
          %v2548 = vpop.f32.mrb[0].mxu0
          %2549 = vmatprep.mubr.bf16.mxu0 %v1658
          %2550 = vmatmul.mubr.bf16.gmra.mrb[0].mxu0 %v1657
          %v2551 = vpop.f32.mrb[0].mxu0
          %v2552 = vadd.f32 %v731, %v2551
          %v2553 = vpop.f32.mrb[0].mxu0
          %v2554 = vpop.f32.mrb[0].mxu0
          %v2555 = vadd.f32 %v731, %v2554
          %v2556 = vpop.f32.mrb[0].mxu0
          %2557 = vmatprep.mubr.bf16.mxu0 %v1662
          %2558 = vmatmul.mubr.bf16.gmra.mrb[0].mxu0 %v1661
          %v2559 = vpop.f32.mrb[0].mxu0
          %v2560 = vadd.f32 %v731, %v2559
          %v2561 = vpop.f32.mrb[0].mxu0
          %v2562 = vpop.f32.mrb[0].mxu0
          %v2563 = vadd.f32 %v731, %v2562
          %v2564 = vpop.f32.mrb[0].mxu0
          %2565 = vmatprep.mubr.bf16.mxu0 %v1666
          %2566 = vmatmul.mubr.bf16.gmra.mrb[0].mxu0 %v1665
          %v2567 = vpop.f32.mrb[0].mxu0
          %v2568 = vadd.f32 %v731, %v2567
          %v2569 = vpop.f32.mrb[0].mxu0
          %v2570 = vpop.f32.mrb[0].mxu0
          %v2571 = vadd.f32 %v731, %v2570
          %v2572 = vpop.f32.mrb[0].mxu0
          %2573 = vmatprep.mubr.bf16.mxu0 %v1670
          %2574 = vmatmul.mubr.bf16.gmra.mrb[0].mxu0 %v1669
          %v2575 = vpop.f32.mrb[0].mxu0
          %v2576 = vadd.f32 %v731, %v2575
          %v2577 = vpop.f32.mrb[0].mxu0
          %v2578 = vpop.f32.mrb[0].mxu0
          %v2579 = vadd.f32 %v731, %v2578
          %v2580 = vpop.f32.mrb[0].mxu0
          %2581 = vmatprep.mubr.bf16.mxu0 %v1674
          %2582 = vmatmul.mubr.bf16.gmra.mrb[0].mxu0 %v1673
          %v2583 = vpop.f32.mrb[0].mxu0
          %v2584 = vadd.f32 %v731, %v2583
          %v2585 = vpop.f32.mrb[0].mxu0
          %v2586 = vpop.f32.mrb[0].mxu0
          %v2587 = vadd.f32 %v731, %v2586
          %v2588 = vpop.f32.mrb[0].mxu0
          %2589 = vmatprep.mubr.bf16.mxu0 %v1678
          %2590 = vmatmul.mubr.bf16.gmra.mrb[0].mxu0 %v1677
          %v2591 = vpop.f32.mrb[0].mxu0
          %v2592 = vadd.f32 %v731, %v2591
          %v2593 = vpop.f32.mrb[0].mxu0
          %v2594 = vpop.f32.mrb[0].mxu0
          %v2595 = vadd.f32 %v731, %v2594
          %v2596 = vpop.f32.mrb[0].mxu0
          %2597 = vmatprep.mubr.bf16.mxu0 %v1682
          %2598 = vmatmul.mubr.bf16.gmra.mrb[0].mxu0 %v1681
          %v2599 = vpop.f32.mrb[0].mxu0
          %v2600 = vadd.f32 %v731, %v2599
          %v2601 = vpop.f32.mrb[0].mxu0
          %v2602 = vpop.f32.mrb[0].mxu0
          %v2603 = vadd.f32 %v731, %v2602
          %v2604 = vpop.f32.mrb[0].mxu0
          %2605 = vmatprep.mubr.bf16.mxu0 %v1686
          %2606 = vmatmul.mubr.bf16.gmra.mrb[0].mxu0 %v1685
          %v2607 = vpop.f32.mrb[0].mxu0
          %v2608 = vadd.f32 %v731, %v2607
          %v2609 = vpop.f32.mrb[0].mxu0
          %v2610 = vpop.f32.mrb[0].mxu0
          %v2611 = vadd.f32 %v731, %v2610
          %v2612 = vpop.f32.mrb[0].mxu0
          %2613 = vmatprep.mubr.bf16.mxu0 %v1690
          %2614 = vmatmul.mubr.bf16.gmra.mrb[0].mxu0 %v1689
          %v2615 = vpop.f32.mrb[0].mxu0
          %v2616 = vadd.f32 %v731, %v2615
          %v2617 = vpop.f32.mrb[0].mxu0
          %v2618 = vpop.f32.mrb[0].mxu0
          %v2619 = vadd.f32 %v731, %v2618
          %v2620 = vpop.f32.mrb[0].mxu0
          %2621 = vmatprep.mubr.bf16.mxu0 %v1694
          %2622 = vmatmul.mubr.bf16.gmra.mrb[0].mxu0 %v1693
          %v2623 = vpop.f32.mrb[0].mxu0
          %v2624 = vadd.f32 %v731, %v2623
          %v2625 = vpop.f32.mrb[0].mxu0
          %v2626 = vpop.f32.mrb[0].mxu0
          %v2627 = vadd.f32 %v731, %v2626
          %v2628 = vpop.f32.mrb[0].mxu0
          %2629 = vmatprep.mubr.bf16.mxu0 %v1698
          %2630 = vmatmul.mubr.bf16.gmra.mrb[0].mxu0 %v1697
          %v2631 = vpop.f32.mrb[0].mxu0
          %v2632 = vadd.f32 %v731, %v2631
          %v2633 = vpop.f32.mrb[0].mxu0
          %v2634 = vpop.f32.mrb[0].mxu0
          %v2635 = vadd.f32 %v731, %v2634
          %v2636 = vpop.f32.mrb[0].mxu0
          %2637 = vmatprep.mubr.bf16.mxu0 %v1702
          %2638 = vmatmul.mubr.bf16.gmra.mrb[0].mxu0 %v1701
          %v2639 = vpop.f32.mrb[0].mxu0
          %v2640 = vadd.f32 %v731, %v2639
          %v2641 = vpop.f32.mrb[0].mxu0
          %v2642 = vpop.f32.mrb[0].mxu0
          %v2643 = vadd.f32 %v731, %v2642
          %v2644 = vpop.f32.mrb[0].mxu0
          %2645 = vmatprep.mubr.bf16.mxu0 %v1706
          %2646 = vmatmul.mubr.bf16.gmra.mrb[0].mxu0 %v1705
          %v2647 = vpop.f32.mrb[0].mxu0
          %v2648 = vadd.f32 %v731, %v2647
          %v2649 = vpop.f32.mrb[0].mxu0
          %v2650 = vpop.f32.mrb[0].mxu0
          %v2651 = vadd.f32 %v731, %v2650
          %v2652 = vpop.f32.mrb[0].mxu0
          %2653 = vmatprep.mubr.bf16.mxu0 %v1710
          %2654 = vmatmul.mubr.bf16.gmra.mrb[0].mxu0 %v1709
          %v2655 = vpop.f32.mrb[0].mxu0
          %v2656 = vadd.f32 %v731, %v2655
          %v2657 = vpop.f32.mrb[0].mxu0
          %v2658 = vpop.f32.mrb[0].mxu0
          %v2659 = vadd.f32 %v731, %v2658
          %v2660 = vpop.f32.mrb[0].mxu0
          %2661 = vmatprep.mubr.bf16.mxu0 %v1714
          %2662 = vmatmul.mubr.bf16.gmra.mrb[0].mxu0 %v1713
          %v2663 = vpop.f32.mrb[0].mxu0
          %v2664 = vadd.f32 %v731, %v2663
          %v2665 = vpop.f32.mrb[0].mxu0
          %v2666 = vpop.f32.mrb[0].mxu0
          %v2667 = vadd.f32 %v731, %v2666
          %v2668 = vpop.f32.mrb[0].mxu0
          %2669 = vmatprep.mubr.bf16.mxu0 %v1718
          %2670 = vmatmul.mubr.bf16.gmra.mrb[0].mxu0 %v1717
          %v2671 = vpop.f32.mrb[0].mxu0
          %v2672 = vadd.f32 %v731, %v2671
          %v2673 = vpop.f32.mrb[0].mxu0
          %v2674 = vpop.f32.mrb[0].mxu0
          %v2675 = vadd.f32 %v731, %v2674
          %v2676 = vpop.f32.mrb[0].mxu0
          %2677 = vmatprep.mubr.bf16.mxu0 %v1722
          %2678 = vmatmul.mubr.bf16.gmra.mrb[0].mxu0 %v1721
          %v2679 = vpop.f32.mrb[0].mxu0
          %v2680 = vadd.f32 %v731, %v2679
          %v2681 = vpop.f32.mrb[0].mxu0
          %v2682 = vpop.f32.mrb[0].mxu0
          %v2683 = vadd.f32 %v731, %v2682
          %v2684 = vpop.f32.mrb[0].mxu0
          %2685 = vmatprep.mubr.bf16.mxu0 %v1726
          %2686 = vmatmul.mubr.bf16.gmra.mrb[0].mxu0 %v1725
          %v2687 = vpop.f32.mrb[0].mxu0
          %v2688 = vadd.f32 %v731, %v2687
          %v2689 = vpop.f32.mrb[0].mxu0
          %v2690 = vpop.f32.mrb[0].mxu0
          %v2691 = vadd.f32 %v731, %v2690
          %v2692 = vpop.f32.mrb[0].mxu0
          %2693 = vmatprep.mubr.bf16.mxu0 %v1730
          %2694 = vmatmul.mubr.bf16.gmra.mrb[0].mxu0 %v1729
          %v2695 = vpop.f32.mrb[0].mxu0
          %v2696 = vadd.f32 %v731, %v2695
          %v2697 = vpop.f32.mrb[0].mxu0
          %v2698 = vpop.f32.mrb[0].mxu0
          %v2699 = vadd.f32 %v731, %v2698
          %v2700 = vpop.f32.mrb[0].mxu0
          %2701 = vmatprep.mubr.bf16.mxu0 %v1734
          %2702 = vmatmul.mubr.bf16.gmra.mrb[0].mxu0 %v1733
          %v2703 = vpop.f32.mrb[0].mxu0
          %v2704 = vadd.f32 %v731, %v2703
          %v2705 = vpop.f32.mrb[0].mxu0
          %v2706 = vpop.f32.mrb[0].mxu0
          %v2707 = vadd.f32 %v731, %v2706
          %v2708 = vpop.f32.mrb[0].mxu0
          %2709 = vmatprep.mubr.bf16.mxu0 %v1738
          %2710 = vmatmul.mubr.bf16.gmra.mrb[0].mxu0 %v1737
          %v2711 = vpop.f32.mrb[0].mxu0
          %v2712 = vadd.f32 %v731, %v2711
          %v2713 = vpop.f32.mrb[0].mxu0
          %v2714 = vpop.f32.mrb[0].mxu0
          %v2715 = vadd.f32 %v731, %v2714
          %v2716 = vpop.f32.mrb[0].mxu0
          %2717 = vmatprep.mubr.bf16.mxu0 %v1742
          %2718 = vmatmul.mubr.bf16.gmra.mrb[0].mxu0 %v1741
          %v2719 = vpop.f32.mrb[0].mxu0
          %v2720 = vadd.f32 %v731, %v2719
          %v2721 = vpop.f32.mrb[0].mxu0
          %v2722 = vpop.f32.mrb[0].mxu0
          %v2723 = vadd.f32 %v731, %v2722
          %v2724 = vpop.f32.mrb[0].mxu0
          %2725 = vmatprep.mubr.bf16.mxu0 %v1746
          %2726 = vmatmul.mubr.bf16.gmra.mrb[0].mxu0 %v1745
          %v2727 = vpop.f32.mrb[0].mxu0
          %v2728 = vadd.f32 %v731, %v2727
          %v2729 = vpop.f32.mrb[0].mxu0
          %v2730 = vpop.f32.mrb[0].mxu0
          %v2731 = vadd.f32 %v731, %v2730
          %v2732 = vpop.f32.mrb[0].mxu0
          %2733 = vmatprep.mubr.bf16.mxu0 %v1750
          %2734 = vmatmul.mubr.bf16.gmra.mrb[0].mxu0 %v1749
          %v2735 = vpop.f32.mrb[0].mxu0
          %v2736 = vadd.f32 %v731, %v2735
          %v2737 = vpop.f32.mrb[0].mxu0
          %v2738 = vpop.f32.mrb[0].mxu0
          %v2739 = vadd.f32 %v731, %v2738
          %v2740 = vpop.f32.mrb[0].mxu0
          %2741 = vmatprep.mubr.bf16.mxu0 %v1754
          %2742 = vmatmul.mubr.bf16.gmra.mrb[0].mxu0 %v1753
          %v2743 = vpop.f32.mrb[0].mxu0
          %v2744 = vadd.f32 %v731, %v2743
          %v2745 = vpop.f32.mrb[0].mxu0
          %v2746 = vpop.f32.mrb[0].mxu0
          %v2747 = vadd.f32 %v731, %v2746
          %v2748 = vpop.f32.mrb[0].mxu0
          %2749 = vdwg.mxu0
          %2750 = vmatprep.subr.bf16.mxu0 0
          %2751 = vmatpush1.bf16.msra.mxu0 %v2157
          %2752 = vmatprep.subr.bf16.mxu0 0
          %2753 = vmatpush1.bf16.msra.mxu0 %v2158
          %2754 = vmatprep.subr.bf16.mxu0 0
          %2755 = vmatpush1.bf16.msra.mxu0 %v2159
          %2756 = vmatprep.subr.bf16.mxu0 0
          %2757 = vmatpush1.bf16.msra.mxu0 %v2160
          %2758 = vmatprep.subr.bf16.mxu0 0
          %2759 = vmatpush1.bf16.msra.mxu0 %v2161
          %2760 = vmatprep.subr.bf16.mxu0 0
          %2761 = vmatpush1.bf16.msra.mxu0 %v2162
          %2762 = vmatprep.subr.bf16.mxu0 0
          %2763 = vmatpush1.bf16.msra.mxu0 %v2163
          %2764 = vmatprep.subr.bf16.mxu0 0
          %2765 = vmatpush1.bf16.msra.mxu0 %v2164
          %2766 = vmatprep.subr.bf16.mxu0 0
          %2767 = vmatpush1.bf16.msra.mxu0 %v2165
          %2768 = vmatprep.subr.bf16.mxu0 0
          %2769 = vmatpush1.bf16.msra.mxu0 %v2166
          %2770 = vmatprep.subr.bf16.mxu0 0
          %2771 = vmatpush1.bf16.msra.mxu0 %v2167
          %2772 = vmatprep.subr.bf16.mxu0 0
          %2773 = vmatpush1.bf16.msra.mxu0 %v2168
          %2774 = vmatprep.subr.bf16.mxu0 0
          %2775 = vmatpush1.bf16.msra.mxu0 %v2169
          %2776 = vmatprep.subr.bf16.mxu0 0
          %2777 = vmatpush1.bf16.msra.mxu0 %v2170
          %2778 = vmatprep.subr.bf16.mxu0 0
          %2779 = vmatpush1.bf16.msra.mxu0 %v2171
          %2780 = vmatprep.subr.bf16.mxu0 0
          %2781 = vmatpush1.bf16.msra.mxu0 %v2172
          %2782 = vmatprep.mubr.bf16.mxu0 %v1504
          %2783 = vmatmul.mubr.bf16.gmra.mrb[0].mxu0 %v1503
          %v2784 = vpop.f32.mrb[0].mxu0
          %v2785 = vadd.f32 %v2240, %v2784
          %v2786 = vpop.f32.mrb[0].mxu0
          %v2787 = vpop.f32.mrb[0].mxu0
          %v2788 = vadd.f32 %v2243, %v2787
          %v2789 = vpop.f32.mrb[0].mxu0
          %2790 = vmatprep.mubr.bf16.mxu0 %v1508
          %2791 = vmatmul.mubr.bf16.gmra.mrb[0].mxu0 %v1507
          %v2792 = vpop.f32.mrb[0].mxu0
          %v2793 = vadd.f32 %v2248, %v2792
          %v2794 = vpop.f32.mrb[0].mxu0
          %v2795 = vpop.f32.mrb[0].mxu0
          %v2796 = vadd.f32 %v2251, %v2795
          %v2797 = vpop.f32.mrb[0].mxu0
          %2798 = vmatprep.mubr.bf16.mxu0 %v1512
          %2799 = vmatmul.mubr.bf16.gmra.mrb[0].mxu0 %v1511
          %v2800 = vpop.f32.mrb[0].mxu0
          %v2801 = vadd.f32 %v2256, %v2800
          %v2802 = vpop.f32.mrb[0].mxu0
          %v2803 = vpop.f32.mrb[0].mxu0
          %v2804 = vadd.f32 %v2259, %v2803
          %v2805 = vpop.f32.mrb[0].mxu0
          %2806 = vmatprep.mubr.bf16.mxu0 %v1516
          %2807 = vmatmul.mubr.bf16.gmra.mrb[0].mxu0 %v1515
          %v2808 = vpop.f32.mrb[0].mxu0
          %v2809 = vadd.f32 %v2264, %v2808
          %v2810 = vpop.f32.mrb[0].mxu0
          %v2811 = vpop.f32.mrb[0].mxu0
          %v2812 = vadd.f32 %v2267, %v2811
          %v2813 = vpop.f32.mrb[0].mxu0
          %2814 = vmatprep.mubr.bf16.mxu0 %v1520
          %2815 = vmatmul.mubr.bf16.gmra.mrb[0].mxu0 %v1519
          %v2816 = vpop.f32.mrb[0].mxu0
          %v2817 = vadd.f32 %v2272, %v2816
          %v2818 = vpop.f32.mrb[0].mxu0
          %v2819 = vpop.f32.mrb[0].mxu0
          %v2820 = vadd.f32 %v2275, %v2819
          %v2821 = vpop.f32.mrb[0].mxu0
          %2822 = vmatprep.mubr.bf16.mxu0 %v1524
          %2823 = vmatmul.mubr.bf16.gmra.mrb[0].mxu0 %v1523
          %v2824 = vpop.f32.mrb[0].mxu0
          %v2825 = vadd.f32 %v2280, %v2824
          %v2826 = vpop.f32.mrb[0].mxu0
          %v2827 = vpop.f32.mrb[0].mxu0
          %v2828 = vadd.f32 %v2283, %v2827
          %v2829 = vpop.f32.mrb[0].mxu0
          %2830 = vmatprep.mubr.bf16.mxu0 %v1528
          %2831 = vmatmul.mubr.bf16.gmra.mrb[0].mxu0 %v1527
          %v2832 = vpop.f32.mrb[0].mxu0
          %v2833 = vadd.f32 %v2288, %v2832
          %v2834 = vpop.f32.mrb[0].mxu0
          %v2835 = vpop.f32.mrb[0].mxu0
          %v2836 = vadd.f32 %v2291, %v2835
          %v2837 = vpop.f32.mrb[0].mxu0
          %2838 = vmatprep.mubr.bf16.mxu0 %v1532
          %2839 = vmatmul.mubr.bf16.gmra.mrb[0].mxu0 %v1531
          %v2840 = vpop.f32.mrb[0].mxu0
          %v2841 = vadd.f32 %v2296, %v2840
          %v2842 = vpop.f32.mrb[0].mxu0
          %v2843 = vpop.f32.mrb[0].mxu0
          %v2844 = vadd.f32 %v2299, %v2843
          %v2845 = vpop.f32.mrb[0].mxu0
          %2846 = vmatprep.mubr.bf16.mxu0 %v1536
          %2847 = vmatmul.mubr.bf16.gmra.mrb[0].mxu0 %v1535
          %v2848 = vpop.f32.mrb[0].mxu0
          %v2849 = vadd.f32 %v2304, %v2848
          %v2850 = vpop.f32.mrb[0].mxu0
          %v2851 = vpop.f32.mrb[0].mxu0
          %v2852 = vadd.f32 %v2307, %v2851
          %v2853 = vpop.f32.mrb[0].mxu0
          %2854 = vmatprep.mubr.bf16.mxu0 %v1540
          %2855 = vmatmul.mubr.bf16.gmra.mrb[0].mxu0 %v1539
          %v2856 = vpop.f32.mrb[0].mxu0
          %v2857 = vadd.f32 %v2312, %v2856
          %v2858 = vpop.f32.mrb[0].mxu0
          %v2859 = vpop.f32.mrb[0].mxu0
          %v2860 = vadd.f32 %v2315, %v2859
          %v2861 = vpop.f32.mrb[0].mxu0
          %2862 = vmatprep.mubr.bf16.mxu0 %v1544
          %2863 = vmatmul.mubr.bf16.gmra.mrb[0].mxu0 %v1543
          %v2864 = vpop.f32.mrb[0].mxu0
          %v2865 = vadd.f32 %v2320, %v2864
          %v2866 = vpop.f32.mrb[0].mxu0
          %v2867 = vpop.f32.mrb[0].mxu0
          %v2868 = vadd.f32 %v2323, %v2867
          %v2869 = vpop.f32.mrb[0].mxu0
          %2870 = vmatprep.mubr.bf16.mxu0 %v1548
          %2871 = vmatmul.mubr.bf16.gmra.mrb[0].mxu0 %v1547
          %v2872 = vpop.f32.mrb[0].mxu0
          %v2873 = vadd.f32 %v2328, %v2872
          %v2874 = vpop.f32.mrb[0].mxu0
          %v2875 = vpop.f32.mrb[0].mxu0
          %v2876 = vadd.f32 %v2331, %v2875
          %v2877 = vpop.f32.mrb[0].mxu0
          %2878 = vmatprep.mubr.bf16.mxu0 %v1552
          %2879 = vmatmul.mubr.bf16.gmra.mrb[0].mxu0 %v1551
          %v2880 = vpop.f32.mrb[0].mxu0
          %v2881 = vadd.f32 %v2336, %v2880
          %v2882 = vpop.f32.mrb[0].mxu0
          %v2883 = vpop.f32.mrb[0].mxu0
          %v2884 = vadd.f32 %v2339, %v2883
          %v2885 = vpop.f32.mrb[0].mxu0
          %2886 = vmatprep.mubr.bf16.mxu0 %v1556
          %2887 = vmatmul.mubr.bf16.gmra.mrb[0].mxu0 %v1555
          %v2888 = vpop.f32.mrb[0].mxu0
          %v2889 = vadd.f32 %v2344, %v2888
          %v2890 = vpop.f32.mrb[0].mxu0
          %v2891 = vpop.f32.mrb[0].mxu0
          %v2892 = vadd.f32 %v2347, %v2891
          %v2893 = vpop.f32.mrb[0].mxu0
          %2894 = vmatprep.mubr.bf16.mxu0 %v1560
          %2895 = vmatmul.mubr.bf16.gmra.mrb[0].mxu0 %v1559
          %v2896 = vpop.f32.mrb[0].mxu0
          %v2897 = vadd.f32 %v2352, %v2896
          %v2898 = vpop.f32.mrb[0].mxu0
          %v2899 = vpop.f32.mrb[0].mxu0
          %v2900 = vadd.f32 %v2355, %v2899
          %v2901 = vpop.f32.mrb[0].mxu0
          %2902 = vmatprep.mubr.bf16.mxu0 %v1564
          %2903 = vmatmul.mubr.bf16.gmra.mrb[0].mxu0 %v1563
          %v2904 = vpop.f32.mrb[0].mxu0
          %v2905 = vadd.f32 %v2360, %v2904
          %v2906 = vpop.f32.mrb[0].mxu0
          %v2907 = vpop.f32.mrb[0].mxu0
          %v2908 = vadd.f32 %v2363, %v2907
          %v2909 = vpop.f32.mrb[0].mxu0
          %2910 = vmatprep.mubr.bf16.mxu0 %v1568
          %2911 = vmatmul.mubr.bf16.gmra.mrb[0].mxu0 %v1567
          %v2912 = vpop.f32.mrb[0].mxu0
          %v2913 = vadd.f32 %v2368, %v2912
          %v2914 = vpop.f32.mrb[0].mxu0
          %v2915 = vpop.f32.mrb[0].mxu0
          %v2916 = vadd.f32 %v2371, %v2915
          %v2917 = vpop.f32.mrb[0].mxu0
          %2918 = vmatprep.mubr.bf16.mxu0 %v1572
          %2919 = vmatmul.mubr.bf16.gmra.mrb[0].mxu0 %v1571
          %v2920 = vpop.f32.mrb[0].mxu0
          %v2921 = vadd.f32 %v2376, %v2920
          %v2922 = vpop.f32.mrb[0].mxu0
          %v2923 = vpop.f32.mrb[0].mxu0
          %v2924 = vadd.f32 %v2379, %v2923
          %v2925 = vpop.f32.mrb[0].mxu0
          %2926 = vmatprep.mubr.bf16.mxu0 %v1576
          %2927 = vmatmul.mubr.bf16.gmra.mrb[0].mxu0 %v1575
          %v2928 = vpop.f32.mrb[0].mxu0
          %v2929 = vadd.f32 %v2384, %v2928
          %v2930 = vpop.f32.mrb[0].mxu0
          %v2931 = vpop.f32.mrb[0].mxu0
          %v2932 = vadd.f32 %v2387, %v2931
          %v2933 = vpop.f32.mrb[0].mxu0
          %2934 = vmatprep.mubr.bf16.mxu0 %v1580
          %2935 = vmatmul.mubr.bf16.gmra.mrb[0].mxu0 %v1579
          %v2936 = vpop.f32.mrb[0].mxu0
          %v2937 = vadd.f32 %v2392, %v2936
          %v2938 = vpop.f32.mrb[0].mxu0
          %v2939 = vpop.f32.mrb[0].mxu0
          %v2940 = vadd.f32 %v2395, %v2939
          %v2941 = vpop.f32.mrb[0].mxu0
          %2942 = vmatprep.mubr.bf16.mxu0 %v1584
          %2943 = vmatmul.mubr.bf16.gmra.mrb[0].mxu0 %v1583
          %v2944 = vpop.f32.mrb[0].mxu0
          %v2945 = vadd.f32 %v2400, %v2944
          %v2946 = vpop.f32.mrb[0].mxu0
          %v2947 = vpop.f32.mrb[0].mxu0
          %v2948 = vadd.f32 %v2403, %v2947
          %v2949 = vpop.f32.mrb[0].mxu0
          %2950 = vmatprep.mubr.bf16.mxu0 %v1588
          %2951 = vmatmul.mubr.bf16.gmra.mrb[0].mxu0 %v1587
          %v2952 = vpop.f32.mrb[0].mxu0
          %v2953 = vadd.f32 %v2408, %v2952
          %v2954 = vpop.f32.mrb[0].mxu0
          %v2955 = vpop.f32.mrb[0].mxu0
          %v2956 = vadd.f32 %v2411, %v2955
          %v2957 = vpop.f32.mrb[0].mxu0
          %2958 = vmatprep.mubr.bf16.mxu0 %v1592
          %2959 = vmatmul.mubr.bf16.gmra.mrb[0].mxu0 %v1591
          %v2960 = vpop.f32.mrb[0].mxu0
          %v2961 = vadd.f32 %v2416, %v2960
          %v2962 = vpop.f32.mrb[0].mxu0
          %v2963 = vpop.f32.mrb[0].mxu0
          %v2964 = vadd.f32 %v2419, %v2963
          %v2965 = vpop.f32.mrb[0].mxu0
          %2966 = vmatprep.mubr.bf16.mxu0 %v1596
          %2967 = vmatmul.mubr.bf16.gmra.mrb[0].mxu0 %v1595
          %v2968 = vpop.f32.mrb[0].mxu0
          %v2969 = vadd.f32 %v2424, %v2968
          %v2970 = vpop.f32.mrb[0].mxu0
          %v2971 = vpop.f32.mrb[0].mxu0
          %v2972 = vadd.f32 %v2427, %v2971
          %v2973 = vpop.f32.mrb[0].mxu0
          %2974 = vmatprep.mubr.bf16.mxu0 %v1600
          %2975 = vmatmul.mubr.bf16.gmra.mrb[0].mxu0 %v1599
          %v2976 = vpop.f32.mrb[0].mxu0
          %v2977 = vadd.f32 %v2432, %v2976
          %v2978 = vpop.f32.mrb[0].mxu0
          %v2979 = vpop.f32.mrb[0].mxu0
          %v2980 = vadd.f32 %v2435, %v2979
          %v2981 = vpop.f32.mrb[0].mxu0
          %2982 = vmatprep.mubr.bf16.mxu0 %v1604
          %2983 = vmatmul.mubr.bf16.gmra.mrb[0].mxu0 %v1603
          %v2984 = vpop.f32.mrb[0].mxu0
          %v2985 = vadd.f32 %v2440, %v2984
          %v2986 = vpop.f32.mrb[0].mxu0
          %v2987 = vpop.f32.mrb[0].mxu0
          %v2988 = vadd.f32 %v2443, %v2987
          %v2989 = vpop.f32.mrb[0].mxu0
          %2990 = vmatprep.mubr.bf16.mxu0 %v1608
          %2991 = vmatmul.mubr.bf16.gmra.mrb[0].mxu0 %v1607
          %v2992 = vpop.f32.mrb[0].mxu0
          %v2993 = vadd.f32 %v2448, %v2992
          %v2994 = vpop.f32.mrb[0].mxu0
          %v2995 = vpop.f32.mrb[0].mxu0
          %v2996 = vadd.f32 %v2451, %v2995
          %v2997 = vpop.f32.mrb[0].mxu0
          %2998 = vmatprep.mubr.bf16.mxu0 %v1612
          %2999 = vmatmul.mubr.bf16.gmra.mrb[0].mxu0 %v1611
          %v3000 = vpop.f32.mrb[0].mxu0
          %v3001 = vadd.f32 %v2456, %v3000
          %v3002 = vpop.f32.mrb[0].mxu0
          %v3003 = vpop.f32.mrb[0].mxu0
          %v3004 = vadd.f32 %v2459, %v3003
          %v3005 = vpop.f32.mrb[0].mxu0
          %3006 = vmatprep.mubr.bf16.mxu0 %v1616
          %3007 = vmatmul.mubr.bf16.gmra.mrb[0].mxu0 %v1615
          %v3008 = vpop.f32.mrb[0].mxu0
          %v3009 = vadd.f32 %v2464, %v3008
          %v3010 = vpop.f32.mrb[0].mxu0
          %v3011 = vpop.f32.mrb[0].mxu0
          %v3012 = vadd.f32 %v2467, %v3011
          %v3013 = vpop.f32.mrb[0].mxu0
          %3014 = vmatprep.mubr.bf16.mxu0 %v1620
          %3015 = vmatmul.mubr.bf16.gmra.mrb[0].mxu0 %v1619
          %v3016 = vpop.f32.mrb[0].mxu0
          %v3017 = vadd.f32 %v2472, %v3016
          %v3018 = vpop.f32.mrb[0].mxu0
          %v3019 = vpop.f32.mrb[0].mxu0
          %v3020 = vadd.f32 %v2475, %v3019
          %v3021 = vpop.f32.mrb[0].mxu0
          %3022 = vmatprep.mubr.bf16.mxu0 %v1624
          %3023 = vmatmul.mubr.bf16.gmra.mrb[0].mxu0 %v1623
          %v3024 = vpop.f32.mrb[0].mxu0
          %v3025 = vadd.f32 %v2480, %v3024
          %v3026 = vpop.f32.mrb[0].mxu0
          %v3027 = vpop.f32.mrb[0].mxu0
          %v3028 = vadd.f32 %v2483, %v3027
          %v3029 = vpop.f32.mrb[0].mxu0
          %3030 = vmatprep.mubr.bf16.mxu0 %v1628
          %3031 = vmatmul.mubr.bf16.gmra.mrb[0].mxu0 %v1627
          %v3032 = vpop.f32.mrb[0].mxu0
          %v3033 = vadd.f32 %v2488, %v3032
          %v3034 = vpop.f32.mrb[0].mxu0
          %v3035 = vpop.f32.mrb[0].mxu0
          %v3036 = vadd.f32 %v2491, %v3035
          %v3037 = vpop.f32.mrb[0].mxu0
          %3038 = vmatprep.mubr.bf16.mxu0 %v1632
          %3039 = vmatmul.mubr.bf16.gmra.mrb[0].mxu0 %v1631
          %v3040 = vpop.f32.mrb[0].mxu0
          %v3041 = vadd.f32 %v2496, %v3040
          %v3042 = vpop.f32.mrb[0].mxu0
          %v3043 = vpop.f32.mrb[0].mxu0
          %v3044 = vadd.f32 %v2499, %v3043
          %v3045 = vpop.f32.mrb[0].mxu0
          %3046 = vmatprep.mubr.bf16.mxu0 %v1636
          %3047 = vmatmul.mubr.bf16.gmra.mrb[0].mxu0 %v1635
          %v3048 = vpop.f32.mrb[0].mxu0
          %v3049 = vadd.f32 %v2504, %v3048
          %v3050 = vpop.f32.mrb[0].mxu0
          %v3051 = vpop.f32.mrb[0].mxu0
          %v3052 = vadd.f32 %v2507, %v3051
          %v3053 = vpop.f32.mrb[0].mxu0
          %3054 = vmatprep.mubr.bf16.mxu0 %v1640
          %3055 = vmatmul.mubr.bf16.gmra.mrb[0].mxu0 %v1639
          %v3056 = vpop.f32.mrb[0].mxu0
          %v3057 = vadd.f32 %v2512, %v3056
          %v3058 = vpop.f32.mrb[0].mxu0
          %v3059 = vpop.f32.mrb[0].mxu0
          %v3060 = vadd.f32 %v2515, %v3059
          %v3061 = vpop.f32.mrb[0].mxu0
          %3062 = vmatprep.mubr.bf16.mxu0 %v1644
          %3063 = vmatmul.mubr.bf16.gmra.mrb[0].mxu0 %v1643
          %v3064 = vpop.f32.mrb[0].mxu0
          %v3065 = vadd.f32 %v2520, %v3064
          %v3066 = vpop.f32.mrb[0].mxu0
          %v3067 = vpop.f32.mrb[0].mxu0
          %v3068 = vadd.f32 %v2523, %v3067
          %v3069 = vpop.f32.mrb[0].mxu0
          %3070 = vmatprep.mubr.bf16.mxu0 %v1648
          %3071 = vmatmul.mubr.bf16.gmra.mrb[0].mxu0 %v1647
          %v3072 = vpop.f32.mrb[0].mxu0
          %v3073 = vadd.f32 %v2528, %v3072
          %v3074 = vpop.f32.mrb[0].mxu0
          %v3075 = vpop.f32.mrb[0].mxu0
          %v3076 = vadd.f32 %v2531, %v3075
          %v3077 = vpop.f32.mrb[0].mxu0
          %3078 = vmatprep.mubr.bf16.mxu0 %v1652
          %3079 = vmatmul.mubr.bf16.gmra.mrb[0].mxu0 %v1651
          %v3080 = vpop.f32.mrb[0].mxu0
          %v3081 = vadd.f32 %v2536, %v3080
          %v3082 = vpop.f32.mrb[0].mxu0
          %v3083 = vpop.f32.mrb[0].mxu0
          %v3084 = vadd.f32 %v2539, %v3083
          %v3085 = vpop.f32.mrb[0].mxu0
          %3086 = vmatprep.mubr.bf16.mxu0 %v1656
          %3087 = vmatmul.mubr.bf16.gmra.mrb[0].mxu0 %v1655
          %v3088 = vpop.f32.mrb[0].mxu0
          %v3089 = vadd.f32 %v2544, %v3088
          %v3090 = vpop.f32.mrb[0].mxu0
          %v3091 = vpop.f32.mrb[0].mxu0
          %v3092 = vadd.f32 %v2547, %v3091
          %v3093 = vpop.f32.mrb[0].mxu0
          %3094 = vmatprep.mubr.bf16.mxu0 %v1660
          %3095 = vmatmul.mubr.bf16.gmra.mrb[0].mxu0 %v1659
          %v3096 = vpop.f32.mrb[0].mxu0
          %v3097 = vadd.f32 %v2552, %v3096
          %v3098 = vpop.f32.mrb[0].mxu0
          %v3099 = vpop.f32.mrb[0].mxu0
          %v3100 = vadd.f32 %v2555, %v3099
          %v3101 = vpop.f32.mrb[0].mxu0
          %3102 = vmatprep.mubr.bf16.mxu0 %v1664
          %3103 = vmatmul.mubr.bf16.gmra.mrb[0].mxu0 %v1663
          %v3104 = vpop.f32.mrb[0].mxu0
          %v3105 = vadd.f32 %v2560, %v3104
          %v3106 = vpop.f32.mrb[0].mxu0
          %v3107 = vpop.f32.mrb[0].mxu0
          %v3108 = vadd.f32 %v2563, %v3107
          %v3109 = vpop.f32.mrb[0].mxu0
          %3110 = vmatprep.mubr.bf16.mxu0 %v1668
          %3111 = vmatmul.mubr.bf16.gmra.mrb[0].mxu0 %v1667
          %v3112 = vpop.f32.mrb[0].mxu0
          %v3113 = vadd.f32 %v2568, %v3112
          %v3114 = vpop.f32.mrb[0].mxu0
          %v3115 = vpop.f32.mrb[0].mxu0
          %v3116 = vadd.f32 %v2571, %v3115
          %v3117 = vpop.f32.mrb[0].mxu0
          %3118 = vmatprep.mubr.bf16.mxu0 %v1672
          %3119 = vmatmul.mubr.bf16.gmra.mrb[0].mxu0 %v1671
          %v3120 = vpop.f32.mrb[0].mxu0
          %v3121 = vadd.f32 %v2576, %v3120
          %v3122 = vpop.f32.mrb[0].mxu0
          %v3123 = vpop.f32.mrb[0].mxu0
          %v3124 = vadd.f32 %v2579, %v3123
          %v3125 = vpop.f32.mrb[0].mxu0
          %3126 = vmatprep.mubr.bf16.mxu0 %v1676
          %3127 = vmatmul.mubr.bf16.gmra.mrb[0].mxu0 %v1675
          %v3128 = vpop.f32.mrb[0].mxu0
          %v3129 = vadd.f32 %v2584, %v3128
          %v3130 = vpop.f32.mrb[0].mxu0
          %v3131 = vpop.f32.mrb[0].mxu0
          %v3132 = vadd.f32 %v2587, %v3131
          %v3133 = vpop.f32.mrb[0].mxu0
          %3134 = vmatprep.mubr.bf16.mxu0 %v1680
          %3135 = vmatmul.mubr.bf16.gmra.mrb[0].mxu0 %v1679
          %v3136 = vpop.f32.mrb[0].mxu0
          %v3137 = vadd.f32 %v2592, %v3136
          %v3138 = vpop.f32.mrb[0].mxu0
          %v3139 = vpop.f32.mrb[0].mxu0
          %v3140 = vadd.f32 %v2595, %v3139
          %v3141 = vpop.f32.mrb[0].mxu0
          %3142 = vmatprep.mubr.bf16.mxu0 %v1684
          %3143 = vmatmul.mubr.bf16.gmra.mrb[0].mxu0 %v1683
          %v3144 = vpop.f32.mrb[0].mxu0
          %v3145 = vadd.f32 %v2600, %v3144
          %v3146 = vpop.f32.mrb[0].mxu0
          %v3147 = vpop.f32.mrb[0].mxu0
          %v3148 = vadd.f32 %v2603, %v3147
          %v3149 = vpop.f32.mrb[0].mxu0
          %3150 = vmatprep.mubr.bf16.mxu0 %v1688
          %3151 = vmatmul.mubr.bf16.gmra.mrb[0].mxu0 %v1687
          %v3152 = vpop.f32.mrb[0].mxu0
          %v3153 = vadd.f32 %v2608, %v3152
          %v3154 = vpop.f32.mrb[0].mxu0
          %v3155 = vpop.f32.mrb[0].mxu0
          %v3156 = vadd.f32 %v2611, %v3155
          %v3157 = vpop.f32.mrb[0].mxu0
          %3158 = vmatprep.mubr.bf16.mxu0 %v1692
          %3159 = vmatmul.mubr.bf16.gmra.mrb[0].mxu0 %v1691
          %v3160 = vpop.f32.mrb[0].mxu0
          %v3161 = vadd.f32 %v2616, %v3160
          %v3162 = vpop.f32.mrb[0].mxu0
          %v3163 = vpop.f32.mrb[0].mxu0
          %v3164 = vadd.f32 %v2619, %v3163
          %v3165 = vpop.f32.mrb[0].mxu0
          %3166 = vmatprep.mubr.bf16.mxu0 %v1696
          %3167 = vmatmul.mubr.bf16.gmra.mrb[0].mxu0 %v1695
          %v3168 = vpop.f32.mrb[0].mxu0
          %v3169 = vadd.f32 %v2624, %v3168
          %v3170 = vpop.f32.mrb[0].mxu0
          %v3171 = vpop.f32.mrb[0].mxu0
          %v3172 = vadd.f32 %v2627, %v3171
          %v3173 = vpop.f32.mrb[0].mxu0
          %3174 = vmatprep.mubr.bf16.mxu0 %v1700
          %3175 = vmatmul.mubr.bf16.gmra.mrb[0].mxu0 %v1699
          %v3176 = vpop.f32.mrb[0].mxu0
          %v3177 = vadd.f32 %v2632, %v3176
          %v3178 = vpop.f32.mrb[0].mxu0
          %v3179 = vpop.f32.mrb[0].mxu0
          %v3180 = vadd.f32 %v2635, %v3179
          %v3181 = vpop.f32.mrb[0].mxu0
          %3182 = vmatprep.mubr.bf16.mxu0 %v1704
          %3183 = vmatmul.mubr.bf16.gmra.mrb[0].mxu0 %v1703
          %v3184 = vpop.f32.mrb[0].mxu0
          %v3185 = vadd.f32 %v2640, %v3184
          %v3186 = vpop.f32.mrb[0].mxu0
          %v3187 = vpop.f32.mrb[0].mxu0
          %v3188 = vadd.f32 %v2643, %v3187
          %v3189 = vpop.f32.mrb[0].mxu0
          %3190 = vmatprep.mubr.bf16.mxu0 %v1708
          %3191 = vmatmul.mubr.bf16.gmra.mrb[0].mxu0 %v1707
          %v3192 = vpop.f32.mrb[0].mxu0
          %v3193 = vadd.f32 %v2648, %v3192
          %v3194 = vpop.f32.mrb[0].mxu0
          %v3195 = vpop.f32.mrb[0].mxu0
          %v3196 = vadd.f32 %v2651, %v3195
          %v3197 = vpop.f32.mrb[0].mxu0
          %3198 = vmatprep.mubr.bf16.mxu0 %v1712
          %3199 = vmatmul.mubr.bf16.gmra.mrb[0].mxu0 %v1711
          %v3200 = vpop.f32.mrb[0].mxu0
          %v3201 = vadd.f32 %v2656, %v3200
          %v3202 = vpop.f32.mrb[0].mxu0
          %v3203 = vpop.f32.mrb[0].mxu0
          %v3204 = vadd.f32 %v2659, %v3203
          %v3205 = vpop.f32.mrb[0].mxu0
          %3206 = vmatprep.mubr.bf16.mxu0 %v1716
          %3207 = vmatmul.mubr.bf16.gmra.mrb[0].mxu0 %v1715
          %v3208 = vpop.f32.mrb[0].mxu0
          %v3209 = vadd.f32 %v2664, %v3208
          %v3210 = vpop.f32.mrb[0].mxu0
          %v3211 = vpop.f32.mrb[0].mxu0
          %v3212 = vadd.f32 %v2667, %v3211
          %v3213 = vpop.f32.mrb[0].mxu0
          %3214 = vmatprep.mubr.bf16.mxu0 %v1720
          %3215 = vmatmul.mubr.bf16.gmra.mrb[0].mxu0 %v1719
          %v3216 = vpop.f32.mrb[0].mxu0
          %v3217 = vadd.f32 %v2672, %v3216
          %v3218 = vpop.f32.mrb[0].mxu0
          %v3219 = vpop.f32.mrb[0].mxu0
          %v3220 = vadd.f32 %v2675, %v3219
          %v3221 = vpop.f32.mrb[0].mxu0
          %3222 = vmatprep.mubr.bf16.mxu0 %v1724
          %3223 = vmatmul.mubr.bf16.gmra.mrb[0].mxu0 %v1723
          %v3224 = vpop.f32.mrb[0].mxu0
          %v3225 = vadd.f32 %v2680, %v3224
          %v3226 = vpop.f32.mrb[0].mxu0
          %v3227 = vpop.f32.mrb[0].mxu0
          %v3228 = vadd.f32 %v2683, %v3227
          %v3229 = vpop.f32.mrb[0].mxu0
          %3230 = vmatprep.mubr.bf16.mxu0 %v1728
          %3231 = vmatmul.mubr.bf16.gmra.mrb[0].mxu0 %v1727
          %v3232 = vpop.f32.mrb[0].mxu0
          %v3233 = vadd.f32 %v2688, %v3232
          %v3234 = vpop.f32.mrb[0].mxu0
          %v3235 = vpop.f32.mrb[0].mxu0
          %v3236 = vadd.f32 %v2691, %v3235
          %v3237 = vpop.f32.mrb[0].mxu0
          %3238 = vmatprep.mubr.bf16.mxu0 %v1732
          %3239 = vmatmul.mubr.bf16.gmra.mrb[0].mxu0 %v1731
          %v3240 = vpop.f32.mrb[0].mxu0
          %v3241 = vadd.f32 %v2696, %v3240
          %v3242 = vpop.f32.mrb[0].mxu0
          %v3243 = vpop.f32.mrb[0].mxu0
          %v3244 = vadd.f32 %v2699, %v3243
          %v3245 = vpop.f32.mrb[0].mxu0
          %3246 = vmatprep.mubr.bf16.mxu0 %v1736
          %3247 = vmatmul.mubr.bf16.gmra.mrb[0].mxu0 %v1735
          %v3248 = vpop.f32.mrb[0].mxu0
          %v3249 = vadd.f32 %v2704, %v3248
          %v3250 = vpop.f32.mrb[0].mxu0
          %v3251 = vpop.f32.mrb[0].mxu0
          %v3252 = vadd.f32 %v2707, %v3251
          %v3253 = vpop.f32.mrb[0].mxu0
          %3254 = vmatprep.mubr.bf16.mxu0 %v1740
          %3255 = vmatmul.mubr.bf16.gmra.mrb[0].mxu0 %v1739
          %v3256 = vpop.f32.mrb[0].mxu0
          %v3257 = vadd.f32 %v2712, %v3256
          %v3258 = vpop.f32.mrb[0].mxu0
          %v3259 = vpop.f32.mrb[0].mxu0
          %v3260 = vadd.f32 %v2715, %v3259
          %v3261 = vpop.f32.mrb[0].mxu0
          %3262 = vmatprep.mubr.bf16.mxu0 %v1744
          %3263 = vmatmul.mubr.bf16.gmra.mrb[0].mxu0 %v1743
          %v3264 = vpop.f32.mrb[0].mxu0
          %v3265 = vadd.f32 %v2720, %v3264
          %v3266 = vpop.f32.mrb[0].mxu0
          %v3267 = vpop.f32.mrb[0].mxu0
          %v3268 = vadd.f32 %v2723, %v3267
          %v3269 = vpop.f32.mrb[0].mxu0
          %3270 = vmatprep.mubr.bf16.mxu0 %v1748
          %3271 = vmatmul.mubr.bf16.gmra.mrb[0].mxu0 %v1747
          %v3272 = vpop.f32.mrb[0].mxu0
          %v3273 = vadd.f32 %v2728, %v3272
          %v3274 = vpop.f32.mrb[0].mxu0
          %v3275 = vpop.f32.mrb[0].mxu0
          %v3276 = vadd.f32 %v2731, %v3275
          %v3277 = vpop.f32.mrb[0].mxu0
          %3278 = vmatprep.mubr.bf16.mxu0 %v1752
          %3279 = vmatmul.mubr.bf16.gmra.mrb[0].mxu0 %v1751
          %v3280 = vpop.f32.mrb[0].mxu0
          %v3281 = vadd.f32 %v2736, %v3280
          %v3282 = vpop.f32.mrb[0].mxu0
          %v3283 = vpop.f32.mrb[0].mxu0
          %v3284 = vadd.f32 %v2739, %v3283
          %v3285 = vpop.f32.mrb[0].mxu0
          %3286 = vmatprep.mubr.bf16.mxu0 %v1756
          %3287 = vmatmul.mubr.bf16.gmra.mrb[0].mxu0 %v1755
          %v3288 = vpop.f32.mrb[0].mxu0
          %v3289 = vadd.f32 %v2744, %v3288
          %v3290 = vpop.f32.mrb[0].mxu0
          %v3291 = vpop.f32.mrb[0].mxu0
          %v3292 = vadd.f32 %v2747, %v3291
          %v3293 = vpop.f32.mrb[0].mxu0
          %3294 = vdwg.mxu0
          %p3295 = scmp.eq.s32.totalorder %s29, 0
          // Predicated region
          $region69: #{tpu_custom_call.1} parent=67 // pred_check
            %p3296 = pneg %p3295
          $region70: #{tpu_custom_call.1} parent=67 // pred_check_branch
            %3298 = sbr.rel (%p3296) target = $region72
          $region71: #{tpu_custom_call.1} parent=67 // pred_region
            %v3299 = vadd.f32 %v2785, %v2788
            %v3300 = vadd.f32 %v3299, %v2793
            %v3301 = vadd.f32 %v3300, %v2796
            %v3302 = vadd.f32 %v3301, %v2801
            %v3303 = vadd.f32 %v3302, %v2804
            %v3304 = vadd.f32 %v3303, %v2809
            %v3305 = vadd.f32 %v3304, %v2812
            %v3306 = vadd.f32 %v3305, %v2817
            %v3307 = vadd.f32 %v3306, %v2820
            %v3308 = vadd.f32 %v3307, %v2825
            %v3309 = vadd.f32 %v3308, %v2828
            %v3310 = vadd.f32 %v3309, %v2833
            %v3311 = vadd.f32 %v3310, %v2836
            %v3312 = vadd.f32 %v3311, %v2841
            %v3313 = vadd.f32 %v3312, %v2844
            %v3314 = vadd.f32 %v3313, %v2849
            %v3315 = vadd.f32 %v3314, %v2852
            %v3316 = vadd.f32 %v3315, %v2857
            %v3317 = vadd.f32 %v3316, %v2860
            %v3318 = vadd.f32 %v3317, %v2865
            %v3319 = vadd.f32 %v3318, %v2868
            %v3320 = vadd.f32 %v3319, %v2873
            %v3321 = vadd.f32 %v3320, %v2876
            %v3322 = vadd.f32 %v3321, %v2881
            %v3323 = vadd.f32 %v3322, %v2884
            %v3324 = vadd.f32 %v3323, %v2889
            %v3325 = vadd.f32 %v3324, %v2892
            %v3326 = vadd.f32 %v3325, %v2897
            %v3327 = vadd.f32 %v3326, %v2900
            %v3328 = vadd.f32 %v3327, %v2905
            %v3329 = vadd.f32 %v3328, %v2908
            %v3330 = vadd.f32 %v3329, %v2913
            %v3331 = vadd.f32 %v3330, %v2916
            %v3332 = vadd.f32 %v3331, %v2921
            %v3333 = vadd.f32 %v3332, %v2924
            %v3334 = vadd.f32 %v3333, %v2929
            %v3335 = vadd.f32 %v3334, %v2932
            %v3336 = vadd.f32 %v3335, %v2937
            %v3337 = vadd.f32 %v3336, %v2940
            %v3338 = vadd.f32 %v3337, %v2945
            %v3339 = vadd.f32 %v3338, %v2948
            %v3340 = vadd.f32 %v3339, %v2953
            %v3341 = vadd.f32 %v3340, %v2956
            %v3342 = vadd.f32 %v3341, %v2961
            %v3343 = vadd.f32 %v3342, %v2964
            %v3344 = vadd.f32 %v3343, %v2969
            %v3345 = vadd.f32 %v3344, %v2972
            %v3346 = vadd.f32 %v3345, %v2977
            %v3347 = vadd.f32 %v3346, %v2980
            %v3348 = vadd.f32 %v3347, %v2985
            %v3349 = vadd.f32 %v3348, %v2988
            %v3350 = vadd.f32 %v3349, %v2993
            %v3351 = vadd.f32 %v3350, %v2996
            %v3352 = vadd.f32 %v3351, %v3001
            %v3353 = vadd.f32 %v3352, %v3004
            %v3354 = vadd.f32 %v3353, %v3009
            %v3355 = vadd.f32 %v3354, %v3012
            %v3356 = vadd.f32 %v3355, %v3017
            %v3357 = vadd.f32 %v3356, %v3020
            %v3358 = vadd.f32 %v3357, %v3025
            %v3359 = vadd.f32 %v3358, %v3028
            %v3360 = vadd.f32 %v3359, %v3033
            %v3361 = vadd.f32 %v3360, %v3036
            %v3362 = vadd.f32 %v3361, %v3041
            %v3363 = vadd.f32 %v3362, %v3044
            %v3364 = vadd.f32 %v3363, %v3049
            %v3365 = vadd.f32 %v3364, %v3052
            %v3366 = vadd.f32 %v3365, %v3057
            %v3367 = vadd.f32 %v3366, %v3060
            %v3368 = vadd.f32 %v3367, %v3065
            %v3369 = vadd.f32 %v3368, %v3068
            %v3370 = vadd.f32 %v3369, %v3073
            %v3371 = vadd.f32 %v3370, %v3076
            %v3372 = vadd.f32 %v3371, %v3081
            %v3373 = vadd.f32 %v3372, %v3084
            %v3374 = vadd.f32 %v3373, %v3089
            %v3375 = vadd.f32 %v3374, %v3092
            %v3376 = vadd.f32 %v3375, %v3097
            %v3377 = vadd.f32 %v3376, %v3100
            %v3378 = vadd.f32 %v3377, %v3105
            %v3379 = vadd.f32 %v3378, %v3108
            %v3380 = vadd.f32 %v3379, %v3113
            %v3381 = vadd.f32 %v3380, %v3116
            %v3382 = vadd.f32 %v3381, %v3121
            %v3383 = vadd.f32 %v3382, %v3124
            %v3384 = vadd.f32 %v3383, %v3129
            %v3385 = vadd.f32 %v3384, %v3132
            %v3386 = vadd.f32 %v3385, %v3137
            %v3387 = vadd.f32 %v3386, %v3140
            %v3388 = vadd.f32 %v3387, %v3145
            %v3389 = vadd.f32 %v3388, %v3148
            %v3390 = vadd.f32 %v3389, %v3153
            %v3391 = vadd.f32 %v3390, %v3156
            %v3392 = vadd.f32 %v3391, %v3161
            %v3393 = vadd.f32 %v3392, %v3164
            %v3394 = vadd.f32 %v3393, %v3169
            %v3395 = vadd.f32 %v3394, %v3172
            %v3396 = vadd.f32 %v3395, %v3177
            %v3397 = vadd.f32 %v3396, %v3180
            %v3398 = vadd.f32 %v3397, %v3185
            %v3399 = vadd.f32 %v3398, %v3188
            %v3400 = vadd.f32 %v3399, %v3193
            %v3401 = vadd.f32 %v3400, %v3196
            %v3402 = vadd.f32 %v3401, %v3201
            %v3403 = vadd.f32 %v3402, %v3204
            %v3404 = vadd.f32 %v3403, %v3209
            %v3405 = vadd.f32 %v3404, %v3212
            %v3406 = vadd.f32 %v3405, %v3217
            %v3407 = vadd.f32 %v3406, %v3220
            %v3408 = vadd.f32 %v3407, %v3225
            %v3409 = vadd.f32 %v3408, %v3228
            %v3410 = vadd.f32 %v3409, %v3233
            %v3411 = vadd.f32 %v3410, %v3236
            %v3412 = vadd.f32 %v3411, %v3241
            %v3413 = vadd.f32 %v3412, %v3244
            %v3414 = vadd.f32 %v3413, %v3249
            %v3415 = vadd.f32 %v3414, %v3252
            %v3416 = vadd.f32 %v3415, %v3257
            %v3417 = vadd.f32 %v3416, %v3260
            %v3418 = vadd.f32 %v3417, %v3265
            %v3419 = vadd.f32 %v3418, %v3268
            %v3420 = vadd.f32 %v3419, %v3273
            %v3421 = vadd.f32 %v3420, %v3276
            %v3422 = vadd.f32 %v3421, %v3281
            %v3423 = vadd.f32 %v3422, %v3284
            %v3424 = vadd.f32 %v3423, %v3289
            %v3425 = vadd.f32 %v3424, %v3292
            %v3426 = vrot.slane %v3425, 4
            %v3427 = vadd.f32 %v3425, %v3426
            %v3428 = vrot.slane %v3427, 2
            %v3429 = vadd.f32 %v3427, %v3428
            %v3430 = vrot.slane %v3429, 1
            %v3431 = vadd.f32 %v3429, %v3430
            %v3432 = vrcp.pop 1024.0
            %v3433 = vmul.f32 %v3431, %v3432
            %3434 = vst [vmem:[#allocation8] sm:$0x1] %v3433
            %3435 = vst [vmem:[#allocation4] sm:$0x1] 0.0
            %3436 = vst [vmem:[#allocation5] sm:$0x1] 0.0
            %vm3437 = vcmask 516096
            %3438 = vst.msk [vmem:[#allocation6] sm:$0x1] %vm3437, 0.0
            %3439 = vst.msk [vmem:[#allocation7] sm:$0x1] %vm3437, 0.0
          $region72: #{tpu_custom_call.1} parent=67 // pred_fallthru
            _
          %v3440 = vld [vmem:[#allocation8] sm:$0x1]
          %v3442 = vlaneseq
          %v3443 = vshrl.u32 %v3442, 7
          %v3444 = vsub.s32 0, %v3443
          %v3445 = vrot.slane %v3440, %v3444
          %v3447 = vsub.f32 %v2785, %v3445
          %v3448 = vsub.f32 %v2788, %v3445
          %v3449 = vsub.f32 %v2793, %v3445
          %v3450 = vsub.f32 %v2796, %v3445
          %v3451 = vsub.f32 %v2801, %v3445
          %v3452 = vsub.f32 %v2804, %v3445
          %v3453 = vsub.f32 %v2809, %v3445
          %v3454 = vsub.f32 %v2812, %v3445
          %v3455 = vsub.f32 %v2817, %v3445
          %v3456 = vsub.f32 %v2820, %v3445
          %v3457 = vsub.f32 %v2825, %v3445
          %v3458 = vsub.f32 %v2828, %v3445
          %v3459 = vsub.f32 %v2833, %v3445
          %v3460 = vsub.f32 %v2836, %v3445
          %v3461 = vsub.f32 %v2841, %v3445
          %v3462 = vsub.f32 %v2844, %v3445
          %v3463 = vsub.f32 %v2849, %v3445
          %v3464 = vsub.f32 %v2852, %v3445
          %v3465 = vsub.f32 %v2857, %v3445
          %v3466 = vsub.f32 %v2860, %v3445
          %v3467 = vsub.f32 %v2865, %v3445
          %v3468 = vsub.f32 %v2868, %v3445
          %v3469 = vsub.f32 %v2873, %v3445
          %v3470 = vsub.f32 %v2876, %v3445
          %v3471 = vsub.f32 %v2881, %v3445
          %v3472 = vsub.f32 %v2884, %v3445
          %v3473 = vsub.f32 %v2889, %v3445
          %v3474 = vsub.f32 %v2892, %v3445
          %v3475 = vsub.f32 %v2897, %v3445
          %v3476 = vsub.f32 %v2900, %v3445
          %v3477 = vsub.f32 %v2905, %v3445
          %v3478 = vsub.f32 %v2908, %v3445
          %v3479 = vsub.f32 %v2913, %v3445
          %v3480 = vsub.f32 %v2916, %v3445
          %v3481 = vsub.f32 %v2921, %v3445
          %v3482 = vsub.f32 %v2924, %v3445
          %v3483 = vsub.f32 %v2929, %v3445
          %v3484 = vsub.f32 %v2932, %v3445
          %v3485 = vsub.f32 %v2937, %v3445
          %v3486 = vsub.f32 %v2940, %v3445
          %v3487 = vsub.f32 %v2945, %v3445
          %v3488 = vsub.f32 %v2948, %v3445
          %v3489 = vsub.f32 %v2953, %v3445
          %v3490 = vsub.f32 %v2956, %v3445
          %v3491 = vsub.f32 %v2961, %v3445
          %v3492 = vsub.f32 %v2964, %v3445
          %v3493 = vsub.f32 %v2969, %v3445
          %v3494 = vsub.f32 %v2972, %v3445
          %v3495 = vsub.f32 %v2977, %v3445
          %v3496 = vsub.f32 %v2980, %v3445
          %v3497 = vsub.f32 %v2985, %v3445
          %v3498 = vsub.f32 %v2988, %v3445
          %v3499 = vsub.f32 %v2993, %v3445
          %v3500 = vsub.f32 %v2996, %v3445
          %v3501 = vsub.f32 %v3001, %v3445
          %v3502 = vsub.f32 %v3004, %v3445
          %v3503 = vsub.f32 %v3009, %v3445
          %v3504 = vsub.f32 %v3012, %v3445
          %v3505 = vsub.f32 %v3017, %v3445
          %v3506 = vsub.f32 %v3020, %v3445
          %v3507 = vsub.f32 %v3025, %v3445
          %v3508 = vsub.f32 %v3028, %v3445
          %v3509 = vsub.f32 %v3033, %v3445
          %v3510 = vsub.f32 %v3036, %v3445
          %v3511 = vsub.f32 %v3041, %v3445
          %v3512 = vsub.f32 %v3044, %v3445
          %v3513 = vsub.f32 %v3049, %v3445
          %v3514 = vsub.f32 %v3052, %v3445
          %v3515 = vsub.f32 %v3057, %v3445
          %v3516 = vsub.f32 %v3060, %v3445
          %v3517 = vsub.f32 %v3065, %v3445
          %v3518 = vsub.f32 %v3068, %v3445
          %v3519 = vsub.f32 %v3073, %v3445
          %v3520 = vsub.f32 %v3076, %v3445
          %v3521 = vsub.f32 %v3081, %v3445
          %v3522 = vsub.f32 %v3084, %v3445
          %v3523 = vsub.f32 %v3089, %v3445
          %v3524 = vsub.f32 %v3092, %v3445
          %v3525 = vsub.f32 %v3097, %v3445
          %v3526 = vsub.f32 %v3100, %v3445
          %v3527 = vsub.f32 %v3105, %v3445
          %v3528 = vsub.f32 %v3108, %v3445
          %v3529 = vsub.f32 %v3113, %v3445
          %v3530 = vsub.f32 %v3116, %v3445
          %v3531 = vsub.f32 %v3121, %v3445
          %v3532 = vsub.f32 %v3124, %v3445
          %v3533 = vsub.f32 %v3129, %v3445
          %v3534 = vsub.f32 %v3132, %v3445
          %v3535 = vsub.f32 %v3137, %v3445
          %v3536 = vsub.f32 %v3140, %v3445
          %v3537 = vsub.f32 %v3145, %v3445
          %v3538 = vsub.f32 %v3148, %v3445
          %v3539 = vsub.f32 %v3153, %v3445
          %v3540 = vsub.f32 %v3156, %v3445
          %v3541 = vsub.f32 %v3161, %v3445
          %v3542 = vsub.f32 %v3164, %v3445
          %v3543 = vsub.f32 %v3169, %v3445
          %v3544 = vsub.f32 %v3172, %v3445
          %v3545 = vsub.f32 %v3177, %v3445
          %v3546 = vsub.f32 %v3180, %v3445
          %v3547 = vsub.f32 %v3185, %v3445
          %v3548 = vsub.f32 %v3188, %v3445
          %v3549 = vsub.f32 %v3193, %v3445
          %v3550 = vsub.f32 %v3196, %v3445
          %v3551 = vsub.f32 %v3201, %v3445
          %v3552 = vsub.f32 %v3204, %v3445
          %v3553 = vsub.f32 %v3209, %v3445
          %v3554 = vsub.f32 %v3212, %v3445
          %v3555 = vsub.f32 %v3217, %v3445
          %v3556 = vsub.f32 %v3220, %v3445
          %v3557 = vsub.f32 %v3225, %v3445
          %v3558 = vsub.f32 %v3228, %v3445
          %v3559 = vsub.f32 %v3233, %v3445
          %v3560 = vsub.f32 %v3236, %v3445
          %v3561 = vsub.f32 %v3241, %v3445
          %v3562 = vsub.f32 %v3244, %v3445
          %v3563 = vsub.f32 %v3249, %v3445
          %v3564 = vsub.f32 %v3252, %v3445
          %v3565 = vsub.f32 %v3257, %v3445
          %v3566 = vsub.f32 %v3260, %v3445
          %v3567 = vsub.f32 %v3265, %v3445
          %v3568 = vsub.f32 %v3268, %v3445
          %v3569 = vsub.f32 %v3273, %v3445
          %v3570 = vsub.f32 %v3276, %v3445
          %v3571 = vsub.f32 %v3281, %v3445
          %v3572 = vsub.f32 %v3284, %v3445
          %v3573 = vsub.f32 %v3289, %v3445
          %v3574 = vsub.f32 %v3292, %v3445
          %v3575 = vld [vmem:[#allocation4] sm:$0x1]
          %v3576 = vadd.f32 %v3447, %v3448
          %v3577 = vadd.f32 %v3576, %v3449
          %v3578 = vadd.f32 %v3577, %v3450
          %v3579 = vadd.f32 %v3578, %v3451
          %v3580 = vadd.f32 %v3579, %v3452
          %v3581 = vadd.f32 %v3580, %v3453
          %v3582 = vadd.f32 %v3581, %v3454
          %v3583 = vadd.f32 %v3582, %v3455
          %v3584 = vadd.f32 %v3583, %v3456
          %v3585 = vadd.f32 %v3584, %v3457
          %v3586 = vadd.f32 %v3585, %v3458
          %v3587 = vadd.f32 %v3586, %v3459
          %v3588 = vadd.f32 %v3587, %v3460
          %v3589 = vadd.f32 %v3588, %v3461
          %v3590 = vadd.f32 %v3589, %v3462
          %v3591 = vadd.f32 %v3590, %v3463
          %v3592 = vadd.f32 %v3591, %v3464
          %v3593 = vadd.f32 %v3592, %v3465
          %v3594 = vadd.f32 %v3593, %v3466
          %v3595 = vadd.f32 %v3594, %v3467
          %v3596 = vadd.f32 %v3595, %v3468
          %v3597 = vadd.f32 %v3596, %v3469
          %v3598 = vadd.f32 %v3597, %v3470
          %v3599 = vadd.f32 %v3598, %v3471
          %v3600 = vadd.f32 %v3599, %v3472
          %v3601 = vadd.f32 %v3600, %v3473
          %v3602 = vadd.f32 %v3601, %v3474
          %v3603 = vadd.f32 %v3602, %v3475
          %v3604 = vadd.f32 %v3603, %v3476
          %v3605 = vadd.f32 %v3604, %v3477
          %v3606 = vadd.f32 %v3605, %v3478
          %v3607 = vadd.f32 %v3606, %v3479
          %v3608 = vadd.f32 %v3607, %v3480
          %v3609 = vadd.f32 %v3608, %v3481
          %v3610 = vadd.f32 %v3609, %v3482
          %v3611 = vadd.f32 %v3610, %v3483
          %v3612 = vadd.f32 %v3611, %v3484
          %v3613 = vadd.f32 %v3612, %v3485
          %v3614 = vadd.f32 %v3613, %v3486
          %v3615 = vadd.f32 %v3614, %v3487
          %v3616 = vadd.f32 %v3615, %v3488
          %v3617 = vadd.f32 %v3616, %v3489
          %v3618 = vadd.f32 %v3617, %v3490
          %v3619 = vadd.f32 %v3618, %v3491
          %v3620 = vadd.f32 %v3619, %v3492
          %v3621 = vadd.f32 %v3620, %v3493
          %v3622 = vadd.f32 %v3621, %v3494
          %v3623 = vadd.f32 %v3622, %v3495
          %v3624 = vadd.f32 %v3623, %v3496
          %v3625 = vadd.f32 %v3624, %v3497
          %v3626 = vadd.f32 %v3625, %v3498
          %v3627 = vadd.f32 %v3626, %v3499
          %v3628 = vadd.f32 %v3627, %v3500
          %v3629 = vadd.f32 %v3628, %v3501
          %v3630 = vadd.f32 %v3629, %v3502
          %v3631 = vadd.f32 %v3630, %v3503
          %v3632 = vadd.f32 %v3631, %v3504
          %v3633 = vadd.f32 %v3632, %v3505
          %v3634 = vadd.f32 %v3633, %v3506
          %v3635 = vadd.f32 %v3634, %v3507
          %v3636 = vadd.f32 %v3635, %v3508
          %v3637 = vadd.f32 %v3636, %v3509
          %v3638 = vadd.f32 %v3637, %v3510
          %v3639 = vadd.f32 %v3638, %v3511
          %v3640 = vadd.f32 %v3639, %v3512
          %v3641 = vadd.f32 %v3640, %v3513
          %v3642 = vadd.f32 %v3641, %v3514
          %v3643 = vadd.f32 %v3642, %v3515
          %v3644 = vadd.f32 %v3643, %v3516
          %v3645 = vadd.f32 %v3644, %v3517
          %v3646 = vadd.f32 %v3645, %v3518
          %v3647 = vadd.f32 %v3646, %v3519
          %v3648 = vadd.f32 %v3647, %v3520
          %v3649 = vadd.f32 %v3648, %v3521
          %v3650 = vadd.f32 %v3649, %v3522
          %v3651 = vadd.f32 %v3650, %v3523
          %v3652 = vadd.f32 %v3651, %v3524
          %v3653 = vadd.f32 %v3652, %v3525
          %v3654 = vadd.f32 %v3653, %v3526
          %v3655 = vadd.f32 %v3654, %v3527
          %v3656 = vadd.f32 %v3655, %v3528
          %v3657 = vadd.f32 %v3656, %v3529
          %v3658 = vadd.f32 %v3657, %v3530
          %v3659 = vadd.f32 %v3658, %v3531
          %v3660 = vadd.f32 %v3659, %v3532
          %v3661 = vadd.f32 %v3660, %v3533
          %v3662 = vadd.f32 %v3661, %v3534
          %v3663 = vadd.f32 %v3662, %v3535
          %v3664 = vadd.f32 %v3663, %v3536
          %v3665 = vadd.f32 %v3664, %v3537
          %v3666 = vadd.f32 %v3665, %v3538
          %v3667 = vadd.f32 %v3666, %v3539
          %v3668 = vadd.f32 %v3667, %v3540
          %v3669 = vadd.f32 %v3668, %v3541
          %v3670 = vadd.f32 %v3669, %v3542
          %v3671 = vadd.f32 %v3670, %v3543
          %v3672 = vadd.f32 %v3671, %v3544
          %v3673 = vadd.f32 %v3672, %v3545
          %v3674 = vadd.f32 %v3673, %v3546
          %v3675 = vadd.f32 %v3674, %v3547
          %v3676 = vadd.f32 %v3675, %v3548
          %v3677 = vadd.f32 %v3676, %v3549
          %v3678 = vadd.f32 %v3677, %v3550
          %v3679 = vadd.f32 %v3678, %v3551
          %v3680 = vadd.f32 %v3679, %v3552
          %v3681 = vadd.f32 %v3680, %v3553
          %v3682 = vadd.f32 %v3681, %v3554
          %v3683 = vadd.f32 %v3682, %v3555
          %v3684 = vadd.f32 %v3683, %v3556
          %v3685 = vadd.f32 %v3684, %v3557
          %v3686 = vadd.f32 %v3685, %v3558
          %v3687 = vadd.f32 %v3686, %v3559
          %v3688 = vadd.f32 %v3687, %v3560
          %v3689 = vadd.f32 %v3688, %v3561
          %v3690 = vadd.f32 %v3689, %v3562
          %v3691 = vadd.f32 %v3690, %v3563
          %v3692 = vadd.f32 %v3691, %v3564
          %v3693 = vadd.f32 %v3692, %v3565
          %v3694 = vadd.f32 %v3693, %v3566
          %v3695 = vadd.f32 %v3694, %v3567
          %v3696 = vadd.f32 %v3695, %v3568
          %v3697 = vadd.f32 %v3696, %v3569
          %v3698 = vadd.f32 %v3697, %v3570
          %v3699 = vadd.f32 %v3698, %v3571
          %v3700 = vadd.f32 %v3699, %v3572
          %v3701 = vadd.f32 %v3700, %v3573
          %v3702 = vadd.f32 %v3701, %v3574
          %v3703 = vrot.slane %v3702, 4
          %v3704 = vadd.f32 %v3702, %v3703
          %v3705 = vrot.slane %v3704, 2
          %v3706 = vadd.f32 %v3704, %v3705
          %v3707 = vrot.slane %v3706, 1
          %v3708 = vadd.f32 %v3706, %v3707
          %v3709 = vadd.f32 %v3575, %v3708
          %3710 = vst [vmem:[#allocation4] sm:$0x1] %v3709
          %v3711 = vld [vmem:[#allocation5] sm:$0x1]
          %v3712 = vmul.f32 %v3447, %v3447
          %v3713 = vmul.f32 %v3448, %v3448
          %v3714 = vmul.f32 %v3449, %v3449
          %v3715 = vmul.f32 %v3450, %v3450
          %v3716 = vmul.f32 %v3451, %v3451
          %v3717 = vmul.f32 %v3452, %v3452
          %v3718 = vmul.f32 %v3453, %v3453
          %v3719 = vmul.f32 %v3454, %v3454
          %v3720 = vmul.f32 %v3455, %v3455
          %v3721 = vmul.f32 %v3456, %v3456
          %v3722 = vmul.f32 %v3457, %v3457
          %v3723 = vmul.f32 %v3458, %v3458
          %v3724 = vmul.f32 %v3459, %v3459
          %v3725 = vmul.f32 %v3460, %v3460
          %v3726 = vmul.f32 %v3461, %v3461
          %v3727 = vmul.f32 %v3462, %v3462
          %v3728 = vmul.f32 %v3463, %v3463
          %v3729 = vmul.f32 %v3464, %v3464
          %v3730 = vmul.f32 %v3465, %v3465
          %v3731 = vmul.f32 %v3466, %v3466
          %v3732 = vmul.f32 %v3467, %v3467
          %v3733 = vmul.f32 %v3468, %v3468
          %v3734 = vmul.f32 %v3469, %v3469
          %v3735 = vmul.f32 %v3470, %v3470
          %v3736 = vmul.f32 %v3471, %v3471
          %v3737 = vmul.f32 %v3472, %v3472
          %v3738 = vmul.f32 %v3473, %v3473
          %v3739 = vmul.f32 %v3474, %v3474
          %v3740 = vmul.f32 %v3475, %v3475
          %v3741 = vmul.f32 %v3476, %v3476
          %v3742 = vmul.f32 %v3477, %v3477
          %v3743 = vmul.f32 %v3478, %v3478
          %v3744 = vmul.f32 %v3479, %v3479
          %v3745 = vmul.f32 %v3480, %v3480
          %v3746 = vmul.f32 %v3481, %v3481
          %v3747 = vmul.f32 %v3482, %v3482
          %v3748 = vmul.f32 %v3483, %v3483
          %v3749 = vmul.f32 %v3484, %v3484
          %v3750 = vmul.f32 %v3485, %v3485
          %v3751 = vmul.f32 %v3486, %v3486
          %v3752 = vmul.f32 %v3487, %v3487
          %v3753 = vmul.f32 %v3488, %v3488
          %v3754 = vmul.f32 %v3489, %v3489
          %v3755 = vmul.f32 %v3490, %v3490
          %v3756 = vmul.f32 %v3491, %v3491
          %v3757 = vmul.f32 %v3492, %v3492
          %v3758 = vmul.f32 %v3493, %v3493
          %v3759 = vmul.f32 %v3494, %v3494
          %v3760 = vmul.f32 %v3495, %v3495
          %v3761 = vmul.f32 %v3496, %v3496
          %v3762 = vmul.f32 %v3497, %v3497
          %v3763 = vmul.f32 %v3498, %v3498
          %v3764 = vmul.f32 %v3499, %v3499
          %v3765 = vmul.f32 %v3500, %v3500
          %v3766 = vmul.f32 %v3501, %v3501
          %v3767 = vmul.f32 %v3502, %v3502
          %v3768 = vmul.f32 %v3503, %v3503
          %v3769 = vmul.f32 %v3504, %v3504
          %v3770 = vmul.f32 %v3505, %v3505
          %v3771 = vmul.f32 %v3506, %v3506
          %v3772 = vmul.f32 %v3507, %v3507
          %v3773 = vmul.f32 %v3508, %v3508
          %v3774 = vmul.f32 %v3509, %v3509
          %v3775 = vmul.f32 %v3510, %v3510
          %v3776 = vmul.f32 %v3511, %v3511
          %v3777 = vmul.f32 %v3512, %v3512
          %v3778 = vmul.f32 %v3513, %v3513
          %v3779 = vmul.f32 %v3514, %v3514
          %v3780 = vmul.f32 %v3515, %v3515
          %v3781 = vmul.f32 %v3516, %v3516
          %v3782 = vmul.f32 %v3517, %v3517
          %v3783 = vmul.f32 %v3518, %v3518
          %v3784 = vmul.f32 %v3519, %v3519
          %v3785 = vmul.f32 %v3520, %v3520
          %v3786 = vmul.f32 %v3521, %v3521
          %v3787 = vmul.f32 %v3522, %v3522
          %v3788 = vmul.f32 %v3523, %v3523
          %v3789 = vmul.f32 %v3524, %v3524
          %v3790 = vmul.f32 %v3525, %v3525
          %v3791 = vmul.f32 %v3526, %v3526
          %v3792 = vmul.f32 %v3527, %v3527
          %v3793 = vmul.f32 %v3528, %v3528
          %v3794 = vmul.f32 %v3529, %v3529
          %v3795 = vmul.f32 %v3530, %v3530
          %v3796 = vmul.f32 %v3531, %v3531
          %v3797 = vmul.f32 %v3532, %v3532
          %v3798 = vmul.f32 %v3533, %v3533
          %v3799 = vmul.f32 %v3534, %v3534
          %v3800 = vmul.f32 %v3535, %v3535
          %v3801 = vmul.f32 %v3536, %v3536
          %v3802 = vmul.f32 %v3537, %v3537
          %v3803 = vmul.f32 %v3538, %v3538
          %v3804 = vmul.f32 %v3539, %v3539
          %v3805 = vmul.f32 %v3540, %v3540
          %v3806 = vmul.f32 %v3541, %v3541
          %v3807 = vmul.f32 %v3542, %v3542
          %v3808 = vmul.f32 %v3543, %v3543
          %v3809 = vmul.f32 %v3544, %v3544
          %v3810 = vmul.f32 %v3545, %v3545
          %v3811 = vmul.f32 %v3546, %v3546
          %v3812 = vmul.f32 %v3547, %v3547
          %v3813 = vmul.f32 %v3548, %v3548
          %v3814 = vmul.f32 %v3549, %v3549
          %v3815 = vmul.f32 %v3550, %v3550
          %v3816 = vmul.f32 %v3551, %v3551
          %v3817 = vmul.f32 %v3552, %v3552
          %v3818 = vmul.f32 %v3553, %v3553
          %v3819 = vmul.f32 %v3554, %v3554
          %v3820 = vmul.f32 %v3555, %v3555
          %v3821 = vmul.f32 %v3556, %v3556
          %v3822 = vmul.f32 %v3557, %v3557
          %v3823 = vmul.f32 %v3558, %v3558
          %v3824 = vmul.f32 %v3559, %v3559
          %v3825 = vmul.f32 %v3560, %v3560
          %v3826 = vmul.f32 %v3561, %v3561
          %v3827 = vmul.f32 %v3562, %v3562
          %v3828 = vmul.f32 %v3563, %v3563
          %v3829 = vmul.f32 %v3564, %v3564
          %v3830 = vmul.f32 %v3565, %v3565
          %v3831 = vmul.f32 %v3566, %v3566
          %v3832 = vmul.f32 %v3567, %v3567
          %v3833 = vmul.f32 %v3568, %v3568
          %v3834 = vmul.f32 %v3569, %v3569
          %v3835 = vmul.f32 %v3570, %v3570
          %v3836 = vmul.f32 %v3571, %v3571
          %v3837 = vmul.f32 %v3572, %v3572
          %v3838 = vmul.f32 %v3573, %v3573
          %v3839 = vmul.f32 %v3574, %v3574
          %v3840 = vadd.f32 %v3712, %v3713
          %v3841 = vadd.f32 %v3840, %v3714
          %v3842 = vadd.f32 %v3841, %v3715
          %v3843 = vadd.f32 %v3842, %v3716
          %v3844 = vadd.f32 %v3843, %v3717
          %v3845 = vadd.f32 %v3844, %v3718
          %v3846 = vadd.f32 %v3845, %v3719
          %v3847 = vadd.f32 %v3846, %v3720
          %v3848 = vadd.f32 %v3847, %v3721
          %v3849 = vadd.f32 %v3848, %v3722
          %v3850 = vadd.f32 %v3849, %v3723
          %v3851 = vadd.f32 %v3850, %v3724
          %v3852 = vadd.f32 %v3851, %v3725
          %v3853 = vadd.f32 %v3852, %v3726
          %v3854 = vadd.f32 %v3853, %v3727
          %v3855 = vadd.f32 %v3854, %v3728
          %v3856 = vadd.f32 %v3855, %v3729
          %v3857 = vadd.f32 %v3856, %v3730
          %v3858 = vadd.f32 %v3857, %v3731
          %v3859 = vadd.f32 %v3858, %v3732
          %v3860 = vadd.f32 %v3859, %v3733
          %v3861 = vadd.f32 %v3860, %v3734
          %v3862 = vadd.f32 %v3861, %v3735
          %v3863 = vadd.f32 %v3862, %v3736
          %v3864 = vadd.f32 %v3863, %v3737
          %v3865 = vadd.f32 %v3864, %v3738
          %v3866 = vadd.f32 %v3865, %v3739
          %v3867 = vadd.f32 %v3866, %v3740
          %v3868 = vadd.f32 %v3867, %v3741
          %v3869 = vadd.f32 %v3868, %v3742
          %v3870 = vadd.f32 %v3869, %v3743
          %v3871 = vadd.f32 %v3870, %v3744
          %v3872 = vadd.f32 %v3871, %v3745
          %v3873 = vadd.f32 %v3872, %v3746
          %v3874 = vadd.f32 %v3873, %v3747
          %v3875 = vadd.f32 %v3874, %v3748
          %v3876 = vadd.f32 %v3875, %v3749
          %v3877 = vadd.f32 %v3876, %v3750
          %v3878 = vadd.f32 %v3877, %v3751
          %v3879 = vadd.f32 %v3878, %v3752
          %v3880 = vadd.f32 %v3879, %v3753
          %v3881 = vadd.f32 %v3880, %v3754
          %v3882 = vadd.f32 %v3881, %v3755
          %v3883 = vadd.f32 %v3882, %v3756
          %v3884 = vadd.f32 %v3883, %v3757
          %v3885 = vadd.f32 %v3884, %v3758
          %v3886 = vadd.f32 %v3885, %v3759
          %v3887 = vadd.f32 %v3886, %v3760
          %v3888 = vadd.f32 %v3887, %v3761
          %v3889 = vadd.f32 %v3888, %v3762
          %v3890 = vadd.f32 %v3889, %v3763
          %v3891 = vadd.f32 %v3890, %v3764
          %v3892 = vadd.f32 %v3891, %v3765
          %v3893 = vadd.f32 %v3892, %v3766
          %v3894 = vadd.f32 %v3893, %v3767
          %v3895 = vadd.f32 %v3894, %v3768
          %v3896 = vadd.f32 %v3895, %v3769
          %v3897 = vadd.f32 %v3896, %v3770
          %v3898 = vadd.f32 %v3897, %v3771
          %v3899 = vadd.f32 %v3898, %v3772
          %v3900 = vadd.f32 %v3899, %v3773
          %v3901 = vadd.f32 %v3900, %v3774
          %v3902 = vadd.f32 %v3901, %v3775
          %v3903 = vadd.f32 %v3902, %v3776
          %v3904 = vadd.f32 %v3903, %v3777
          %v3905 = vadd.f32 %v3904, %v3778
          %v3906 = vadd.f32 %v3905, %v3779
          %v3907 = vadd.f32 %v3906, %v3780
          %v3908 = vadd.f32 %v3907, %v3781
          %v3909 = vadd.f32 %v3908, %v3782
          %v3910 = vadd.f32 %v3909, %v3783
          %v3911 = vadd.f32 %v3910, %v3784
          %v3912 = vadd.f32 %v3911, %v3785
          %v3913 = vadd.f32 %v3912, %v3786
          %v3914 = vadd.f32 %v3913, %v3787
          %v3915 = vadd.f32 %v3914, %v3788
          %v3916 = vadd.f32 %v3915, %v3789
          %v3917 = vadd.f32 %v3916, %v3790
          %v3918 = vadd.f32 %v3917, %v3791
          %v3919 = vadd.f32 %v3918, %v3792
          %v3920 = vadd.f32 %v3919, %v3793
          %v3921 = vadd.f32 %v3920, %v3794
          %v3922 = vadd.f32 %v3921, %v3795
          %v3923 = vadd.f32 %v3922, %v3796
          %v3924 = vadd.f32 %v3923, %v3797
          %v3925 = vadd.f32 %v3924, %v3798
          %v3926 = vadd.f32 %v3925, %v3799
          %v3927 = vadd.f32 %v3926, %v3800
          %v3928 = vadd.f32 %v3927, %v3801
          %v3929 = vadd.f32 %v3928, %v3802
          %v3930 = vadd.f32 %v3929, %v3803
          %v3931 = vadd.f32 %v3930, %v3804
          %v3932 = vadd.f32 %v3931, %v3805
          %v3933 = vadd.f32 %v3932, %v3806
          %v3934 = vadd.f32 %v3933, %v3807
          %v3935 = vadd.f32 %v3934, %v3808
          %v3936 = vadd.f32 %v3935, %v3809
          %v3937 = vadd.f32 %v3936, %v3810
          %v3938 = vadd.f32 %v3937, %v3811
          %v3939 = vadd.f32 %v3938, %v3812
          %v3940 = vadd.f32 %v3939, %v3813
          %v3941 = vadd.f32 %v3940, %v3814
          %v3942 = vadd.f32 %v3941, %v3815
          %v3943 = vadd.f32 %v3942, %v3816
          %v3944 = vadd.f32 %v3943, %v3817
          %v3945 = vadd.f32 %v3944, %v3818
          %v3946 = vadd.f32 %v3945, %v3819
          %v3947 = vadd.f32 %v3946, %v3820
          %v3948 = vadd.f32 %v3947, %v3821
          %v3949 = vadd.f32 %v3948, %v3822
          %v3950 = vadd.f32 %v3949, %v3823
          %v3951 = vadd.f32 %v3950, %v3824
          %v3952 = vadd.f32 %v3951, %v3825
          %v3953 = vadd.f32 %v3952, %v3826
          %v3954 = vadd.f32 %v3953, %v3827
          %v3955 = vadd.f32 %v3954, %v3828
          %v3956 = vadd.f32 %v3955, %v3829
          %v3957 = vadd.f32 %v3956, %v3830
          %v3958 = vadd.f32 %v3957, %v3831
          %v3959 = vadd.f32 %v3958, %v3832
          %v3960 = vadd.f32 %v3959, %v3833
          %v3961 = vadd.f32 %v3960, %v3834
          %v3962 = vadd.f32 %v3961, %v3835
          %v3963 = vadd.f32 %v3962, %v3836
          %v3964 = vadd.f32 %v3963, %v3837
          %v3965 = vadd.f32 %v3964, %v3838
          %v3966 = vadd.f32 %v3965, %v3839
          %v3967 = vrot.slane %v3966, 4
          %v3968 = vadd.f32 %v3966, %v3967
          %v3969 = vrot.slane %v3968, 2
          %v3970 = vadd.f32 %v3968, %v3969
          %v3971 = vrot.slane %v3970, 1
          %v3972 = vadd.f32 %v3970, %v3971
          %v3973 = vadd.f32 %v3711, %v3972
          %3974 = vst [vmem:[#allocation5] sm:$0x1] %v3973
          %v3975 = vpack.c.bf16 %v2788, %v2785
          %v3976 = vpack.c.bf16 %v2796, %v2793
          %v3977 = vpack.c.bf16 %v2804, %v2801
          %v3978 = vpack.c.bf16 %v2812, %v2809
          %v3979 = vpack.c.bf16 %v2820, %v2817
          %v3980 = vpack.c.bf16 %v2828, %v2825
          %v3981 = vpack.c.bf16 %v2836, %v2833
          %v3982 = vpack.c.bf16 %v2844, %v2841
          %v3983 = vpack.c.bf16 %v2852, %v2849
          %v3984 = vpack.c.bf16 %v2860, %v2857
          %v3985 = vpack.c.bf16 %v2868, %v2865
          %v3986 = vpack.c.bf16 %v2876, %v2873
          %v3987 = vpack.c.bf16 %v2884, %v2881
          %v3988 = vpack.c.bf16 %v2892, %v2889
          %v3989 = vpack.c.bf16 %v2900, %v2897
          %v3990 = vpack.c.bf16 %v2908, %v2905
          %v3991 = vpack.c.bf16 %v2916, %v2913
          %v3992 = vpack.c.bf16 %v2924, %v2921
          %v3993 = vpack.c.bf16 %v2932, %v2929
          %v3994 = vpack.c.bf16 %v2940, %v2937
          %v3995 = vpack.c.bf16 %v2948, %v2945
          %v3996 = vpack.c.bf16 %v2956, %v2953
          %v3997 = vpack.c.bf16 %v2964, %v2961
          %v3998 = vpack.c.bf16 %v2972, %v2969
          %v3999 = vpack.c.bf16 %v2980, %v2977
          %v4000 = vpack.c.bf16 %v2988, %v2985
          %v4001 = vpack.c.bf16 %v2996, %v2993
          %v4002 = vpack.c.bf16 %v3004, %v3001
          %v4003 = vpack.c.bf16 %v3012, %v3009
          %v4004 = vpack.c.bf16 %v3020, %v3017
          %v4005 = vpack.c.bf16 %v3028, %v3025
          %v4006 = vpack.c.bf16 %v3036, %v3033
          %v4007 = vpack.c.bf16 %v3044, %v3041
          %v4008 = vpack.c.bf16 %v3052, %v3049
          %v4009 = vpack.c.bf16 %v3060, %v3057
          %v4010 = vpack.c.bf16 %v3068, %v3065
          %v4011 = vpack.c.bf16 %v3076, %v3073
          %v4012 = vpack.c.bf16 %v3084, %v3081
          %v4013 = vpack.c.bf16 %v3092, %v3089
          %v4014 = vpack.c.bf16 %v3100, %v3097
          %v4015 = vpack.c.bf16 %v3108, %v3105
          %v4016 = vpack.c.bf16 %v3116, %v3113
          %v4017 = vpack.c.bf16 %v3124, %v3121
          %v4018 = vpack.c.bf16 %v3132, %v3129
          %v4019 = vpack.c.bf16 %v3140, %v3137
          %v4020 = vpack.c.bf16 %v3148, %v3145
          %v4021 = vpack.c.bf16 %v3156, %v3153
          %v4022 = vpack.c.bf16 %v3164, %v3161
          %v4023 = vpack.c.bf16 %v3172, %v3169
          %v4024 = vpack.c.bf16 %v3180, %v3177
          %v4025 = vpack.c.bf16 %v3188, %v3185
          %v4026 = vpack.c.bf16 %v3196, %v3193
          %v4027 = vpack.c.bf16 %v3204, %v3201
          %v4028 = vpack.c.bf16 %v3212, %v3209
          %v4029 = vpack.c.bf16 %v3220, %v3217
          %v4030 = vpack.c.bf16 %v3228, %v3225
          %v4031 = vpack.c.bf16 %v3236, %v3233
          %v4032 = vpack.c.bf16 %v3244, %v3241
          %v4033 = vpack.c.bf16 %v3252, %v3249
          %v4034 = vpack.c.bf16 %v3260, %v3257
          %v4035 = vpack.c.bf16 %v3268, %v3265
          %v4036 = vpack.c.bf16 %v3276, %v3273
          %v4037 = vpack.c.bf16 %v3284, %v3281
          %v4038 = vpack.c.bf16 %v3292, %v3289
          %s4039 = smul.u32 %s29, 64
          %s4040 = smul.addr %s4039, 8
          %s4041 = scalar_lea.vmem [#allocation2], %s4040
          %4042 = vst [vmem:[%s4041] sm:$0xff] %v3975
          %4043 = vst [vmem:[%s4041 + $0x8] sm:$0xff] %v3976
          %4044 = vst [vmem:[%s4041 + $0x10] sm:$0xff] %v3977
          %4045 = vst [vmem:[%s4041 + $0x18] sm:$0xff] %v3978
          %4046 = vst [vmem:[%s4041 + $0x20] sm:$0xff] %v3979
          %4047 = vst [vmem:[%s4041 + $0x28] sm:$0xff] %v3980
          %4048 = vst [vmem:[%s4041 + $0x30] sm:$0xff] %v3981
          %4049 = vst [vmem:[%s4041 + $0x38] sm:$0xff] %v3982
          %4050 = vst [vmem:[%s4041 + $0x40] sm:$0xff] %v3983
          %4051 = vst [vmem:[%s4041 + $0x48] sm:$0xff] %v3984
          %4052 = vst [vmem:[%s4041 + $0x50] sm:$0xff] %v3985
          %4053 = vst [vmem:[%s4041 + $0x58] sm:$0xff] %v3986
          %4054 = vst [vmem:[%s4041 + $0x60] sm:$0xff] %v3987
          %4055 = vst [vmem:[%s4041 + $0x68] sm:$0xff] %v3988
          %4056 = vst [vmem:[%s4041 + $0x70] sm:$0xff] %v3989
          %4057 = vst [vmem:[%s4041 + $0x78] sm:$0xff] %v3990
          %4058 = vst [vmem:[%s4041 + $0x80] sm:$0xff] %v3991
          %4059 = vst [vmem:[%s4041 + $0x88] sm:$0xff] %v3992
          %4060 = vst [vmem:[%s4041 + $0x90] sm:$0xff] %v3993
          %4061 = vst [vmem:[%s4041 + $0x98] sm:$0xff] %v3994
          %4062 = vst [vmem:[%s4041 + $0xa0] sm:$0xff] %v3995
          %4063 = vst [vmem:[%s4041 + $0xa8] sm:$0xff] %v3996
          %4064 = vst [vmem:[%s4041 + $0xb0] sm:$0xff] %v3997
          %4065 = vst [vmem:[%s4041 + $0xb8] sm:$0xff] %v3998
          %4066 = vst [vmem:[%s4041 + $0xc0] sm:$0xff] %v3999
          %4067 = vst [vmem:[%s4041 + $0xc8] sm:$0xff] %v4000
          %4068 = vst [vmem:[%s4041 + $0xd0] sm:$0xff] %v4001
          %4069 = vst [vmem:[%s4041 + $0xd8] sm:$0xff] %v4002
          %4070 = vst [vmem:[%s4041 + $0xe0] sm:$0xff] %v4003
          %4071 = vst [vmem:[%s4041 + $0xe8] sm:$0xff] %v4004
          %4072 = vst [vmem:[%s4041 + $0xf0] sm:$0xff] %v4005
          %4073 = vst [vmem:[%s4041 + $0xf8] sm:$0xff] %v4006
          %4074 = vst [vmem:[%s4041 + $0x100] sm:$0xff] %v4007
          %4075 = vst [vmem:[%s4041 + $0x108] sm:$0xff] %v4008
          %4076 = vst [vmem:[%s4041 + $0x110] sm:$0xff] %v4009
          %4077 = vst [vmem:[%s4041 + $0x118] sm:$0xff] %v4010
          %4078 = vst [vmem:[%s4041 + $0x120] sm:$0xff] %v4011
          %4079 = vst [vmem:[%s4041 + $0x128] sm:$0xff] %v4012
          %4080 = vst [vmem:[%s4041 + $0x130] sm:$0xff] %v4013
          %4081 = vst [vmem:[%s4041 + $0x138] sm:$0xff] %v4014
          %4082 = vst [vmem:[%s4041 + $0x140] sm:$0xff] %v4015
          %4083 = vst [vmem:[%s4041 + $0x148] sm:$0xff] %v4016
          %4084 = vst [vmem:[%s4041 + $0x150] sm:$0xff] %v4017
          %4085 = vst [vmem:[%s4041 + $0x158] sm:$0xff] %v4018
          %4086 = vst [vmem:[%s4041 + $0x160] sm:$0xff] %v4019
          %4087 = vst [vmem:[%s4041 + $0x168] sm:$0xff] %v4020
          %4088 = vst [vmem:[%s4041 + $0x170] sm:$0xff] %v4021
          %4089 = vst [vmem:[%s4041 + $0x178] sm:$0xff] %v4022
          %4090 = vst [vmem:[%s4041 + $0x180] sm:$0xff] %v4023
          %4091 = vst [vmem:[%s4041 + $0x188] sm:$0xff] %v4024
          %4092 = vst [vmem:[%s4041 + $0x190] sm:$0xff] %v4025
          %4093 = vst [vmem:[%s4041 + $0x198] sm:$0xff] %v4026
          %4094 = vst [vmem:[%s4041 + $0x1a0] sm:$0xff] %v4027
          %4095 = vst [vmem:[%s4041 + $0x1a8] sm:$0xff] %v4028
          %4096 = vst [vmem:[%s4041 + $0x1b0] sm:$0xff] %v4029
          %4097 = vst [vmem:[%s4041 + $0x1b8] sm:$0xff] %v4030
          %4098 = vst [vmem:[%s4041 + $0x1c0] sm:$0xff] %v4031
          %4099 = vst [vmem:[%s4041 + $0x1c8] sm:$0xff] %v4032
          %4100 = vst [vmem:[%s4041 + $0x1d0] sm:$0xff] %v4033
          %4101 = vst [vmem:[%s4041 + $0x1d8] sm:$0xff] %v4034
          %4102 = vst [vmem:[%s4041 + $0x1e0] sm:$0xff] %v4035
          %4103 = vst [vmem:[%s4041 + $0x1e8] sm:$0xff] %v4036
          %4104 = vst [vmem:[%s4041 + $0x1f0] sm:$0xff] %v4037
          %4105 = vst [vmem:[%s4041 + $0x1f8] sm:$0xff] %v4038
        $region68: #{tpu_custom_call.1} parent=55 // pred_fallthru
          _
        %p4106 = scmp.eq.s32.totalorder %s28, 1
        // Predicated region
        $region73: #{tpu_custom_call.1} parent=55 // pred_check
          %p4107 = pneg %p4106
        $region74: #{tpu_custom_call.1} parent=55 // pred_check_branch
          %4109 = sbr.rel (%p4107) target = $region76
        $region75: #{tpu_custom_call.1} parent=55 // pred_region
          %p4110 = scmp.eq.s32.totalorder %s29, 0
          // Predicated region
          $region77: #{tpu_custom_call.1} parent=75 // pred_check
            %p4111 = pneg %p4110
          $region78: #{tpu_custom_call.1} parent=75 // pred_check_branch
            %4113 = sbr.rel (%p4111) target = $region80
          $region79: #{tpu_custom_call.1} parent=75 // pred_region
            %v4114 = vld [vmem:[#allocation4] sm:$0x1]
            %v4115 = vmul.f32 %v4114, 0.0009765625
            %v4116 = vld [vmem:[#allocation5] sm:$0x1]
            %v4117 = vmul.f32 %v4116, 0.0009765625
            %v4118 = vmul.f32 %v4115, %v4115
            %v4119 = vsub.f32 %v4117, %v4118
            %v4120 = vld [vmem:[%s3] sm:$0x1]
            %v4121 = vadd.f32 %v4119, 1e-05
            %v4122 = vrsqrt.pop %v4121
            %v4123 = vmul.f32 %v4120, %v4122
            %4124 = vst [vmem:[#allocation10] sm:$0x1] %v4123
            %v4125 = vld [vmem:[%s4] sm:$0x1]
            %v4126 = vld [vmem:[#allocation8] sm:$0x1]
            %v4127 = vadd.f32 %v4126, %v4115
            %v4128 = vmul.f32 %v4127, %v4123
            %v4129 = vsub.f32 %v4125, %v4128
            %4130 = vst [vmem:[#allocation11] sm:$0x1] %v4129
          $region80: #{tpu_custom_call.1} parent=75 // pred_fallthru
            _
          %s4131 = smul.u32 %s29, 64
          %s4132 = smul.addr %s4131, 8
          %s4133 = scalar_lea.vmem [#allocation2], %s4132
          %v4134 = vld [vmem:[%s4133] sm:$0xff]
          %v4135 = vld [vmem:[%s4133 + $0x8] sm:$0xff]
          %v4136 = vld [vmem:[%s4133 + $0x10] sm:$0xff]
          %v4137 = vld [vmem:[%s4133 + $0x18] sm:$0xff]
          %v4138 = vld [vmem:[%s4133 + $0x20] sm:$0xff]
          %v4139 = vld [vmem:[%s4133 + $0x28] sm:$0xff]
          %v4140 = vld [vmem:[%s4133 + $0x30] sm:$0xff]
          %v4141 = vld [vmem:[%s4133 + $0x38] sm:$0xff]
          %v4142 = vld [vmem:[%s4133 + $0x40] sm:$0xff]
          %v4143 = vld [vmem:[%s4133 + $0x48] sm:$0xff]
          %v4144 = vld [vmem:[%s4133 + $0x50] sm:$0xff]
          %v4145 = vld [vmem:[%s4133 + $0x58] sm:$0xff]
          %v4146 = vld [vmem:[%s4133 + $0x60] sm:$0xff]
          %v4147 = vld [vmem:[%s4133 + $0x68] sm:$0xff]
          %v4148 = vld [vmem:[%s4133 + $0x70] sm:$0xff]
          %v4149 = vld [vmem:[%s4133 + $0x78] sm:$0xff]
          %v4150 = vld [vmem:[%s4133 + $0x80] sm:$0xff]
          %v4151 = vld [vmem:[%s4133 + $0x88] sm:$0xff]
          %v4152 = vld [vmem:[%s4133 + $0x90] sm:$0xff]
          %v4153 = vld [vmem:[%s4133 + $0x98] sm:$0xff]
          %v4154 = vld [vmem:[%s4133 + $0xa0] sm:$0xff]
          %v4155 = vld [vmem:[%s4133 + $0xa8] sm:$0xff]
          %v4156 = vld [vmem:[%s4133 + $0xb0] sm:$0xff]
          %v4157 = vld [vmem:[%s4133 + $0xb8] sm:$0xff]
          %v4158 = vld [vmem:[%s4133 + $0xc0] sm:$0xff]
          %v4159 = vld [vmem:[%s4133 + $0xc8] sm:$0xff]
          %v4160 = vld [vmem:[%s4133 + $0xd0] sm:$0xff]
          %v4161 = vld [vmem:[%s4133 + $0xd8] sm:$0xff]
          %v4162 = vld [vmem:[%s4133 + $0xe0] sm:$0xff]
          %v4163 = vld [vmem:[%s4133 + $0xe8] sm:$0xff]
          %v4164 = vld [vmem:[%s4133 + $0xf0] sm:$0xff]
          %v4165 = vld [vmem:[%s4133 + $0xf8] sm:$0xff]
          %v4166 = vld [vmem:[%s4133 + $0x100] sm:$0xff]
          %v4167 = vld [vmem:[%s4133 + $0x108] sm:$0xff]
          %v4168 = vld [vmem:[%s4133 + $0x110] sm:$0xff]
          %v4169 = vld [vmem:[%s4133 + $0x118] sm:$0xff]
          %v4170 = vld [vmem:[%s4133 + $0x120] sm:$0xff]
          %v4171 = vld [vmem:[%s4133 + $0x128] sm:$0xff]
          %v4172 = vld [vmem:[%s4133 + $0x130] sm:$0xff]
          %v4173 = vld [vmem:[%s4133 + $0x138] sm:$0xff]
          %v4174 = vld [vmem:[%s4133 + $0x140] sm:$0xff]
          %v4175 = vld [vmem:[%s4133 + $0x148] sm:$0xff]
          %v4176 = vld [vmem:[%s4133 + $0x150] sm:$0xff]
          %v4177 = vld [vmem:[%s4133 + $0x158] sm:$0xff]
          %v4178 = vld [vmem:[%s4133 + $0x160] sm:$0xff]
          %v4179 = vld [vmem:[%s4133 + $0x168] sm:$0xff]
          %v4180 = vld [vmem:[%s4133 + $0x170] sm:$0xff]
          %v4181 = vld [vmem:[%s4133 + $0x178] sm:$0xff]
          %v4182 = vld [vmem:[%s4133 + $0x180] sm:$0xff]
          %v4183 = vld [vmem:[%s4133 + $0x188] sm:$0xff]
          %v4184 = vld [vmem:[%s4133 + $0x190] sm:$0xff]
          %v4185 = vld [vmem:[%s4133 + $0x198] sm:$0xff]
          %v4186 = vld [vmem:[%s4133 + $0x1a0] sm:$0xff]
          %v4187 = vld [vmem:[%s4133 + $0x1a8] sm:$0xff]
          %v4188 = vld [vmem:[%s4133 + $0x1b0] sm:$0xff]
          %v4189 = vld [vmem:[%s4133 + $0x1b8] sm:$0xff]
          %v4190 = vld [vmem:[%s4133 + $0x1c0] sm:$0xff]
          %v4191 = vld [vmem:[%s4133 + $0x1c8] sm:$0xff]
          %v4192 = vld [vmem:[%s4133 + $0x1d0] sm:$0xff]
          %v4193 = vld [vmem:[%s4133 + $0x1d8] sm:$0xff]
          %v4194 = vld [vmem:[%s4133 + $0x1e0] sm:$0xff]
          %v4195 = vld [vmem:[%s4133 + $0x1e8] sm:$0xff]
          %v4196 = vld [vmem:[%s4133 + $0x1f0] sm:$0xff]
          %v4197 = vld [vmem:[%s4133 + $0x1f8] sm:$0xff]
          %v4198 = vunpack.c.l.bf16 %v4134
          %v4199 = vunpack.c.h.bf16 %v4134
          %v4200 = vunpack.c.l.bf16 %v4135
          %v4201 = vunpack.c.h.bf16 %v4135
          %v4202 = vunpack.c.l.bf16 %v4136
          %v4203 = vunpack.c.h.bf16 %v4136
          %v4204 = vunpack.c.l.bf16 %v4137
          %v4205 = vunpack.c.h.bf16 %v4137
          %v4206 = vunpack.c.l.bf16 %v4138
          %v4207 = vunpack.c.h.bf16 %v4138
          %v4208 = vunpack.c.l.bf16 %v4139
          %v4209 = vunpack.c.h.bf16 %v4139
          %v4210 = vunpack.c.l.bf16 %v4140
          %v4211 = vunpack.c.h.bf16 %v4140
          %v4212 = vunpack.c.l.bf16 %v4141
          %v4213 = vunpack.c.h.bf16 %v4141
          %v4214 = vunpack.c.l.bf16 %v4142
          %v4215 = vunpack.c.h.bf16 %v4142
          %v4216 = vunpack.c.l.bf16 %v4143
          %v4217 = vunpack.c.h.bf16 %v4143
          %v4218 = vunpack.c.l.bf16 %v4144
          %v4219 = vunpack.c.h.bf16 %v4144
          %v4220 = vunpack.c.l.bf16 %v4145
          %v4221 = vunpack.c.h.bf16 %v4145
          %v4222 = vunpack.c.l.bf16 %v4146
          %v4223 = vunpack.c.h.bf16 %v4146
          %v4224 = vunpack.c.l.bf16 %v4147
          %v4225 = vunpack.c.h.bf16 %v4147
          %v4226 = vunpack.c.l.bf16 %v4148
          %v4227 = vunpack.c.h.bf16 %v4148
          %v4228 = vunpack.c.l.bf16 %v4149
          %v4229 = vunpack.c.h.bf16 %v4149
          %v4230 = vunpack.c.l.bf16 %v4150
          %v4231 = vunpack.c.h.bf16 %v4150
          %v4232 = vunpack.c.l.bf16 %v4151
          %v4233 = vunpack.c.h.bf16 %v4151
          %v4234 = vunpack.c.l.bf16 %v4152
          %v4235 = vunpack.c.h.bf16 %v4152
          %v4236 = vunpack.c.l.bf16 %v4153
          %v4237 = vunpack.c.h.bf16 %v4153
          %v4238 = vunpack.c.l.bf16 %v4154
          %v4239 = vunpack.c.h.bf16 %v4154
          %v4240 = vunpack.c.l.bf16 %v4155
          %v4241 = vunpack.c.h.bf16 %v4155
          %v4242 = vunpack.c.l.bf16 %v4156
          %v4243 = vunpack.c.h.bf16 %v4156
          %v4244 = vunpack.c.l.bf16 %v4157
          %v4245 = vunpack.c.h.bf16 %v4157
          %v4246 = vunpack.c.l.bf16 %v4158
          %v4247 = vunpack.c.h.bf16 %v4158
          %v4248 = vunpack.c.l.bf16 %v4159
          %v4249 = vunpack.c.h.bf16 %v4159
          %v4250 = vunpack.c.l.bf16 %v4160
          %v4251 = vunpack.c.h.bf16 %v4160
          %v4252 = vunpack.c.l.bf16 %v4161
          %v4253 = vunpack.c.h.bf16 %v4161
          %v4254 = vunpack.c.l.bf16 %v4162
          %v4255 = vunpack.c.h.bf16 %v4162
          %v4256 = vunpack.c.l.bf16 %v4163
          %v4257 = vunpack.c.h.bf16 %v4163
          %v4258 = vunpack.c.l.bf16 %v4164
          %v4259 = vunpack.c.h.bf16 %v4164
          %v4260 = vunpack.c.l.bf16 %v4165
          %v4261 = vunpack.c.h.bf16 %v4165
          %v4262 = vunpack.c.l.bf16 %v4166
          %v4263 = vunpack.c.h.bf16 %v4166
          %v4264 = vunpack.c.l.bf16 %v4167
          %v4265 = vunpack.c.h.bf16 %v4167
          %v4266 = vunpack.c.l.bf16 %v4168
          %v4267 = vunpack.c.h.bf16 %v4168
          %v4268 = vunpack.c.l.bf16 %v4169
          %v4269 = vunpack.c.h.bf16 %v4169
          %v4270 = vunpack.c.l.bf16 %v4170
          %v4271 = vunpack.c.h.bf16 %v4170
          %v4272 = vunpack.c.l.bf16 %v4171
          %v4273 = vunpack.c.h.bf16 %v4171
          %v4274 = vunpack.c.l.bf16 %v4172
          %v4275 = vunpack.c.h.bf16 %v4172
          %v4276 = vunpack.c.l.bf16 %v4173
          %v4277 = vunpack.c.h.bf16 %v4173
          %v4278 = vunpack.c.l.bf16 %v4174
          %v4279 = vunpack.c.h.bf16 %v4174
          %v4280 = vunpack.c.l.bf16 %v4175
          %v4281 = vunpack.c.h.bf16 %v4175
          %v4282 = vunpack.c.l.bf16 %v4176
          %v4283 = vunpack.c.h.bf16 %v4176
          %v4284 = vunpack.c.l.bf16 %v4177
          %v4285 = vunpack.c.h.bf16 %v4177
          %v4286 = vunpack.c.l.bf16 %v4178
          %v4287 = vunpack.c.h.bf16 %v4178
          %v4288 = vunpack.c.l.bf16 %v4179
          %v4289 = vunpack.c.h.bf16 %v4179
          %v4290 = vunpack.c.l.bf16 %v4180
          %v4291 = vunpack.c.h.bf16 %v4180
          %v4292 = vunpack.c.l.bf16 %v4181
          %v4293 = vunpack.c.h.bf16 %v4181
          %v4294 = vunpack.c.l.bf16 %v4182
          %v4295 = vunpack.c.h.bf16 %v4182
          %v4296 = vunpack.c.l.bf16 %v4183
          %v4297 = vunpack.c.h.bf16 %v4183
          %v4298 = vunpack.c.l.bf16 %v4184
          %v4299 = vunpack.c.h.bf16 %v4184
          %v4300 = vunpack.c.l.bf16 %v4185
          %v4301 = vunpack.c.h.bf16 %v4185
          %v4302 = vunpack.c.l.bf16 %v4186
          %v4303 = vunpack.c.h.bf16 %v4186
          %v4304 = vunpack.c.l.bf16 %v4187
          %v4305 = vunpack.c.h.bf16 %v4187
          %v4306 = vunpack.c.l.bf16 %v4188
          %v4307 = vunpack.c.h.bf16 %v4188
          %v4308 = vunpack.c.l.bf16 %v4189
          %v4309 = vunpack.c.h.bf16 %v4189
          %v4310 = vunpack.c.l.bf16 %v4190
          %v4311 = vunpack.c.h.bf16 %v4190
          %v4312 = vunpack.c.l.bf16 %v4191
          %v4313 = vunpack.c.h.bf16 %v4191
          %v4314 = vunpack.c.l.bf16 %v4192
          %v4315 = vunpack.c.h.bf16 %v4192
          %v4316 = vunpack.c.l.bf16 %v4193
          %v4317 = vunpack.c.h.bf16 %v4193
          %v4318 = vunpack.c.l.bf16 %v4194
          %v4319 = vunpack.c.h.bf16 %v4194
          %v4320 = vunpack.c.l.bf16 %v4195
          %v4321 = vunpack.c.h.bf16 %v4195
          %v4322 = vunpack.c.l.bf16 %v4196
          %v4323 = vunpack.c.h.bf16 %v4196
          %v4324 = vunpack.c.l.bf16 %v4197
          %v4325 = vunpack.c.h.bf16 %v4197
          %v4326 = vld [vmem:[#allocation10] sm:$0x1]
          %v4328 = vlaneseq
          %v4329 = vshrl.u32 %v4328, 7
          %v4330 = vsub.s32 0, %v4329
          %v4331 = vrot.slane %v4326, %v4330
          %v4333 = vmul.f32 %v4198, %v4331
          %v4334 = vmul.f32 %v4199, %v4331
          %v4335 = vmul.f32 %v4200, %v4331
          %v4336 = vmul.f32 %v4201, %v4331
          %v4337 = vmul.f32 %v4202, %v4331
          %v4338 = vmul.f32 %v4203, %v4331
          %v4339 = vmul.f32 %v4204, %v4331
          %v4340 = vmul.f32 %v4205, %v4331
          %v4341 = vmul.f32 %v4206, %v4331
          %v4342 = vmul.f32 %v4207, %v4331
          %v4343 = vmul.f32 %v4208, %v4331
          %v4344 = vmul.f32 %v4209, %v4331
          %v4345 = vmul.f32 %v4210, %v4331
          %v4346 = vmul.f32 %v4211, %v4331
          %v4347 = vmul.f32 %v4212, %v4331
          %v4348 = vmul.f32 %v4213, %v4331
          %v4349 = vmul.f32 %v4214, %v4331
          %v4350 = vmul.f32 %v4215, %v4331
          %v4351 = vmul.f32 %v4216, %v4331
          %v4352 = vmul.f32 %v4217, %v4331
          %v4353 = vmul.f32 %v4218, %v4331
          %v4354 = vmul.f32 %v4219, %v4331
          %v4355 = vmul.f32 %v4220, %v4331
          %v4356 = vmul.f32 %v4221, %v4331
          %v4357 = vmul.f32 %v4222, %v4331
          %v4358 = vmul.f32 %v4223, %v4331
          %v4359 = vmul.f32 %v4224, %v4331
          %v4360 = vmul.f32 %v4225, %v4331
          %v4361 = vmul.f32 %v4226, %v4331
          %v4362 = vmul.f32 %v4227, %v4331
          %v4363 = vmul.f32 %v4228, %v4331
          %v4364 = vmul.f32 %v4229, %v4331
          %v4365 = vmul.f32 %v4230, %v4331
          %v4366 = vmul.f32 %v4231, %v4331
          %v4367 = vmul.f32 %v4232, %v4331
          %v4368 = vmul.f32 %v4233, %v4331
          %v4369 = vmul.f32 %v4234, %v4331
          %v4370 = vmul.f32 %v4235, %v4331
          %v4371 = vmul.f32 %v4236, %v4331
          %v4372 = vmul.f32 %v4237, %v4331
          %v4373 = vmul.f32 %v4238, %v4331
          %v4374 = vmul.f32 %v4239, %v4331
          %v4375 = vmul.f32 %v4240, %v4331
          %v4376 = vmul.f32 %v4241, %v4331
          %v4377 = vmul.f32 %v4242, %v4331
          %v4378 = vmul.f32 %v4243, %v4331
          %v4379 = vmul.f32 %v4244, %v4331
          %v4380 = vmul.f32 %v4245, %v4331
          %v4381 = vmul.f32 %v4246, %v4331
          %v4382 = vmul.f32 %v4247, %v4331
          %v4383 = vmul.f32 %v4248, %v4331
          %v4384 = vmul.f32 %v4249, %v4331
          %v4385 = vmul.f32 %v4250, %v4331
          %v4386 = vmul.f32 %v4251, %v4331
          %v4387 = vmul.f32 %v4252, %v4331
          %v4388 = vmul.f32 %v4253, %v4331
          %v4389 = vmul.f32 %v4254, %v4331
          %v4390 = vmul.f32 %v4255, %v4331
          %v4391 = vmul.f32 %v4256, %v4331
          %v4392 = vmul.f32 %v4257, %v4331
          %v4393 = vmul.f32 %v4258, %v4331
          %v4394 = vmul.f32 %v4259, %v4331
          %v4395 = vmul.f32 %v4260, %v4331
          %v4396 = vmul.f32 %v4261, %v4331
          %v4397 = vmul.f32 %v4262, %v4331
          %v4398 = vmul.f32 %v4263, %v4331
          %v4399 = vmul.f32 %v4264, %v4331
          %v4400 = vmul.f32 %v4265, %v4331
          %v4401 = vmul.f32 %v4266, %v4331
          %v4402 = vmul.f32 %v4267, %v4331
          %v4403 = vmul.f32 %v4268, %v4331
          %v4404 = vmul.f32 %v4269, %v4331
          %v4405 = vmul.f32 %v4270, %v4331
          %v4406 = vmul.f32 %v4271, %v4331
          %v4407 = vmul.f32 %v4272, %v4331
          %v4408 = vmul.f32 %v4273, %v4331
          %v4409 = vmul.f32 %v4274, %v4331
          %v4410 = vmul.f32 %v4275, %v4331
          %v4411 = vmul.f32 %v4276, %v4331
          %v4412 = vmul.f32 %v4277, %v4331
          %v4413 = vmul.f32 %v4278, %v4331
          %v4414 = vmul.f32 %v4279, %v4331
          %v4415 = vmul.f32 %v4280, %v4331
          %v4416 = vmul.f32 %v4281, %v4331
          %v4417 = vmul.f32 %v4282, %v4331
          %v4418 = vmul.f32 %v4283, %v4331
          %v4419 = vmul.f32 %v4284, %v4331
          %v4420 = vmul.f32 %v4285, %v4331
          %v4421 = vmul.f32 %v4286, %v4331
          %v4422 = vmul.f32 %v4287, %v4331
          %v4423 = vmul.f32 %v4288, %v4331
          %v4424 = vmul.f32 %v4289, %v4331
          %v4425 = vmul.f32 %v4290, %v4331
          %v4426 = vmul.f32 %v4291, %v4331
          %v4427 = vmul.f32 %v4292, %v4331
          %v4428 = vmul.f32 %v4293, %v4331
          %v4429 = vmul.f32 %v4294, %v4331
          %v4430 = vmul.f32 %v4295, %v4331
          %v4431 = vmul.f32 %v4296, %v4331
          %v4432 = vmul.f32 %v4297, %v4331
          %v4433 = vmul.f32 %v4298, %v4331
          %v4434 = vmul.f32 %v4299, %v4331
          %v4435 = vmul.f32 %v4300, %v4331
          %v4436 = vmul.f32 %v4301, %v4331
          %v4437 = vmul.f32 %v4302, %v4331
          %v4438 = vmul.f32 %v4303, %v4331
          %v4439 = vmul.f32 %v4304, %v4331
          %v4440 = vmul.f32 %v4305, %v4331
          %v4441 = vmul.f32 %v4306, %v4331
          %v4442 = vmul.f32 %v4307, %v4331
          %v4443 = vmul.f32 %v4308, %v4331
          %v4444 = vmul.f32 %v4309, %v4331
          %v4445 = vmul.f32 %v4310, %v4331
          %v4446 = vmul.f32 %v4311, %v4331
          %v4447 = vmul.f32 %v4312, %v4331
          %v4448 = vmul.f32 %v4313, %v4331
          %v4449 = vmul.f32 %v4314, %v4331
          %v4450 = vmul.f32 %v4315, %v4331
          %v4451 = vmul.f32 %v4316, %v4331
          %v4452 = vmul.f32 %v4317, %v4331
          %v4453 = vmul.f32 %v4318, %v4331
          %v4454 = vmul.f32 %v4319, %v4331
          %v4455 = vmul.f32 %v4320, %v4331
          %v4456 = vmul.f32 %v4321, %v4331
          %v4457 = vmul.f32 %v4322, %v4331
          %v4458 = vmul.f32 %v4323, %v4331
          %v4459 = vmul.f32 %v4324, %v4331
          %v4460 = vmul.f32 %v4325, %v4331
          %v4461 = vld [vmem:[#allocation11] sm:$0x1]
          %v4463 = vlaneseq
          %v4464 = vshrl.u32 %v4463, 7
          %v4465 = vsub.s32 0, %v4464
          %v4466 = vrot.slane %v4461, %v4465
          %v4468 = vadd.f32 %v4333, %v4466
          %v4469 = vadd.f32 %v4334, %v4466
          %v4470 = vadd.f32 %v4335, %v4466
          %v4471 = vadd.f32 %v4336, %v4466
          %v4472 = vadd.f32 %v4337, %v4466
          %v4473 = vadd.f32 %v4338, %v4466
          %v4474 = vadd.f32 %v4339, %v4466
          %v4475 = vadd.f32 %v4340, %v4466
          %v4476 = vadd.f32 %v4341, %v4466
          %v4477 = vadd.f32 %v4342, %v4466
          %v4478 = vadd.f32 %v4343, %v4466
          %v4479 = vadd.f32 %v4344, %v4466
          %v4480 = vadd.f32 %v4345, %v4466
          %v4481 = vadd.f32 %v4346, %v4466
          %v4482 = vadd.f32 %v4347, %v4466
          %v4483 = vadd.f32 %v4348, %v4466
          %v4484 = vadd.f32 %v4349, %v4466
          %v4485 = vadd.f32 %v4350, %v4466
          %v4486 = vadd.f32 %v4351, %v4466
          %v4487 = vadd.f32 %v4352, %v4466
          %v4488 = vadd.f32 %v4353, %v4466
          %v4489 = vadd.f32 %v4354, %v4466
          %v4490 = vadd.f32 %v4355, %v4466
          %v4491 = vadd.f32 %v4356, %v4466
          %v4492 = vadd.f32 %v4357, %v4466
          %v4493 = vadd.f32 %v4358, %v4466
          %v4494 = vadd.f32 %v4359, %v4466
          %v4495 = vadd.f32 %v4360, %v4466
          %v4496 = vadd.f32 %v4361, %v4466
          %v4497 = vadd.f32 %v4362, %v4466
          %v4498 = vadd.f32 %v4363, %v4466
          %v4499 = vadd.f32 %v4364, %v4466
          %v4500 = vadd.f32 %v4365, %v4466
          %v4501 = vadd.f32 %v4366, %v4466
          %v4502 = vadd.f32 %v4367, %v4466
          %v4503 = vadd.f32 %v4368, %v4466
          %v4504 = vadd.f32 %v4369, %v4466
          %v4505 = vadd.f32 %v4370, %v4466
          %v4506 = vadd.f32 %v4371, %v4466
          %v4507 = vadd.f32 %v4372, %v4466
          %v4508 = vadd.f32 %v4373, %v4466
          %v4509 = vadd.f32 %v4374, %v4466
          %v4510 = vadd.f32 %v4375, %v4466
          %v4511 = vadd.f32 %v4376, %v4466
          %v4512 = vadd.f32 %v4377, %v4466
          %v4513 = vadd.f32 %v4378, %v4466
          %v4514 = vadd.f32 %v4379, %v4466
          %v4515 = vadd.f32 %v4380, %v4466
          %v4516 = vadd.f32 %v4381, %v4466
          %v4517 = vadd.f32 %v4382, %v4466
          %v4518 = vadd.f32 %v4383, %v4466
          %v4519 = vadd.f32 %v4384, %v4466
          %v4520 = vadd.f32 %v4385, %v4466
          %v4521 = vadd.f32 %v4386, %v4466
          %v4522 = vadd.f32 %v4387, %v4466
          %v4523 = vadd.f32 %v4388, %v4466
          %v4524 = vadd.f32 %v4389, %v4466
          %v4525 = vadd.f32 %v4390, %v4466
          %v4526 = vadd.f32 %v4391, %v4466
          %v4527 = vadd.f32 %v4392, %v4466
          %v4528 = vadd.f32 %v4393, %v4466
          %v4529 = vadd.f32 %v4394, %v4466
          %v4530 = vadd.f32 %v4395, %v4466
          %v4531 = vadd.f32 %v4396, %v4466
          %v4532 = vadd.f32 %v4397, %v4466
          %v4533 = vadd.f32 %v4398, %v4466
          %v4534 = vadd.f32 %v4399, %v4466
          %v4535 = vadd.f32 %v4400, %v4466
          %v4536 = vadd.f32 %v4401, %v4466
          %v4537 = vadd.f32 %v4402, %v4466
          %v4538 = vadd.f32 %v4403, %v4466
          %v4539 = vadd.f32 %v4404, %v4466
          %v4540 = vadd.f32 %v4405, %v4466
          %v4541 = vadd.f32 %v4406, %v4466
          %v4542 = vadd.f32 %v4407, %v4466
          %v4543 = vadd.f32 %v4408, %v4466
          %v4544 = vadd.f32 %v4409, %v4466
          %v4545 = vadd.f32 %v4410, %v4466
          %v4546 = vadd.f32 %v4411, %v4466
          %v4547 = vadd.f32 %v4412, %v4466
          %v4548 = vadd.f32 %v4413, %v4466
          %v4549 = vadd.f32 %v4414, %v4466
          %v4550 = vadd.f32 %v4415, %v4466
          %v4551 = vadd.f32 %v4416, %v4466
          %v4552 = vadd.f32 %v4417, %v4466
          %v4553 = vadd.f32 %v4418, %v4466
          %v4554 = vadd.f32 %v4419, %v4466
          %v4555 = vadd.f32 %v4420, %v4466
          %v4556 = vadd.f32 %v4421, %v4466
          %v4557 = vadd.f32 %v4422, %v4466
          %v4558 = vadd.f32 %v4423, %v4466
          %v4559 = vadd.f32 %v4424, %v4466
          %v4560 = vadd.f32 %v4425, %v4466
          %v4561 = vadd.f32 %v4426, %v4466
          %v4562 = vadd.f32 %v4427, %v4466
          %v4563 = vadd.f32 %v4428, %v4466
          %v4564 = vadd.f32 %v4429, %v4466
          %v4565 = vadd.f32 %v4430, %v4466
          %v4566 = vadd.f32 %v4431, %v4466
          %v4567 = vadd.f32 %v4432, %v4466
          %v4568 = vadd.f32 %v4433, %v4466
          %v4569 = vadd.f32 %v4434, %v4466
          %v4570 = vadd.f32 %v4435, %v4466
          %v4571 = vadd.f32 %v4436, %v4466
          %v4572 = vadd.f32 %v4437, %v4466
          %v4573 = vadd.f32 %v4438, %v4466
          %v4574 = vadd.f32 %v4439, %v4466
          %v4575 = vadd.f32 %v4440, %v4466
          %v4576 = vadd.f32 %v4441, %v4466
          %v4577 = vadd.f32 %v4442, %v4466
          %v4578 = vadd.f32 %v4443, %v4466
          %v4579 = vadd.f32 %v4444, %v4466
          %v4580 = vadd.f32 %v4445, %v4466
          %v4581 = vadd.f32 %v4446, %v4466
          %v4582 = vadd.f32 %v4447, %v4466
          %v4583 = vadd.f32 %v4448, %v4466
          %v4584 = vadd.f32 %v4449, %v4466
          %v4585 = vadd.f32 %v4450, %v4466
          %v4586 = vadd.f32 %v4451, %v4466
          %v4587 = vadd.f32 %v4452, %v4466
          %v4588 = vadd.f32 %v4453, %v4466
          %v4589 = vadd.f32 %v4454, %v4466
          %v4590 = vadd.f32 %v4455, %v4466
          %v4591 = vadd.f32 %v4456, %v4466
          %v4592 = vadd.f32 %v4457, %v4466
          %v4593 = vadd.f32 %v4458, %v4466
          %v4594 = vadd.f32 %v4459, %v4466
          %v4595 = vadd.f32 %v4460, %v4466
          %v4596 = vmax.f32 %v4468, 0.0
          %v4597 = vmax.f32 %v4469, 0.0
          %v4598 = vmax.f32 %v4470, 0.0
          %v4599 = vmax.f32 %v4471, 0.0
          %v4600 = vmax.f32 %v4472, 0.0
          %v4601 = vmax.f32 %v4473, 0.0
          %v4602 = vmax.f32 %v4474, 0.0
          %v4603 = vmax.f32 %v4475, 0.0
          %v4604 = vmax.f32 %v4476, 0.0
          %v4605 = vmax.f32 %v4477, 0.0
          %v4606 = vmax.f32 %v4478, 0.0
          %v4607 = vmax.f32 %v4479, 0.0
          %v4608 = vmax.f32 %v4480, 0.0
          %v4609 = vmax.f32 %v4481, 0.0
          %v4610 = vmax.f32 %v4482, 0.0
          %v4611 = vmax.f32 %v4483, 0.0
          %v4612 = vmax.f32 %v4484, 0.0
          %v4613 = vmax.f32 %v4485, 0.0
          %v4614 = vmax.f32 %v4486, 0.0
          %v4615 = vmax.f32 %v4487, 0.0
          %v4616 = vmax.f32 %v4488, 0.0
          %v4617 = vmax.f32 %v4489, 0.0
          %v4618 = vmax.f32 %v4490, 0.0
          %v4619 = vmax.f32 %v4491, 0.0
          %v4620 = vmax.f32 %v4492, 0.0
          %v4621 = vmax.f32 %v4493, 0.0
          %v4622 = vmax.f32 %v4494, 0.0
          %v4623 = vmax.f32 %v4495, 0.0
          %v4624 = vmax.f32 %v4496, 0.0
          %v4625 = vmax.f32 %v4497, 0.0
          %v4626 = vmax.f32 %v4498, 0.0
          %v4627 = vmax.f32 %v4499, 0.0
          %v4628 = vmax.f32 %v4500, 0.0
          %v4629 = vmax.f32 %v4501, 0.0
          %v4630 = vmax.f32 %v4502, 0.0
          %v4631 = vmax.f32 %v4503, 0.0
          %v4632 = vmax.f32 %v4504, 0.0
          %v4633 = vmax.f32 %v4505, 0.0
          %v4634 = vmax.f32 %v4506, 0.0
          %v4635 = vmax.f32 %v4507, 0.0
          %v4636 = vmax.f32 %v4508, 0.0
          %v4637 = vmax.f32 %v4509, 0.0
          %v4638 = vmax.f32 %v4510, 0.0
          %v4639 = vmax.f32 %v4511, 0.0
          %v4640 = vmax.f32 %v4512, 0.0
          %v4641 = vmax.f32 %v4513, 0.0
          %v4642 = vmax.f32 %v4514, 0.0
          %v4643 = vmax.f32 %v4515, 0.0
          %v4644 = vmax.f32 %v4516, 0.0
          %v4645 = vmax.f32 %v4517, 0.0
          %v4646 = vmax.f32 %v4518, 0.0
          %v4647 = vmax.f32 %v4519, 0.0
          %v4648 = vmax.f32 %v4520, 0.0
          %v4649 = vmax.f32 %v4521, 0.0
          %v4650 = vmax.f32 %v4522, 0.0
          %v4651 = vmax.f32 %v4523, 0.0
          %v4652 = vmax.f32 %v4524, 0.0
          %v4653 = vmax.f32 %v4525, 0.0
          %v4654 = vmax.f32 %v4526, 0.0
          %v4655 = vmax.f32 %v4527, 0.0
          %v4656 = vmax.f32 %v4528, 0.0
          %v4657 = vmax.f32 %v4529, 0.0
          %v4658 = vmax.f32 %v4530, 0.0
          %v4659 = vmax.f32 %v4531, 0.0
          %v4660 = vmax.f32 %v4532, 0.0
          %v4661 = vmax.f32 %v4533, 0.0
          %v4662 = vmax.f32 %v4534, 0.0
          %v4663 = vmax.f32 %v4535, 0.0
          %v4664 = vmax.f32 %v4536, 0.0
          %v4665 = vmax.f32 %v4537, 0.0
          %v4666 = vmax.f32 %v4538, 0.0
          %v4667 = vmax.f32 %v4539, 0.0
          %v4668 = vmax.f32 %v4540, 0.0
          %v4669 = vmax.f32 %v4541, 0.0
          %v4670 = vmax.f32 %v4542, 0.0
          %v4671 = vmax.f32 %v4543, 0.0
          %v4672 = vmax.f32 %v4544, 0.0
          %v4673 = vmax.f32 %v4545, 0.0
          %v4674 = vmax.f32 %v4546, 0.0
          %v4675 = vmax.f32 %v4547, 0.0
          %v4676 = vmax.f32 %v4548, 0.0
          %v4677 = vmax.f32 %v4549, 0.0
          %v4678 = vmax.f32 %v4550, 0.0
          %v4679 = vmax.f32 %v4551, 0.0
          %v4680 = vmax.f32 %v4552, 0.0
          %v4681 = vmax.f32 %v4553, 0.0
          %v4682 = vmax.f32 %v4554, 0.0
          %v4683 = vmax.f32 %v4555, 0.0
          %v4684 = vmax.f32 %v4556, 0.0
          %v4685 = vmax.f32 %v4557, 0.0
          %v4686 = vmax.f32 %v4558, 0.0
          %v4687 = vmax.f32 %v4559, 0.0
          %v4688 = vmax.f32 %v4560, 0.0
          %v4689 = vmax.f32 %v4561, 0.0
          %v4690 = vmax.f32 %v4562, 0.0
          %v4691 = vmax.f32 %v4563, 0.0
          %v4692 = vmax.f32 %v4564, 0.0
          %v4693 = vmax.f32 %v4565, 0.0
          %v4694 = vmax.f32 %v4566, 0.0
          %v4695 = vmax.f32 %v4567, 0.0
          %v4696 = vmax.f32 %v4568, 0.0
          %v4697 = vmax.f32 %v4569, 0.0
          %v4698 = vmax.f32 %v4570, 0.0
          %v4699 = vmax.f32 %v4571, 0.0
          %v4700 = vmax.f32 %v4572, 0.0
          %v4701 = vmax.f32 %v4573, 0.0
          %v4702 = vmax.f32 %v4574, 0.0
          %v4703 = vmax.f32 %v4575, 0.0
          %v4704 = vmax.f32 %v4576, 0.0
          %v4705 = vmax.f32 %v4577, 0.0
          %v4706 = vmax.f32 %v4578, 0.0
          %v4707 = vmax.f32 %v4579, 0.0
          %v4708 = vmax.f32 %v4580, 0.0
          %v4709 = vmax.f32 %v4581, 0.0
          %v4710 = vmax.f32 %v4582, 0.0
          %v4711 = vmax.f32 %v4583, 0.0
          %v4712 = vmax.f32 %v4584, 0.0
          %v4713 = vmax.f32 %v4585, 0.0
          %v4714 = vmax.f32 %v4586, 0.0
          %v4715 = vmax.f32 %v4587, 0.0
          %v4716 = vmax.f32 %v4588, 0.0
          %v4717 = vmax.f32 %v4589, 0.0
          %v4718 = vmax.f32 %v4590, 0.0
          %v4719 = vmax.f32 %v4591, 0.0
          %v4720 = vmax.f32 %v4592, 0.0
          %v4721 = vmax.f32 %v4593, 0.0
          %v4722 = vmax.f32 %v4594, 0.0
          %v4723 = vmax.f32 %v4595, 0.0
          %v4724 = vpack.c.bf16 %v4597, %v4596
          %v4725 = vpack.c.bf16 %v4599, %v4598
          %v4726 = vpack.c.bf16 %v4601, %v4600
          %v4727 = vpack.c.bf16 %v4603, %v4602
          %v4728 = vpack.c.bf16 %v4605, %v4604
          %v4729 = vpack.c.bf16 %v4607, %v4606
          %v4730 = vpack.c.bf16 %v4609, %v4608
          %v4731 = vpack.c.bf16 %v4611, %v4610
          %v4732 = vpack.c.bf16 %v4613, %v4612
          %v4733 = vpack.c.bf16 %v4615, %v4614
          %v4734 = vpack.c.bf16 %v4617, %v4616
          %v4735 = vpack.c.bf16 %v4619, %v4618
          %v4736 = vpack.c.bf16 %v4621, %v4620
          %v4737 = vpack.c.bf16 %v4623, %v4622
          %v4738 = vpack.c.bf16 %v4625, %v4624
          %v4739 = vpack.c.bf16 %v4627, %v4626
          %v4740 = vpack.c.bf16 %v4629, %v4628
          %v4741 = vpack.c.bf16 %v4631, %v4630
          %v4742 = vpack.c.bf16 %v4633, %v4632
          %v4743 = vpack.c.bf16 %v4635, %v4634
          %v4744 = vpack.c.bf16 %v4637, %v4636
          %v4745 = vpack.c.bf16 %v4639, %v4638
          %v4746 = vpack.c.bf16 %v4641, %v4640
          %v4747 = vpack.c.bf16 %v4643, %v4642
          %v4748 = vpack.c.bf16 %v4645, %v4644
          %v4749 = vpack.c.bf16 %v4647, %v4646
          %v4750 = vpack.c.bf16 %v4649, %v4648
          %v4751 = vpack.c.bf16 %v4651, %v4650
          %v4752 = vpack.c.bf16 %v4653, %v4652
          %v4753 = vpack.c.bf16 %v4655, %v4654
          %v4754 = vpack.c.bf16 %v4657, %v4656
          %v4755 = vpack.c.bf16 %v4659, %v4658
          %v4756 = vpack.c.bf16 %v4661, %v4660
          %v4757 = vpack.c.bf16 %v4663, %v4662
          %v4758 = vpack.c.bf16 %v4665, %v4664
          %v4759 = vpack.c.bf16 %v4667, %v4666
          %v4760 = vpack.c.bf16 %v4669, %v4668
          %v4761 = vpack.c.bf16 %v4671, %v4670
          %v4762 = vpack.c.bf16 %v4673, %v4672
          %v4763 = vpack.c.bf16 %v4675, %v4674
          %v4764 = vpack.c.bf16 %v4677, %v4676
          %v4765 = vpack.c.bf16 %v4679, %v4678
          %v4766 = vpack.c.bf16 %v4681, %v4680
          %v4767 = vpack.c.bf16 %v4683, %v4682
          %v4768 = vpack.c.bf16 %v4685, %v4684
          %v4769 = vpack.c.bf16 %v4687, %v4686
          %v4770 = vpack.c.bf16 %v4689, %v4688
          %v4771 = vpack.c.bf16 %v4691, %v4690
          %v4772 = vpack.c.bf16 %v4693, %v4692
          %v4773 = vpack.c.bf16 %v4695, %v4694
          %v4774 = vpack.c.bf16 %v4697, %v4696
          %v4775 = vpack.c.bf16 %v4699, %v4698
          %v4776 = vpack.c.bf16 %v4701, %v4700
          %v4777 = vpack.c.bf16 %v4703, %v4702
          %v4778 = vpack.c.bf16 %v4705, %v4704
          %v4779 = vpack.c.bf16 %v4707, %v4706
          %v4780 = vpack.c.bf16 %v4709, %v4708
          %v4781 = vpack.c.bf16 %v4711, %v4710
          %v4782 = vpack.c.bf16 %v4713, %v4712
          %v4783 = vpack.c.bf16 %v4715, %v4714
          %v4784 = vpack.c.bf16 %v4717, %v4716
          %v4785 = vpack.c.bf16 %v4719, %v4718
          %v4786 = vpack.c.bf16 %v4721, %v4720
          %v4787 = vpack.c.bf16 %v4723, %v4722
          %v4788 = vld [vmem:[%s5] sm:$0xf]
          %v4789 = vld [vmem:[%s5 + $0x4] sm:$0xf]
          %v4790 = vld [vmem:[%s5 + $0x8] sm:$0xf]
          %v4791 = vld [vmem:[%s5 + $0xc] sm:$0xf]
          %v4792 = vld [vmem:[%s5 + $0x10] sm:$0xf]
          %v4793 = vld [vmem:[%s5 + $0x14] sm:$0xf]
          %v4794 = vld [vmem:[%s5 + $0x18] sm:$0xf]
          %v4795 = vld [vmem:[%s5 + $0x1c] sm:$0xf]
          %v4796 = vld [vmem:[%s5 + $0x20] sm:$0xf]
          %v4797 = vld [vmem:[%s5 + $0x24] sm:$0xf]
          %v4798 = vld [vmem:[%s5 + $0x28] sm:$0xf]
          %v4799 = vld [vmem:[%s5 + $0x2c] sm:$0xf]
          %v4800 = vld [vmem:[%s5 + $0x30] sm:$0xf]
          %v4801 = vld [vmem:[%s5 + $0x34] sm:$0xf]
          %v4802 = vld [vmem:[%s5 + $0x38] sm:$0xf]
          %v4803 = vld [vmem:[%s5 + $0x3c] sm:$0xf]
          %v4804 = vld [vmem:[%s6] sm:$0x1]
          %v4806 = vlaneseq
          %v4807 = vshrl.u32 %v4806, 7
          %v4808 = vsub.s32 0, %v4807
          %v4809 = vrot.slane %v4804, %v4808
          %v4827 = vunpack.c.l.b16 %v4788
          %v4828 = vunpack.c.l.b16 %v4789
          %v4829 = vunpack.c.l.b16 %v4790
          %v4830 = vunpack.c.l.b16 %v4791
          %v4831 = vunpack.c.l.b16 %v4792
          %v4832 = vunpack.c.l.b16 %v4793
          %v4833 = vunpack.c.l.b16 %v4794
          %v4834 = vunpack.c.l.b16 %v4795
          %v4835 = vunpack.c.l.b16 %v4796
          %v4836 = vunpack.c.l.b16 %v4797
          %v4837 = vunpack.c.l.b16 %v4798
          %v4838 = vunpack.c.l.b16 %v4799
          %v4839 = vunpack.c.l.b16 %v4800
          %v4840 = vunpack.c.l.b16 %v4801
          %v4841 = vunpack.c.l.b16 %v4802
          %v4842 = vunpack.c.l.b16 %v4803
          %v4843 = vpack.c.b16 %v4828, %v4827
          %v4844 = vpack.c.b16 %v4830, %v4829
          %v4845 = vpack.c.b16 %v4832, %v4831
          %v4846 = vpack.c.b16 %v4834, %v4833
          %v4847 = vpack.c.b16 %v4836, %v4835
          %v4848 = vpack.c.b16 %v4838, %v4837
          %v4849 = vpack.c.b16 %v4840, %v4839
          %v4850 = vpack.c.b16 %v4842, %v4841
          %4859 = vmatprep.subr.bf16.mxu0 0
          %4860 = vmatpush1.bf16.msra.mxu0 %v4843
          %4861 = vmatprep.subr.bf16.mxu0 0
          %4862 = vmatpush1.bf16.msra.mxu0 %v4844
          %4863 = vmatprep.subr.bf16.mxu0 0
          %4864 = vmatpush1.bf16.msra.mxu0 %v4845
          %4865 = vmatprep.subr.bf16.mxu0 0
          %4866 = vmatpush1.bf16.msra.mxu0 %v4846
          %4867 = vmatprep.subr.bf16.mxu0 0
          %4868 = vmatpush1.bf16.msra.mxu0 %v4847
          %4869 = vmatprep.subr.bf16.mxu0 0
          %4870 = vmatpush1.bf16.msra.mxu0 %v4848
          %4871 = vmatprep.subr.bf16.mxu0 0
          %4872 = vmatpush1.bf16.msra.mxu0 %v4849
          %4873 = vmatprep.subr.bf16.mxu0 0
          %4874 = vmatpush1.bf16.msra.mxu0 %v4850
          %4875 = vmatprep.subr.bf16.mxu0 0
          %4876 = vmatpush1.bf16.msra.mxu0 0
          %4877 = vmatprep.subr.bf16.mxu0 0
          %4878 = vmatpush1.bf16.msra.mxu0 0
          %4879 = vmatprep.subr.bf16.mxu0 0
          %4880 = vmatpush1.bf16.msra.mxu0 0
          %4881 = vmatprep.subr.bf16.mxu0 0
          %4882 = vmatpush1.bf16.msra.mxu0 0
          %4883 = vmatprep.subr.bf16.mxu0 0
          %4884 = vmatpush1.bf16.msra.mxu0 0
          %4885 = vmatprep.subr.bf16.mxu0 0
          %4886 = vmatpush1.bf16.msra.mxu0 0
          %4887 = vmatprep.subr.bf16.mxu0 0
          %4888 = vmatpush1.bf16.msra.mxu0 0
          %4889 = vmatprep.subr.bf16.mxu0 0
          %4890 = vmatpush1.bf16.msra.mxu0 0
          %4891 = vmatprep.mubr.bf16.mxu0 0
          %4892 = vmatmul.mubr.bf16.gmra.mrb[0].mxu0 %v4724
          %v4893 = vpop.f32.mrb[0].mxu0
          %v4894 = vadd.f32 %v4809, %v4893
          %v4895 = vpop.f32.mrb[0].mxu0
          %v4896 = vpop.f32.mrb[0].mxu0
          %v4897 = vadd.f32 %v4809, %v4896
          %v4898 = vpop.f32.mrb[0].mxu0
          %4899 = vmatprep.mubr.bf16.mxu0 0
          %4900 = vmatmul.mubr.bf16.gmra.mrb[0].mxu0 %v4725
          %v4901 = vpop.f32.mrb[0].mxu0
          %v4902 = vadd.f32 %v4809, %v4901
          %v4903 = vpop.f32.mrb[0].mxu0
          %v4904 = vpop.f32.mrb[0].mxu0
          %v4905 = vadd.f32 %v4809, %v4904
          %v4906 = vpop.f32.mrb[0].mxu0
          %4907 = vmatprep.mubr.bf16.mxu0 0
          %4908 = vmatmul.mubr.bf16.gmra.mrb[0].mxu0 %v4726
          %v4909 = vpop.f32.mrb[0].mxu0
          %v4910 = vadd.f32 %v4809, %v4909
          %v4911 = vpop.f32.mrb[0].mxu0
          %v4912 = vpop.f32.mrb[0].mxu0
          %v4913 = vadd.f32 %v4809, %v4912
          %v4914 = vpop.f32.mrb[0].mxu0
          %4915 = vmatprep.mubr.bf16.mxu0 0
          %4916 = vmatmul.mubr.bf16.gmra.mrb[0].mxu0 %v4727
          %v4917 = vpop.f32.mrb[0].mxu0
          %v4918 = vadd.f32 %v4809, %v4917
          %v4919 = vpop.f32.mrb[0].mxu0
          %v4920 = vpop.f32.mrb[0].mxu0
          %v4921 = vadd.f32 %v4809, %v4920
          %v4922 = vpop.f32.mrb[0].mxu0
          %4923 = vmatprep.mubr.bf16.mxu0 0
          %4924 = vmatmul.mubr.bf16.gmra.mrb[0].mxu0 %v4728
          %v4925 = vpop.f32.mrb[0].mxu0
          %v4926 = vadd.f32 %v4809, %v4925
          %v4927 = vpop.f32.mrb[0].mxu0
          %v4928 = vpop.f32.mrb[0].mxu0
          %v4929 = vadd.f32 %v4809, %v4928
          %v4930 = vpop.f32.mrb[0].mxu0
          %4931 = vmatprep.mubr.bf16.mxu0 0
          %4932 = vmatmul.mubr.bf16.gmra.mrb[0].mxu0 %v4729
          %v4933 = vpop.f32.mrb[0].mxu0
          %v4934 = vadd.f32 %v4809, %v4933
          %v4935 = vpop.f32.mrb[0].mxu0
          %v4936 = vpop.f32.mrb[0].mxu0
          %v4937 = vadd.f32 %v4809, %v4936
          %v4938 = vpop.f32.mrb[0].mxu0
          %4939 = vmatprep.mubr.bf16.mxu0 0
          %4940 = vmatmul.mubr.bf16.gmra.mrb[0].mxu0 %v4730
          %v4941 = vpop.f32.mrb[0].mxu0
          %v4942 = vadd.f32 %v4809, %v4941
          %v4943 = vpop.f32.mrb[0].mxu0
          %v4944 = vpop.f32.mrb[0].mxu0
          %v4945 = vadd.f32 %v4809, %v4944
          %v4946 = vpop.f32.mrb[0].mxu0
          %4947 = vmatprep.mubr.bf16.mxu0 0
          %4948 = vmatmul.mubr.bf16.gmra.mrb[0].mxu0 %v4731
          %v4949 = vpop.f32.mrb[0].mxu0
          %v4950 = vadd.f32 %v4809, %v4949
          %v4951 = vpop.f32.mrb[0].mxu0
          %v4952 = vpop.f32.mrb[0].mxu0
          %v4953 = vadd.f32 %v4809, %v4952
          %v4954 = vpop.f32.mrb[0].mxu0
          %4955 = vmatprep.mubr.bf16.mxu0 0
          %4956 = vmatmul.mubr.bf16.gmra.mrb[0].mxu0 %v4732
          %v4957 = vpop.f32.mrb[0].mxu0
          %v4958 = vadd.f32 %v4809, %v4957
          %v4959 = vpop.f32.mrb[0].mxu0
          %v4960 = vpop.f32.mrb[0].mxu0
          %v4961 = vadd.f32 %v4809, %v4960
          %v4962 = vpop.f32.mrb[0].mxu0
          %4963 = vmatprep.mubr.bf16.mxu0 0
          %4964 = vmatmul.mubr.bf16.gmra.mrb[0].mxu0 %v4733
          %v4965 = vpop.f32.mrb[0].mxu0
          %v4966 = vadd.f32 %v4809, %v4965
          %v4967 = vpop.f32.mrb[0].mxu0
          %v4968 = vpop.f32.mrb[0].mxu0
          %v4969 = vadd.f32 %v4809, %v4968
          %v4970 = vpop.f32.mrb[0].mxu0
          %4971 = vmatprep.mubr.bf16.mxu0 0
          %4972 = vmatmul.mubr.bf16.gmra.mrb[0].mxu0 %v4734
          %v4973 = vpop.f32.mrb[0].mxu0
          %v4974 = vadd.f32 %v4809, %v4973
          %v4975 = vpop.f32.mrb[0].mxu0
          %v4976 = vpop.f32.mrb[0].mxu0
          %v4977 = vadd.f32 %v4809, %v4976
          %v4978 = vpop.f32.mrb[0].mxu0
          %4979 = vmatprep.mubr.bf16.mxu0 0
          %4980 = vmatmul.mubr.bf16.gmra.mrb[0].mxu0 %v4735
          %v4981 = vpop.f32.mrb[0].mxu0
          %v4982 = vadd.f32 %v4809, %v4981
          %v4983 = vpop.f32.mrb[0].mxu0
          %v4984 = vpop.f32.mrb[0].mxu0
          %v4985 = vadd.f32 %v4809, %v4984
          %v4986 = vpop.f32.mrb[0].mxu0
          %4987 = vmatprep.mubr.bf16.mxu0 0
          %4988 = vmatmul.mubr.bf16.gmra.mrb[0].mxu0 %v4736
          %v4989 = vpop.f32.mrb[0].mxu0
          %v4990 = vadd.f32 %v4809, %v4989
          %v4991 = vpop.f32.mrb[0].mxu0
          %v4992 = vpop.f32.mrb[0].mxu0
          %v4993 = vadd.f32 %v4809, %v4992
          %v4994 = vpop.f32.mrb[0].mxu0
          %4995 = vmatprep.mubr.bf16.mxu0 0
          %4996 = vmatmul.mubr.bf16.gmra.mrb[0].mxu0 %v4737
          %v4997 = vpop.f32.mrb[0].mxu0
          %v4998 = vadd.f32 %v4809, %v4997
          %v4999 = vpop.f32.mrb[0].mxu0
          %v5000 = vpop.f32.mrb[0].mxu0
          %v5001 = vadd.f32 %v4809, %v5000
          %v5002 = vpop.f32.mrb[0].mxu0
          %5003 = vmatprep.mubr.bf16.mxu0 0
          %5004 = vmatmul.mubr.bf16.gmra.mrb[0].mxu0 %v4738
          %v5005 = vpop.f32.mrb[0].mxu0
          %v5006 = vadd.f32 %v4809, %v5005
          %v5007 = vpop.f32.mrb[0].mxu0
          %v5008 = vpop.f32.mrb[0].mxu0
          %v5009 = vadd.f32 %v4809, %v5008
          %v5010 = vpop.f32.mrb[0].mxu0
          %5011 = vmatprep.mubr.bf16.mxu0 0
          %5012 = vmatmul.mubr.bf16.gmra.mrb[0].mxu0 %v4739
          %v5013 = vpop.f32.mrb[0].mxu0
          %v5014 = vadd.f32 %v4809, %v5013
          %v5015 = vpop.f32.mrb[0].mxu0
          %v5016 = vpop.f32.mrb[0].mxu0
          %v5017 = vadd.f32 %v4809, %v5016
          %v5018 = vpop.f32.mrb[0].mxu0
          %5019 = vmatprep.mubr.bf16.mxu0 0
          %5020 = vmatmul.mubr.bf16.gmra.mrb[0].mxu0 %v4740
          %v5021 = vpop.f32.mrb[0].mxu0
          %v5022 = vadd.f32 %v4809, %v5021
          %v5023 = vpop.f32.mrb[0].mxu0
          %v5024 = vpop.f32.mrb[0].mxu0
          %v5025 = vadd.f32 %v4809, %v5024
          %v5026 = vpop.f32.mrb[0].mxu0
          %5027 = vmatprep.mubr.bf16.mxu0 0
          %5028 = vmatmul.mubr.bf16.gmra.mrb[0].mxu0 %v4741
          %v5029 = vpop.f32.mrb[0].mxu0
          %v5030 = vadd.f32 %v4809, %v5029
          %v5031 = vpop.f32.mrb[0].mxu0
          %v5032 = vpop.f32.mrb[0].mxu0
          %v5033 = vadd.f32 %v4809, %v5032
          %v5034 = vpop.f32.mrb[0].mxu0
          %5035 = vmatprep.mubr.bf16.mxu0 0
          %5036 = vmatmul.mubr.bf16.gmra.mrb[0].mxu0 %v4742
          %v5037 = vpop.f32.mrb[0].mxu0
          %v5038 = vadd.f32 %v4809, %v5037
          %v5039 = vpop.f32.mrb[0].mxu0
          %v5040 = vpop.f32.mrb[0].mxu0
          %v5041 = vadd.f32 %v4809, %v5040
          %v5042 = vpop.f32.mrb[0].mxu0
          %5043 = vmatprep.mubr.bf16.mxu0 0
          %5044 = vmatmul.mubr.bf16.gmra.mrb[0].mxu0 %v4743
          %v5045 = vpop.f32.mrb[0].mxu0
          %v5046 = vadd.f32 %v4809, %v5045
          %v5047 = vpop.f32.mrb[0].mxu0
          %v5048 = vpop.f32.mrb[0].mxu0
          %v5049 = vadd.f32 %v4809, %v5048
          %v5050 = vpop.f32.mrb[0].mxu0
          %5051 = vmatprep.mubr.bf16.mxu0 0
          %5052 = vmatmul.mubr.bf16.gmra.mrb[0].mxu0 %v4744
          %v5053 = vpop.f32.mrb[0].mxu0
          %v5054 = vadd.f32 %v4809, %v5053
          %v5055 = vpop.f32.mrb[0].mxu0
          %v5056 = vpop.f32.mrb[0].mxu0
          %v5057 = vadd.f32 %v4809, %v5056
          %v5058 = vpop.f32.mrb[0].mxu0
          %5059 = vmatprep.mubr.bf16.mxu0 0
          %5060 = vmatmul.mubr.bf16.gmra.mrb[0].mxu0 %v4745
          %v5061 = vpop.f32.mrb[0].mxu0
          %v5062 = vadd.f32 %v4809, %v5061
          %v5063 = vpop.f32.mrb[0].mxu0
          %v5064 = vpop.f32.mrb[0].mxu0
          %v5065 = vadd.f32 %v4809, %v5064
          %v5066 = vpop.f32.mrb[0].mxu0
          %5067 = vmatprep.mubr.bf16.mxu0 0
          %5068 = vmatmul.mubr.bf16.gmra.mrb[0].mxu0 %v4746
          %v5069 = vpop.f32.mrb[0].mxu0
          %v5070 = vadd.f32 %v4809, %v5069
          %v5071 = vpop.f32.mrb[0].mxu0
          %v5072 = vpop.f32.mrb[0].mxu0
          %v5073 = vadd.f32 %v4809, %v5072
          %v5074 = vpop.f32.mrb[0].mxu0
          %5075 = vmatprep.mubr.bf16.mxu0 0
          %5076 = vmatmul.mubr.bf16.gmra.mrb[0].mxu0 %v4747
          %v5077 = vpop.f32.mrb[0].mxu0
          %v5078 = vadd.f32 %v4809, %v5077
          %v5079 = vpop.f32.mrb[0].mxu0
          %v5080 = vpop.f32.mrb[0].mxu0
          %v5081 = vadd.f32 %v4809, %v5080
          %v5082 = vpop.f32.mrb[0].mxu0
          %5083 = vmatprep.mubr.bf16.mxu0 0
          %5084 = vmatmul.mubr.bf16.gmra.mrb[0].mxu0 %v4748
          %v5085 = vpop.f32.mrb[0].mxu0
          %v5086 = vadd.f32 %v4809, %v5085
          %v5087 = vpop.f32.mrb[0].mxu0
          %v5088 = vpop.f32.mrb[0].mxu0
          %v5089 = vadd.f32 %v4809, %v5088
          %v5090 = vpop.f32.mrb[0].mxu0
          %5091 = vmatprep.mubr.bf16.mxu0 0
          %5092 = vmatmul.mubr.bf16.gmra.mrb[0].mxu0 %v4749
          %v5093 = vpop.f32.mrb[0].mxu0
          %v5094 = vadd.f32 %v4809, %v5093
          %v5095 = vpop.f32.mrb[0].mxu0
          %v5096 = vpop.f32.mrb[0].mxu0
          %v5097 = vadd.f32 %v4809, %v5096
          %v5098 = vpop.f32.mrb[0].mxu0
          %5099 = vmatprep.mubr.bf16.mxu0 0
          %5100 = vmatmul.mubr.bf16.gmra.mrb[0].mxu0 %v4750
          %v5101 = vpop.f32.mrb[0].mxu0
          %v5102 = vadd.f32 %v4809, %v5101
          %v5103 = vpop.f32.mrb[0].mxu0
          %v5104 = vpop.f32.mrb[0].mxu0
          %v5105 = vadd.f32 %v4809, %v5104
          %v5106 = vpop.f32.mrb[0].mxu0
          %5107 = vmatprep.mubr.bf16.mxu0 0
          %5108 = vmatmul.mubr.bf16.gmra.mrb[0].mxu0 %v4751
          %v5109 = vpop.f32.mrb[0].mxu0
          %v5110 = vadd.f32 %v4809, %v5109
          %v5111 = vpop.f32.mrb[0].mxu0
          %v5112 = vpop.f32.mrb[0].mxu0
          %v5113 = vadd.f32 %v4809, %v5112
          %v5114 = vpop.f32.mrb[0].mxu0
          %5115 = vmatprep.mubr.bf16.mxu0 0
          %5116 = vmatmul.mubr.bf16.gmra.mrb[0].mxu0 %v4752
          %v5117 = vpop.f32.mrb[0].mxu0
          %v5118 = vadd.f32 %v4809, %v5117
          %v5119 = vpop.f32.mrb[0].mxu0
          %v5120 = vpop.f32.mrb[0].mxu0
          %v5121 = vadd.f32 %v4809, %v5120
          %v5122 = vpop.f32.mrb[0].mxu0
          %5123 = vmatprep.mubr.bf16.mxu0 0
          %5124 = vmatmul.mubr.bf16.gmra.mrb[0].mxu0 %v4753
          %v5125 = vpop.f32.mrb[0].mxu0
          %v5126 = vadd.f32 %v4809, %v5125
          %v5127 = vpop.f32.mrb[0].mxu0
          %v5128 = vpop.f32.mrb[0].mxu0
          %v5129 = vadd.f32 %v4809, %v5128
          %v5130 = vpop.f32.mrb[0].mxu0
          %5131 = vmatprep.mubr.bf16.mxu0 0
          %5132 = vmatmul.mubr.bf16.gmra.mrb[0].mxu0 %v4754
          %v5133 = vpop.f32.mrb[0].mxu0
          %v5134 = vadd.f32 %v4809, %v5133
          %v5135 = vpop.f32.mrb[0].mxu0
          %v5136 = vpop.f32.mrb[0].mxu0
          %v5137 = vadd.f32 %v4809, %v5136
          %v5138 = vpop.f32.mrb[0].mxu0
          %5139 = vmatprep.mubr.bf16.mxu0 0
          %5140 = vmatmul.mubr.bf16.gmra.mrb[0].mxu0 %v4755
          %v5141 = vpop.f32.mrb[0].mxu0
          %v5142 = vadd.f32 %v4809, %v5141
          %v5143 = vpop.f32.mrb[0].mxu0
          %v5144 = vpop.f32.mrb[0].mxu0
          %v5145 = vadd.f32 %v4809, %v5144
          %v5146 = vpop.f32.mrb[0].mxu0
          %5147 = vmatprep.mubr.bf16.mxu0 0
          %5148 = vmatmul.mubr.bf16.gmra.mrb[0].mxu0 %v4756
          %v5149 = vpop.f32.mrb[0].mxu0
          %v5150 = vadd.f32 %v4809, %v5149
          %v5151 = vpop.f32.mrb[0].mxu0
          %v5152 = vpop.f32.mrb[0].mxu0
          %v5153 = vadd.f32 %v4809, %v5152
          %v5154 = vpop.f32.mrb[0].mxu0
          %5155 = vmatprep.mubr.bf16.mxu0 0
          %5156 = vmatmul.mubr.bf16.gmra.mrb[0].mxu0 %v4757
          %v5157 = vpop.f32.mrb[0].mxu0
          %v5158 = vadd.f32 %v4809, %v5157
          %v5159 = vpop.f32.mrb[0].mxu0
          %v5160 = vpop.f32.mrb[0].mxu0
          %v5161 = vadd.f32 %v4809, %v5160
          %v5162 = vpop.f32.mrb[0].mxu0
          %5163 = vmatprep.mubr.bf16.mxu0 0
          %5164 = vmatmul.mubr.bf16.gmra.mrb[0].mxu0 %v4758
          %v5165 = vpop.f32.mrb[0].mxu0
          %v5166 = vadd.f32 %v4809, %v5165
          %v5167 = vpop.f32.mrb[0].mxu0
          %v5168 = vpop.f32.mrb[0].mxu0
          %v5169 = vadd.f32 %v4809, %v5168
          %v5170 = vpop.f32.mrb[0].mxu0
          %5171 = vmatprep.mubr.bf16.mxu0 0
          %5172 = vmatmul.mubr.bf16.gmra.mrb[0].mxu0 %v4759
          %v5173 = vpop.f32.mrb[0].mxu0
          %v5174 = vadd.f32 %v4809, %v5173
          %v5175 = vpop.f32.mrb[0].mxu0
          %v5176 = vpop.f32.mrb[0].mxu0
          %v5177 = vadd.f32 %v4809, %v5176
          %v5178 = vpop.f32.mrb[0].mxu0
          %5179 = vmatprep.mubr.bf16.mxu0 0
          %5180 = vmatmul.mubr.bf16.gmra.mrb[0].mxu0 %v4760
          %v5181 = vpop.f32.mrb[0].mxu0
          %v5182 = vadd.f32 %v4809, %v5181
          %v5183 = vpop.f32.mrb[0].mxu0
          %v5184 = vpop.f32.mrb[0].mxu0
          %v5185 = vadd.f32 %v4809, %v5184
          %v5186 = vpop.f32.mrb[0].mxu0
          %5187 = vmatprep.mubr.bf16.mxu0 0
          %5188 = vmatmul.mubr.bf16.gmra.mrb[0].mxu0 %v4761
          %v5189 = vpop.f32.mrb[0].mxu0
          %v5190 = vadd.f32 %v4809, %v5189
          %v5191 = vpop.f32.mrb[0].mxu0
          %v5192 = vpop.f32.mrb[0].mxu0
          %v5193 = vadd.f32 %v4809, %v5192
          %v5194 = vpop.f32.mrb[0].mxu0
          %5195 = vmatprep.mubr.bf16.mxu0 0
          %5196 = vmatmul.mubr.bf16.gmra.mrb[0].mxu0 %v4762
          %v5197 = vpop.f32.mrb[0].mxu0
          %v5198 = vadd.f32 %v4809, %v5197
          %v5199 = vpop.f32.mrb[0].mxu0
          %v5200 = vpop.f32.mrb[0].mxu0
          %v5201 = vadd.f32 %v4809, %v5200
          %v5202 = vpop.f32.mrb[0].mxu0
          %5203 = vmatprep.mubr.bf16.mxu0 0
          %5204 = vmatmul.mubr.bf16.gmra.mrb[0].mxu0 %v4763
          %v5205 = vpop.f32.mrb[0].mxu0
          %v5206 = vadd.f32 %v4809, %v5205
          %v5207 = vpop.f32.mrb[0].mxu0
          %v5208 = vpop.f32.mrb[0].mxu0
          %v5209 = vadd.f32 %v4809, %v5208
          %v5210 = vpop.f32.mrb[0].mxu0
          %5211 = vmatprep.mubr.bf16.mxu0 0
          %5212 = vmatmul.mubr.bf16.gmra.mrb[0].mxu0 %v4764
          %v5213 = vpop.f32.mrb[0].mxu0
          %v5214 = vadd.f32 %v4809, %v5213
          %v5215 = vpop.f32.mrb[0].mxu0
          %v5216 = vpop.f32.mrb[0].mxu0
          %v5217 = vadd.f32 %v4809, %v5216
          %v5218 = vpop.f32.mrb[0].mxu0
          %5219 = vmatprep.mubr.bf16.mxu0 0
          %5220 = vmatmul.mubr.bf16.gmra.mrb[0].mxu0 %v4765
          %v5221 = vpop.f32.mrb[0].mxu0
          %v5222 = vadd.f32 %v4809, %v5221
          %v5223 = vpop.f32.mrb[0].mxu0
          %v5224 = vpop.f32.mrb[0].mxu0
          %v5225 = vadd.f32 %v4809, %v5224
          %v5226 = vpop.f32.mrb[0].mxu0
          %5227 = vmatprep.mubr.bf16.mxu0 0
          %5228 = vmatmul.mubr.bf16.gmra.mrb[0].mxu0 %v4766
          %v5229 = vpop.f32.mrb[0].mxu0
          %v5230 = vadd.f32 %v4809, %v5229
          %v5231 = vpop.f32.mrb[0].mxu0
          %v5232 = vpop.f32.mrb[0].mxu0
          %v5233 = vadd.f32 %v4809, %v5232
          %v5234 = vpop.f32.mrb[0].mxu0
          %5235 = vmatprep.mubr.bf16.mxu0 0
          %5236 = vmatmul.mubr.bf16.gmra.mrb[0].mxu0 %v4767
          %v5237 = vpop.f32.mrb[0].mxu0
          %v5238 = vadd.f32 %v4809, %v5237
          %v5239 = vpop.f32.mrb[0].mxu0
          %v5240 = vpop.f32.mrb[0].mxu0
          %v5241 = vadd.f32 %v4809, %v5240
          %v5242 = vpop.f32.mrb[0].mxu0
          %5243 = vmatprep.mubr.bf16.mxu0 0
          %5244 = vmatmul.mubr.bf16.gmra.mrb[0].mxu0 %v4768
          %v5245 = vpop.f32.mrb[0].mxu0
          %v5246 = vadd.f32 %v4809, %v5245
          %v5247 = vpop.f32.mrb[0].mxu0
          %v5248 = vpop.f32.mrb[0].mxu0
          %v5249 = vadd.f32 %v4809, %v5248
          %v5250 = vpop.f32.mrb[0].mxu0
          %5251 = vmatprep.mubr.bf16.mxu0 0
          %5252 = vmatmul.mubr.bf16.gmra.mrb[0].mxu0 %v4769
          %v5253 = vpop.f32.mrb[0].mxu0
          %v5254 = vadd.f32 %v4809, %v5253
          %v5255 = vpop.f32.mrb[0].mxu0
          %v5256 = vpop.f32.mrb[0].mxu0
          %v5257 = vadd.f32 %v4809, %v5256
          %v5258 = vpop.f32.mrb[0].mxu0
          %5259 = vmatprep.mubr.bf16.mxu0 0
          %5260 = vmatmul.mubr.bf16.gmra.mrb[0].mxu0 %v4770
          %v5261 = vpop.f32.mrb[0].mxu0
          %v5262 = vadd.f32 %v4809, %v5261
          %v5263 = vpop.f32.mrb[0].mxu0
          %v5264 = vpop.f32.mrb[0].mxu0
          %v5265 = vadd.f32 %v4809, %v5264
          %v5266 = vpop.f32.mrb[0].mxu0
          %5267 = vmatprep.mubr.bf16.mxu0 0
          %5268 = vmatmul.mubr.bf16.gmra.mrb[0].mxu0 %v4771
          %v5269 = vpop.f32.mrb[0].mxu0
          %v5270 = vadd.f32 %v4809, %v5269
          %v5271 = vpop.f32.mrb[0].mxu0
          %v5272 = vpop.f32.mrb[0].mxu0
          %v5273 = vadd.f32 %v4809, %v5272
          %v5274 = vpop.f32.mrb[0].mxu0
          %5275 = vmatprep.mubr.bf16.mxu0 0
          %5276 = vmatmul.mubr.bf16.gmra.mrb[0].mxu0 %v4772
          %v5277 = vpop.f32.mrb[0].mxu0
          %v5278 = vadd.f32 %v4809, %v5277
          %v5279 = vpop.f32.mrb[0].mxu0
          %v5280 = vpop.f32.mrb[0].mxu0
          %v5281 = vadd.f32 %v4809, %v5280
          %v5282 = vpop.f32.mrb[0].mxu0
          %5283 = vmatprep.mubr.bf16.mxu0 0
          %5284 = vmatmul.mubr.bf16.gmra.mrb[0].mxu0 %v4773
          %v5285 = vpop.f32.mrb[0].mxu0
          %v5286 = vadd.f32 %v4809, %v5285
          %v5287 = vpop.f32.mrb[0].mxu0
          %v5288 = vpop.f32.mrb[0].mxu0
          %v5289 = vadd.f32 %v4809, %v5288
          %v5290 = vpop.f32.mrb[0].mxu0
          %5291 = vmatprep.mubr.bf16.mxu0 0
          %5292 = vmatmul.mubr.bf16.gmra.mrb[0].mxu0 %v4774
          %v5293 = vpop.f32.mrb[0].mxu0
          %v5294 = vadd.f32 %v4809, %v5293
          %v5295 = vpop.f32.mrb[0].mxu0
          %v5296 = vpop.f32.mrb[0].mxu0
          %v5297 = vadd.f32 %v4809, %v5296
          %v5298 = vpop.f32.mrb[0].mxu0
          %5299 = vmatprep.mubr.bf16.mxu0 0
          %5300 = vmatmul.mubr.bf16.gmra.mrb[0].mxu0 %v4775
          %v5301 = vpop.f32.mrb[0].mxu0
          %v5302 = vadd.f32 %v4809, %v5301
          %v5303 = vpop.f32.mrb[0].mxu0
          %v5304 = vpop.f32.mrb[0].mxu0
          %v5305 = vadd.f32 %v4809, %v5304
          %v5306 = vpop.f32.mrb[0].mxu0
          %5307 = vmatprep.mubr.bf16.mxu0 0
          %5308 = vmatmul.mubr.bf16.gmra.mrb[0].mxu0 %v4776
          %v5309 = vpop.f32.mrb[0].mxu0
          %v5310 = vadd.f32 %v4809, %v5309
          %v5311 = vpop.f32.mrb[0].mxu0
          %v5312 = vpop.f32.mrb[0].mxu0
          %v5313 = vadd.f32 %v4809, %v5312
          %v5314 = vpop.f32.mrb[0].mxu0
          %5315 = vmatprep.mubr.bf16.mxu0 0
          %5316 = vmatmul.mubr.bf16.gmra.mrb[0].mxu0 %v4777
          %v5317 = vpop.f32.mrb[0].mxu0
          %v5318 = vadd.f32 %v4809, %v5317
          %v5319 = vpop.f32.mrb[0].mxu0
          %v5320 = vpop.f32.mrb[0].mxu0
          %v5321 = vadd.f32 %v4809, %v5320
          %v5322 = vpop.f32.mrb[0].mxu0
          %5323 = vmatprep.mubr.bf16.mxu0 0
          %5324 = vmatmul.mubr.bf16.gmra.mrb[0].mxu0 %v4778
          %v5325 = vpop.f32.mrb[0].mxu0
          %v5326 = vadd.f32 %v4809, %v5325
          %v5327 = vpop.f32.mrb[0].mxu0
          %v5328 = vpop.f32.mrb[0].mxu0
          %v5329 = vadd.f32 %v4809, %v5328
          %v5330 = vpop.f32.mrb[0].mxu0
          %5331 = vmatprep.mubr.bf16.mxu0 0
          %5332 = vmatmul.mubr.bf16.gmra.mrb[0].mxu0 %v4779
          %v5333 = vpop.f32.mrb[0].mxu0
          %v5334 = vadd.f32 %v4809, %v5333
          %v5335 = vpop.f32.mrb[0].mxu0
          %v5336 = vpop.f32.mrb[0].mxu0
          %v5337 = vadd.f32 %v4809, %v5336
          %v5338 = vpop.f32.mrb[0].mxu0
          %5339 = vmatprep.mubr.bf16.mxu0 0
          %5340 = vmatmul.mubr.bf16.gmra.mrb[0].mxu0 %v4780
          %v5341 = vpop.f32.mrb[0].mxu0
          %v5342 = vadd.f32 %v4809, %v5341
          %v5343 = vpop.f32.mrb[0].mxu0
          %v5344 = vpop.f32.mrb[0].mxu0
          %v5345 = vadd.f32 %v4809, %v5344
          %v5346 = vpop.f32.mrb[0].mxu0
          %5347 = vmatprep.mubr.bf16.mxu0 0
          %5348 = vmatmul.mubr.bf16.gmra.mrb[0].mxu0 %v4781
          %v5349 = vpop.f32.mrb[0].mxu0
          %v5350 = vadd.f32 %v4809, %v5349
          %v5351 = vpop.f32.mrb[0].mxu0
          %v5352 = vpop.f32.mrb[0].mxu0
          %v5353 = vadd.f32 %v4809, %v5352
          %v5354 = vpop.f32.mrb[0].mxu0
          %5355 = vmatprep.mubr.bf16.mxu0 0
          %5356 = vmatmul.mubr.bf16.gmra.mrb[0].mxu0 %v4782
          %v5357 = vpop.f32.mrb[0].mxu0
          %v5358 = vadd.f32 %v4809, %v5357
          %v5359 = vpop.f32.mrb[0].mxu0
          %v5360 = vpop.f32.mrb[0].mxu0
          %v5361 = vadd.f32 %v4809, %v5360
          %v5362 = vpop.f32.mrb[0].mxu0
          %5363 = vmatprep.mubr.bf16.mxu0 0
          %5364 = vmatmul.mubr.bf16.gmra.mrb[0].mxu0 %v4783
          %v5365 = vpop.f32.mrb[0].mxu0
          %v5366 = vadd.f32 %v4809, %v5365
          %v5367 = vpop.f32.mrb[0].mxu0
          %v5368 = vpop.f32.mrb[0].mxu0
          %v5369 = vadd.f32 %v4809, %v5368
          %v5370 = vpop.f32.mrb[0].mxu0
          %5371 = vmatprep.mubr.bf16.mxu0 0
          %5372 = vmatmul.mubr.bf16.gmra.mrb[0].mxu0 %v4784
          %v5373 = vpop.f32.mrb[0].mxu0
          %v5374 = vadd.f32 %v4809, %v5373
          %v5375 = vpop.f32.mrb[0].mxu0
          %v5376 = vpop.f32.mrb[0].mxu0
          %v5377 = vadd.f32 %v4809, %v5376
          %v5378 = vpop.f32.mrb[0].mxu0
          %5379 = vmatprep.mubr.bf16.mxu0 0
          %5380 = vmatmul.mubr.bf16.gmra.mrb[0].mxu0 %v4785
          %v5381 = vpop.f32.mrb[0].mxu0
          %v5382 = vadd.f32 %v4809, %v5381
          %v5383 = vpop.f32.mrb[0].mxu0
          %v5384 = vpop.f32.mrb[0].mxu0
          %v5385 = vadd.f32 %v4809, %v5384
          %v5386 = vpop.f32.mrb[0].mxu0
          %5387 = vmatprep.mubr.bf16.mxu0 0
          %5388 = vmatmul.mubr.bf16.gmra.mrb[0].mxu0 %v4786
          %v5389 = vpop.f32.mrb[0].mxu0
          %v5390 = vadd.f32 %v4809, %v5389
          %v5391 = vpop.f32.mrb[0].mxu0
          %v5392 = vpop.f32.mrb[0].mxu0
          %v5393 = vadd.f32 %v4809, %v5392
          %v5394 = vpop.f32.mrb[0].mxu0
          %5395 = vmatprep.mubr.bf16.mxu0 0
          %5396 = vmatmul.mubr.bf16.gmra.mrb[0].mxu0 %v4787
          %v5397 = vpop.f32.mrb[0].mxu0
          %v5398 = vadd.f32 %v4809, %v5397
          %v5399 = vpop.f32.mrb[0].mxu0
          %v5400 = vpop.f32.mrb[0].mxu0
          %v5401 = vadd.f32 %v4809, %v5400
          %v5402 = vpop.f32.mrb[0].mxu0
          %5403 = vdwg.mxu0
          // Predicated region
          $region81: #{tpu_custom_call.1} parent=75 // pred_check
            %p5404 = pneg %p4110
          $region82: #{tpu_custom_call.1} parent=75 // pred_check_branch
            %5406 = sbr.rel (%p5404) target = $region84
          $region83: #{tpu_custom_call.1} parent=75 // pred_region
            %vm5407 = vcmask 523264
            %v5408 = vsel %vm5407, %v4894, 0.0
            %v5409 = vsel %vm5407, %v4897, 0.0
            %v5410 = vadd.f32 %v5408, %v5409
            %v5411 = vsel %vm5407, %v4902, 0.0
            %v5412 = vadd.f32 %v5410, %v5411
            %v5413 = vsel %vm5407, %v4905, 0.0
            %v5414 = vadd.f32 %v5412, %v5413
            %v5415 = vsel %vm5407, %v4910, 0.0
            %v5416 = vadd.f32 %v5414, %v5415
            %v5417 = vsel %vm5407, %v4913, 0.0
            %v5418 = vadd.f32 %v5416, %v5417
            %v5419 = vsel %vm5407, %v4918, 0.0
            %v5420 = vadd.f32 %v5418, %v5419
            %v5421 = vsel %vm5407, %v4921, 0.0
            %v5422 = vadd.f32 %v5420, %v5421
            %v5423 = vsel %vm5407, %v4926, 0.0
            %v5424 = vadd.f32 %v5422, %v5423
            %v5425 = vsel %vm5407, %v4929, 0.0
            %v5426 = vadd.f32 %v5424, %v5425
            %v5427 = vsel %vm5407, %v4934, 0.0
            %v5428 = vadd.f32 %v5426, %v5427
            %v5429 = vsel %vm5407, %v4937, 0.0
            %v5430 = vadd.f32 %v5428, %v5429
            %v5431 = vsel %vm5407, %v4942, 0.0
            %v5432 = vadd.f32 %v5430, %v5431
            %v5433 = vsel %vm5407, %v4945, 0.0
            %v5434 = vadd.f32 %v5432, %v5433
            %v5435 = vsel %vm5407, %v4950, 0.0
            %v5436 = vadd.f32 %v5434, %v5435
            %v5437 = vsel %vm5407, %v4953, 0.0
            %v5438 = vadd.f32 %v5436, %v5437
            %v5439 = vsel %vm5407, %v4958, 0.0
            %v5440 = vadd.f32 %v5438, %v5439
            %v5441 = vsel %vm5407, %v4961, 0.0
            %v5442 = vadd.f32 %v5440, %v5441
            %v5443 = vsel %vm5407, %v4966, 0.0
            %v5444 = vadd.f32 %v5442, %v5443
            %v5445 = vsel %vm5407, %v4969, 0.0
            %v5446 = vadd.f32 %v5444, %v5445
            %v5447 = vsel %vm5407, %v4974, 0.0
            %v5448 = vadd.f32 %v5446, %v5447
            %v5449 = vsel %vm5407, %v4977, 0.0
            %v5450 = vadd.f32 %v5448, %v5449
            %v5451 = vsel %vm5407, %v4982, 0.0
            %v5452 = vadd.f32 %v5450, %v5451
            %v5453 = vsel %vm5407, %v4985, 0.0
            %v5454 = vadd.f32 %v5452, %v5453
            %v5455 = vsel %vm5407, %v4990, 0.0
            %v5456 = vadd.f32 %v5454, %v5455
            %v5457 = vsel %vm5407, %v4993, 0.0
            %v5458 = vadd.f32 %v5456, %v5457
            %v5459 = vsel %vm5407, %v4998, 0.0
            %v5460 = vadd.f32 %v5458, %v5459
            %v5461 = vsel %vm5407, %v5001, 0.0
            %v5462 = vadd.f32 %v5460, %v5461
            %v5463 = vsel %vm5407, %v5006, 0.0
            %v5464 = vadd.f32 %v5462, %v5463
            %v5465 = vsel %vm5407, %v5009, 0.0
            %v5466 = vadd.f32 %v5464, %v5465
            %v5467 = vsel %vm5407, %v5014, 0.0
            %v5468 = vadd.f32 %v5466, %v5467
            %v5469 = vsel %vm5407, %v5017, 0.0
            %v5470 = vadd.f32 %v5468, %v5469
            %v5471 = vsel %vm5407, %v5022, 0.0
            %v5472 = vadd.f32 %v5470, %v5471
            %v5473 = vsel %vm5407, %v5025, 0.0
            %v5474 = vadd.f32 %v5472, %v5473
            %v5475 = vsel %vm5407, %v5030, 0.0
            %v5476 = vadd.f32 %v5474, %v5475
            %v5477 = vsel %vm5407, %v5033, 0.0
            %v5478 = vadd.f32 %v5476, %v5477
            %v5479 = vsel %vm5407, %v5038, 0.0
            %v5480 = vadd.f32 %v5478, %v5479
            %v5481 = vsel %vm5407, %v5041, 0.0
            %v5482 = vadd.f32 %v5480, %v5481
            %v5483 = vsel %vm5407, %v5046, 0.0
            %v5484 = vadd.f32 %v5482, %v5483
            %v5485 = vsel %vm5407, %v5049, 0.0
            %v5486 = vadd.f32 %v5484, %v5485
            %v5487 = vsel %vm5407, %v5054, 0.0
            %v5488 = vadd.f32 %v5486, %v5487
            %v5489 = vsel %vm5407, %v5057, 0.0
            %v5490 = vadd.f32 %v5488, %v5489
            %v5491 = vsel %vm5407, %v5062, 0.0
            %v5492 = vadd.f32 %v5490, %v5491
            %v5493 = vsel %vm5407, %v5065, 0.0
            %v5494 = vadd.f32 %v5492, %v5493
            %v5495 = vsel %vm5407, %v5070, 0.0
            %v5496 = vadd.f32 %v5494, %v5495
            %v5497 = vsel %vm5407, %v5073, 0.0
            %v5498 = vadd.f32 %v5496, %v5497
            %v5499 = vsel %vm5407, %v5078, 0.0
            %v5500 = vadd.f32 %v5498, %v5499
            %v5501 = vsel %vm5407, %v5081, 0.0
            %v5502 = vadd.f32 %v5500, %v5501
            %v5503 = vsel %vm5407, %v5086, 0.0
            %v5504 = vadd.f32 %v5502, %v5503
            %v5505 = vsel %vm5407, %v5089, 0.0
            %v5506 = vadd.f32 %v5504, %v5505
            %v5507 = vsel %vm5407, %v5094, 0.0
            %v5508 = vadd.f32 %v5506, %v5507
            %v5509 = vsel %vm5407, %v5097, 0.0
            %v5510 = vadd.f32 %v5508, %v5509
            %v5511 = vsel %vm5407, %v5102, 0.0
            %v5512 = vadd.f32 %v5510, %v5511
            %v5513 = vsel %vm5407, %v5105, 0.0
            %v5514 = vadd.f32 %v5512, %v5513
            %v5515 = vsel %vm5407, %v5110, 0.0
            %v5516 = vadd.f32 %v5514, %v5515
            %v5517 = vsel %vm5407, %v5113, 0.0
            %v5518 = vadd.f32 %v5516, %v5517
            %v5519 = vsel %vm5407, %v5118, 0.0
            %v5520 = vadd.f32 %v5518, %v5519
            %v5521 = vsel %vm5407, %v5121, 0.0
            %v5522 = vadd.f32 %v5520, %v5521
            %v5523 = vsel %vm5407, %v5126, 0.0
            %v5524 = vadd.f32 %v5522, %v5523
            %v5525 = vsel %vm5407, %v5129, 0.0
            %v5526 = vadd.f32 %v5524, %v5525
            %v5527 = vsel %vm5407, %v5134, 0.0
            %v5528 = vadd.f32 %v5526, %v5527
            %v5529 = vsel %vm5407, %v5137, 0.0
            %v5530 = vadd.f32 %v5528, %v5529
            %v5531 = vsel %vm5407, %v5142, 0.0
            %v5532 = vadd.f32 %v5530, %v5531
            %v5533 = vsel %vm5407, %v5145, 0.0
            %v5534 = vadd.f32 %v5532, %v5533
            %v5535 = vsel %vm5407, %v5150, 0.0
            %v5536 = vadd.f32 %v5534, %v5535
            %v5537 = vsel %vm5407, %v5153, 0.0
            %v5538 = vadd.f32 %v5536, %v5537
            %v5539 = vsel %vm5407, %v5158, 0.0
            %v5540 = vadd.f32 %v5538, %v5539
            %v5541 = vsel %vm5407, %v5161, 0.0
            %v5542 = vadd.f32 %v5540, %v5541
            %v5543 = vsel %vm5407, %v5166, 0.0
            %v5544 = vadd.f32 %v5542, %v5543
            %v5545 = vsel %vm5407, %v5169, 0.0
            %v5546 = vadd.f32 %v5544, %v5545
            %v5547 = vsel %vm5407, %v5174, 0.0
            %v5548 = vadd.f32 %v5546, %v5547
            %v5549 = vsel %vm5407, %v5177, 0.0
            %v5550 = vadd.f32 %v5548, %v5549
            %v5551 = vsel %vm5407, %v5182, 0.0
            %v5552 = vadd.f32 %v5550, %v5551
            %v5553 = vsel %vm5407, %v5185, 0.0
            %v5554 = vadd.f32 %v5552, %v5553
            %v5555 = vsel %vm5407, %v5190, 0.0
            %v5556 = vadd.f32 %v5554, %v5555
            %v5557 = vsel %vm5407, %v5193, 0.0
            %v5558 = vadd.f32 %v5556, %v5557
            %v5559 = vsel %vm5407, %v5198, 0.0
            %v5560 = vadd.f32 %v5558, %v5559
            %v5561 = vsel %vm5407, %v5201, 0.0
            %v5562 = vadd.f32 %v5560, %v5561
            %v5563 = vsel %vm5407, %v5206, 0.0
            %v5564 = vadd.f32 %v5562, %v5563
            %v5565 = vsel %vm5407, %v5209, 0.0
            %v5566 = vadd.f32 %v5564, %v5565
            %v5567 = vsel %vm5407, %v5214, 0.0
            %v5568 = vadd.f32 %v5566, %v5567
            %v5569 = vsel %vm5407, %v5217, 0.0
            %v5570 = vadd.f32 %v5568, %v5569
            %v5571 = vsel %vm5407, %v5222, 0.0
            %v5572 = vadd.f32 %v5570, %v5571
            %v5573 = vsel %vm5407, %v5225, 0.0
            %v5574 = vadd.f32 %v5572, %v5573
            %v5575 = vsel %vm5407, %v5230, 0.0
            %v5576 = vadd.f32 %v5574, %v5575
            %v5577 = vsel %vm5407, %v5233, 0.0
            %v5578 = vadd.f32 %v5576, %v5577
            %v5579 = vsel %vm5407, %v5238, 0.0
            %v5580 = vadd.f32 %v5578, %v5579
            %v5581 = vsel %vm5407, %v5241, 0.0
            %v5582 = vadd.f32 %v5580, %v5581
            %v5583 = vsel %vm5407, %v5246, 0.0
            %v5584 = vadd.f32 %v5582, %v5583
            %v5585 = vsel %vm5407, %v5249, 0.0
            %v5586 = vadd.f32 %v5584, %v5585
            %v5587 = vsel %vm5407, %v5254, 0.0
            %v5588 = vadd.f32 %v5586, %v5587
            %v5589 = vsel %vm5407, %v5257, 0.0
            %v5590 = vadd.f32 %v5588, %v5589
            %v5591 = vsel %vm5407, %v5262, 0.0
            %v5592 = vadd.f32 %v5590, %v5591
            %v5593 = vsel %vm5407, %v5265, 0.0
            %v5594 = vadd.f32 %v5592, %v5593
            %v5595 = vsel %vm5407, %v5270, 0.0
            %v5596 = vadd.f32 %v5594, %v5595
            %v5597 = vsel %vm5407, %v5273, 0.0
            %v5598 = vadd.f32 %v5596, %v5597
            %v5599 = vsel %vm5407, %v5278, 0.0
            %v5600 = vadd.f32 %v5598, %v5599
            %v5601 = vsel %vm5407, %v5281, 0.0
            %v5602 = vadd.f32 %v5600, %v5601
            %v5603 = vsel %vm5407, %v5286, 0.0
            %v5604 = vadd.f32 %v5602, %v5603
            %v5605 = vsel %vm5407, %v5289, 0.0
            %v5606 = vadd.f32 %v5604, %v5605
            %v5607 = vsel %vm5407, %v5294, 0.0
            %v5608 = vadd.f32 %v5606, %v5607
            %v5609 = vsel %vm5407, %v5297, 0.0
            %v5610 = vadd.f32 %v5608, %v5609
            %v5611 = vsel %vm5407, %v5302, 0.0
            %v5612 = vadd.f32 %v5610, %v5611
            %v5613 = vsel %vm5407, %v5305, 0.0
            %v5614 = vadd.f32 %v5612, %v5613
            %v5615 = vsel %vm5407, %v5310, 0.0
            %v5616 = vadd.f32 %v5614, %v5615
            %v5617 = vsel %vm5407, %v5313, 0.0
            %v5618 = vadd.f32 %v5616, %v5617
            %v5619 = vsel %vm5407, %v5318, 0.0
            %v5620 = vadd.f32 %v5618, %v5619
            %v5621 = vsel %vm5407, %v5321, 0.0
            %v5622 = vadd.f32 %v5620, %v5621
            %v5623 = vsel %vm5407, %v5326, 0.0
            %v5624 = vadd.f32 %v5622, %v5623
            %v5625 = vsel %vm5407, %v5329, 0.0
            %v5626 = vadd.f32 %v5624, %v5625
            %v5627 = vsel %vm5407, %v5334, 0.0
            %v5628 = vadd.f32 %v5626, %v5627
            %v5629 = vsel %vm5407, %v5337, 0.0
            %v5630 = vadd.f32 %v5628, %v5629
            %v5631 = vsel %vm5407, %v5342, 0.0
            %v5632 = vadd.f32 %v5630, %v5631
            %v5633 = vsel %vm5407, %v5345, 0.0
            %v5634 = vadd.f32 %v5632, %v5633
            %v5635 = vsel %vm5407, %v5350, 0.0
            %v5636 = vadd.f32 %v5634, %v5635
            %v5637 = vsel %vm5407, %v5353, 0.0
            %v5638 = vadd.f32 %v5636, %v5637
            %v5639 = vsel %vm5407, %v5358, 0.0
            %v5640 = vadd.f32 %v5638, %v5639
            %v5641 = vsel %vm5407, %v5361, 0.0
            %v5642 = vadd.f32 %v5640, %v5641
            %v5643 = vsel %vm5407, %v5366, 0.0
            %v5644 = vadd.f32 %v5642, %v5643
            %v5645 = vsel %vm5407, %v5369, 0.0
            %v5646 = vadd.f32 %v5644, %v5645
            %v5647 = vsel %vm5407, %v5374, 0.0
            %v5648 = vadd.f32 %v5646, %v5647
            %v5649 = vsel %vm5407, %v5377, 0.0
            %v5650 = vadd.f32 %v5648, %v5649
            %v5651 = vsel %vm5407, %v5382, 0.0
            %v5652 = vadd.f32 %v5650, %v5651
            %v5653 = vsel %vm5407, %v5385, 0.0
            %v5654 = vadd.f32 %v5652, %v5653
            %v5655 = vsel %vm5407, %v5390, 0.0
            %v5656 = vadd.f32 %v5654, %v5655
            %v5657 = vsel %vm5407, %v5393, 0.0
            %v5658 = vadd.f32 %v5656, %v5657
            %v5659 = vsel %vm5407, %v5398, 0.0
            %v5660 = vadd.f32 %v5658, %v5659
            %v5661 = vsel %vm5407, %v5401, 0.0
            %v5662 = vadd.f32 %v5660, %v5661
            %v5663 = vrot.slane %v5662, 4
            %v5664 = vadd.f32 %v5662, %v5663
            %v5665 = vrot.slane %v5664, 2
            %v5666 = vadd.f32 %v5664, %v5665
            %v5667 = vrot.slane %v5666, 1
            %v5668 = vadd.f32 %v5666, %v5667
            %v5669 = vrcp.pop 1024.0
            %v5670 = vmul.f32 %v5668, %v5669
            %vm5671 = vcmask 516096
            %5672 = vst.msk [vmem:[#allocation9] sm:$0x1] %vm5671, %v5670
          $region84: #{tpu_custom_call.1} parent=75 // pred_fallthru
            _
          %v5673 = vld [vmem:[#allocation9] sm:$0x1]
          %v5675 = vlaneseq
          %v5676 = vshrl.u32 %v5675, 7
          %v5677 = vsub.s32 0, %v5676
          %v5678 = vrot.slane %v5673, %v5677
          %v5680 = vsub.f32 %v4894, %v5678
          %v5681 = vsub.f32 %v4897, %v5678
          %v5682 = vsub.f32 %v4902, %v5678
          %v5683 = vsub.f32 %v4905, %v5678
          %v5684 = vsub.f32 %v4910, %v5678
          %v5685 = vsub.f32 %v4913, %v5678
          %v5686 = vsub.f32 %v4918, %v5678
          %v5687 = vsub.f32 %v4921, %v5678
          %v5688 = vsub.f32 %v4926, %v5678
          %v5689 = vsub.f32 %v4929, %v5678
          %v5690 = vsub.f32 %v4934, %v5678
          %v5691 = vsub.f32 %v4937, %v5678
          %v5692 = vsub.f32 %v4942, %v5678
          %v5693 = vsub.f32 %v4945, %v5678
          %v5694 = vsub.f32 %v4950, %v5678
          %v5695 = vsub.f32 %v4953, %v5678
          %v5696 = vsub.f32 %v4958, %v5678
          %v5697 = vsub.f32 %v4961, %v5678
          %v5698 = vsub.f32 %v4966, %v5678
          %v5699 = vsub.f32 %v4969, %v5678
          %v5700 = vsub.f32 %v4974, %v5678
          %v5701 = vsub.f32 %v4977, %v5678
          %v5702 = vsub.f32 %v4982, %v5678
          %v5703 = vsub.f32 %v4985, %v5678
          %v5704 = vsub.f32 %v4990, %v5678
          %v5705 = vsub.f32 %v4993, %v5678
          %v5706 = vsub.f32 %v4998, %v5678
          %v5707 = vsub.f32 %v5001, %v5678
          %v5708 = vsub.f32 %v5006, %v5678
          %v5709 = vsub.f32 %v5009, %v5678
          %v5710 = vsub.f32 %v5014, %v5678
          %v5711 = vsub.f32 %v5017, %v5678
          %v5712 = vsub.f32 %v5022, %v5678
          %v5713 = vsub.f32 %v5025, %v5678
          %v5714 = vsub.f32 %v5030, %v5678
          %v5715 = vsub.f32 %v5033, %v5678
          %v5716 = vsub.f32 %v5038, %v5678
          %v5717 = vsub.f32 %v5041, %v5678
          %v5718 = vsub.f32 %v5046, %v5678
          %v5719 = vsub.f32 %v5049, %v5678
          %v5720 = vsub.f32 %v5054, %v5678
          %v5721 = vsub.f32 %v5057, %v5678
          %v5722 = vsub.f32 %v5062, %v5678
          %v5723 = vsub.f32 %v5065, %v5678
          %v5724 = vsub.f32 %v5070, %v5678
          %v5725 = vsub.f32 %v5073, %v5678
          %v5726 = vsub.f32 %v5078, %v5678
          %v5727 = vsub.f32 %v5081, %v5678
          %v5728 = vsub.f32 %v5086, %v5678
          %v5729 = vsub.f32 %v5089, %v5678
          %v5730 = vsub.f32 %v5094, %v5678
          %v5731 = vsub.f32 %v5097, %v5678
          %v5732 = vsub.f32 %v5102, %v5678
          %v5733 = vsub.f32 %v5105, %v5678
          %v5734 = vsub.f32 %v5110, %v5678
          %v5735 = vsub.f32 %v5113, %v5678
          %v5736 = vsub.f32 %v5118, %v5678
          %v5737 = vsub.f32 %v5121, %v5678
          %v5738 = vsub.f32 %v5126, %v5678
          %v5739 = vsub.f32 %v5129, %v5678
          %v5740 = vsub.f32 %v5134, %v5678
          %v5741 = vsub.f32 %v5137, %v5678
          %v5742 = vsub.f32 %v5142, %v5678
          %v5743 = vsub.f32 %v5145, %v5678
          %v5744 = vsub.f32 %v5150, %v5678
          %v5745 = vsub.f32 %v5153, %v5678
          %v5746 = vsub.f32 %v5158, %v5678
          %v5747 = vsub.f32 %v5161, %v5678
          %v5748 = vsub.f32 %v5166, %v5678
          %v5749 = vsub.f32 %v5169, %v5678
          %v5750 = vsub.f32 %v5174, %v5678
          %v5751 = vsub.f32 %v5177, %v5678
          %v5752 = vsub.f32 %v5182, %v5678
          %v5753 = vsub.f32 %v5185, %v5678
          %v5754 = vsub.f32 %v5190, %v5678
          %v5755 = vsub.f32 %v5193, %v5678
          %v5756 = vsub.f32 %v5198, %v5678
          %v5757 = vsub.f32 %v5201, %v5678
          %v5758 = vsub.f32 %v5206, %v5678
          %v5759 = vsub.f32 %v5209, %v5678
          %v5760 = vsub.f32 %v5214, %v5678
          %v5761 = vsub.f32 %v5217, %v5678
          %v5762 = vsub.f32 %v5222, %v5678
          %v5763 = vsub.f32 %v5225, %v5678
          %v5764 = vsub.f32 %v5230, %v5678
          %v5765 = vsub.f32 %v5233, %v5678
          %v5766 = vsub.f32 %v5238, %v5678
          %v5767 = vsub.f32 %v5241, %v5678
          %v5768 = vsub.f32 %v5246, %v5678
          %v5769 = vsub.f32 %v5249, %v5678
          %v5770 = vsub.f32 %v5254, %v5678
          %v5771 = vsub.f32 %v5257, %v5678
          %v5772 = vsub.f32 %v5262, %v5678
          %v5773 = vsub.f32 %v5265, %v5678
          %v5774 = vsub.f32 %v5270, %v5678
          %v5775 = vsub.f32 %v5273, %v5678
          %v5776 = vsub.f32 %v5278, %v5678
          %v5777 = vsub.f32 %v5281, %v5678
          %v5778 = vsub.f32 %v5286, %v5678
          %v5779 = vsub.f32 %v5289, %v5678
          %v5780 = vsub.f32 %v5294, %v5678
          %v5781 = vsub.f32 %v5297, %v5678
          %v5782 = vsub.f32 %v5302, %v5678
          %v5783 = vsub.f32 %v5305, %v5678
          %v5784 = vsub.f32 %v5310, %v5678
          %v5785 = vsub.f32 %v5313, %v5678
          %v5786 = vsub.f32 %v5318, %v5678
          %v5787 = vsub.f32 %v5321, %v5678
          %v5788 = vsub.f32 %v5326, %v5678
          %v5789 = vsub.f32 %v5329, %v5678
          %v5790 = vsub.f32 %v5334, %v5678
          %v5791 = vsub.f32 %v5337, %v5678
          %v5792 = vsub.f32 %v5342, %v5678
          %v5793 = vsub.f32 %v5345, %v5678
          %v5794 = vsub.f32 %v5350, %v5678
          %v5795 = vsub.f32 %v5353, %v5678
          %v5796 = vsub.f32 %v5358, %v5678
          %v5797 = vsub.f32 %v5361, %v5678
          %v5798 = vsub.f32 %v5366, %v5678
          %v5799 = vsub.f32 %v5369, %v5678
          %v5800 = vsub.f32 %v5374, %v5678
          %v5801 = vsub.f32 %v5377, %v5678
          %v5802 = vsub.f32 %v5382, %v5678
          %v5803 = vsub.f32 %v5385, %v5678
          %v5804 = vsub.f32 %v5390, %v5678
          %v5805 = vsub.f32 %v5393, %v5678
          %v5806 = vsub.f32 %v5398, %v5678
          %v5807 = vsub.f32 %v5401, %v5678
          %v5808 = vld [vmem:[#allocation6] sm:$0x1]
          %vm5809 = vcmask 523264
          %v5810 = vsel %vm5809, %v5680, 0.0
          %v5811 = vsel %vm5809, %v5681, 0.0
          %v5812 = vadd.f32 %v5810, %v5811
          %v5813 = vsel %vm5809, %v5682, 0.0
          %v5814 = vadd.f32 %v5812, %v5813
          %v5815 = vsel %vm5809, %v5683, 0.0
          %v5816 = vadd.f32 %v5814, %v5815
          %v5817 = vsel %vm5809, %v5684, 0.0
          %v5818 = vadd.f32 %v5816, %v5817
          %v5819 = vsel %vm5809, %v5685, 0.0
          %v5820 = vadd.f32 %v5818, %v5819
          %v5821 = vsel %vm5809, %v5686, 0.0
          %v5822 = vadd.f32 %v5820, %v5821
          %v5823 = vsel %vm5809, %v5687, 0.0
          %v5824 = vadd.f32 %v5822, %v5823
          %v5825 = vsel %vm5809, %v5688, 0.0
          %v5826 = vadd.f32 %v5824, %v5825
          %v5827 = vsel %vm5809, %v5689, 0.0
          %v5828 = vadd.f32 %v5826, %v5827
          %v5829 = vsel %vm5809, %v5690, 0.0
          %v5830 = vadd.f32 %v5828, %v5829
          %v5831 = vsel %vm5809, %v5691, 0.0
          %v5832 = vadd.f32 %v5830, %v5831
          %v5833 = vsel %vm5809, %v5692, 0.0
          %v5834 = vadd.f32 %v5832, %v5833
          %v5835 = vsel %vm5809, %v5693, 0.0
          %v5836 = vadd.f32 %v5834, %v5835
          %v5837 = vsel %vm5809, %v5694, 0.0
          %v5838 = vadd.f32 %v5836, %v5837
          %v5839 = vsel %vm5809, %v5695, 0.0
          %v5840 = vadd.f32 %v5838, %v5839
          %v5841 = vsel %vm5809, %v5696, 0.0
          %v5842 = vadd.f32 %v5840, %v5841
          %v5843 = vsel %vm5809, %v5697, 0.0
          %v5844 = vadd.f32 %v5842, %v5843
          %v5845 = vsel %vm5809, %v5698, 0.0
          %v5846 = vadd.f32 %v5844, %v5845
          %v5847 = vsel %vm5809, %v5699, 0.0
          %v5848 = vadd.f32 %v5846, %v5847
          %v5849 = vsel %vm5809, %v5700, 0.0
          %v5850 = vadd.f32 %v5848, %v5849
          %v5851 = vsel %vm5809, %v5701, 0.0
          %v5852 = vadd.f32 %v5850, %v5851
          %v5853 = vsel %vm5809, %v5702, 0.0
          %v5854 = vadd.f32 %v5852, %v5853
          %v5855 = vsel %vm5809, %v5703, 0.0
          %v5856 = vadd.f32 %v5854, %v5855
          %v5857 = vsel %vm5809, %v5704, 0.0
          %v5858 = vadd.f32 %v5856, %v5857
          %v5859 = vsel %vm5809, %v5705, 0.0
          %v5860 = vadd.f32 %v5858, %v5859
          %v5861 = vsel %vm5809, %v5706, 0.0
          %v5862 = vadd.f32 %v5860, %v5861
          %v5863 = vsel %vm5809, %v5707, 0.0
          %v5864 = vadd.f32 %v5862, %v5863
          %v5865 = vsel %vm5809, %v5708, 0.0
          %v5866 = vadd.f32 %v5864, %v5865
          %v5867 = vsel %vm5809, %v5709, 0.0
          %v5868 = vadd.f32 %v5866, %v5867
          %v5869 = vsel %vm5809, %v5710, 0.0
          %v5870 = vadd.f32 %v5868, %v5869
          %v5871 = vsel %vm5809, %v5711, 0.0
          %v5872 = vadd.f32 %v5870, %v5871
          %v5873 = vsel %vm5809, %v5712, 0.0
          %v5874 = vadd.f32 %v5872, %v5873
          %v5875 = vsel %vm5809, %v5713, 0.0
          %v5876 = vadd.f32 %v5874, %v5875
          %v5877 = vsel %vm5809, %v5714, 0.0
          %v5878 = vadd.f32 %v5876, %v5877
          %v5879 = vsel %vm5809, %v5715, 0.0
          %v5880 = vadd.f32 %v5878, %v5879
          %v5881 = vsel %vm5809, %v5716, 0.0
          %v5882 = vadd.f32 %v5880, %v5881
          %v5883 = vsel %vm5809, %v5717, 0.0
          %v5884 = vadd.f32 %v5882, %v5883
          %v5885 = vsel %vm5809, %v5718, 0.0
          %v5886 = vadd.f32 %v5884, %v5885
          %v5887 = vsel %vm5809, %v5719, 0.0
          %v5888 = vadd.f32 %v5886, %v5887
          %v5889 = vsel %vm5809, %v5720, 0.0
          %v5890 = vadd.f32 %v5888, %v5889
          %v5891 = vsel %vm5809, %v5721, 0.0
          %v5892 = vadd.f32 %v5890, %v5891
          %v5893 = vsel %vm5809, %v5722, 0.0
          %v5894 = vadd.f32 %v5892, %v5893
          %v5895 = vsel %vm5809, %v5723, 0.0
          %v5896 = vadd.f32 %v5894, %v5895
          %v5897 = vsel %vm5809, %v5724, 0.0
          %v5898 = vadd.f32 %v5896, %v5897
          %v5899 = vsel %vm5809, %v5725, 0.0
          %v5900 = vadd.f32 %v5898, %v5899
          %v5901 = vsel %vm5809, %v5726, 0.0
          %v5902 = vadd.f32 %v5900, %v5901
          %v5903 = vsel %vm5809, %v5727, 0.0
          %v5904 = vadd.f32 %v5902, %v5903
          %v5905 = vsel %vm5809, %v5728, 0.0
          %v5906 = vadd.f32 %v5904, %v5905
          %v5907 = vsel %vm5809, %v5729, 0.0
          %v5908 = vadd.f32 %v5906, %v5907
          %v5909 = vsel %vm5809, %v5730, 0.0
          %v5910 = vadd.f32 %v5908, %v5909
          %v5911 = vsel %vm5809, %v5731, 0.0
          %v5912 = vadd.f32 %v5910, %v5911
          %v5913 = vsel %vm5809, %v5732, 0.0
          %v5914 = vadd.f32 %v5912, %v5913
          %v5915 = vsel %vm5809, %v5733, 0.0
          %v5916 = vadd.f32 %v5914, %v5915
          %v5917 = vsel %vm5809, %v5734, 0.0
          %v5918 = vadd.f32 %v5916, %v5917
          %v5919 = vsel %vm5809, %v5735, 0.0
          %v5920 = vadd.f32 %v5918, %v5919
          %v5921 = vsel %vm5809, %v5736, 0.0
          %v5922 = vadd.f32 %v5920, %v5921
          %v5923 = vsel %vm5809, %v5737, 0.0
          %v5924 = vadd.f32 %v5922, %v5923
          %v5925 = vsel %vm5809, %v5738, 0.0
          %v5926 = vadd.f32 %v5924, %v5925
          %v5927 = vsel %vm5809, %v5739, 0.0
          %v5928 = vadd.f32 %v5926, %v5927
          %v5929 = vsel %vm5809, %v5740, 0.0
          %v5930 = vadd.f32 %v5928, %v5929
          %v5931 = vsel %vm5809, %v5741, 0.0
          %v5932 = vadd.f32 %v5930, %v5931
          %v5933 = vsel %vm5809, %v5742, 0.0
          %v5934 = vadd.f32 %v5932, %v5933
          %v5935 = vsel %vm5809, %v5743, 0.0
          %v5936 = vadd.f32 %v5934, %v5935
          %v5937 = vsel %vm5809, %v5744, 0.0
          %v5938 = vadd.f32 %v5936, %v5937
          %v5939 = vsel %vm5809, %v5745, 0.0
          %v5940 = vadd.f32 %v5938, %v5939
          %v5941 = vsel %vm5809, %v5746, 0.0
          %v5942 = vadd.f32 %v5940, %v5941
          %v5943 = vsel %vm5809, %v5747, 0.0
          %v5944 = vadd.f32 %v5942, %v5943
          %v5945 = vsel %vm5809, %v5748, 0.0
          %v5946 = vadd.f32 %v5944, %v5945
          %v5947 = vsel %vm5809, %v5749, 0.0
          %v5948 = vadd.f32 %v5946, %v5947
          %v5949 = vsel %vm5809, %v5750, 0.0
          %v5950 = vadd.f32 %v5948, %v5949
          %v5951 = vsel %vm5809, %v5751, 0.0
          %v5952 = vadd.f32 %v5950, %v5951
          %v5953 = vsel %vm5809, %v5752, 0.0
          %v5954 = vadd.f32 %v5952, %v5953
          %v5955 = vsel %vm5809, %v5753, 0.0
          %v5956 = vadd.f32 %v5954, %v5955
          %v5957 = vsel %vm5809, %v5754, 0.0
          %v5958 = vadd.f32 %v5956, %v5957
          %v5959 = vsel %vm5809, %v5755, 0.0
          %v5960 = vadd.f32 %v5958, %v5959
          %v5961 = vsel %vm5809, %v5756, 0.0
          %v5962 = vadd.f32 %v5960, %v5961
          %v5963 = vsel %vm5809, %v5757, 0.0
          %v5964 = vadd.f32 %v5962, %v5963
          %v5965 = vsel %vm5809, %v5758, 0.0
          %v5966 = vadd.f32 %v5964, %v5965
          %v5967 = vsel %vm5809, %v5759, 0.0
          %v5968 = vadd.f32 %v5966, %v5967
          %v5969 = vsel %vm5809, %v5760, 0.0
          %v5970 = vadd.f32 %v5968, %v5969
          %v5971 = vsel %vm5809, %v5761, 0.0
          %v5972 = vadd.f32 %v5970, %v5971
          %v5973 = vsel %vm5809, %v5762, 0.0
          %v5974 = vadd.f32 %v5972, %v5973
          %v5975 = vsel %vm5809, %v5763, 0.0
          %v5976 = vadd.f32 %v5974, %v5975
          %v5977 = vsel %vm5809, %v5764, 0.0
          %v5978 = vadd.f32 %v5976, %v5977
          %v5979 = vsel %vm5809, %v5765, 0.0
          %v5980 = vadd.f32 %v5978, %v5979
          %v5981 = vsel %vm5809, %v5766, 0.0
          %v5982 = vadd.f32 %v5980, %v5981
          %v5983 = vsel %vm5809, %v5767, 0.0
          %v5984 = vadd.f32 %v5982, %v5983
          %v5985 = vsel %vm5809, %v5768, 0.0
          %v5986 = vadd.f32 %v5984, %v5985
          %v5987 = vsel %vm5809, %v5769, 0.0
          %v5988 = vadd.f32 %v5986, %v5987
          %v5989 = vsel %vm5809, %v5770, 0.0
          %v5990 = vadd.f32 %v5988, %v5989
          %v5991 = vsel %vm5809, %v5771, 0.0
          %v5992 = vadd.f32 %v5990, %v5991
          %v5993 = vsel %vm5809, %v5772, 0.0
          %v5994 = vadd.f32 %v5992, %v5993
          %v5995 = vsel %vm5809, %v5773, 0.0
          %v5996 = vadd.f32 %v5994, %v5995
          %v5997 = vsel %vm5809, %v5774, 0.0
          %v5998 = vadd.f32 %v5996, %v5997
          %v5999 = vsel %vm5809, %v5775, 0.0
          %v6000 = vadd.f32 %v5998, %v5999
          %v6001 = vsel %vm5809, %v5776, 0.0
          %v6002 = vadd.f32 %v6000, %v6001
          %v6003 = vsel %vm5809, %v5777, 0.0
          %v6004 = vadd.f32 %v6002, %v6003
          %v6005 = vsel %vm5809, %v5778, 0.0
          %v6006 = vadd.f32 %v6004, %v6005
          %v6007 = vsel %vm5809, %v5779, 0.0
          %v6008 = vadd.f32 %v6006, %v6007
          %v6009 = vsel %vm5809, %v5780, 0.0
          %v6010 = vadd.f32 %v6008, %v6009
          %v6011 = vsel %vm5809, %v5781, 0.0
          %v6012 = vadd.f32 %v6010, %v6011
          %v6013 = vsel %vm5809, %v5782, 0.0
          %v6014 = vadd.f32 %v6012, %v6013
          %v6015 = vsel %vm5809, %v5783, 0.0
          %v6016 = vadd.f32 %v6014, %v6015
          %v6017 = vsel %vm5809, %v5784, 0.0
          %v6018 = vadd.f32 %v6016, %v6017
          %v6019 = vsel %vm5809, %v5785, 0.0
          %v6020 = vadd.f32 %v6018, %v6019
          %v6021 = vsel %vm5809, %v5786, 0.0
          %v6022 = vadd.f32 %v6020, %v6021
          %v6023 = vsel %vm5809, %v5787, 0.0
          %v6024 = vadd.f32 %v6022, %v6023
          %v6025 = vsel %vm5809, %v5788, 0.0
          %v6026 = vadd.f32 %v6024, %v6025
          %v6027 = vsel %vm5809, %v5789, 0.0
          %v6028 = vadd.f32 %v6026, %v6027
          %v6029 = vsel %vm5809, %v5790, 0.0
          %v6030 = vadd.f32 %v6028, %v6029
          %v6031 = vsel %vm5809, %v5791, 0.0
          %v6032 = vadd.f32 %v6030, %v6031
          %v6033 = vsel %vm5809, %v5792, 0.0
          %v6034 = vadd.f32 %v6032, %v6033
          %v6035 = vsel %vm5809, %v5793, 0.0
          %v6036 = vadd.f32 %v6034, %v6035
          %v6037 = vsel %vm5809, %v5794, 0.0
          %v6038 = vadd.f32 %v6036, %v6037
          %v6039 = vsel %vm5809, %v5795, 0.0
          %v6040 = vadd.f32 %v6038, %v6039
          %v6041 = vsel %vm5809, %v5796, 0.0
          %v6042 = vadd.f32 %v6040, %v6041
          %v6043 = vsel %vm5809, %v5797, 0.0
          %v6044 = vadd.f32 %v6042, %v6043
          %v6045 = vsel %vm5809, %v5798, 0.0
          %v6046 = vadd.f32 %v6044, %v6045
          %v6047 = vsel %vm5809, %v5799, 0.0
          %v6048 = vadd.f32 %v6046, %v6047
          %v6049 = vsel %vm5809, %v5800, 0.0
          %v6050 = vadd.f32 %v6048, %v6049
          %v6051 = vsel %vm5809, %v5801, 0.0
          %v6052 = vadd.f32 %v6050, %v6051
          %v6053 = vsel %vm5809, %v5802, 0.0
          %v6054 = vadd.f32 %v6052, %v6053
          %v6055 = vsel %vm5809, %v5803, 0.0
          %v6056 = vadd.f32 %v6054, %v6055
          %v6057 = vsel %vm5809, %v5804, 0.0
          %v6058 = vadd.f32 %v6056, %v6057
          %v6059 = vsel %vm5809, %v5805, 0.0
          %v6060 = vadd.f32 %v6058, %v6059
          %v6061 = vsel %vm5809, %v5806, 0.0
          %v6062 = vadd.f32 %v6060, %v6061
          %v6063 = vsel %vm5809, %v5807, 0.0
          %v6064 = vadd.f32 %v6062, %v6063
          %v6065 = vrot.slane %v6064, 4
          %v6066 = vadd.f32 %v6064, %v6065
          %v6067 = vrot.slane %v6066, 2
          %v6068 = vadd.f32 %v6066, %v6067
          %v6069 = vrot.slane %v6068, 1
          %v6070 = vadd.f32 %v6068, %v6069
          %v6071 = vadd.f32 %v5808, %v6070
          %vm6072 = vcmask 516096
          %6073 = vst.msk [vmem:[#allocation6] sm:$0x1] %vm6072, %v6071
          %v6074 = vld [vmem:[#allocation7] sm:$0x1]
          %v6075 = vmul.f32 %v5680, %v5680
          %v6076 = vmul.f32 %v5681, %v5681
          %v6077 = vmul.f32 %v5682, %v5682
          %v6078 = vmul.f32 %v5683, %v5683
          %v6079 = vmul.f32 %v5684, %v5684
          %v6080 = vmul.f32 %v5685, %v5685
          %v6081 = vmul.f32 %v5686, %v5686
          %v6082 = vmul.f32 %v5687, %v5687
          %v6083 = vmul.f32 %v5688, %v5688
          %v6084 = vmul.f32 %v5689, %v5689
          %v6085 = vmul.f32 %v5690, %v5690
          %v6086 = vmul.f32 %v5691, %v5691
          %v6087 = vmul.f32 %v5692, %v5692
          %v6088 = vmul.f32 %v5693, %v5693
          %v6089 = vmul.f32 %v5694, %v5694
          %v6090 = vmul.f32 %v5695, %v5695
          %v6091 = vmul.f32 %v5696, %v5696
          %v6092 = vmul.f32 %v5697, %v5697
          %v6093 = vmul.f32 %v5698, %v5698
          %v6094 = vmul.f32 %v5699, %v5699
          %v6095 = vmul.f32 %v5700, %v5700
          %v6096 = vmul.f32 %v5701, %v5701
          %v6097 = vmul.f32 %v5702, %v5702
          %v6098 = vmul.f32 %v5703, %v5703
          %v6099 = vmul.f32 %v5704, %v5704
          %v6100 = vmul.f32 %v5705, %v5705
          %v6101 = vmul.f32 %v5706, %v5706
          %v6102 = vmul.f32 %v5707, %v5707
          %v6103 = vmul.f32 %v5708, %v5708
          %v6104 = vmul.f32 %v5709, %v5709
          %v6105 = vmul.f32 %v5710, %v5710
          %v6106 = vmul.f32 %v5711, %v5711
          %v6107 = vmul.f32 %v5712, %v5712
          %v6108 = vmul.f32 %v5713, %v5713
          %v6109 = vmul.f32 %v5714, %v5714
          %v6110 = vmul.f32 %v5715, %v5715
          %v6111 = vmul.f32 %v5716, %v5716
          %v6112 = vmul.f32 %v5717, %v5717
          %v6113 = vmul.f32 %v5718, %v5718
          %v6114 = vmul.f32 %v5719, %v5719
          %v6115 = vmul.f32 %v5720, %v5720
          %v6116 = vmul.f32 %v5721, %v5721
          %v6117 = vmul.f32 %v5722, %v5722
          %v6118 = vmul.f32 %v5723, %v5723
          %v6119 = vmul.f32 %v5724, %v5724
          %v6120 = vmul.f32 %v5725, %v5725
          %v6121 = vmul.f32 %v5726, %v5726
          %v6122 = vmul.f32 %v5727, %v5727
          %v6123 = vmul.f32 %v5728, %v5728
          %v6124 = vmul.f32 %v5729, %v5729
          %v6125 = vmul.f32 %v5730, %v5730
          %v6126 = vmul.f32 %v5731, %v5731
          %v6127 = vmul.f32 %v5732, %v5732
          %v6128 = vmul.f32 %v5733, %v5733
          %v6129 = vmul.f32 %v5734, %v5734
          %v6130 = vmul.f32 %v5735, %v5735
          %v6131 = vmul.f32 %v5736, %v5736
          %v6132 = vmul.f32 %v5737, %v5737
          %v6133 = vmul.f32 %v5738, %v5738
          %v6134 = vmul.f32 %v5739, %v5739
          %v6135 = vmul.f32 %v5740, %v5740
          %v6136 = vmul.f32 %v5741, %v5741
          %v6137 = vmul.f32 %v5742, %v5742
          %v6138 = vmul.f32 %v5743, %v5743
          %v6139 = vmul.f32 %v5744, %v5744
          %v6140 = vmul.f32 %v5745, %v5745
          %v6141 = vmul.f32 %v5746, %v5746
          %v6142 = vmul.f32 %v5747, %v5747
          %v6143 = vmul.f32 %v5748, %v5748
          %v6144 = vmul.f32 %v5749, %v5749
          %v6145 = vmul.f32 %v5750, %v5750
          %v6146 = vmul.f32 %v5751, %v5751
          %v6147 = vmul.f32 %v5752, %v5752
          %v6148 = vmul.f32 %v5753, %v5753
          %v6149 = vmul.f32 %v5754, %v5754
          %v6150 = vmul.f32 %v5755, %v5755
          %v6151 = vmul.f32 %v5756, %v5756
          %v6152 = vmul.f32 %v5757, %v5757
          %v6153 = vmul.f32 %v5758, %v5758
          %v6154 = vmul.f32 %v5759, %v5759
          %v6155 = vmul.f32 %v5760, %v5760
          %v6156 = vmul.f32 %v5761, %v5761
          %v6157 = vmul.f32 %v5762, %v5762
          %v6158 = vmul.f32 %v5763, %v5763
          %v6159 = vmul.f32 %v5764, %v5764
          %v6160 = vmul.f32 %v5765, %v5765
          %v6161 = vmul.f32 %v5766, %v5766
          %v6162 = vmul.f32 %v5767, %v5767
          %v6163 = vmul.f32 %v5768, %v5768
          %v6164 = vmul.f32 %v5769, %v5769
          %v6165 = vmul.f32 %v5770, %v5770
          %v6166 = vmul.f32 %v5771, %v5771
          %v6167 = vmul.f32 %v5772, %v5772
          %v6168 = vmul.f32 %v5773, %v5773
          %v6169 = vmul.f32 %v5774, %v5774
          %v6170 = vmul.f32 %v5775, %v5775
          %v6171 = vmul.f32 %v5776, %v5776
          %v6172 = vmul.f32 %v5777, %v5777
          %v6173 = vmul.f32 %v5778, %v5778
          %v6174 = vmul.f32 %v5779, %v5779
          %v6175 = vmul.f32 %v5780, %v5780
          %v6176 = vmul.f32 %v5781, %v5781
          %v6177 = vmul.f32 %v5782, %v5782
          %v6178 = vmul.f32 %v5783, %v5783
          %v6179 = vmul.f32 %v5784, %v5784
          %v6180 = vmul.f32 %v5785, %v5785
          %v6181 = vmul.f32 %v5786, %v5786
          %v6182 = vmul.f32 %v5787, %v5787
          %v6183 = vmul.f32 %v5788, %v5788
          %v6184 = vmul.f32 %v5789, %v5789
          %v6185 = vmul.f32 %v5790, %v5790
          %v6186 = vmul.f32 %v5791, %v5791
          %v6187 = vmul.f32 %v5792, %v5792
          %v6188 = vmul.f32 %v5793, %v5793
          %v6189 = vmul.f32 %v5794, %v5794
          %v6190 = vmul.f32 %v5795, %v5795
          %v6191 = vmul.f32 %v5796, %v5796
          %v6192 = vmul.f32 %v5797, %v5797
          %v6193 = vmul.f32 %v5798, %v5798
          %v6194 = vmul.f32 %v5799, %v5799
          %v6195 = vmul.f32 %v5800, %v5800
          %v6196 = vmul.f32 %v5801, %v5801
          %v6197 = vmul.f32 %v5802, %v5802
          %v6198 = vmul.f32 %v5803, %v5803
          %v6199 = vmul.f32 %v5804, %v5804
          %v6200 = vmul.f32 %v5805, %v5805
          %v6201 = vmul.f32 %v5806, %v5806
          %v6202 = vmul.f32 %v5807, %v5807
          %v6203 = vsel %vm5809, %v6075, 0.0
          %v6204 = vsel %vm5809, %v6076, 0.0
          %v6205 = vadd.f32 %v6203, %v6204
          %v6206 = vsel %vm5809, %v6077, 0.0
          %v6207 = vadd.f32 %v6205, %v6206
          %v6208 = vsel %vm5809, %v6078, 0.0
          %v6209 = vadd.f32 %v6207, %v6208
          %v6210 = vsel %vm5809, %v6079, 0.0
          %v6211 = vadd.f32 %v6209, %v6210
          %v6212 = vsel %vm5809, %v6080, 0.0
          %v6213 = vadd.f32 %v6211, %v6212
          %v6214 = vsel %vm5809, %v6081, 0.0
          %v6215 = vadd.f32 %v6213, %v6214
          %v6216 = vsel %vm5809, %v6082, 0.0
          %v6217 = vadd.f32 %v6215, %v6216
          %v6218 = vsel %vm5809, %v6083, 0.0
          %v6219 = vadd.f32 %v6217, %v6218
          %v6220 = vsel %vm5809, %v6084, 0.0
          %v6221 = vadd.f32 %v6219, %v6220
          %v6222 = vsel %vm5809, %v6085, 0.0
          %v6223 = vadd.f32 %v6221, %v6222
          %v6224 = vsel %vm5809, %v6086, 0.0
          %v6225 = vadd.f32 %v6223, %v6224
          %v6226 = vsel %vm5809, %v6087, 0.0
          %v6227 = vadd.f32 %v6225, %v6226
          %v6228 = vsel %vm5809, %v6088, 0.0
          %v6229 = vadd.f32 %v6227, %v6228
          %v6230 = vsel %vm5809, %v6089, 0.0
          %v6231 = vadd.f32 %v6229, %v6230
          %v6232 = vsel %vm5809, %v6090, 0.0
          %v6233 = vadd.f32 %v6231, %v6232
          %v6234 = vsel %vm5809, %v6091, 0.0
          %v6235 = vadd.f32 %v6233, %v6234
          %v6236 = vsel %vm5809, %v6092, 0.0
          %v6237 = vadd.f32 %v6235, %v6236
          %v6238 = vsel %vm5809, %v6093, 0.0
          %v6239 = vadd.f32 %v6237, %v6238
          %v6240 = vsel %vm5809, %v6094, 0.0
          %v6241 = vadd.f32 %v6239, %v6240
          %v6242 = vsel %vm5809, %v6095, 0.0
          %v6243 = vadd.f32 %v6241, %v6242
          %v6244 = vsel %vm5809, %v6096, 0.0
          %v6245 = vadd.f32 %v6243, %v6244
          %v6246 = vsel %vm5809, %v6097, 0.0
          %v6247 = vadd.f32 %v6245, %v6246
          %v6248 = vsel %vm5809, %v6098, 0.0
          %v6249 = vadd.f32 %v6247, %v6248
          %v6250 = vsel %vm5809, %v6099, 0.0
          %v6251 = vadd.f32 %v6249, %v6250
          %v6252 = vsel %vm5809, %v6100, 0.0
          %v6253 = vadd.f32 %v6251, %v6252
          %v6254 = vsel %vm5809, %v6101, 0.0
          %v6255 = vadd.f32 %v6253, %v6254
          %v6256 = vsel %vm5809, %v6102, 0.0
          %v6257 = vadd.f32 %v6255, %v6256
          %v6258 = vsel %vm5809, %v6103, 0.0
          %v6259 = vadd.f32 %v6257, %v6258
          %v6260 = vsel %vm5809, %v6104, 0.0
          %v6261 = vadd.f32 %v6259, %v6260
          %v6262 = vsel %vm5809, %v6105, 0.0
          %v6263 = vadd.f32 %v6261, %v6262
          %v6264 = vsel %vm5809, %v6106, 0.0
          %v6265 = vadd.f32 %v6263, %v6264
          %v6266 = vsel %vm5809, %v6107, 0.0
          %v6267 = vadd.f32 %v6265, %v6266
          %v6268 = vsel %vm5809, %v6108, 0.0
          %v6269 = vadd.f32 %v6267, %v6268
          %v6270 = vsel %vm5809, %v6109, 0.0
          %v6271 = vadd.f32 %v6269, %v6270
          %v6272 = vsel %vm5809, %v6110, 0.0
          %v6273 = vadd.f32 %v6271, %v6272
          %v6274 = vsel %vm5809, %v6111, 0.0
          %v6275 = vadd.f32 %v6273, %v6274
          %v6276 = vsel %vm5809, %v6112, 0.0
          %v6277 = vadd.f32 %v6275, %v6276
          %v6278 = vsel %vm5809, %v6113, 0.0
          %v6279 = vadd.f32 %v6277, %v6278
          %v6280 = vsel %vm5809, %v6114, 0.0
          %v6281 = vadd.f32 %v6279, %v6280
          %v6282 = vsel %vm5809, %v6115, 0.0
          %v6283 = vadd.f32 %v6281, %v6282
          %v6284 = vsel %vm5809, %v6116, 0.0
          %v6285 = vadd.f32 %v6283, %v6284
          %v6286 = vsel %vm5809, %v6117, 0.0
          %v6287 = vadd.f32 %v6285, %v6286
          %v6288 = vsel %vm5809, %v6118, 0.0
          %v6289 = vadd.f32 %v6287, %v6288
          %v6290 = vsel %vm5809, %v6119, 0.0
          %v6291 = vadd.f32 %v6289, %v6290
          %v6292 = vsel %vm5809, %v6120, 0.0
          %v6293 = vadd.f32 %v6291, %v6292
          %v6294 = vsel %vm5809, %v6121, 0.0
          %v6295 = vadd.f32 %v6293, %v6294
          %v6296 = vsel %vm5809, %v6122, 0.0
          %v6297 = vadd.f32 %v6295, %v6296
          %v6298 = vsel %vm5809, %v6123, 0.0
          %v6299 = vadd.f32 %v6297, %v6298
          %v6300 = vsel %vm5809, %v6124, 0.0
          %v6301 = vadd.f32 %v6299, %v6300
          %v6302 = vsel %vm5809, %v6125, 0.0
          %v6303 = vadd.f32 %v6301, %v6302
          %v6304 = vsel %vm5809, %v6126, 0.0
          %v6305 = vadd.f32 %v6303, %v6304
          %v6306 = vsel %vm5809, %v6127, 0.0
          %v6307 = vadd.f32 %v6305, %v6306
          %v6308 = vsel %vm5809, %v6128, 0.0
          %v6309 = vadd.f32 %v6307, %v6308
          %v6310 = vsel %vm5809, %v6129, 0.0
          %v6311 = vadd.f32 %v6309, %v6310
          %v6312 = vsel %vm5809, %v6130, 0.0
          %v6313 = vadd.f32 %v6311, %v6312
          %v6314 = vsel %vm5809, %v6131, 0.0
          %v6315 = vadd.f32 %v6313, %v6314
          %v6316 = vsel %vm5809, %v6132, 0.0
          %v6317 = vadd.f32 %v6315, %v6316
          %v6318 = vsel %vm5809, %v6133, 0.0
          %v6319 = vadd.f32 %v6317, %v6318
          %v6320 = vsel %vm5809, %v6134, 0.0
          %v6321 = vadd.f32 %v6319, %v6320
          %v6322 = vsel %vm5809, %v6135, 0.0
          %v6323 = vadd.f32 %v6321, %v6322
          %v6324 = vsel %vm5809, %v6136, 0.0
          %v6325 = vadd.f32 %v6323, %v6324
          %v6326 = vsel %vm5809, %v6137, 0.0
          %v6327 = vadd.f32 %v6325, %v6326
          %v6328 = vsel %vm5809, %v6138, 0.0
          %v6329 = vadd.f32 %v6327, %v6328
          %v6330 = vsel %vm5809, %v6139, 0.0
          %v6331 = vadd.f32 %v6329, %v6330
          %v6332 = vsel %vm5809, %v6140, 0.0
          %v6333 = vadd.f32 %v6331, %v6332
          %v6334 = vsel %vm5809, %v6141, 0.0
          %v6335 = vadd.f32 %v6333, %v6334
          %v6336 = vsel %vm5809, %v6142, 0.0
          %v6337 = vadd.f32 %v6335, %v6336
          %v6338 = vsel %vm5809, %v6143, 0.0
          %v6339 = vadd.f32 %v6337, %v6338
          %v6340 = vsel %vm5809, %v6144, 0.0
          %v6341 = vadd.f32 %v6339, %v6340
          %v6342 = vsel %vm5809, %v6145, 0.0
          %v6343 = vadd.f32 %v6341, %v6342
          %v6344 = vsel %vm5809, %v6146, 0.0
          %v6345 = vadd.f32 %v6343, %v6344
          %v6346 = vsel %vm5809, %v6147, 0.0
          %v6347 = vadd.f32 %v6345, %v6346
          %v6348 = vsel %vm5809, %v6148, 0.0
          %v6349 = vadd.f32 %v6347, %v6348
          %v6350 = vsel %vm5809, %v6149, 0.0
          %v6351 = vadd.f32 %v6349, %v6350
          %v6352 = vsel %vm5809, %v6150, 0.0
          %v6353 = vadd.f32 %v6351, %v6352
          %v6354 = vsel %vm5809, %v6151, 0.0
          %v6355 = vadd.f32 %v6353, %v6354
          %v6356 = vsel %vm5809, %v6152, 0.0
          %v6357 = vadd.f32 %v6355, %v6356
          %v6358 = vsel %vm5809, %v6153, 0.0
          %v6359 = vadd.f32 %v6357, %v6358
          %v6360 = vsel %vm5809, %v6154, 0.0
          %v6361 = vadd.f32 %v6359, %v6360
          %v6362 = vsel %vm5809, %v6155, 0.0
          %v6363 = vadd.f32 %v6361, %v6362
          %v6364 = vsel %vm5809, %v6156, 0.0
          %v6365 = vadd.f32 %v6363, %v6364
          %v6366 = vsel %vm5809, %v6157, 0.0
          %v6367 = vadd.f32 %v6365, %v6366
          %v6368 = vsel %vm5809, %v6158, 0.0
          %v6369 = vadd.f32 %v6367, %v6368
          %v6370 = vsel %vm5809, %v6159, 0.0
          %v6371 = vadd.f32 %v6369, %v6370
          %v6372 = vsel %vm5809, %v6160, 0.0
          %v6373 = vadd.f32 %v6371, %v6372
          %v6374 = vsel %vm5809, %v6161, 0.0
          %v6375 = vadd.f32 %v6373, %v6374
          %v6376 = vsel %vm5809, %v6162, 0.0
          %v6377 = vadd.f32 %v6375, %v6376
          %v6378 = vsel %vm5809, %v6163, 0.0
          %v6379 = vadd.f32 %v6377, %v6378
          %v6380 = vsel %vm5809, %v6164, 0.0
          %v6381 = vadd.f32 %v6379, %v6380
          %v6382 = vsel %vm5809, %v6165, 0.0
          %v6383 = vadd.f32 %v6381, %v6382
          %v6384 = vsel %vm5809, %v6166, 0.0
          %v6385 = vadd.f32 %v6383, %v6384
          %v6386 = vsel %vm5809, %v6167, 0.0
          %v6387 = vadd.f32 %v6385, %v6386
          %v6388 = vsel %vm5809, %v6168, 0.0
          %v6389 = vadd.f32 %v6387, %v6388
          %v6390 = vsel %vm5809, %v6169, 0.0
          %v6391 = vadd.f32 %v6389, %v6390
          %v6392 = vsel %vm5809, %v6170, 0.0
          %v6393 = vadd.f32 %v6391, %v6392
          %v6394 = vsel %vm5809, %v6171, 0.0
          %v6395 = vadd.f32 %v6393, %v6394
          %v6396 = vsel %vm5809, %v6172, 0.0
          %v6397 = vadd.f32 %v6395, %v6396
          %v6398 = vsel %vm5809, %v6173, 0.0
          %v6399 = vadd.f32 %v6397, %v6398
          %v6400 = vsel %vm5809, %v6174, 0.0
          %v6401 = vadd.f32 %v6399, %v6400
          %v6402 = vsel %vm5809, %v6175, 0.0
          %v6403 = vadd.f32 %v6401, %v6402
          %v6404 = vsel %vm5809, %v6176, 0.0
          %v6405 = vadd.f32 %v6403, %v6404
          %v6406 = vsel %vm5809, %v6177, 0.0
          %v6407 = vadd.f32 %v6405, %v6406
          %v6408 = vsel %vm5809, %v6178, 0.0
          %v6409 = vadd.f32 %v6407, %v6408
          %v6410 = vsel %vm5809, %v6179, 0.0
          %v6411 = vadd.f32 %v6409, %v6410
          %v6412 = vsel %vm5809, %v6180, 0.0
          %v6413 = vadd.f32 %v6411, %v6412
          %v6414 = vsel %vm5809, %v6181, 0.0
          %v6415 = vadd.f32 %v6413, %v6414
          %v6416 = vsel %vm5809, %v6182, 0.0
          %v6417 = vadd.f32 %v6415, %v6416
          %v6418 = vsel %vm5809, %v6183, 0.0
          %v6419 = vadd.f32 %v6417, %v6418
          %v6420 = vsel %vm5809, %v6184, 0.0
          %v6421 = vadd.f32 %v6419, %v6420
          %v6422 = vsel %vm5809, %v6185, 0.0
          %v6423 = vadd.f32 %v6421, %v6422
          %v6424 = vsel %vm5809, %v6186, 0.0
          %v6425 = vadd.f32 %v6423, %v6424
          %v6426 = vsel %vm5809, %v6187, 0.0
          %v6427 = vadd.f32 %v6425, %v6426
          %v6428 = vsel %vm5809, %v6188, 0.0
          %v6429 = vadd.f32 %v6427, %v6428
          %v6430 = vsel %vm5809, %v6189, 0.0
          %v6431 = vadd.f32 %v6429, %v6430
          %v6432 = vsel %vm5809, %v6190, 0.0
          %v6433 = vadd.f32 %v6431, %v6432
          %v6434 = vsel %vm5809, %v6191, 0.0
          %v6435 = vadd.f32 %v6433, %v6434
          %v6436 = vsel %vm5809, %v6192, 0.0
          %v6437 = vadd.f32 %v6435, %v6436
          %v6438 = vsel %vm5809, %v6193, 0.0
          %v6439 = vadd.f32 %v6437, %v6438
          %v6440 = vsel %vm5809, %v6194, 0.0
          %v6441 = vadd.f32 %v6439, %v6440
          %v6442 = vsel %vm5809, %v6195, 0.0
          %v6443 = vadd.f32 %v6441, %v6442
          %v6444 = vsel %vm5809, %v6196, 0.0
          %v6445 = vadd.f32 %v6443, %v6444
          %v6446 = vsel %vm5809, %v6197, 0.0
          %v6447 = vadd.f32 %v6445, %v6446
          %v6448 = vsel %vm5809, %v6198, 0.0
          %v6449 = vadd.f32 %v6447, %v6448
          %v6450 = vsel %vm5809, %v6199, 0.0
          %v6451 = vadd.f32 %v6449, %v6450
          %v6452 = vsel %vm5809, %v6200, 0.0
          %v6453 = vadd.f32 %v6451, %v6452
          %v6454 = vsel %vm5809, %v6201, 0.0
          %v6455 = vadd.f32 %v6453, %v6454
          %v6456 = vsel %vm5809, %v6202, 0.0
          %v6457 = vadd.f32 %v6455, %v6456
          %v6458 = vrot.slane %v6457, 4
          %v6459 = vadd.f32 %v6457, %v6458
          %v6460 = vrot.slane %v6459, 2
          %v6461 = vadd.f32 %v6459, %v6460
          %v6462 = vrot.slane %v6461, 1
          %v6463 = vadd.f32 %v6461, %v6462
          %v6464 = vadd.f32 %v6074, %v6463
          %6465 = vst.msk [vmem:[#allocation7] sm:$0x1] %vm6072, %v6464
          %s6466 = smul.u32 %s29, 1024
          %s6467 = scalar_lea.vmem [#allocation3], %s6466
          %6468 = vst.msk [vmem:[%s6467] sm:$0xff] %vm5809, %v4894
          %6469 = vst.msk [vmem:[%s6467 + $0x8] sm:$0xff] %vm5809, %v4897
          %6470 = vst.msk [vmem:[%s6467 + $0x10] sm:$0xff] %vm5809, %v4902
          %6471 = vst.msk [vmem:[%s6467 + $0x18] sm:$0xff] %vm5809, %v4905
          %6472 = vst.msk [vmem:[%s6467 + $0x20] sm:$0xff] %vm5809, %v4910
          %6473 = vst.msk [vmem:[%s6467 + $0x28] sm:$0xff] %vm5809, %v4913
          %6474 = vst.msk [vmem:[%s6467 + $0x30] sm:$0xff] %vm5809, %v4918
          %6475 = vst.msk [vmem:[%s6467 + $0x38] sm:$0xff] %vm5809, %v4921
          %6476 = vst.msk [vmem:[%s6467 + $0x40] sm:$0xff] %vm5809, %v4926
          %6477 = vst.msk [vmem:[%s6467 + $0x48] sm:$0xff] %vm5809, %v4929
          %6478 = vst.msk [vmem:[%s6467 + $0x50] sm:$0xff] %vm5809, %v4934
          %6479 = vst.msk [vmem:[%s6467 + $0x58] sm:$0xff] %vm5809, %v4937
          %6480 = vst.msk [vmem:[%s6467 + $0x60] sm:$0xff] %vm5809, %v4942
          %6481 = vst.msk [vmem:[%s6467 + $0x68] sm:$0xff] %vm5809, %v4945
          %6482 = vst.msk [vmem:[%s6467 + $0x70] sm:$0xff] %vm5809, %v4950
          %6483 = vst.msk [vmem:[%s6467 + $0x78] sm:$0xff] %vm5809, %v4953
          %6484 = vst.msk [vmem:[%s6467 + $0x80] sm:$0xff] %vm5809, %v4958
          %6485 = vst.msk [vmem:[%s6467 + $0x88] sm:$0xff] %vm5809, %v4961
          %6486 = vst.msk [vmem:[%s6467 + $0x90] sm:$0xff] %vm5809, %v4966
          %6487 = vst.msk [vmem:[%s6467 + $0x98] sm:$0xff] %vm5809, %v4969
          %6488 = vst.msk [vmem:[%s6467 + $0xa0] sm:$0xff] %vm5809, %v4974
          %6489 = vst.msk [vmem:[%s6467 + $0xa8] sm:$0xff] %vm5809, %v4977
          %6490 = vst.msk [vmem:[%s6467 + $0xb0] sm:$0xff] %vm5809, %v4982
          %6491 = vst.msk [vmem:[%s6467 + $0xb8] sm:$0xff] %vm5809, %v4985
          %6492 = vst.msk [vmem:[%s6467 + $0xc0] sm:$0xff] %vm5809, %v4990
          %6493 = vst.msk [vmem:[%s6467 + $0xc8] sm:$0xff] %vm5809, %v4993
          %6494 = vst.msk [vmem:[%s6467 + $0xd0] sm:$0xff] %vm5809, %v4998
          %6495 = vst.msk [vmem:[%s6467 + $0xd8] sm:$0xff] %vm5809, %v5001
          %6496 = vst.msk [vmem:[%s6467 + $0xe0] sm:$0xff] %vm5809, %v5006
          %6497 = vst.msk [vmem:[%s6467 + $0xe8] sm:$0xff] %vm5809, %v5009
          %6498 = vst.msk [vmem:[%s6467 + $0xf0] sm:$0xff] %vm5809, %v5014
          %6499 = vst.msk [vmem:[%s6467 + $0xf8] sm:$0xff] %vm5809, %v5017
          %6500 = vst.msk [vmem:[%s6467 + $0x100] sm:$0xff] %vm5809, %v5022
          %6501 = vst.msk [vmem:[%s6467 + $0x108] sm:$0xff] %vm5809, %v5025
          %6502 = vst.msk [vmem:[%s6467 + $0x110] sm:$0xff] %vm5809, %v5030
          %6503 = vst.msk [vmem:[%s6467 + $0x118] sm:$0xff] %vm5809, %v5033
          %6504 = vst.msk [vmem:[%s6467 + $0x120] sm:$0xff] %vm5809, %v5038
          %6505 = vst.msk [vmem:[%s6467 + $0x128] sm:$0xff] %vm5809, %v5041
          %6506 = vst.msk [vmem:[%s6467 + $0x130] sm:$0xff] %vm5809, %v5046
          %6507 = vst.msk [vmem:[%s6467 + $0x138] sm:$0xff] %vm5809, %v5049
          %6508 = vst.msk [vmem:[%s6467 + $0x140] sm:$0xff] %vm5809, %v5054
          %6509 = vst.msk [vmem:[%s6467 + $0x148] sm:$0xff] %vm5809, %v5057
          %6510 = vst.msk [vmem:[%s6467 + $0x150] sm:$0xff] %vm5809, %v5062
          %6511 = vst.msk [vmem:[%s6467 + $0x158] sm:$0xff] %vm5809, %v5065
          %6512 = vst.msk [vmem:[%s6467 + $0x160] sm:$0xff] %vm5809, %v5070
          %6513 = vst.msk [vmem:[%s6467 + $0x168] sm:$0xff] %vm5809, %v5073
          %6514 = vst.msk [vmem:[%s6467 + $0x170] sm:$0xff] %vm5809, %v5078
          %6515 = vst.msk [vmem:[%s6467 + $0x178] sm:$0xff] %vm5809, %v5081
          %6516 = vst.msk [vmem:[%s6467 + $0x180] sm:$0xff] %vm5809, %v5086
          %6517 = vst.msk [vmem:[%s6467 + $0x188] sm:$0xff] %vm5809, %v5089
          %6518 = vst.msk [vmem:[%s6467 + $0x190] sm:$0xff] %vm5809, %v5094
          %6519 = vst.msk [vmem:[%s6467 + $0x198] sm:$0xff] %vm5809, %v5097
          %6520 = vst.msk [vmem:[%s6467 + $0x1a0] sm:$0xff] %vm5809, %v5102
          %6521 = vst.msk [vmem:[%s6467 + $0x1a8] sm:$0xff] %vm5809, %v5105
          %6522 = vst.msk [vmem:[%s6467 + $0x1b0] sm:$0xff] %vm5809, %v5110
          %6523 = vst.msk [vmem:[%s6467 + $0x1b8] sm:$0xff] %vm5809, %v5113
          %6524 = vst.msk [vmem:[%s6467 + $0x1c0] sm:$0xff] %vm5809, %v5118
          %6525 = vst.msk [vmem:[%s6467 + $0x1c8] sm:$0xff] %vm5809, %v5121
          %6526 = vst.msk [vmem:[%s6467 + $0x1d0] sm:$0xff] %vm5809, %v5126
          %6527 = vst.msk [vmem:[%s6467 + $0x1d8] sm:$0xff] %vm5809, %v5129
          %6528 = vst.msk [vmem:[%s6467 + $0x1e0] sm:$0xff] %vm5809, %v5134
          %6529 = vst.msk [vmem:[%s6467 + $0x1e8] sm:$0xff] %vm5809, %v5137
          %6530 = vst.msk [vmem:[%s6467 + $0x1f0] sm:$0xff] %vm5809, %v5142
          %6531 = vst.msk [vmem:[%s6467 + $0x1f8] sm:$0xff] %vm5809, %v5145
          %6532 = vst.msk [vmem:[%s6467 + $0x200] sm:$0xff] %vm5809, %v5150
          %6533 = vst.msk [vmem:[%s6467 + $0x208] sm:$0xff] %vm5809, %v5153
          %6534 = vst.msk [vmem:[%s6467 + $0x210] sm:$0xff] %vm5809, %v5158
          %6535 = vst.msk [vmem:[%s6467 + $0x218] sm:$0xff] %vm5809, %v5161
          %6536 = vst.msk [vmem:[%s6467 + $0x220] sm:$0xff] %vm5809, %v5166
          %6537 = vst.msk [vmem:[%s6467 + $0x228] sm:$0xff] %vm5809, %v5169
          %6538 = vst.msk [vmem:[%s6467 + $0x230] sm:$0xff] %vm5809, %v5174
          %6539 = vst.msk [vmem:[%s6467 + $0x238] sm:$0xff] %vm5809, %v5177
          %6540 = vst.msk [vmem:[%s6467 + $0x240] sm:$0xff] %vm5809, %v5182
          %6541 = vst.msk [vmem:[%s6467 + $0x248] sm:$0xff] %vm5809, %v5185
          %6542 = vst.msk [vmem:[%s6467 + $0x250] sm:$0xff] %vm5809, %v5190
          %6543 = vst.msk [vmem:[%s6467 + $0x258] sm:$0xff] %vm5809, %v5193
          %6544 = vst.msk [vmem:[%s6467 + $0x260] sm:$0xff] %vm5809, %v5198
          %6545 = vst.msk [vmem:[%s6467 + $0x268] sm:$0xff] %vm5809, %v5201
          %6546 = vst.msk [vmem:[%s6467 + $0x270] sm:$0xff] %vm5809, %v5206
          %6547 = vst.msk [vmem:[%s6467 + $0x278] sm:$0xff] %vm5809, %v5209
          %6548 = vst.msk [vmem:[%s6467 + $0x280] sm:$0xff] %vm5809, %v5214
          %6549 = vst.msk [vmem:[%s6467 + $0x288] sm:$0xff] %vm5809, %v5217
          %6550 = vst.msk [vmem:[%s6467 + $0x290] sm:$0xff] %vm5809, %v5222
          %6551 = vst.msk [vmem:[%s6467 + $0x298] sm:$0xff] %vm5809, %v5225
          %6552 = vst.msk [vmem:[%s6467 + $0x2a0] sm:$0xff] %vm5809, %v5230
          %6553 = vst.msk [vmem:[%s6467 + $0x2a8] sm:$0xff] %vm5809, %v5233
          %6554 = vst.msk [vmem:[%s6467 + $0x2b0] sm:$0xff] %vm5809, %v5238
          %6555 = vst.msk [vmem:[%s6467 + $0x2b8] sm:$0xff] %vm5809, %v5241
          %6556 = vst.msk [vmem:[%s6467 + $0x2c0] sm:$0xff] %vm5809, %v5246
          %6557 = vst.msk [vmem:[%s6467 + $0x2c8] sm:$0xff] %vm5809, %v5249
          %6558 = vst.msk [vmem:[%s6467 + $0x2d0] sm:$0xff] %vm5809, %v5254
          %6559 = vst.msk [vmem:[%s6467 + $0x2d8] sm:$0xff] %vm5809, %v5257
          %6560 = vst.msk [vmem:[%s6467 + $0x2e0] sm:$0xff] %vm5809, %v5262
          %6561 = vst.msk [vmem:[%s6467 + $0x2e8] sm:$0xff] %vm5809, %v5265
          %6562 = vst.msk [vmem:[%s6467 + $0x2f0] sm:$0xff] %vm5809, %v5270
          %6563 = vst.msk [vmem:[%s6467 + $0x2f8] sm:$0xff] %vm5809, %v5273
          %6564 = vst.msk [vmem:[%s6467 + $0x300] sm:$0xff] %vm5809, %v5278
          %6565 = vst.msk [vmem:[%s6467 + $0x308] sm:$0xff] %vm5809, %v5281
          %6566 = vst.msk [vmem:[%s6467 + $0x310] sm:$0xff] %vm5809, %v5286
          %6567 = vst.msk [vmem:[%s6467 + $0x318] sm:$0xff] %vm5809, %v5289
          %6568 = vst.msk [vmem:[%s6467 + $0x320] sm:$0xff] %vm5809, %v5294
          %6569 = vst.msk [vmem:[%s6467 + $0x328] sm:$0xff] %vm5809, %v5297
          %6570 = vst.msk [vmem:[%s6467 + $0x330] sm:$0xff] %vm5809, %v5302
          %6571 = vst.msk [vmem:[%s6467 + $0x338] sm:$0xff] %vm5809, %v5305
          %6572 = vst.msk [vmem:[%s6467 + $0x340] sm:$0xff] %vm5809, %v5310
          %6573 = vst.msk [vmem:[%s6467 + $0x348] sm:$0xff] %vm5809, %v5313
          %6574 = vst.msk [vmem:[%s6467 + $0x350] sm:$0xff] %vm5809, %v5318
          %6575 = vst.msk [vmem:[%s6467 + $0x358] sm:$0xff] %vm5809, %v5321
          %6576 = vst.msk [vmem:[%s6467 + $0x360] sm:$0xff] %vm5809, %v5326
          %6577 = vst.msk [vmem:[%s6467 + $0x368] sm:$0xff] %vm5809, %v5329
          %6578 = vst.msk [vmem:[%s6467 + $0x370] sm:$0xff] %vm5809, %v5334
          %6579 = vst.msk [vmem:[%s6467 + $0x378] sm:$0xff] %vm5809, %v5337
          %6580 = vst.msk [vmem:[%s6467 + $0x380] sm:$0xff] %vm5809, %v5342
          %6581 = vst.msk [vmem:[%s6467 + $0x388] sm:$0xff] %vm5809, %v5345
          %6582 = vst.msk [vmem:[%s6467 + $0x390] sm:$0xff] %vm5809, %v5350
          %6583 = vst.msk [vmem:[%s6467 + $0x398] sm:$0xff] %vm5809, %v5353
          %6584 = vst.msk [vmem:[%s6467 + $0x3a0] sm:$0xff] %vm5809, %v5358
          %6585 = vst.msk [vmem:[%s6467 + $0x3a8] sm:$0xff] %vm5809, %v5361
          %6586 = vst.msk [vmem:[%s6467 + $0x3b0] sm:$0xff] %vm5809, %v5366
          %6587 = vst.msk [vmem:[%s6467 + $0x3b8] sm:$0xff] %vm5809, %v5369
          %6588 = vst.msk [vmem:[%s6467 + $0x3c0] sm:$0xff] %vm5809, %v5374
          %6589 = vst.msk [vmem:[%s6467 + $0x3c8] sm:$0xff] %vm5809, %v5377
          %6590 = vst.msk [vmem:[%s6467 + $0x3d0] sm:$0xff] %vm5809, %v5382
          %6591 = vst.msk [vmem:[%s6467 + $0x3d8] sm:$0xff] %vm5809, %v5385
          %6592 = vst.msk [vmem:[%s6467 + $0x3e0] sm:$0xff] %vm5809, %v5390
          %6593 = vst.msk [vmem:[%s6467 + $0x3e8] sm:$0xff] %vm5809, %v5393
          %6594 = vst.msk [vmem:[%s6467 + $0x3f0] sm:$0xff] %vm5809, %v5398
          %6595 = vst.msk [vmem:[%s6467 + $0x3f8] sm:$0xff] %vm5809, %v5401
        $region76: #{tpu_custom_call.1} parent=55 // pred_fallthru
          _
        %p6596 = scmp.eq.s32.totalorder %s28, 2
        // Predicated region
        $region85: #{tpu_custom_call.1} parent=55 // pred_check
          %p6597 = pneg %p6596
        $region86: #{tpu_custom_call.1} parent=55 // pred_check_branch
          %6599 = sbr.rel (%p6597) target = $region88
        $region87: #{tpu_custom_call.1} parent=55 // pred_region
          %p6600 = scmp.eq.s32.totalorder %s29, 0
          // Predicated region
          $region89: #{tpu_custom_call.1} parent=87 // pred_check
            %p6601 = pneg %p6600
          $region90: #{tpu_custom_call.1} parent=87 // pred_check_branch
            %6603 = sbr.rel (%p6601) target = $region92
          $region91: #{tpu_custom_call.1} parent=87 // pred_region
            %v6604 = vld [vmem:[#allocation6] sm:$0x1]
            %v6605 = vmul.f32 %v6604, 0.0009765625
            %v6606 = vld [vmem:[#allocation7] sm:$0x1]
            %v6607 = vmul.f32 %v6606, 0.0009765625
            %v6608 = vmul.f32 %v6605, %v6605
            %v6609 = vsub.f32 %v6607, %v6608
            %v6610 = vld [vmem:[%s7] sm:$0x1]
            %v6611 = vadd.f32 %v6609, 1e-05
            %v6612 = vrsqrt.pop %v6611
            %v6613 = vmul.f32 %v6610, %v6612
            %vm6614 = vcmask 516096
            %6615 = vst.msk [vmem:[#allocation12] sm:$0x1] %vm6614, %v6613
            %v6616 = vld [vmem:[%s8] sm:$0x1]
            %v6617 = vld [vmem:[#allocation9] sm:$0x1]
            %v6618 = vadd.f32 %v6617, %v6605
            %v6619 = vmul.f32 %v6618, %v6613
            %v6620 = vsub.f32 %v6616, %v6619
            %6621 = vst.msk [vmem:[#allocation13] sm:$0x1] %vm6614, %v6620
          $region92: #{tpu_custom_call.1} parent=87 // pred_fallthru
            _
          %s6622 = smul.u32 %s29, 1024
          %s6623 = scalar_lea.vmem [#allocation3], %s6622
          %v6624 = vld [vmem:[%s6623] sm:$0xff]
          %v6625 = vld [vmem:[%s6623 + $0x8] sm:$0xff]
          %v6626 = vld [vmem:[%s6623 + $0x10] sm:$0xff]
          %v6627 = vld [vmem:[%s6623 + $0x18] sm:$0xff]
          %v6628 = vld [vmem:[%s6623 + $0x20] sm:$0xff]
          %v6629 = vld [vmem:[%s6623 + $0x28] sm:$0xff]
          %v6630 = vld [vmem:[%s6623 + $0x30] sm:$0xff]
          %v6631 = vld [vmem:[%s6623 + $0x38] sm:$0xff]
          %v6632 = vld [vmem:[%s6623 + $0x40] sm:$0xff]
          %v6633 = vld [vmem:[%s6623 + $0x48] sm:$0xff]
          %v6634 = vld [vmem:[%s6623 + $0x50] sm:$0xff]
          %v6635 = vld [vmem:[%s6623 + $0x58] sm:$0xff]
          %v6636 = vld [vmem:[%s6623 + $0x60] sm:$0xff]
          %v6637 = vld [vmem:[%s6623 + $0x68] sm:$0xff]
          %v6638 = vld [vmem:[%s6623 + $0x70] sm:$0xff]
          %v6639 = vld [vmem:[%s6623 + $0x78] sm:$0xff]
          %v6640 = vld [vmem:[%s6623 + $0x80] sm:$0xff]
          %v6641 = vld [vmem:[%s6623 + $0x88] sm:$0xff]
          %v6642 = vld [vmem:[%s6623 + $0x90] sm:$0xff]
          %v6643 = vld [vmem:[%s6623 + $0x98] sm:$0xff]
          %v6644 = vld [vmem:[%s6623 + $0xa0] sm:$0xff]
          %v6645 = vld [vmem:[%s6623 + $0xa8] sm:$0xff]
          %v6646 = vld [vmem:[%s6623 + $0xb0] sm:$0xff]
          %v6647 = vld [vmem:[%s6623 + $0xb8] sm:$0xff]
          %v6648 = vld [vmem:[%s6623 + $0xc0] sm:$0xff]
          %v6649 = vld [vmem:[%s6623 + $0xc8] sm:$0xff]
          %v6650 = vld [vmem:[%s6623 + $0xd0] sm:$0xff]
          %v6651 = vld [vmem:[%s6623 + $0xd8] sm:$0xff]
          %v6652 = vld [vmem:[%s6623 + $0xe0] sm:$0xff]
          %v6653 = vld [vmem:[%s6623 + $0xe8] sm:$0xff]
          %v6654 = vld [vmem:[%s6623 + $0xf0] sm:$0xff]
          %v6655 = vld [vmem:[%s6623 + $0xf8] sm:$0xff]
          %v6656 = vld [vmem:[%s6623 + $0x100] sm:$0xff]
          %v6657 = vld [vmem:[%s6623 + $0x108] sm:$0xff]
          %v6658 = vld [vmem:[%s6623 + $0x110] sm:$0xff]
          %v6659 = vld [vmem:[%s6623 + $0x118] sm:$0xff]
          %v6660 = vld [vmem:[%s6623 + $0x120] sm:$0xff]
          %v6661 = vld [vmem:[%s6623 + $0x128] sm:$0xff]
          %v6662 = vld [vmem:[%s6623 + $0x130] sm:$0xff]
          %v6663 = vld [vmem:[%s6623 + $0x138] sm:$0xff]
          %v6664 = vld [vmem:[%s6623 + $0x140] sm:$0xff]
          %v6665 = vld [vmem:[%s6623 + $0x148] sm:$0xff]
          %v6666 = vld [vmem:[%s6623 + $0x150] sm:$0xff]
          %v6667 = vld [vmem:[%s6623 + $0x158] sm:$0xff]
          %v6668 = vld [vmem:[%s6623 + $0x160] sm:$0xff]
          %v6669 = vld [vmem:[%s6623 + $0x168] sm:$0xff]
          %v6670 = vld [vmem:[%s6623 + $0x170] sm:$0xff]
          %v6671 = vld [vmem:[%s6623 + $0x178] sm:$0xff]
          %v6672 = vld [vmem:[%s6623 + $0x180] sm:$0xff]
          %v6673 = vld [vmem:[%s6623 + $0x188] sm:$0xff]
          %v6674 = vld [vmem:[%s6623 + $0x190] sm:$0xff]
          %v6675 = vld [vmem:[%s6623 + $0x198] sm:$0xff]
          %v6676 = vld [vmem:[%s6623 + $0x1a0] sm:$0xff]
          %v6677 = vld [vmem:[%s6623 + $0x1a8] sm:$0xff]
          %v6678 = vld [vmem:[%s6623 + $0x1b0] sm:$0xff]
          %v6679 = vld [vmem:[%s6623 + $0x1b8] sm:$0xff]
          %v6680 = vld [vmem:[%s6623 + $0x1c0] sm:$0xff]
          %v6681 = vld [vmem:[%s6623 + $0x1c8] sm:$0xff]
          %v6682 = vld [vmem:[%s6623 + $0x1d0] sm:$0xff]
          %v6683 = vld [vmem:[%s6623 + $0x1d8] sm:$0xff]
          %v6684 = vld [vmem:[%s6623 + $0x1e0] sm:$0xff]
          %v6685 = vld [vmem:[%s6623 + $0x1e8] sm:$0xff]
          %v6686 = vld [vmem:[%s6623 + $0x1f0] sm:$0xff]
          %v6687 = vld [vmem:[%s6623 + $0x1f8] sm:$0xff]
          %v6688 = vld [vmem:[%s6623 + $0x200] sm:$0xff]
          %v6689 = vld [vmem:[%s6623 + $0x208] sm:$0xff]
          %v6690 = vld [vmem:[%s6623 + $0x210] sm:$0xff]
          %v6691 = vld [vmem:[%s6623 + $0x218] sm:$0xff]
          %v6692 = vld [vmem:[%s6623 + $0x220] sm:$0xff]
          %v6693 = vld [vmem:[%s6623 + $0x228] sm:$0xff]
          %v6694 = vld [vmem:[%s6623 + $0x230] sm:$0xff]
          %v6695 = vld [vmem:[%s6623 + $0x238] sm:$0xff]
          %v6696 = vld [vmem:[%s6623 + $0x240] sm:$0xff]
          %v6697 = vld [vmem:[%s6623 + $0x248] sm:$0xff]
          %v6698 = vld [vmem:[%s6623 + $0x250] sm:$0xff]
          %v6699 = vld [vmem:[%s6623 + $0x258] sm:$0xff]
          %v6700 = vld [vmem:[%s6623 + $0x260] sm:$0xff]
          %v6701 = vld [vmem:[%s6623 + $0x268] sm:$0xff]
          %v6702 = vld [vmem:[%s6623 + $0x270] sm:$0xff]
          %v6703 = vld [vmem:[%s6623 + $0x278] sm:$0xff]
          %v6704 = vld [vmem:[%s6623 + $0x280] sm:$0xff]
          %v6705 = vld [vmem:[%s6623 + $0x288] sm:$0xff]
          %v6706 = vld [vmem:[%s6623 + $0x290] sm:$0xff]
          %v6707 = vld [vmem:[%s6623 + $0x298] sm:$0xff]
          %v6708 = vld [vmem:[%s6623 + $0x2a0] sm:$0xff]
          %v6709 = vld [vmem:[%s6623 + $0x2a8] sm:$0xff]
          %v6710 = vld [vmem:[%s6623 + $0x2b0] sm:$0xff]
          %v6711 = vld [vmem:[%s6623 + $0x2b8] sm:$0xff]
          %v6712 = vld [vmem:[%s6623 + $0x2c0] sm:$0xff]
          %v6713 = vld [vmem:[%s6623 + $0x2c8] sm:$0xff]
          %v6714 = vld [vmem:[%s6623 + $0x2d0] sm:$0xff]
          %v6715 = vld [vmem:[%s6623 + $0x2d8] sm:$0xff]
          %v6716 = vld [vmem:[%s6623 + $0x2e0] sm:$0xff]
          %v6717 = vld [vmem:[%s6623 + $0x2e8] sm:$0xff]
          %v6718 = vld [vmem:[%s6623 + $0x2f0] sm:$0xff]
          %v6719 = vld [vmem:[%s6623 + $0x2f8] sm:$0xff]
          %v6720 = vld [vmem:[%s6623 + $0x300] sm:$0xff]
          %v6721 = vld [vmem:[%s6623 + $0x308] sm:$0xff]
          %v6722 = vld [vmem:[%s6623 + $0x310] sm:$0xff]
          %v6723 = vld [vmem:[%s6623 + $0x318] sm:$0xff]
          %v6724 = vld [vmem:[%s6623 + $0x320] sm:$0xff]
          %v6725 = vld [vmem:[%s6623 + $0x328] sm:$0xff]
          %v6726 = vld [vmem:[%s6623 + $0x330] sm:$0xff]
          %v6727 = vld [vmem:[%s6623 + $0x338] sm:$0xff]
          %v6728 = vld [vmem:[%s6623 + $0x340] sm:$0xff]
          %v6729 = vld [vmem:[%s6623 + $0x348] sm:$0xff]
          %v6730 = vld [vmem:[%s6623 + $0x350] sm:$0xff]
          %v6731 = vld [vmem:[%s6623 + $0x358] sm:$0xff]
          %v6732 = vld [vmem:[%s6623 + $0x360] sm:$0xff]
          %v6733 = vld [vmem:[%s6623 + $0x368] sm:$0xff]
          %v6734 = vld [vmem:[%s6623 + $0x370] sm:$0xff]
          %v6735 = vld [vmem:[%s6623 + $0x378] sm:$0xff]
          %v6736 = vld [vmem:[%s6623 + $0x380] sm:$0xff]
          %v6737 = vld [vmem:[%s6623 + $0x388] sm:$0xff]
          %v6738 = vld [vmem:[%s6623 + $0x390] sm:$0xff]
          %v6739 = vld [vmem:[%s6623 + $0x398] sm:$0xff]
          %v6740 = vld [vmem:[%s6623 + $0x3a0] sm:$0xff]
          %v6741 = vld [vmem:[%s6623 + $0x3a8] sm:$0xff]
          %v6742 = vld [vmem:[%s6623 + $0x3b0] sm:$0xff]
          %v6743 = vld [vmem:[%s6623 + $0x3b8] sm:$0xff]
          %v6744 = vld [vmem:[%s6623 + $0x3c0] sm:$0xff]
          %v6745 = vld [vmem:[%s6623 + $0x3c8] sm:$0xff]
          %v6746 = vld [vmem:[%s6623 + $0x3d0] sm:$0xff]
          %v6747 = vld [vmem:[%s6623 + $0x3d8] sm:$0xff]
          %v6748 = vld [vmem:[%s6623 + $0x3e0] sm:$0xff]
          %v6749 = vld [vmem:[%s6623 + $0x3e8] sm:$0xff]
          %v6750 = vld [vmem:[%s6623 + $0x3f0] sm:$0xff]
          %v6751 = vld [vmem:[%s6623 + $0x3f8] sm:$0xff]
          %v6752 = vld [vmem:[#allocation12] sm:$0x1]
          %v6754 = vlaneseq
          %v6755 = vshrl.u32 %v6754, 7
          %v6756 = vsub.s32 0, %v6755
          %v6757 = vrot.slane %v6752, %v6756
          %v6759 = vmul.f32 %v6624, %v6757
          %v6760 = vmul.f32 %v6625, %v6757
          %v6761 = vmul.f32 %v6626, %v6757
          %v6762 = vmul.f32 %v6627, %v6757
          %v6763 = vmul.f32 %v6628, %v6757
          %v6764 = vmul.f32 %v6629, %v6757
          %v6765 = vmul.f32 %v6630, %v6757
          %v6766 = vmul.f32 %v6631, %v6757
          %v6767 = vmul.f32 %v6632, %v6757
          %v6768 = vmul.f32 %v6633, %v6757
          %v6769 = vmul.f32 %v6634, %v6757
          %v6770 = vmul.f32 %v6635, %v6757
          %v6771 = vmul.f32 %v6636, %v6757
          %v6772 = vmul.f32 %v6637, %v6757
          %v6773 = vmul.f32 %v6638, %v6757
          %v6774 = vmul.f32 %v6639, %v6757
          %v6775 = vmul.f32 %v6640, %v6757
          %v6776 = vmul.f32 %v6641, %v6757
          %v6777 = vmul.f32 %v6642, %v6757
          %v6778 = vmul.f32 %v6643, %v6757
          %v6779 = vmul.f32 %v6644, %v6757
          %v6780 = vmul.f32 %v6645, %v6757
          %v6781 = vmul.f32 %v6646, %v6757
          %v6782 = vmul.f32 %v6647, %v6757
          %v6783 = vmul.f32 %v6648, %v6757
          %v6784 = vmul.f32 %v6649, %v6757
          %v6785 = vmul.f32 %v6650, %v6757
          %v6786 = vmul.f32 %v6651, %v6757
          %v6787 = vmul.f32 %v6652, %v6757
          %v6788 = vmul.f32 %v6653, %v6757
          %v6789 = vmul.f32 %v6654, %v6757
          %v6790 = vmul.f32 %v6655, %v6757
          %v6791 = vmul.f32 %v6656, %v6757
          %v6792 = vmul.f32 %v6657, %v6757
          %v6793 = vmul.f32 %v6658, %v6757
          %v6794 = vmul.f32 %v6659, %v6757
          %v6795 = vmul.f32 %v6660, %v6757
          %v6796 = vmul.f32 %v6661, %v6757
          %v6797 = vmul.f32 %v6662, %v6757
          %v6798 = vmul.f32 %v6663, %v6757
          %v6799 = vmul.f32 %v6664, %v6757
          %v6800 = vmul.f32 %v6665, %v6757
          %v6801 = vmul.f32 %v6666, %v6757
          %v6802 = vmul.f32 %v6667, %v6757
          %v6803 = vmul.f32 %v6668, %v6757
          %v6804 = vmul.f32 %v6669, %v6757
          %v6805 = vmul.f32 %v6670, %v6757
          %v6806 = vmul.f32 %v6671, %v6757
          %v6807 = vmul.f32 %v6672, %v6757
          %v6808 = vmul.f32 %v6673, %v6757
          %v6809 = vmul.f32 %v6674, %v6757
          %v6810 = vmul.f32 %v6675, %v6757
          %v6811 = vmul.f32 %v6676, %v6757
          %v6812 = vmul.f32 %v6677, %v6757
          %v6813 = vmul.f32 %v6678, %v6757
          %v6814 = vmul.f32 %v6679, %v6757
          %v6815 = vmul.f32 %v6680, %v6757
          %v6816 = vmul.f32 %v6681, %v6757
          %v6817 = vmul.f32 %v6682, %v6757
          %v6818 = vmul.f32 %v6683, %v6757
          %v6819 = vmul.f32 %v6684, %v6757
          %v6820 = vmul.f32 %v6685, %v6757
          %v6821 = vmul.f32 %v6686, %v6757
          %v6822 = vmul.f32 %v6687, %v6757
          %v6823 = vmul.f32 %v6688, %v6757
          %v6824 = vmul.f32 %v6689, %v6757
          %v6825 = vmul.f32 %v6690, %v6757
          %v6826 = vmul.f32 %v6691, %v6757
          %v6827 = vmul.f32 %v6692, %v6757
          %v6828 = vmul.f32 %v6693, %v6757
          %v6829 = vmul.f32 %v6694, %v6757
          %v6830 = vmul.f32 %v6695, %v6757
          %v6831 = vmul.f32 %v6696, %v6757
          %v6832 = vmul.f32 %v6697, %v6757
          %v6833 = vmul.f32 %v6698, %v6757
          %v6834 = vmul.f32 %v6699, %v6757
          %v6835 = vmul.f32 %v6700, %v6757
          %v6836 = vmul.f32 %v6701, %v6757
          %v6837 = vmul.f32 %v6702, %v6757
          %v6838 = vmul.f32 %v6703, %v6757
          %v6839 = vmul.f32 %v6704, %v6757
          %v6840 = vmul.f32 %v6705, %v6757
          %v6841 = vmul.f32 %v6706, %v6757
          %v6842 = vmul.f32 %v6707, %v6757
          %v6843 = vmul.f32 %v6708, %v6757
          %v6844 = vmul.f32 %v6709, %v6757
          %v6845 = vmul.f32 %v6710, %v6757
          %v6846 = vmul.f32 %v6711, %v6757
          %v6847 = vmul.f32 %v6712, %v6757
          %v6848 = vmul.f32 %v6713, %v6757
          %v6849 = vmul.f32 %v6714, %v6757
          %v6850 = vmul.f32 %v6715, %v6757
          %v6851 = vmul.f32 %v6716, %v6757
          %v6852 = vmul.f32 %v6717, %v6757
          %v6853 = vmul.f32 %v6718, %v6757
          %v6854 = vmul.f32 %v6719, %v6757
          %v6855 = vmul.f32 %v6720, %v6757
          %v6856 = vmul.f32 %v6721, %v6757
          %v6857 = vmul.f32 %v6722, %v6757
          %v6858 = vmul.f32 %v6723, %v6757
          %v6859 = vmul.f32 %v6724, %v6757
          %v6860 = vmul.f32 %v6725, %v6757
          %v6861 = vmul.f32 %v6726, %v6757
          %v6862 = vmul.f32 %v6727, %v6757
          %v6863 = vmul.f32 %v6728, %v6757
          %v6864 = vmul.f32 %v6729, %v6757
          %v6865 = vmul.f32 %v6730, %v6757
          %v6866 = vmul.f32 %v6731, %v6757
          %v6867 = vmul.f32 %v6732, %v6757
          %v6868 = vmul.f32 %v6733, %v6757
          %v6869 = vmul.f32 %v6734, %v6757
          %v6870 = vmul.f32 %v6735, %v6757
          %v6871 = vmul.f32 %v6736, %v6757
          %v6872 = vmul.f32 %v6737, %v6757
          %v6873 = vmul.f32 %v6738, %v6757
          %v6874 = vmul.f32 %v6739, %v6757
          %v6875 = vmul.f32 %v6740, %v6757
          %v6876 = vmul.f32 %v6741, %v6757
          %v6877 = vmul.f32 %v6742, %v6757
          %v6878 = vmul.f32 %v6743, %v6757
          %v6879 = vmul.f32 %v6744, %v6757
          %v6880 = vmul.f32 %v6745, %v6757
          %v6881 = vmul.f32 %v6746, %v6757
          %v6882 = vmul.f32 %v6747, %v6757
          %v6883 = vmul.f32 %v6748, %v6757
          %v6884 = vmul.f32 %v6749, %v6757
          %v6885 = vmul.f32 %v6750, %v6757
          %v6886 = vmul.f32 %v6751, %v6757
          %v6887 = vld [vmem:[#allocation13] sm:$0x1]
          %v6889 = vlaneseq
          %v6890 = vshrl.u32 %v6889, 7
          %v6891 = vsub.s32 0, %v6890
          %v6892 = vrot.slane %v6887, %v6891
          %v6894 = vadd.f32 %v6759, %v6892
          %v6895 = vadd.f32 %v6760, %v6892
          %v6896 = vadd.f32 %v6761, %v6892
          %v6897 = vadd.f32 %v6762, %v6892
          %v6898 = vadd.f32 %v6763, %v6892
          %v6899 = vadd.f32 %v6764, %v6892
          %v6900 = vadd.f32 %v6765, %v6892
          %v6901 = vadd.f32 %v6766, %v6892
          %v6902 = vadd.f32 %v6767, %v6892
          %v6903 = vadd.f32 %v6768, %v6892
          %v6904 = vadd.f32 %v6769, %v6892
          %v6905 = vadd.f32 %v6770, %v6892
          %v6906 = vadd.f32 %v6771, %v6892
          %v6907 = vadd.f32 %v6772, %v6892
          %v6908 = vadd.f32 %v6773, %v6892
          %v6909 = vadd.f32 %v6774, %v6892
          %v6910 = vadd.f32 %v6775, %v6892
          %v6911 = vadd.f32 %v6776, %v6892
          %v6912 = vadd.f32 %v6777, %v6892
          %v6913 = vadd.f32 %v6778, %v6892
          %v6914 = vadd.f32 %v6779, %v6892
          %v6915 = vadd.f32 %v6780, %v6892
          %v6916 = vadd.f32 %v6781, %v6892
          %v6917 = vadd.f32 %v6782, %v6892
          %v6918 = vadd.f32 %v6783, %v6892
          %v6919 = vadd.f32 %v6784, %v6892
          %v6920 = vadd.f32 %v6785, %v6892
          %v6921 = vadd.f32 %v6786, %v6892
          %v6922 = vadd.f32 %v6787, %v6892
          %v6923 = vadd.f32 %v6788, %v6892
          %v6924 = vadd.f32 %v6789, %v6892
          %v6925 = vadd.f32 %v6790, %v6892
          %v6926 = vadd.f32 %v6791, %v6892
          %v6927 = vadd.f32 %v6792, %v6892
          %v6928 = vadd.f32 %v6793, %v6892
          %v6929 = vadd.f32 %v6794, %v6892
          %v6930 = vadd.f32 %v6795, %v6892
          %v6931 = vadd.f32 %v6796, %v6892
          %v6932 = vadd.f32 %v6797, %v6892
          %v6933 = vadd.f32 %v6798, %v6892
          %v6934 = vadd.f32 %v6799, %v6892
          %v6935 = vadd.f32 %v6800, %v6892
          %v6936 = vadd.f32 %v6801, %v6892
          %v6937 = vadd.f32 %v6802, %v6892
          %v6938 = vadd.f32 %v6803, %v6892
          %v6939 = vadd.f32 %v6804, %v6892
          %v6940 = vadd.f32 %v6805, %v6892
          %v6941 = vadd.f32 %v6806, %v6892
          %v6942 = vadd.f32 %v6807, %v6892
          %v6943 = vadd.f32 %v6808, %v6892
          %v6944 = vadd.f32 %v6809, %v6892
          %v6945 = vadd.f32 %v6810, %v6892
          %v6946 = vadd.f32 %v6811, %v6892
          %v6947 = vadd.f32 %v6812, %v6892
          %v6948 = vadd.f32 %v6813, %v6892
          %v6949 = vadd.f32 %v6814, %v6892
          %v6950 = vadd.f32 %v6815, %v6892
          %v6951 = vadd.f32 %v6816, %v6892
          %v6952 = vadd.f32 %v6817, %v6892
          %v6953 = vadd.f32 %v6818, %v6892
          %v6954 = vadd.f32 %v6819, %v6892
          %v6955 = vadd.f32 %v6820, %v6892
          %v6956 = vadd.f32 %v6821, %v6892
          %v6957 = vadd.f32 %v6822, %v6892
          %v6958 = vadd.f32 %v6823, %v6892
          %v6959 = vadd.f32 %v6824, %v6892
          %v6960 = vadd.f32 %v6825, %v6892
          %v6961 = vadd.f32 %v6826, %v6892
          %v6962 = vadd.f32 %v6827, %v6892
          %v6963 = vadd.f32 %v6828, %v6892
          %v6964 = vadd.f32 %v6829, %v6892
          %v6965 = vadd.f32 %v6830, %v6892
          %v6966 = vadd.f32 %v6831, %v6892
          %v6967 = vadd.f32 %v6832, %v6892
          %v6968 = vadd.f32 %v6833, %v6892
          %v6969 = vadd.f32 %v6834, %v6892
          %v6970 = vadd.f32 %v6835, %v6892
          %v6971 = vadd.f32 %v6836, %v6892
          %v6972 = vadd.f32 %v6837, %v6892
          %v6973 = vadd.f32 %v6838, %v6892
          %v6974 = vadd.f32 %v6839, %v6892
          %v6975 = vadd.f32 %v6840, %v6892
          %v6976 = vadd.f32 %v6841, %v6892
          %v6977 = vadd.f32 %v6842, %v6892
          %v6978 = vadd.f32 %v6843, %v6892
          %v6979 = vadd.f32 %v6844, %v6892
          %v6980 = vadd.f32 %v6845, %v6892
          %v6981 = vadd.f32 %v6846, %v6892
          %v6982 = vadd.f32 %v6847, %v6892
          %v6983 = vadd.f32 %v6848, %v6892
          %v6984 = vadd.f32 %v6849, %v6892
          %v6985 = vadd.f32 %v6850, %v6892
          %v6986 = vadd.f32 %v6851, %v6892
          %v6987 = vadd.f32 %v6852, %v6892
          %v6988 = vadd.f32 %v6853, %v6892
          %v6989 = vadd.f32 %v6854, %v6892
          %v6990 = vadd.f32 %v6855, %v6892
          %v6991 = vadd.f32 %v6856, %v6892
          %v6992 = vadd.f32 %v6857, %v6892
          %v6993 = vadd.f32 %v6858, %v6892
          %v6994 = vadd.f32 %v6859, %v6892
          %v6995 = vadd.f32 %v6860, %v6892
          %v6996 = vadd.f32 %v6861, %v6892
          %v6997 = vadd.f32 %v6862, %v6892
          %v6998 = vadd.f32 %v6863, %v6892
          %v6999 = vadd.f32 %v6864, %v6892
          %v7000 = vadd.f32 %v6865, %v6892
          %v7001 = vadd.f32 %v6866, %v6892
          %v7002 = vadd.f32 %v6867, %v6892
          %v7003 = vadd.f32 %v6868, %v6892
          %v7004 = vadd.f32 %v6869, %v6892
          %v7005 = vadd.f32 %v6870, %v6892
          %v7006 = vadd.f32 %v6871, %v6892
          %v7007 = vadd.f32 %v6872, %v6892
          %v7008 = vadd.f32 %v6873, %v6892
          %v7009 = vadd.f32 %v6874, %v6892
          %v7010 = vadd.f32 %v6875, %v6892
          %v7011 = vadd.f32 %v6876, %v6892
          %v7012 = vadd.f32 %v6877, %v6892
          %v7013 = vadd.f32 %v6878, %v6892
          %v7014 = vadd.f32 %v6879, %v6892
          %v7015 = vadd.f32 %v6880, %v6892
          %v7016 = vadd.f32 %v6881, %v6892
          %v7017 = vadd.f32 %v6882, %v6892
          %v7018 = vadd.f32 %v6883, %v6892
          %v7019 = vadd.f32 %v6884, %v6892
          %v7020 = vadd.f32 %v6885, %v6892
          %v7021 = vadd.f32 %v6886, %v6892
          %vm7022 = vcmask 523264
          %7023 = vst.msk [vmem:[%s397] sm:$0xff] %vm7022, %v6894
          %7024 = vst.msk [vmem:[%s397 + $0x8] sm:$0xff] %vm7022, %v6895
          %7025 = vst.msk [vmem:[%s397 + $0x10] sm:$0xff] %vm7022, %v6896
          %7026 = vst.msk [vmem:[%s397 + $0x18] sm:$0xff] %vm7022, %v6897
          %7027 = vst.msk [vmem:[%s397 + $0x20] sm:$0xff] %vm7022, %v6898
          %7028 = vst.msk [vmem:[%s397 + $0x28] sm:$0xff] %vm7022, %v6899
          %7029 = vst.msk [vmem:[%s397 + $0x30] sm:$0xff] %vm7022, %v6900
          %7030 = vst.msk [vmem:[%s397 + $0x38] sm:$0xff] %vm7022, %v6901
          %7031 = vst.msk [vmem:[%s397 + $0x40] sm:$0xff] %vm7022, %v6902
          %7032 = vst.msk [vmem:[%s397 + $0x48] sm:$0xff] %vm7022, %v6903
          %7033 = vst.msk [vmem:[%s397 + $0x50] sm:$0xff] %vm7022, %v6904
          %7034 = vst.msk [vmem:[%s397 + $0x58] sm:$0xff] %vm7022, %v6905
          %7035 = vst.msk [vmem:[%s397 + $0x60] sm:$0xff] %vm7022, %v6906
          %7036 = vst.msk [vmem:[%s397 + $0x68] sm:$0xff] %vm7022, %v6907
          %7037 = vst.msk [vmem:[%s397 + $0x70] sm:$0xff] %vm7022, %v6908
          %7038 = vst.msk [vmem:[%s397 + $0x78] sm:$0xff] %vm7022, %v6909
          %7039 = vst.msk [vmem:[%s397 + $0x80] sm:$0xff] %vm7022, %v6910
          %7040 = vst.msk [vmem:[%s397 + $0x88] sm:$0xff] %vm7022, %v6911
          %7041 = vst.msk [vmem:[%s397 + $0x90] sm:$0xff] %vm7022, %v6912
          %7042 = vst.msk [vmem:[%s397 + $0x98] sm:$0xff] %vm7022, %v6913
          %7043 = vst.msk [vmem:[%s397 + $0xa0] sm:$0xff] %vm7022, %v6914
          %7044 = vst.msk [vmem:[%s397 + $0xa8] sm:$0xff] %vm7022, %v6915
          %7045 = vst.msk [vmem:[%s397 + $0xb0] sm:$0xff] %vm7022, %v6916
          %7046 = vst.msk [vmem:[%s397 + $0xb8] sm:$0xff] %vm7022, %v6917
          %7047 = vst.msk [vmem:[%s397 + $0xc0] sm:$0xff] %vm7022, %v6918
          %7048 = vst.msk [vmem:[%s397 + $0xc8] sm:$0xff] %vm7022, %v6919
          %7049 = vst.msk [vmem:[%s397 + $0xd0] sm:$0xff] %vm7022, %v6920
          %7050 = vst.msk [vmem:[%s397 + $0xd8] sm:$0xff] %vm7022, %v6921
          %7051 = vst.msk [vmem:[%s397 + $0xe0] sm:$0xff] %vm7022, %v6922
          %7052 = vst.msk [vmem:[%s397 + $0xe8] sm:$0xff] %vm7022, %v6923
          %7053 = vst.msk [vmem:[%s397 + $0xf0] sm:$0xff] %vm7022, %v6924
          %7054 = vst.msk [vmem:[%s397 + $0xf8] sm:$0xff] %vm7022, %v6925
          %7055 = vst.msk [vmem:[%s397 + $0x100] sm:$0xff] %vm7022, %v6926
          %7056 = vst.msk [vmem:[%s397 + $0x108] sm:$0xff] %vm7022, %v6927
          %7057 = vst.msk [vmem:[%s397 + $0x110] sm:$0xff] %vm7022, %v6928
          %7058 = vst.msk [vmem:[%s397 + $0x118] sm:$0xff] %vm7022, %v6929
          %7059 = vst.msk [vmem:[%s397 + $0x120] sm:$0xff] %vm7022, %v6930
          %7060 = vst.msk [vmem:[%s397 + $0x128] sm:$0xff] %vm7022, %v6931
          %7061 = vst.msk [vmem:[%s397 + $0x130] sm:$0xff] %vm7022, %v6932
          %7062 = vst.msk [vmem:[%s397 + $0x138] sm:$0xff] %vm7022, %v6933
          %7063 = vst.msk [vmem:[%s397 + $0x140] sm:$0xff] %vm7022, %v6934
          %7064 = vst.msk [vmem:[%s397 + $0x148] sm:$0xff] %vm7022, %v6935
          %7065 = vst.msk [vmem:[%s397 + $0x150] sm:$0xff] %vm7022, %v6936
          %7066 = vst.msk [vmem:[%s397 + $0x158] sm:$0xff] %vm7022, %v6937
          %7067 = vst.msk [vmem:[%s397 + $0x160] sm:$0xff] %vm7022, %v6938
          %7068 = vst.msk [vmem:[%s397 + $0x168] sm:$0xff] %vm7022, %v6939
          %7069 = vst.msk [vmem:[%s397 + $0x170] sm:$0xff] %vm7022, %v6940
          %7070 = vst.msk [vmem:[%s397 + $0x178] sm:$0xff] %vm7022, %v6941
          %7071 = vst.msk [vmem:[%s397 + $0x180] sm:$0xff] %vm7022, %v6942
          %7072 = vst.msk [vmem:[%s397 + $0x188] sm:$0xff] %vm7022, %v6943
          %7073 = vst.msk [vmem:[%s397 + $0x190] sm:$0xff] %vm7022, %v6944
          %7074 = vst.msk [vmem:[%s397 + $0x198] sm:$0xff] %vm7022, %v6945
          %7075 = vst.msk [vmem:[%s397 + $0x1a0] sm:$0xff] %vm7022, %v6946
          %7076 = vst.msk [vmem:[%s397 + $0x1a8] sm:$0xff] %vm7022, %v6947
          %7077 = vst.msk [vmem:[%s397 + $0x1b0] sm:$0xff] %vm7022, %v6948
          %7078 = vst.msk [vmem:[%s397 + $0x1b8] sm:$0xff] %vm7022, %v6949
          %7079 = vst.msk [vmem:[%s397 + $0x1c0] sm:$0xff] %vm7022, %v6950
          %7080 = vst.msk [vmem:[%s397 + $0x1c8] sm:$0xff] %vm7022, %v6951
          %7081 = vst.msk [vmem:[%s397 + $0x1d0] sm:$0xff] %vm7022, %v6952
          %7082 = vst.msk [vmem:[%s397 + $0x1d8] sm:$0xff] %vm7022, %v6953
          %7083 = vst.msk [vmem:[%s397 + $0x1e0] sm:$0xff] %vm7022, %v6954
          %7084 = vst.msk [vmem:[%s397 + $0x1e8] sm:$0xff] %vm7022, %v6955
          %7085 = vst.msk [vmem:[%s397 + $0x1f0] sm:$0xff] %vm7022, %v6956
          %7086 = vst.msk [vmem:[%s397 + $0x1f8] sm:$0xff] %vm7022, %v6957
          %7087 = vst.msk [vmem:[%s397 + $0x200] sm:$0xff] %vm7022, %v6958
          %7088 = vst.msk [vmem:[%s397 + $0x208] sm:$0xff] %vm7022, %v6959
          %7089 = vst.msk [vmem:[%s397 + $0x210] sm:$0xff] %vm7022, %v6960
          %7090 = vst.msk [vmem:[%s397 + $0x218] sm:$0xff] %vm7022, %v6961
          %7091 = vst.msk [vmem:[%s397 + $0x220] sm:$0xff] %vm7022, %v6962
          %7092 = vst.msk [vmem:[%s397 + $0x228] sm:$0xff] %vm7022, %v6963
          %7093 = vst.msk [vmem:[%s397 + $0x230] sm:$0xff] %vm7022, %v6964
          %7094 = vst.msk [vmem:[%s397 + $0x238] sm:$0xff] %vm7022, %v6965
          %7095 = vst.msk [vmem:[%s397 + $0x240] sm:$0xff] %vm7022, %v6966
          %7096 = vst.msk [vmem:[%s397 + $0x248] sm:$0xff] %vm7022, %v6967
          %7097 = vst.msk [vmem:[%s397 + $0x250] sm:$0xff] %vm7022, %v6968
          %7098 = vst.msk [vmem:[%s397 + $0x258] sm:$0xff] %vm7022, %v6969
          %7099 = vst.msk [vmem:[%s397 + $0x260] sm:$0xff] %vm7022, %v6970
          %7100 = vst.msk [vmem:[%s397 + $0x268] sm:$0xff] %vm7022, %v6971
          %7101 = vst.msk [vmem:[%s397 + $0x270] sm:$0xff] %vm7022, %v6972
          %7102 = vst.msk [vmem:[%s397 + $0x278] sm:$0xff] %vm7022, %v6973
          %7103 = vst.msk [vmem:[%s397 + $0x280] sm:$0xff] %vm7022, %v6974
          %7104 = vst.msk [vmem:[%s397 + $0x288] sm:$0xff] %vm7022, %v6975
          %7105 = vst.msk [vmem:[%s397 + $0x290] sm:$0xff] %vm7022, %v6976
          %7106 = vst.msk [vmem:[%s397 + $0x298] sm:$0xff] %vm7022, %v6977
          %7107 = vst.msk [vmem:[%s397 + $0x2a0] sm:$0xff] %vm7022, %v6978
          %7108 = vst.msk [vmem:[%s397 + $0x2a8] sm:$0xff] %vm7022, %v6979
          %7109 = vst.msk [vmem:[%s397 + $0x2b0] sm:$0xff] %vm7022, %v6980
          %7110 = vst.msk [vmem:[%s397 + $0x2b8] sm:$0xff] %vm7022, %v6981
          %7111 = vst.msk [vmem:[%s397 + $0x2c0] sm:$0xff] %vm7022, %v6982
          %7112 = vst.msk [vmem:[%s397 + $0x2c8] sm:$0xff] %vm7022, %v6983
          %7113 = vst.msk [vmem:[%s397 + $0x2d0] sm:$0xff] %vm7022, %v6984
          %7114 = vst.msk [vmem:[%s397 + $0x2d8] sm:$0xff] %vm7022, %v6985
          %7115 = vst.msk [vmem:[%s397 + $0x2e0] sm:$0xff] %vm7022, %v6986
          %7116 = vst.msk [vmem:[%s397 + $0x2e8] sm:$0xff] %vm7022, %v6987
          %7117 = vst.msk [vmem:[%s397 + $0x2f0] sm:$0xff] %vm7022, %v6988
          %7118 = vst.msk [vmem:[%s397 + $0x2f8] sm:$0xff] %vm7022, %v6989
          %7119 = vst.msk [vmem:[%s397 + $0x300] sm:$0xff] %vm7022, %v6990
          %7120 = vst.msk [vmem:[%s397 + $0x308] sm:$0xff] %vm7022, %v6991
          %7121 = vst.msk [vmem:[%s397 + $0x310] sm:$0xff] %vm7022, %v6992
          %7122 = vst.msk [vmem:[%s397 + $0x318] sm:$0xff] %vm7022, %v6993
          %7123 = vst.msk [vmem:[%s397 + $0x320] sm:$0xff] %vm7022, %v6994
          %7124 = vst.msk [vmem:[%s397 + $0x328] sm:$0xff] %vm7022, %v6995
          %7125 = vst.msk [vmem:[%s397 + $0x330] sm:$0xff] %vm7022, %v6996
          %7126 = vst.msk [vmem:[%s397 + $0x338] sm:$0xff] %vm7022, %v6997
          %7127 = vst.msk [vmem:[%s397 + $0x340] sm:$0xff] %vm7022, %v6998
          %7128 = vst.msk [vmem:[%s397 + $0x348] sm:$0xff] %vm7022, %v6999
          %7129 = vst.msk [vmem:[%s397 + $0x350] sm:$0xff] %vm7022, %v7000
          %7130 = vst.msk [vmem:[%s397 + $0x358] sm:$0xff] %vm7022, %v7001
          %7131 = vst.msk [vmem:[%s397 + $0x360] sm:$0xff] %vm7022, %v7002
          %7132 = vst.msk [vmem:[%s397 + $0x368] sm:$0xff] %vm7022, %v7003
          %7133 = vst.msk [vmem:[%s397 + $0x370] sm:$0xff] %vm7022, %v7004
          %7134 = vst.msk [vmem:[%s397 + $0x378] sm:$0xff] %vm7022, %v7005
          %7135 = vst.msk [vmem:[%s397 + $0x380] sm:$0xff] %vm7022, %v7006
          %7136 = vst.msk [vmem:[%s397 + $0x388] sm:$0xff] %vm7022, %v7007
          %7137 = vst.msk [vmem:[%s397 + $0x390] sm:$0xff] %vm7022, %v7008
          %7138 = vst.msk [vmem:[%s397 + $0x398] sm:$0xff] %vm7022, %v7009
          %7139 = vst.msk [vmem:[%s397 + $0x3a0] sm:$0xff] %vm7022, %v7010
          %7140 = vst.msk [vmem:[%s397 + $0x3a8] sm:$0xff] %vm7022, %v7011
          %7141 = vst.msk [vmem:[%s397 + $0x3b0] sm:$0xff] %vm7022, %v7012
          %7142 = vst.msk [vmem:[%s397 + $0x3b8] sm:$0xff] %vm7022, %v7013
          %7143 = vst.msk [vmem:[%s397 + $0x3c0] sm:$0xff] %vm7022, %v7014
          %7144 = vst.msk [vmem:[%s397 + $0x3c8] sm:$0xff] %vm7022, %v7015
          %7145 = vst.msk [vmem:[%s397 + $0x3d0] sm:$0xff] %vm7022, %v7016
          %7146 = vst.msk [vmem:[%s397 + $0x3d8] sm:$0xff] %vm7022, %v7017
          %7147 = vst.msk [vmem:[%s397 + $0x3e0] sm:$0xff] %vm7022, %v7018
          %7148 = vst.msk [vmem:[%s397 + $0x3e8] sm:$0xff] %vm7022, %v7019
          %7149 = vst.msk [vmem:[%s397 + $0x3f0] sm:$0xff] %vm7022, %v7020
          %7150 = vst.msk [vmem:[%s397 + $0x3f8] sm:$0xff] %vm7022, %v7021
        $region88: #{tpu_custom_call.1} parent=55 // pred_fallthru
          _
        %p7151 = scmp.eq.s32.totalorder %s28, 2
        %s7152 = scalar_select %p7151, %s29, 0
        %s7153 = smul.u32 128, %s7152
        %p7154 = scmp.lt.s32.totalorder %s7153, 127
        %s7155 = scalar_select %p7154, %s7153, 127
        %s7156 = smul.addr %s7155, 8
        %s7157 = scalar_lea.vmem %s9, %s7156
        // Predicated region
        $region93: #{tpu_custom_call.1} parent=55 // pred_check
          %p7158 = pneg %p256
        $region94: #{tpu_custom_call.1} parent=55 // pred_check_branch
          %7160 = sbr.rel (%p7158) target = $region96
        $region95: #{tpu_custom_call.1} parent=55 // pred_region
          %p7161 = scmp.eq.s32.totalorder %s28, 2
          %s7162 = scalar_select %p7161, %s29, 0
          %s7163 = smul.u32 128, %s7162
        $region96: #{tpu_custom_call.1} parent=55 // pred_fallthru
          _
      $region56: #{tpu_custom_call.1} parent=5 // pred_fallthru
        _
      %p7164 = scmp.le.s32.totalorder 2, %s19
      // Predicated region
      $region97: #{tpu_custom_call.1} parent=5 // pred_check
        %p7165 = pneg %p7164
      $region98: #{tpu_custom_call.1} parent=5 // pred_check_branch
        %7167 = sbr.rel (%p7165) target = $region100
      $region99: #{tpu_custom_call.1} parent=5 // pred_region
        %s7168 = ssub.s32 %s19, 2
        // Predicated region
        $region101: #{tpu_custom_call.1} parent=99 // pred_check
          %p7169 = pneg %p262
        $region102: #{tpu_custom_call.1} parent=99 // pred_check_branch
          %7171 = sbr.rel (%p7169) target = $region104
        $region103: #{tpu_custom_call.1} parent=99 // pred_region
          %p7172 = scmp.eq.s32.totalorder %s30, 2
          %s7173 = scalar_select %p7172, %s31, 0
          %s7174 = smul.u32 128, %s7173
          %p7175 = scmp.lt.s32.totalorder %s7174, 127
          %s7176 = scalar_select %p7175, %s7174, 127
          %s7177 = smul.addr %s7176, 8
          %s7178 = scalar_lea.vmem %s9, %s7177
        $region104: #{tpu_custom_call.1} parent=99 // pred_fallthru
          _
      $region100: #{tpu_custom_call.1} parent=5 // pred_fallthru
        _
    $region6: #{tpu_custom_call.1} parent=1 // loop_footer
      %s23 = sadd.s32 1, %s19
    $region7: #{tpu_custom_call.1} parent=1 // loop_footer_branch
      %18 = sbr.rel target = $region3
    $region8: #{tpu_custom_call.1} parent=1 // loop_exit
      _
    %7179 = vsyncpa [#allocation15], 1
    %s7180 = scalar_lea.sflag [#allocation15], 1
    %7181 = vsyncpa %s7180, 1
    %7182 = vsyncpa [#allocation17], 1

</llo_original>
